<compile_context>
chip_gen: v6e
topology: v6e:2x2x1
jax: 0.10.0
libtpu: 0.0.40
codegen_flags: <defaults>
</compile_context>

<pallas_src>
import functools
import math

import jax
import jax.numpy as jnp
from jax.experimental import pallas as pl
from jax.experimental.pallas import tpu as pltpu


# ------------------------------- the kernel ----------------------------------

def _tfd_kernel(slab_ref, xp_ref, xf_ref, out_ref, *, offsets, num_vars,
                num_heads, past_len, future_len, d_model):
    d = d_model
    Tp, Tf = past_len, future_len
    T = Tp + Tf
    B = xp_ref.shape[1]                       # time-major inputs: [T*, B, V]
    H = num_heads
    dh = d // H
    nv = num_vars

    # ---- packed-parameter accessors (static slices of the VMEM slab) ----
    def g(name):
        r0, nr, nc = offsets[name]
        return slab_ref[r0:r0 + nr, 0:nc]

    def dense(x, name):
        e = g(name)                           # rows [0:k] = W, row k = bias
        k = x.shape[-1]
        return (jnp.dot(x, e[:k, :], preferred_element_type=jnp.float32)
                + e[k:k + 1, :])

    def layer_norm(x, name, eps=1e-5):
        wb = g(name)                          # row 0 = weight, row 1 = bias
        mu = jnp.mean(x, axis=-1, keepdims=True)
        var = jnp.mean(jnp.square(x - mu), axis=-1, keepdims=True)
        return (x - mu) * jax.lax.rsqrt(var + eps) * wb[0:1, :] + wb[1:2, :]

    def elu(x):
        return jnp.where(x > 0, x, jnp.exp(jnp.minimum(x, 0.0)) - 1.0)

    def glu(x, name, width):
        gv = dense(x, name)                   # fused gate|value matmul
        return jax.nn.sigmoid(gv[:, :width]) * gv[:, width:2 * width]

    def softmax_lastdim(x):
        m = jnp.max(x, axis=-1, keepdims=True)
        e = jnp.exp(x - m)
        return e * pl.reciprocal(jnp.sum(e, axis=-1, keepdims=True),
                                 approx=True)

    def grn(x, pfx):
        # W1/b1 already folded into pfx.Wgv; ctx precomputed in the slab
        h = elu(dense(x, pfx + '.W2') + g(pfx + '.ctx'))
        gate = glu(h, pfx + '.Wgv', d)
        return layer_norm(x + gate, pfx + '.ln')

    def vsn(x_raw, pfx, n_var):
        # per-variable scale+shift embedding as one MXU matmul
        emb = dense(x_raw, pfx + '.emb')                       # [N, n_var*d]
        # flat GRN (co-packed W2|Wskip, W1 folded) -> selection weights
        h0 = dense(emb, pfx + '.flat.W2s')                     # [N, d+n_var]
        skip = h0[:, d:d + n_var]
        hh = elu(h0[:, :d])
        gate = glu(hh, pfx + '.flat.Wgv', n_var)
        w = softmax_lastdim(layer_norm(skip + gate, pfx + '.flat.ln'))
        # all per-variable GRNs as block-diagonal matmuls (W1bd folded)
        h2 = elu(dense(emb, pfx + '.W2bd'))
        gate2 = (jax.nn.sigmoid(dense(h2, pfx + '.Wgbd'))
                 * dense(h2, pfx + '.Wvbd'))
        y = emb + gate2
        # per-variable layer norm via block-averaging matmuls (centered/stable)
        wavg = g(pfx + '.Wavg')
        mu = jnp.dot(y, wavg, preferred_element_type=jnp.float32)
        diff = y - mu
        var = jnp.dot(diff * diff, wavg, preferred_element_type=jnp.float32)
        wb = g(pfx + '.lnbd')
        proc = diff * jax.lax.rsqrt(var + 1e-5) * wb[0:1, :] + wb[1:2, :]
        # weighted selection sum over variables on the (otherwise idle) MXU
        w_rep = jnp.dot(w, g(pfx + '.R'), preferred_element_type=jnp.float32)
        return jnp.dot(proc * w_rep, g(pfx + '.S'),
                       preferred_element_type=jnp.float32)     # [N, d]

    def lstm(x_flat, pfx, h, c, t_seq):
        # input projection hoisted out of the recurrence (time-major rows)
        xproj = dense(x_flat, pfx + '.Wihb')                   # [t_seq*B, 4d]
        whh = g(pfx + '.Whh')
        hs = []
        for t in range(t_seq):
            gates = xproj[t * B:(t + 1) * B, :] + jnp.dot(
                h, whh, preferred_element_type=jnp.float32)
            act = jax.nn.sigmoid(gates)       # single EUP push over all 4 gates
            i, f, o = act[:, 0:d], act[:, d:2 * d], act[:, 3 * d:4 * d]
            gg = jnp.tanh(gates[:, 2 * d:3 * d])
            c = f * c + i * gg
            h = o * jnp.tanh(c)
            hs.append(h)
        return hs, h, c

    def attention(x_flat):
        # fused Q|K|V projection (scale folded into Q, head mean into Wo)
        qkv = dense(x_flat, 'attn.Wqkv')                       # [T*B, 2H*dh+dh]
        qkv_b = jnp.transpose(qkv.reshape(T, B, 2 * H * dh + dh), (1, 0, 2))
        v = qkv_b[:, :, 2 * H * dh:]                           # shared V
        A = None
        for hh in range(H):                   # sum softmax matrices, then 1 AV
            qh = qkv_b[:, :, hh * dh:(hh + 1) * dh]
            kh = qkv_b[:, :, H * dh + hh * dh:H * dh + (hh + 1) * dh]
            s = jnp.einsum('btd,bsd->bts', qh, kh,
                           preferred_element_type=jnp.float32)
            a = softmax_lastdim(s)
            A = a if A is None else A + a
        hv = jnp.einsum('bts,bsd->btd', A, v,
                        preferred_element_type=jnp.float32)    # [B, T, dh]
        # only future rows feed the rest of the network
        hv_f = jnp.transpose(hv[:, Tp:, :], (1, 0, 2)).reshape(Tf * B, dh)
        return dense(hv_f, 'attn.Wo')                          # [Tf*B, d]

    # ---------------------- forward pass (time-major rows) ----------------------
    xp = xp_ref[...].reshape(Tp * B, nv)
    xf = xf_ref[...].reshape(Tf * B, nv - 1)

    past_vsn = vsn(xp, 'pvsn', nv)                             # [Tp*B, d]
    fut_vsn = vsn(xf, 'fvsn', nv - 1)                          # [Tf*B, d]

    h0 = jnp.zeros((B, d), jnp.float32)
    c0 = jnp.zeros((B, d), jnp.float32)
    hs_e, h_e, c_e = lstm(past_vsn, 'lstm_e', h0, c0, Tp)
    hs_d, _, _ = lstm(fut_vsn, 'lstm_d', h_e, c_e, Tf)
    lstm_out = jnp.concatenate(hs_e + hs_d, axis=0)            # [T*B, d]

    vsn_combined = jnp.concatenate([past_vsn, fut_vsn], axis=0)

    locality = glu(lstm_out, 'loc_glu.Wgv', d)
    locality_enhanced = layer_norm(vsn_combined + locality, 'loc_ln.ln')

    enriched = grn(locality_enhanced, 'sgrn')

    att_f = attention(enriched)                                # [Tf*B, d]

    fut_loc = locality_enhanced[Tp * B:, :]                    # contiguous rows
    fut_enr = enriched[Tp * B:, :]

    post_attn = glu(att_f, 'pattn_glu.Wgv', d)
    post_attended = layer_norm(fut_enr + post_attn, 'pattn_ln.ln')

    position_wise = grn(post_attended, 'pgrn')
    final = glu(position_wise, 'final_glu.Wgv', d)
    features = layer_norm(fut_loc + final, 'final_ln.ln')

    out = dense(features, 'out')                               # [Tf*B, Q]
    out_ref[...] = out.reshape(out_ref.shape)                  # [Tf, B, Q]


# --------------------------- host-side param packing --------------------------

def _pack_params(params, *, d, num_vars, num_heads, batch, past_len,
                 future_len):
    """Fuse + concatenate the canonical params into one [R,128] f32 slab."""
    entries = []

    def add(name, arr):
        arr = jnp.asarray(arr, jnp.float32)
        if arr.ndim == 1:
            arr = arr[None, :]
        assert arr.ndim == 2 and arr.shape[1] <= 128, (name, arr.shape)
        entries.append((name, arr))

    def add_wb(name, w, b):                   # weight rows + 1 bias row
        add(name, jnp.concatenate(
            [jnp.asarray(w, jnp.float32),
             jnp.asarray(b, jnp.float32).reshape(1, -1)], axis=0))

    def add_ln(name, w, b):                   # row 0 = weight, row 1 = bias
        add(name, jnp.concatenate(
            [jnp.asarray(w, jnp.float32).reshape(1, -1),
             jnp.asarray(b, jnp.float32).reshape(1, -1)], axis=0))

    def block_diag(mats):
        r, c = mats[0].shape
        out = jnp.zeros((len(mats) * r, len(mats) * c), jnp.float32)
        for v, m in enumerate(mats):
            out = out.at[v * r:(v + 1) * r, v * c:(v + 1) * c].set(m)
        return out

    p = params

    # x.unsqueeze(-1) + Linear(1, d)  ==  one [nv, nv*d] embedding matmul
    for pfx, tr, nvv in (('pvsn', 'past_tr', num_vars),
                         ('fvsn', 'fut_tr', num_vars - 1)):
        w = p[tr + '.W'].reshape(1, d)
        b = p[tr + '.b'].reshape(1, d)
        add_wb(pfx + '.emb', block_diag([w] * nvv), jnp.tile(b, (1, nvv)))

    for pfx, nvv in (('pvsn', num_vars), ('fvsn', num_vars - 1)):
        f = pfx + '.flat'
        # shared-input co-pack: [W2 | Wskip] consume emb in one matmul
        add_wb(pfx + '.flat.W2s',
               jnp.concatenate([p[f + '.W2'], p[f + '.Wskip']], axis=1),
               jnp.concatenate([p[f + '.b2'], p[f + '.bskip']], axis=1))
        # fold flat.W1/b1 into the flat GLU
        wgv = jnp.concatenate([p[f + '.Wg'], p[f + '.Wv']], axis=1)
        bgv = jnp.concatenate([p[f + '.bg'], p[f + '.bv']], axis=1)
        add_wb(pfx + '.flat.Wgv', p[f + '.W1'] @ wgv, p[f + '.b1'] @ wgv + bgv)
        add_ln(pfx + '.flat.ln', p[f + '.lnw'], p[f + '.lnb'])

        v = pfx + '.var'
        add_wb(pfx + '.W2bd',
               block_diag([p[v + '.W2'][i] for i in range(nvv)]),
               jnp.concatenate([p[v + '.b2'][i] for i in range(nvv)], axis=1))
        # fold W1bd/b1bd into the block-diagonal gate / value matmuls
        wg_f, bg_f, wv_f, bv_f = [], [], [], []
        for i in range(nvv):
            w1, b1 = p[v + '.W1'][i], p[v + '.b1'][i]
            wg_f.append(w1 @ p[v + '.Wg'][i])
            bg_f.append(b1 @ p[v + '.Wg'][i] + p[v + '.bg'][i])
            wv_f.append(w1 @ p[v + '.Wv'][i])
            bv_f.append(b1 @ p[v + '.Wv'][i] + p[v + '.bv'][i])
        add_wb(pfx + '.Wgbd', block_diag(wg_f), jnp.concatenate(bg_f, axis=1))
        add_wb(pfx + '.Wvbd', block_diag(wv_f), jnp.concatenate(bv_f, axis=1))
        add_ln(pfx + '.lnbd',
               jnp.concatenate([p[v + '.lnw'][i] for i in range(nvv)], axis=1),
               jnp.concatenate([p[v + '.lnb'][i] for i in range(nvv)], axis=1))
        add(pfx + '.Wavg',
            block_diag([jnp.full((d, d), 1.0 / d, jnp.float32)] * nvv))
        # selection helpers: w @ R broadcasts weights, (proc*w_rep) @ S sums
        add(pfx + '.R', block_diag([jnp.ones((1, d), jnp.float32)] * nvv))
        add(pfx + '.S', jnp.tile(jnp.eye(d, dtype=jnp.float32), (nvv, 1)))

    for pfx in ('lstm_e', 'lstm_d'):          # fuse gates i,f,g,o -> [d, 4d]
        add_wb(pfx + '.Wihb',
               jnp.concatenate([p[pfx + '.Wih'][k] for k in range(4)], axis=1),
               jnp.concatenate([p[pfx + '.b'][k] for k in range(4)], axis=1))
        add(pfx + '.Whh',
            jnp.concatenate([p[pfx + '.Whh'][k] for k in range(4)], axis=1))

    for pfx in ('loc_glu', 'pattn_glu', 'final_glu'):
        add_wb(pfx + '.Wgv',
               jnp.concatenate([p[pfx + '.Wg'], p[pfx + '.Wv']], axis=1),
               jnp.concatenate([p[pfx + '.bg'], p[pfx + '.bv']], axis=1))

    for pfx in ('loc_ln', 'pattn_ln', 'final_ln'):
        add_ln(pfx + '.ln', p[pfx + '.w'], p[pfx + '.b'])

    # GRNs: fold W1/b1 into the GLU, precompute the position context (time-major)
    pos_all = jnp.repeat(jnp.arange(-past_len, future_len, dtype=jnp.float32),
                         batch)
    pos_fut = jnp.repeat(jnp.arange(0, future_len, dtype=jnp.float32), batch)
    for pfx, pos in (('sgrn', pos_all), ('pgrn', pos_fut)):
        add_wb(pfx + '.W2', p[pfx + '.W2'], p[pfx + '.b2'])
        wgv = jnp.concatenate([p[pfx + '.Wg'], p[pfx + '.Wv']], axis=1)
        bgv = jnp.concatenate([p[pfx + '.bg'], p[pfx + '.bv']], axis=1)
        add_wb(pfx + '.Wgv', p[pfx + '.W1'] @ wgv, p[pfx + '.b1'] @ wgv + bgv)
        add_ln(pfx + '.ln', p[pfx + '.lnw'], p[pfx + '.lnb'])
        add(pfx + '.ctx', pos[:, None] * p[pfx + '.Wc'])       # [rows, d]

    # attention: one fused Q|K|V projection; scale into Q, 1/H into Wo
    dh = d // num_heads
    scale = 1.0 / math.sqrt(dh)
    wq = jnp.concatenate([p['attn.Wq'][h] for h in range(num_heads)], 1) * scale
    bq = jnp.concatenate([p['attn.bq'][h] for h in range(num_heads)], 1) * scale
    wk = jnp.concatenate([p['attn.Wk'][h] for h in range(num_heads)], 1)
    bk = jnp.concatenate([p['attn.bk'][h] for h in range(num_heads)], 1)
    add_wb('attn.Wqkv',
           jnp.concatenate([wq, wk, p['attn.Wv']], axis=1),
           jnp.concatenate([bq, bk, p['attn.bv']], axis=1))
    add_wb('attn.Wo', p['attn.Wo'] / float(num_heads), p['attn.bo'])

    add_wb('out', p['out.W'], p['out.b'])

    # assemble the slab; every entry starts on an 8-row (sublane) boundary
    offsets, blocks, r = {}, [], 0
    for name, arr in entries:
        nr, nc = arr.shape
        pr = (-nr) % 8
        offsets[name] = (r, nr, nc)
        blocks.append(jnp.pad(arr, ((0, pr), (0, 128 - nc))))
        r += nr + pr
    slab = jnp.concatenate(blocks, axis=0)
    return slab, offsets


# ---------------------------------- wrapper -----------------------------------

def temporal_fusion_decoder(params, x_past, x_future, *, num_heads, past_len,
                            future_len, num_quantiles, d_model, num_vars):
    B = x_past.shape[0]
    slab, offsets = _pack_params(
        params, d=d_model, num_vars=num_vars, num_heads=num_heads,
        batch=B, past_len=past_len, future_len=future_len)

    kernel = functools.partial(
        _tfd_kernel, offsets=offsets, num_vars=num_vars, num_heads=num_heads,
        past_len=past_len, future_len=future_len, d_model=d_model)

    out_tm = pl.pallas_call(
        kernel,
        out_shape=jax.ShapeDtypeStruct((future_len, B, num_quantiles),
                                       jnp.float32),
        in_specs=[pl.BlockSpec(memory_space=pltpu.MemorySpace.VMEM)] * 3,
        out_specs=pl.BlockSpec(memory_space=pltpu.MemorySpace.VMEM),
    )(slab,
      jnp.transpose(x_past.astype(jnp.float32), (1, 0, 2)),    # time-major
      jnp.transpose(x_future.astype(jnp.float32), (1, 0, 2)))
    return jnp.transpose(out_tm, (1, 0, 2))                    # [B, Tf, Q]


# ------------------------ deterministic parameter init ------------------------

def _init_params(key, d, num_vars, num_heads, num_quantiles):
    params = {}
    counter = [0]

    def nk():
        counter[0] += 1
        return jax.random.fold_in(key, counter[0])

    def add(name, shape, scale):
        params[name] = scale * jax.random.normal(nk(), shape, dtype=jnp.float32)

    def add_linear(pfx, din, dout):
        add(pfx + '.W', (din, dout), 1.0 / math.sqrt(din))
        add(pfx + '.b', (1, dout), 0.01)

    def add_glu(pfx, dim):
        add(pfx + '.Wg', (dim, dim), 1.0 / math.sqrt(dim))
        add(pfx + '.bg', (1, dim), 0.01)
        add(pfx + '.Wv', (dim, dim), 1.0 / math.sqrt(dim))
        add(pfx + '.bv', (1, dim), 0.01)

    def add_ln(pfx, dim):
        params[pfx + '.w'] = jnp.ones((1, dim), jnp.float32)
        params[pfx + '.b'] = jnp.zeros((1, dim), jnp.float32)

    def add_grn(pfx, dim, ctx=False):
        add(pfx + '.W2', (dim, dim), 1.0 / math.sqrt(dim))
        add(pfx + '.b2', (1, dim), 0.01)
        if ctx:
            add(pfx + '.Wc', (1, dim), 0.1)
        add(pfx + '.W1', (dim, dim), 1.0 / math.sqrt(dim))
        add(pfx + '.b1', (1, dim), 0.01)
        add_glu(pfx, dim)
        params[pfx + '.lnw'] = jnp.ones((1, dim), jnp.float32)
        params[pfx + '.lnb'] = jnp.zeros((1, dim), jnp.float32)

    def add_vsn(pfx, nv):
        fp = pfx + '.flat'
        add(fp + '.Wskip', (nv * d, nv), 1.0 / math.sqrt(nv * d))
        add(fp + '.bskip', (1, nv), 0.01)
        add(fp + '.W2', (nv * d, d), 1.0 / math.sqrt(nv * d))
        add(fp + '.b2', (1, d), 0.01)
        add(fp + '.W1', (d, nv), 1.0 / math.sqrt(d))
        add(fp + '.b1', (1, nv), 0.01)
        add(fp + '.Wg', (nv, nv), 1.0 / math.sqrt(nv))
        add(fp + '.bg', (1, nv), 0.01)
        add(fp + '.Wv', (nv, nv), 1.0 / math.sqrt(nv))
        add(fp + '.bv', (1, nv), 0.01)
        params[fp + '.lnw'] = jnp.ones((1, nv), jnp.float32)
        params[fp + '.lnb'] = jnp.zeros((1, nv), jnp.float32)
        vp = pfx + '.var'
        for nm in ('W2', 'W1', 'Wg', 'Wv'):
            add(vp + '.' + nm, (nv, d, d), 1.0 / math.sqrt(d))
        for nm in ('b2', 'b1', 'bg', 'bv'):
            add(vp + '.' + nm, (nv, 1, d), 0.01)
        params[vp + '.lnw'] = jnp.ones((nv, 1, d), jnp.float32)
        params[vp + '.lnb'] = jnp.zeros((nv, 1, d), jnp.float32)

    def add_lstm(pfx):
        add(pfx + '.Wih', (4, d, d), 1.0 / math.sqrt(d))
        add(pfx + '.Whh', (4, d, d), 1.0 / math.sqrt(d))
        add(pfx + '.b', (4, 1, d), 0.01)

    add_linear('past_tr', 1, d)
    add_linear('fut_tr', 1, d)
    add_vsn('pvsn', num_vars)
    add_vsn('fvsn', num_vars - 1)
    add_lstm('lstm_e')
    add_lstm('lstm_d')
    add_glu('loc_glu', d)
    add_ln('loc_ln', d)
    add_grn('sgrn', d, ctx=True)
    dh = d // num_heads
    add('attn.Wq', (num_heads, d, dh), 1.0 / math.sqrt(d))
    add('attn.bq', (num_heads, 1, dh), 0.01)
    add('attn.Wk', (num_heads, d, dh), 1.0 / math.sqrt(d))
    add('attn.bk', (num_heads, 1, dh), 0.01)
    add('attn.Wv', (d, dh), 1.0 / math.sqrt(d))
    add('attn.bv', (1, dh), 0.01)
    add('attn.Wo', (dh, d), 1.0 / math.sqrt(dh))
    add('attn.bo', (1, d), 0.01)
    add_glu('pattn_glu', d)
    add_ln('pattn_ln', d)
    add_grn('pgrn', d, ctx=True)
    add_glu('final_glu', d)
    add_ln('final_ln', d)
    add_linear('out', d, num_quantiles)
    return params


# ------------------------------------ main ------------------------------------

if __name__ == "__main__":
    d_model = 32
    num_vars = 4
    num_heads = 4
    past_len = 8
    future_len = 4          # == forecast_len
    num_quantiles = 3       # quantiles [0.1, 0.5, 0.9]
    batch = 2

    root = jax.random.PRNGKey(0)
    k_past, k_fut, k_w = jax.random.split(root, 3)
    x_past = jax.random.normal(k_past, (batch, past_len, num_vars), jnp.float32)
    x_future = jax.random.normal(k_fut, (batch, future_len, num_vars - 1),
                                 jnp.float32)
    params = _init_params(k_w, d_model, num_vars, num_heads, num_quantiles)

    out = temporal_fusion_decoder(
        params, x_past, x_future,
        num_heads=num_heads, past_len=past_len, future_len=future_len,
        num_quantiles=num_quantiles, d_model=d_model, num_vars=num_vars)
    out = jax.block_until_ready(out)
    assert out.shape == (batch, future_len, num_quantiles)
    assert bool(jnp.all(jnp.isfinite(out)))
    print("KERNEL_OK")
</pallas_src>

<mosaic_0001>
module attributes {stable_mosaic.version = 11 : i64} {
  func.func @_tfd_kernel(%arg0: memref<2144x128xf32, #tpu.memory_space<vmem>>, %arg1: memref<8x2x4xf32, #tpu.memory_space<vmem>>, %arg2: memref<4x2x3xf32, #tpu.memory_space<vmem>>, %arg3: memref<4x2x3xf32, #tpu.memory_space<vmem>>) attributes {dimension_semantics = [], scalar_prefetch = 0 : i64, scratch_operands = 0 : i64, tpu.core_type = #tpu.core_type<tc>} {
    %c0 = arith.constant 0 : index
    %c0_0 = arith.constant 0 : index
    %c0_1 = arith.constant 0 : index
    %0 = vector.load %arg1[%c0, %c0_0, %c0_1] : memref<8x2x4xf32, #tpu.memory_space<vmem>>, vector<8x2x4xf32>
    %1 = vector.shape_cast %0 : vector<8x2x4xf32> to vector<16x4xf32>
    %c0_2 = arith.constant 0 : index
    %c0_3 = arith.constant 0 : index
    %c0_4 = arith.constant 0 : index
    %2 = vector.load %arg2[%c0_2, %c0_3, %c0_4] : memref<4x2x3xf32, #tpu.memory_space<vmem>>, vector<4x2x3xf32>
    %3 = vector.shape_cast %2 : vector<4x2x3xf32> to vector<8x3xf32>
    %c0_5 = arith.constant 0 : index
    %c0_6 = arith.constant 0 : index
    %4 = vector.load %arg0[%c0_5, %c0_6] : memref<2144x128xf32, #tpu.memory_space<vmem>>, vector<5x128xf32>
    %5 = vector.extract_strided_slice %4 {offsets = [0, 0], sizes = [4, 128], strides = [1, 1]} : vector<5x128xf32> to vector<4x128xf32>
    %cst = arith.constant dense<0.000000e+00> : vector<16x128xf32>
    %6 = tpu.matmul %1, %5, %cst {dimension_numbers = #tpu.dot_dimension_numbers<[1], [0], [0], [1], [0, 0, 1, 1], [], []>} : vector<16x4xf32>, vector<4x128xf32>, vector<16x128xf32> -> vector<16x128xf32>
    %7 = vector.extract_strided_slice %4 {offsets = [4, 0], sizes = [1, 128], strides = [1, 1]} : vector<5x128xf32> to vector<1x128xf32>
    %8 = vector.broadcast %7 : vector<1x128xf32> to vector<16x128xf32>
    %9 = arith.addf %6, %8 : vector<16x128xf32>
    %c16 = arith.constant 16 : index
    %c0_7 = arith.constant 0 : index
    %10 = vector.load %arg0[%c16, %c0_7] : memref<2144x128xf32, #tpu.memory_space<vmem>>, vector<129x36xf32>
    %11 = vector.extract_strided_slice %10 {offsets = [0, 0], sizes = [128, 36], strides = [1, 1]} : vector<129x36xf32> to vector<128x36xf32>
    %cst_8 = arith.constant dense<0.000000e+00> : vector<16x36xf32>
    %12 = tpu.matmul %9, %11, %cst_8 {dimension_numbers = #tpu.dot_dimension_numbers<[1], [0], [0], [1], [0, 0, 1, 1], [], []>} : vector<16x128xf32>, vector<128x36xf32>, vector<16x36xf32> -> vector<16x36xf32>
    %13 = vector.extract_strided_slice %10 {offsets = [128, 0], sizes = [1, 36], strides = [1, 1]} : vector<129x36xf32> to vector<1x36xf32>
    %14 = vector.broadcast %13 : vector<1x36xf32> to vector<16x36xf32>
    %15 = arith.addf %12, %14 : vector<16x36xf32>
    %16 = vector.extract_strided_slice %15 {offsets = [0, 32], sizes = [16, 4], strides = [1, 1]} : vector<16x36xf32> to vector<16x4xf32>
    %17 = vector.extract_strided_slice %15 {offsets = [0, 0], sizes = [16, 32], strides = [1, 1]} : vector<16x36xf32> to vector<16x32xf32>
    %cst_9 = arith.constant 0.000000e+00 : f32
    %18 = vector.broadcast %cst_9 : f32 to vector<16x32xf32>
    %19 = arith.cmpf ogt, %17, %18 : vector<16x32xf32>
    %cst_10 = arith.constant 0.000000e+00 : f32
    %20 = vector.broadcast %cst_10 : f32 to vector<16x32xf32>
    %21 = arith.minimumf %17, %20 : vector<16x32xf32>
    %22 = math.exp %21 : vector<16x32xf32>
    %cst_11 = arith.constant 1.000000e+00 : f32
    %23 = vector.broadcast %cst_11 : f32 to vector<16x32xf32>
    %24 = arith.subf %22, %23 : vector<16x32xf32>
    %25 = arith.select %19, %17, %24 : vector<16x32xi1>, vector<16x32xf32>
    %c152 = arith.constant 152 : index
    %c0_12 = arith.constant 0 : index
    %26 = vector.load %arg0[%c152, %c0_12] : memref<2144x128xf32, #tpu.memory_space<vmem>>, vector<33x8xf32>
    %27 = vector.extract_strided_slice %26 {offsets = [0, 0], sizes = [32, 8], strides = [1, 1]} : vector<33x8xf32> to vector<32x8xf32>
    %cst_13 = arith.constant dense<0.000000e+00> : vector<16x8xf32>
    %28 = tpu.matmul %25, %27, %cst_13 {dimension_numbers = #tpu.dot_dimension_numbers<[1], [0], [0], [1], [0, 0, 1, 1], [], []>} : vector<16x32xf32>, vector<32x8xf32>, vector<16x8xf32> -> vector<16x8xf32>
    %29 = vector.extract_strided_slice %26 {offsets = [32, 0], sizes = [1, 8], strides = [1, 1]} : vector<33x8xf32> to vector<1x8xf32>
    %30 = vector.broadcast %29 : vector<1x8xf32> to vector<16x8xf32>
    %31 = arith.addf %28, %30 : vector<16x8xf32>
    %32 = vector.extract_strided_slice %31 {offsets = [0, 0], sizes = [16, 4], strides = [1, 1]} : vector<16x8xf32> to vector<16x4xf32>
    %33 = arith.negf %32 : vector<16x4xf32>
    %34 = math.exp %33 : vector<16x4xf32>
    %cst_14 = arith.constant 1.000000e+00 : f32
    %35 = vector.broadcast %cst_14 : f32 to vector<16x4xf32>
    %36 = arith.addf %35, %34 : vector<16x4xf32>
    %37 = arith.divf %35, %36 : vector<16x4xf32>
    %38 = vector.extract_strided_slice %31 {offsets = [0, 4], sizes = [16, 4], strides = [1, 1]} : vector<16x8xf32> to vector<16x4xf32>
    %39 = arith.mulf %37, %38 : vector<16x4xf32>
    %40 = arith.addf %16, %39 : vector<16x4xf32>
    %c192 = arith.constant 192 : index
    %c0_15 = arith.constant 0 : index
    %41 = vector.load %arg0[%c192, %c0_15] : memref<2144x128xf32, #tpu.memory_space<vmem>>, vector<2x4xf32>
    %cst_16 = arith.constant dense<0.000000e+00> : vector<16xf32>
    %42 = vector.multi_reduction <add>, %40, %cst_16 [1] : vector<16x4xf32> to vector<16xf32>
    %43 = vector.shape_cast %42 : vector<16xf32> to vector<16x1xf32>
    %cst_17 = arith.constant 4.000000e+00 : f32
    %44 = vector.broadcast %cst_17 : f32 to vector<16x1xf32>
    %45 = arith.divf %43, %44 : vector<16x1xf32>
    %46 = vector.broadcast %45 : vector<16x1xf32> to vector<16x4xf32>
    %47 = arith.subf %40, %46 : vector<16x4xf32>
    %48 = arith.mulf %47, %47 : vector<16x4xf32>
    %cst_18 = arith.constant dense<0.000000e+00> : vector<16xf32>
    %49 = vector.multi_reduction <add>, %48, %cst_18 [1] : vector<16x4xf32> to vector<16xf32>
    %50 = vector.shape_cast %49 : vector<16xf32> to vector<16x1xf32>
    %cst_19 = arith.constant 4.000000e+00 : f32
    %51 = vector.broadcast %cst_19 : f32 to vector<16x1xf32>
    %52 = arith.divf %50, %51 : vector<16x1xf32>
    %53 = vector.broadcast %45 : vector<16x1xf32> to vector<16x4xf32>
    %54 = arith.subf %40, %53 : vector<16x4xf32>
    %cst_20 = arith.constant 9.99999974E-6 : f32
    %55 = vector.broadcast %cst_20 : f32 to vector<16x1xf32>
    %56 = arith.addf %52, %55 : vector<16x1xf32>
    %57 = math.rsqrt %56 : vector<16x1xf32>
    %58 = vector.broadcast %57 : vector<16x1xf32> to vector<16x4xf32>
    %59 = arith.mulf %54, %58 : vector<16x4xf32>
    %60 = vector.extract_strided_slice %41 {offsets = [0, 0], sizes = [1, 4], strides = [1, 1]} : vector<2x4xf32> to vector<1x4xf32>
    %61 = vector.broadcast %60 : vector<1x4xf32> to vector<16x4xf32>
    %62 = arith.mulf %59, %61 : vector<16x4xf32>
    %63 = vector.extract_strided_slice %41 {offsets = [1, 0], sizes = [1, 4], strides = [1, 1]} : vector<2x4xf32> to vector<1x4xf32>
    %64 = vector.broadcast %63 : vector<1x4xf32> to vector<16x4xf32>
    %65 = arith.addf %62, %64 : vector<16x4xf32>
    %cst_21 = arith.constant dense<0xFF800000> : vector<16xf32>
    %66 = vector.multi_reduction <maximumf>, %65, %cst_21 [1] : vector<16x4xf32> to vector<16xf32>
    %67 = vector.shape_cast %66 : vector<16xf32> to vector<16x1xf32>
    %68 = vector.broadcast %67 : vector<16x1xf32> to vector<16x4xf32>
    %69 = arith.subf %65, %68 : vector<16x4xf32>
    %70 = math.exp %69 : vector<16x4xf32>
    %cst_22 = arith.constant dense<0.000000e+00> : vector<16xf32>
    %71 = vector.multi_reduction <add>, %70, %cst_22 [1] : vector<16x4xf32> to vector<16xf32>
    %72 = vector.shape_cast %71 : vector<16xf32> to vector<16x1xf32>
    %73 = tpu.reciprocal %72 {approx = true} : vector<16x1xf32> -> vector<16x1xf32>
    %74 = vector.broadcast %73 : vector<16x1xf32> to vector<16x4xf32>
    %75 = arith.mulf %70, %74 : vector<16x4xf32>
    %c200 = arith.constant 200 : index
    %c0_23 = arith.constant 0 : index
    %76 = vector.load %arg0[%c200, %c0_23] : memref<2144x128xf32, #tpu.memory_space<vmem>>, vector<129x128xf32>
    %77 = vector.extract_strided_slice %76 {offsets = [0, 0], sizes = [128, 128], strides = [1, 1]} : vector<129x128xf32> to vector<128x128xf32>
    %cst_24 = arith.constant dense<0.000000e+00> : vector<16x128xf32>
    %78 = tpu.matmul %9, %77, %cst_24 {dimension_numbers = #tpu.dot_dimension_numbers<[1], [0], [0], [1], [0, 0, 1, 1], [], []>} : vector<16x128xf32>, vector<128x128xf32>, vector<16x128xf32> -> vector<16x128xf32>
    %79 = vector.extract_strided_slice %76 {offsets = [128, 0], sizes = [1, 128], strides = [1, 1]} : vector<129x128xf32> to vector<1x128xf32>
    %80 = vector.broadcast %79 : vector<1x128xf32> to vector<16x128xf32>
    %81 = arith.addf %78, %80 : vector<16x128xf32>
    %cst_25 = arith.constant 0.000000e+00 : f32
    %82 = vector.broadcast %cst_25 : f32 to vector<16x128xf32>
    %83 = arith.cmpf ogt, %81, %82 : vector<16x128xf32>
    %cst_26 = arith.constant 0.000000e+00 : f32
    %84 = vector.broadcast %cst_26 : f32 to vector<16x128xf32>
    %85 = arith.minimumf %81, %84 : vector<16x128xf32>
    %86 = math.exp %85 : vector<16x128xf32>
    %cst_27 = arith.constant 1.000000e+00 : f32
    %87 = vector.broadcast %cst_27 : f32 to vector<16x128xf32>
    %88 = arith.subf %86, %87 : vector<16x128xf32>
    %89 = arith.select %83, %81, %88 : vector<16x128xi1>, vector<16x128xf32>
    %c336 = arith.constant 336 : index
    %c0_28 = arith.constant 0 : index
    %90 = vector.load %arg0[%c336, %c0_28] : memref<2144x128xf32, #tpu.memory_space<vmem>>, vector<129x128xf32>
    %91 = vector.extract_strided_slice %90 {offsets = [0, 0], sizes = [128, 128], strides = [1, 1]} : vector<129x128xf32> to vector<128x128xf32>
    %cst_29 = arith.constant dense<0.000000e+00> : vector<16x128xf32>
    %92 = tpu.matmul %89, %91, %cst_29 {dimension_numbers = #tpu.dot_dimension_numbers<[1], [0], [0], [1], [0, 0, 1, 1], [], []>} : vector<16x128xf32>, vector<128x128xf32>, vector<16x128xf32> -> vector<16x128xf32>
    %93 = vector.extract_strided_slice %90 {offsets = [128, 0], sizes = [1, 128], strides = [1, 1]} : vector<129x128xf32> to vector<1x128xf32>
    %94 = vector.broadcast %93 : vector<1x128xf32> to vector<16x128xf32>
    %95 = arith.addf %92, %94 : vector<16x128xf32>
    %96 = arith.negf %95 : vector<16x128xf32>
    %97 = math.exp %96 : vector<16x128xf32>
    %cst_30 = arith.constant 1.000000e+00 : f32
    %98 = vector.broadcast %cst_30 : f32 to vector<16x128xf32>
    %99 = arith.addf %98, %97 : vector<16x128xf32>
    %100 = arith.divf %98, %99 : vector<16x128xf32>
    %c472 = arith.constant 472 : index
    %c0_31 = arith.constant 0 : index
    %101 = vector.load %arg0[%c472, %c0_31] : memref<2144x128xf32, #tpu.memory_space<vmem>>, vector<129x128xf32>
    %102 = vector.extract_strided_slice %101 {offsets = [0, 0], sizes = [128, 128], strides = [1, 1]} : vector<129x128xf32> to vector<128x128xf32>
    %cst_32 = arith.constant dense<0.000000e+00> : vector<16x128xf32>
    %103 = tpu.matmul %89, %102, %cst_32 {dimension_numbers = #tpu.dot_dimension_numbers<[1], [0], [0], [1], [0, 0, 1, 1], [], []>} : vector<16x128xf32>, vector<128x128xf32>, vector<16x128xf32> -> vector<16x128xf32>
    %104 = vector.extract_strided_slice %101 {offsets = [128, 0], sizes = [1, 128], strides = [1, 1]} : vector<129x128xf32> to vector<1x128xf32>
    %105 = vector.broadcast %104 : vector<1x128xf32> to vector<16x128xf32>
    %106 = arith.addf %103, %105 : vector<16x128xf32>
    %107 = arith.mulf %100, %106 : vector<16x128xf32>
    %108 = arith.addf %9, %107 : vector<16x128xf32>
    %c616 = arith.constant 616 : index
    %c0_33 = arith.constant 0 : index
    %109 = vector.load %arg0[%c616, %c0_33] : memref<2144x128xf32, #tpu.memory_space<vmem>>, vector<128x128xf32>
    %cst_34 = arith.constant dense<0.000000e+00> : vector<16x128xf32>
    %110 = tpu.matmul %108, %109, %cst_34 {dimension_numbers = #tpu.dot_dimension_numbers<[1], [0], [0], [1], [0, 0, 1, 1], [], []>} : vector<16x128xf32>, vector<128x128xf32>, vector<16x128xf32> -> vector<16x128xf32>
    %111 = arith.subf %108, %110 : vector<16x128xf32>
    %112 = arith.mulf %111, %111 : vector<16x128xf32>
    %cst_35 = arith.constant dense<0.000000e+00> : vector<16x128xf32>
    %113 = tpu.matmul %112, %109, %cst_35 {dimension_numbers = #tpu.dot_dimension_numbers<[1], [0], [0], [1], [0, 0, 1, 1], [], []>} : vector<16x128xf32>, vector<128x128xf32>, vector<16x128xf32> -> vector<16x128xf32>
    %c608 = arith.constant 608 : index
    %c0_36 = arith.constant 0 : index
    %114 = vector.load %arg0[%c608, %c0_36] : memref<2144x128xf32, #tpu.memory_space<vmem>>, vector<2x128xf32>
    %cst_37 = arith.constant 9.99999974E-6 : f32
    %115 = vector.broadcast %cst_37 : f32 to vector<16x128xf32>
    %116 = arith.addf %113, %115 : vector<16x128xf32>
    %117 = math.rsqrt %116 : vector<16x128xf32>
    %118 = arith.mulf %111, %117 : vector<16x128xf32>
    %119 = vector.extract_strided_slice %114 {offsets = [0, 0], sizes = [1, 128], strides = [1, 1]} : vector<2x128xf32> to vector<1x128xf32>
    %120 = vector.broadcast %119 : vector<1x128xf32> to vector<16x128xf32>
    %121 = arith.mulf %118, %120 : vector<16x128xf32>
    %122 = vector.extract_strided_slice %114 {offsets = [1, 0], sizes = [1, 128], strides = [1, 1]} : vector<2x128xf32> to vector<1x128xf32>
    %123 = vector.broadcast %122 : vector<1x128xf32> to vector<16x128xf32>
    %124 = arith.addf %121, %123 : vector<16x128xf32>
    %c744 = arith.constant 744 : index
    %c0_38 = arith.constant 0 : index
    %125 = vector.load %arg0[%c744, %c0_38] : memref<2144x128xf32, #tpu.memory_space<vmem>>, vector<4x128xf32>
    %cst_39 = arith.constant dense<0.000000e+00> : vector<16x128xf32>
    %126 = tpu.matmul %75, %125, %cst_39 {dimension_numbers = #tpu.dot_dimension_numbers<[1], [0], [0], [1], [0, 0, 1, 1], [], []>} : vector<16x4xf32>, vector<4x128xf32>, vector<16x128xf32> -> vector<16x128xf32>
    %127 = arith.mulf %124, %126 : vector<16x128xf32>
    %c752 = arith.constant 752 : index
    %c0_40 = arith.constant 0 : index
    %128 = vector.load %arg0[%c752, %c0_40] : memref<2144x128xf32, #tpu.memory_space<vmem>>, vector<128x32xf32>
    %cst_41 = arith.constant dense<0.000000e+00> : vector<16x32xf32>
    %129 = tpu.matmul %127, %128, %cst_41 {dimension_numbers = #tpu.dot_dimension_numbers<[1], [0], [0], [1], [0, 0, 1, 1], [], []>} : vector<16x128xf32>, vector<128x32xf32>, vector<16x32xf32> -> vector<16x32xf32>
    %c8 = arith.constant 8 : index
    %c0_42 = arith.constant 0 : index
    %130 = vector.load %arg0[%c8, %c0_42] : memref<2144x128xf32, #tpu.memory_space<vmem>>, vector<4x96xf32>
    %131 = vector.extract_strided_slice %130 {offsets = [0, 0], sizes = [3, 96], strides = [1, 1]} : vector<4x96xf32> to vector<3x96xf32>
    %cst_43 = arith.constant dense<0.000000e+00> : vector<8x96xf32>
    %132 = tpu.matmul %3, %131, %cst_43 {dimension_numbers = #tpu.dot_dimension_numbers<[1], [0], [0], [1], [0, 0, 1, 1], [], []>} : vector<8x3xf32>, vector<3x96xf32>, vector<8x96xf32> -> vector<8x96xf32>
    %133 = vector.extract_strided_slice %130 {offsets = [3, 0], sizes = [1, 96], strides = [1, 1]} : vector<4x96xf32> to vector<1x96xf32>
    %134 = vector.broadcast %133 : vector<1x96xf32> to vector<8x96xf32>
    %135 = arith.addf %132, %134 : vector<8x96xf32>
    %c880 = arith.constant 880 : index
    %c0_44 = arith.constant 0 : index
    %136 = vector.load %arg0[%c880, %c0_44] : memref<2144x128xf32, #tpu.memory_space<vmem>>, vector<97x35xf32>
    %137 = vector.extract_strided_slice %136 {offsets = [0, 0], sizes = [96, 35], strides = [1, 1]} : vector<97x35xf32> to vector<96x35xf32>
    %cst_45 = arith.constant dense<0.000000e+00> : vector<8x35xf32>
    %138 = tpu.matmul %135, %137, %cst_45 {dimension_numbers = #tpu.dot_dimension_numbers<[1], [0], [0], [1], [0, 0, 1, 1], [], []>} : vector<8x96xf32>, vector<96x35xf32>, vector<8x35xf32> -> vector<8x35xf32>
    %139 = vector.extract_strided_slice %136 {offsets = [96, 0], sizes = [1, 35], strides = [1, 1]} : vector<97x35xf32> to vector<1x35xf32>
    %140 = vector.broadcast %139 : vector<1x35xf32> to vector<8x35xf32>
    %141 = arith.addf %138, %140 : vector<8x35xf32>
    %142 = vector.extract_strided_slice %141 {offsets = [0, 32], sizes = [8, 3], strides = [1, 1]} : vector<8x35xf32> to vector<8x3xf32>
    %143 = vector.extract_strided_slice %141 {offsets = [0, 0], sizes = [8, 32], strides = [1, 1]} : vector<8x35xf32> to vector<8x32xf32>
    %cst_46 = arith.constant 0.000000e+00 : f32
    %144 = vector.broadcast %cst_46 : f32 to vector<8x32xf32>
    %145 = arith.cmpf ogt, %143, %144 : vector<8x32xf32>
    %cst_47 = arith.constant 0.000000e+00 : f32
    %146 = vector.broadcast %cst_47 : f32 to vector<8x32xf32>
    %147 = arith.minimumf %143, %146 : vector<8x32xf32>
    %148 = math.exp %147 : vector<8x32xf32>
    %cst_48 = arith.constant 1.000000e+00 : f32
    %149 = vector.broadcast %cst_48 : f32 to vector<8x32xf32>
    %150 = arith.subf %148, %149 : vector<8x32xf32>
    %151 = arith.select %145, %143, %150 : vector<8x32xi1>, vector<8x32xf32>
    %c984 = arith.constant 984 : index
    %c0_49 = arith.constant 0 : index
    %152 = vector.load %arg0[%c984, %c0_49] : memref<2144x128xf32, #tpu.memory_space<vmem>>, vector<33x6xf32>
    %153 = vector.extract_strided_slice %152 {offsets = [0, 0], sizes = [32, 6], strides = [1, 1]} : vector<33x6xf32> to vector<32x6xf32>
    %cst_50 = arith.constant dense<0.000000e+00> : vector<8x6xf32>
    %154 = tpu.matmul %151, %153, %cst_50 {dimension_numbers = #tpu.dot_dimension_numbers<[1], [0], [0], [1], [0, 0, 1, 1], [], []>} : vector<8x32xf32>, vector<32x6xf32>, vector<8x6xf32> -> vector<8x6xf32>
    %155 = vector.extract_strided_slice %152 {offsets = [32, 0], sizes = [1, 6], strides = [1, 1]} : vector<33x6xf32> to vector<1x6xf32>
    %156 = vector.broadcast %155 : vector<1x6xf32> to vector<8x6xf32>
    %157 = arith.addf %154, %156 : vector<8x6xf32>
    %158 = vector.extract_strided_slice %157 {offsets = [0, 0], sizes = [8, 3], strides = [1, 1]} : vector<8x6xf32> to vector<8x3xf32>
    %159 = arith.negf %158 : vector<8x3xf32>
    %160 = math.exp %159 : vector<8x3xf32>
    %cst_51 = arith.constant 1.000000e+00 : f32
    %161 = vector.broadcast %cst_51 : f32 to vector<8x3xf32>
    %162 = arith.addf %161, %160 : vector<8x3xf32>
    %163 = arith.divf %161, %162 : vector<8x3xf32>
    %164 = vector.extract_strided_slice %157 {offsets = [0, 3], sizes = [8, 3], strides = [1, 1]} : vector<8x6xf32> to vector<8x3xf32>
    %165 = arith.mulf %163, %164 : vector<8x3xf32>
    %166 = arith.addf %142, %165 : vector<8x3xf32>
    %c1024 = arith.constant 1024 : index
    %c0_52 = arith.constant 0 : index
    %167 = vector.load %arg0[%c1024, %c0_52] : memref<2144x128xf32, #tpu.memory_space<vmem>>, vector<2x3xf32>
    %cst_53 = arith.constant dense<0.000000e+00> : vector<8xf32>
    %168 = vector.multi_reduction <add>, %166, %cst_53 [1] : vector<8x3xf32> to vector<8xf32>
    %169 = vector.shape_cast %168 : vector<8xf32> to vector<8x1xf32>
    %cst_54 = arith.constant 3.000000e+00 : f32
    %170 = vector.broadcast %cst_54 : f32 to vector<8x1xf32>
    %171 = arith.divf %169, %170 : vector<8x1xf32>
    %172 = vector.broadcast %171 : vector<8x1xf32> to vector<8x3xf32>
    %173 = arith.subf %166, %172 : vector<8x3xf32>
    %174 = arith.mulf %173, %173 : vector<8x3xf32>
    %cst_55 = arith.constant dense<0.000000e+00> : vector<8xf32>
    %175 = vector.multi_reduction <add>, %174, %cst_55 [1] : vector<8x3xf32> to vector<8xf32>
    %176 = vector.shape_cast %175 : vector<8xf32> to vector<8x1xf32>
    %cst_56 = arith.constant 3.000000e+00 : f32
    %177 = vector.broadcast %cst_56 : f32 to vector<8x1xf32>
    %178 = arith.divf %176, %177 : vector<8x1xf32>
    %179 = vector.broadcast %171 : vector<8x1xf32> to vector<8x3xf32>
    %180 = arith.subf %166, %179 : vector<8x3xf32>
    %cst_57 = arith.constant 9.99999974E-6 : f32
    %181 = vector.broadcast %cst_57 : f32 to vector<8x1xf32>
    %182 = arith.addf %178, %181 : vector<8x1xf32>
    %183 = math.rsqrt %182 : vector<8x1xf32>
    %184 = vector.broadcast %183 : vector<8x1xf32> to vector<8x3xf32>
    %185 = arith.mulf %180, %184 : vector<8x3xf32>
    %186 = vector.extract_strided_slice %167 {offsets = [0, 0], sizes = [1, 3], strides = [1, 1]} : vector<2x3xf32> to vector<1x3xf32>
    %187 = vector.broadcast %186 : vector<1x3xf32> to vector<8x3xf32>
    %188 = arith.mulf %185, %187 : vector<8x3xf32>
    %189 = vector.extract_strided_slice %167 {offsets = [1, 0], sizes = [1, 3], strides = [1, 1]} : vector<2x3xf32> to vector<1x3xf32>
    %190 = vector.broadcast %189 : vector<1x3xf32> to vector<8x3xf32>
    %191 = arith.addf %188, %190 : vector<8x3xf32>
    %cst_58 = arith.constant dense<0xFF800000> : vector<8xf32>
    %192 = vector.multi_reduction <maximumf>, %191, %cst_58 [1] : vector<8x3xf32> to vector<8xf32>
    %193 = vector.shape_cast %192 : vector<8xf32> to vector<8x1xf32>
    %194 = vector.broadcast %193 : vector<8x1xf32> to vector<8x3xf32>
    %195 = arith.subf %191, %194 : vector<8x3xf32>
    %196 = math.exp %195 : vector<8x3xf32>
    %cst_59 = arith.constant dense<0.000000e+00> : vector<8xf32>
    %197 = vector.multi_reduction <add>, %196, %cst_59 [1] : vector<8x3xf32> to vector<8xf32>
    %198 = vector.shape_cast %197 : vector<8xf32> to vector<8x1xf32>
    %199 = tpu.reciprocal %198 {approx = true} : vector<8x1xf32> -> vector<8x1xf32>
    %200 = vector.broadcast %199 : vector<8x1xf32> to vector<8x3xf32>
    %201 = arith.mulf %196, %200 : vector<8x3xf32>
    %c1032 = arith.constant 1032 : index
    %c0_60 = arith.constant 0 : index
    %202 = vector.load %arg0[%c1032, %c0_60] : memref<2144x128xf32, #tpu.memory_space<vmem>>, vector<97x96xf32>
    %203 = vector.extract_strided_slice %202 {offsets = [0, 0], sizes = [96, 96], strides = [1, 1]} : vector<97x96xf32> to vector<96x96xf32>
    %cst_61 = arith.constant dense<0.000000e+00> : vector<8x96xf32>
    %204 = tpu.matmul %135, %203, %cst_61 {dimension_numbers = #tpu.dot_dimension_numbers<[1], [0], [0], [1], [0, 0, 1, 1], [], []>} : vector<8x96xf32>, vector<96x96xf32>, vector<8x96xf32> -> vector<8x96xf32>
    %205 = vector.extract_strided_slice %202 {offsets = [96, 0], sizes = [1, 96], strides = [1, 1]} : vector<97x96xf32> to vector<1x96xf32>
    %206 = vector.broadcast %205 : vector<1x96xf32> to vector<8x96xf32>
    %207 = arith.addf %204, %206 : vector<8x96xf32>
    %cst_62 = arith.constant 0.000000e+00 : f32
    %208 = vector.broadcast %cst_62 : f32 to vector<8x96xf32>
    %209 = arith.cmpf ogt, %207, %208 : vector<8x96xf32>
    %cst_63 = arith.constant 0.000000e+00 : f32
    %210 = vector.broadcast %cst_63 : f32 to vector<8x96xf32>
    %211 = arith.minimumf %207, %210 : vector<8x96xf32>
    %212 = math.exp %211 : vector<8x96xf32>
    %cst_64 = arith.constant 1.000000e+00 : f32
    %213 = vector.broadcast %cst_64 : f32 to vector<8x96xf32>
    %214 = arith.subf %212, %213 : vector<8x96xf32>
    %215 = arith.select %209, %207, %214 : vector<8x96xi1>, vector<8x96xf32>
    %c1136 = arith.constant 1136 : index
    %c0_65 = arith.constant 0 : index
    %216 = vector.load %arg0[%c1136, %c0_65] : memref<2144x128xf32, #tpu.memory_space<vmem>>, vector<97x96xf32>
    %217 = vector.extract_strided_slice %216 {offsets = [0, 0], sizes = [96, 96], strides = [1, 1]} : vector<97x96xf32> to vector<96x96xf32>
    %cst_66 = arith.constant dense<0.000000e+00> : vector<8x96xf32>
    %218 = tpu.matmul %215, %217, %cst_66 {dimension_numbers = #tpu.dot_dimension_numbers<[1], [0], [0], [1], [0, 0, 1, 1], [], []>} : vector<8x96xf32>, vector<96x96xf32>, vector<8x96xf32> -> vector<8x96xf32>
    %219 = vector.extract_strided_slice %216 {offsets = [96, 0], sizes = [1, 96], strides = [1, 1]} : vector<97x96xf32> to vector<1x96xf32>
    %220 = vector.broadcast %219 : vector<1x96xf32> to vector<8x96xf32>
    %221 = arith.addf %218, %220 : vector<8x96xf32>
    %222 = arith.negf %221 : vector<8x96xf32>
    %223 = math.exp %222 : vector<8x96xf32>
    %cst_67 = arith.constant 1.000000e+00 : f32
    %224 = vector.broadcast %cst_67 : f32 to vector<8x96xf32>
    %225 = arith.addf %224, %223 : vector<8x96xf32>
    %226 = arith.divf %224, %225 : vector<8x96xf32>
    %c1240 = arith.constant 1240 : index
    %c0_68 = arith.constant 0 : index
    %227 = vector.load %arg0[%c1240, %c0_68] : memref<2144x128xf32, #tpu.memory_space<vmem>>, vector<97x96xf32>
    %228 = vector.extract_strided_slice %227 {offsets = [0, 0], sizes = [96, 96], strides = [1, 1]} : vector<97x96xf32> to vector<96x96xf32>
    %cst_69 = arith.constant dense<0.000000e+00> : vector<8x96xf32>
    %229 = tpu.matmul %215, %228, %cst_69 {dimension_numbers = #tpu.dot_dimension_numbers<[1], [0], [0], [1], [0, 0, 1, 1], [], []>} : vector<8x96xf32>, vector<96x96xf32>, vector<8x96xf32> -> vector<8x96xf32>
    %230 = vector.extract_strided_slice %227 {offsets = [96, 0], sizes = [1, 96], strides = [1, 1]} : vector<97x96xf32> to vector<1x96xf32>
    %231 = vector.broadcast %230 : vector<1x96xf32> to vector<8x96xf32>
    %232 = arith.addf %229, %231 : vector<8x96xf32>
    %233 = arith.mulf %226, %232 : vector<8x96xf32>
    %234 = arith.addf %135, %233 : vector<8x96xf32>
    %c1352 = arith.constant 1352 : index
    %c0_70 = arith.constant 0 : index
    %235 = vector.load %arg0[%c1352, %c0_70] : memref<2144x128xf32, #tpu.memory_space<vmem>>, vector<96x96xf32>
    %cst_71 = arith.constant dense<0.000000e+00> : vector<8x96xf32>
    %236 = tpu.matmul %234, %235, %cst_71 {dimension_numbers = #tpu.dot_dimension_numbers<[1], [0], [0], [1], [0, 0, 1, 1], [], []>} : vector<8x96xf32>, vector<96x96xf32>, vector<8x96xf32> -> vector<8x96xf32>
    %237 = arith.subf %234, %236 : vector<8x96xf32>
    %238 = arith.mulf %237, %237 : vector<8x96xf32>
    %cst_72 = arith.constant dense<0.000000e+00> : vector<8x96xf32>
    %239 = tpu.matmul %238, %235, %cst_72 {dimension_numbers = #tpu.dot_dimension_numbers<[1], [0], [0], [1], [0, 0, 1, 1], [], []>} : vector<8x96xf32>, vector<96x96xf32>, vector<8x96xf32> -> vector<8x96xf32>
    %c1344 = arith.constant 1344 : index
    %c0_73 = arith.constant 0 : index
    %240 = vector.load %arg0[%c1344, %c0_73] : memref<2144x128xf32, #tpu.memory_space<vmem>>, vector<2x96xf32>
    %cst_74 = arith.constant 9.99999974E-6 : f32
    %241 = vector.broadcast %cst_74 : f32 to vector<8x96xf32>
    %242 = arith.addf %239, %241 : vector<8x96xf32>
    %243 = math.rsqrt %242 : vector<8x96xf32>
    %244 = arith.mulf %237, %243 : vector<8x96xf32>
    %245 = vector.extract_strided_slice %240 {offsets = [0, 0], sizes = [1, 96], strides = [1, 1]} : vector<2x96xf32> to vector<1x96xf32>
    %246 = vector.broadcast %245 : vector<1x96xf32> to vector<8x96xf32>
    %247 = arith.mulf %244, %246 : vector<8x96xf32>
    %248 = vector.extract_strided_slice %240 {offsets = [1, 0], sizes = [1, 96], strides = [1, 1]} : vector<2x96xf32> to vector<1x96xf32>
    %249 = vector.broadcast %248 : vector<1x96xf32> to vector<8x96xf32>
    %250 = arith.addf %247, %249 : vector<8x96xf32>
    %c1448 = arith.constant 1448 : index
    %c0_75 = arith.constant 0 : index
    %251 = vector.load %arg0[%c1448, %c0_75] : memref<2144x128xf32, #tpu.memory_space<vmem>>, vector<3x96xf32>
    %cst_76 = arith.constant dense<0.000000e+00> : vector<8x96xf32>
    %252 = tpu.matmul %201, %251, %cst_76 {dimension_numbers = #tpu.dot_dimension_numbers<[1], [0], [0], [1], [0, 0, 1, 1], [], []>} : vector<8x3xf32>, vector<3x96xf32>, vector<8x96xf32> -> vector<8x96xf32>
    %253 = arith.mulf %250, %252 : vector<8x96xf32>
    %c1456 = arith.constant 1456 : index
    %c0_77 = arith.constant 0 : index
    %254 = vector.load %arg0[%c1456, %c0_77] : memref<2144x128xf32, #tpu.memory_space<vmem>>, vector<96x32xf32>
    %cst_78 = arith.constant dense<0.000000e+00> : vector<8x32xf32>
    %255 = tpu.matmul %253, %254, %cst_78 {dimension_numbers = #tpu.dot_dimension_numbers<[1], [0], [0], [1], [0, 0, 1, 1], [], []>} : vector<8x96xf32>, vector<96x32xf32>, vector<8x32xf32> -> vector<8x32xf32>
    %cst_79 = arith.constant 0.000000e+00 : f32
    %256 = vector.broadcast %cst_79 : f32 to vector<2x32xf32>
    %cst_80 = arith.constant 0.000000e+00 : f32
    %257 = vector.broadcast %cst_80 : f32 to vector<2x32xf32>
    %c1552 = arith.constant 1552 : index
    %c0_81 = arith.constant 0 : index
    %258 = vector.load %arg0[%c1552, %c0_81] : memref<2144x128xf32, #tpu.memory_space<vmem>>, vector<33x128xf32>
    %259 = vector.extract_strided_slice %258 {offsets = [0, 0], sizes = [32, 128], strides = [1, 1]} : vector<33x128xf32> to vector<32x128xf32>
    %cst_82 = arith.constant dense<0.000000e+00> : vector<16x128xf32>
    %260 = tpu.matmul %129, %259, %cst_82 {dimension_numbers = #tpu.dot_dimension_numbers<[1], [0], [0], [1], [0, 0, 1, 1], [], []>} : vector<16x32xf32>, vector<32x128xf32>, vector<16x128xf32> -> vector<16x128xf32>
    %261 = vector.extract_strided_slice %258 {offsets = [32, 0], sizes = [1, 128], strides = [1, 1]} : vector<33x128xf32> to vector<1x128xf32>
    %262 = vector.broadcast %261 : vector<1x128xf32> to vector<16x128xf32>
    %263 = arith.addf %260, %262 : vector<16x128xf32>
    %c1592 = arith.constant 1592 : index
    %c0_83 = arith.constant 0 : index
    %264 = vector.load %arg0[%c1592, %c0_83] : memref<2144x128xf32, #tpu.memory_space<vmem>>, vector<32x128xf32>
    %265 = vector.extract_strided_slice %263 {offsets = [0, 0], sizes = [2, 128], strides = [1, 1]} : vector<16x128xf32> to vector<2x128xf32>
    %cst_84 = arith.constant dense<0.000000e+00> : vector<2x128xf32>
    %266 = tpu.matmul %256, %264, %cst_84 {dimension_numbers = #tpu.dot_dimension_numbers<[1], [0], [0], [1], [0, 0, 1, 1], [], []>} : vector<2x32xf32>, vector<32x128xf32>, vector<2x128xf32> -> vector<2x128xf32>
    %267 = arith.addf %265, %266 : vector<2x128xf32>
    %268 = arith.negf %267 : vector<2x128xf32>
    %269 = math.exp %268 : vector<2x128xf32>
    %cst_85 = arith.constant 1.000000e+00 : f32
    %270 = vector.broadcast %cst_85 : f32 to vector<2x128xf32>
    %271 = arith.addf %270, %269 : vector<2x128xf32>
    %272 = arith.divf %270, %271 : vector<2x128xf32>
    %273 = vector.extract_strided_slice %272 {offsets = [0, 0], sizes = [2, 32], strides = [1, 1]} : vector<2x128xf32> to vector<2x32xf32>
    %274 = vector.extract_strided_slice %272 {offsets = [0, 32], sizes = [2, 32], strides = [1, 1]} : vector<2x128xf32> to vector<2x32xf32>
    %275 = vector.extract_strided_slice %272 {offsets = [0, 96], sizes = [2, 32], strides = [1, 1]} : vector<2x128xf32> to vector<2x32xf32>
    %276 = vector.extract_strided_slice %267 {offsets = [0, 64], sizes = [2, 32], strides = [1, 1]} : vector<2x128xf32> to vector<2x32xf32>
    %277 = math.tanh %276 : vector<2x32xf32>
    %278 = arith.mulf %274, %257 : vector<2x32xf32>
    %279 = arith.mulf %273, %277 : vector<2x32xf32>
    %280 = arith.addf %278, %279 : vector<2x32xf32>
    %281 = math.tanh %280 : vector<2x32xf32>
    %282 = arith.mulf %275, %281 : vector<2x32xf32>
    %283 = vector.extract_strided_slice %263 {offsets = [2, 0], sizes = [2, 128], strides = [1, 1]} : vector<16x128xf32> to vector<2x128xf32>
    %cst_86 = arith.constant dense<0.000000e+00> : vector<2x128xf32>
    %284 = tpu.matmul %282, %264, %cst_86 {dimension_numbers = #tpu.dot_dimension_numbers<[1], [0], [0], [1], [0, 0, 1, 1], [], []>} : vector<2x32xf32>, vector<32x128xf32>, vector<2x128xf32> -> vector<2x128xf32>
    %285 = arith.addf %283, %284 : vector<2x128xf32>
    %286 = arith.negf %285 : vector<2x128xf32>
    %287 = math.exp %286 : vector<2x128xf32>
    %cst_87 = arith.constant 1.000000e+00 : f32
    %288 = vector.broadcast %cst_87 : f32 to vector<2x128xf32>
    %289 = arith.addf %288, %287 : vector<2x128xf32>
    %290 = arith.divf %288, %289 : vector<2x128xf32>
    %291 = vector.extract_strided_slice %290 {offsets = [0, 0], sizes = [2, 32], strides = [1, 1]} : vector<2x128xf32> to vector<2x32xf32>
    %292 = vector.extract_strided_slice %290 {offsets = [0, 32], sizes = [2, 32], strides = [1, 1]} : vector<2x128xf32> to vector<2x32xf32>
    %293 = vector.extract_strided_slice %290 {offsets = [0, 96], sizes = [2, 32], strides = [1, 1]} : vector<2x128xf32> to vector<2x32xf32>
    %294 = vector.extract_strided_slice %285 {offsets = [0, 64], sizes = [2, 32], strides = [1, 1]} : vector<2x128xf32> to vector<2x32xf32>
    %295 = math.tanh %294 : vector<2x32xf32>
    %296 = arith.mulf %292, %280 : vector<2x32xf32>
    %297 = arith.mulf %291, %295 : vector<2x32xf32>
    %298 = arith.addf %296, %297 : vector<2x32xf32>
    %299 = math.tanh %298 : vector<2x32xf32>
    %300 = arith.mulf %293, %299 : vector<2x32xf32>
    %301 = vector.extract_strided_slice %263 {offsets = [4, 0], sizes = [2, 128], strides = [1, 1]} : vector<16x128xf32> to vector<2x128xf32>
    %cst_88 = arith.constant dense<0.000000e+00> : vector<2x128xf32>
    %302 = tpu.matmul %300, %264, %cst_88 {dimension_numbers = #tpu.dot_dimension_numbers<[1], [0], [0], [1], [0, 0, 1, 1], [], []>} : vector<2x32xf32>, vector<32x128xf32>, vector<2x128xf32> -> vector<2x128xf32>
    %303 = arith.addf %301, %302 : vector<2x128xf32>
    %304 = arith.negf %303 : vector<2x128xf32>
    %305 = math.exp %304 : vector<2x128xf32>
    %cst_89 = arith.constant 1.000000e+00 : f32
    %306 = vector.broadcast %cst_89 : f32 to vector<2x128xf32>
    %307 = arith.addf %306, %305 : vector<2x128xf32>
    %308 = arith.divf %306, %307 : vector<2x128xf32>
    %309 = vector.extract_strided_slice %308 {offsets = [0, 0], sizes = [2, 32], strides = [1, 1]} : vector<2x128xf32> to vector<2x32xf32>
    %310 = vector.extract_strided_slice %308 {offsets = [0, 32], sizes = [2, 32], strides = [1, 1]} : vector<2x128xf32> to vector<2x32xf32>
    %311 = vector.extract_strided_slice %308 {offsets = [0, 96], sizes = [2, 32], strides = [1, 1]} : vector<2x128xf32> to vector<2x32xf32>
    %312 = vector.extract_strided_slice %303 {offsets = [0, 64], sizes = [2, 32], strides = [1, 1]} : vector<2x128xf32> to vector<2x32xf32>
    %313 = math.tanh %312 : vector<2x32xf32>
    %314 = arith.mulf %310, %298 : vector<2x32xf32>
    %315 = arith.mulf %309, %313 : vector<2x32xf32>
    %316 = arith.addf %314, %315 : vector<2x32xf32>
    %317 = math.tanh %316 : vector<2x32xf32>
    %318 = arith.mulf %311, %317 : vector<2x32xf32>
    %319 = vector.extract_strided_slice %263 {offsets = [6, 0], sizes = [2, 128], strides = [1, 1]} : vector<16x128xf32> to vector<2x128xf32>
    %cst_90 = arith.constant dense<0.000000e+00> : vector<2x128xf32>
    %320 = tpu.matmul %318, %264, %cst_90 {dimension_numbers = #tpu.dot_dimension_numbers<[1], [0], [0], [1], [0, 0, 1, 1], [], []>} : vector<2x32xf32>, vector<32x128xf32>, vector<2x128xf32> -> vector<2x128xf32>
    %321 = arith.addf %319, %320 : vector<2x128xf32>
    %322 = arith.negf %321 : vector<2x128xf32>
    %323 = math.exp %322 : vector<2x128xf32>
    %cst_91 = arith.constant 1.000000e+00 : f32
    %324 = vector.broadcast %cst_91 : f32 to vector<2x128xf32>
    %325 = arith.addf %324, %323 : vector<2x128xf32>
    %326 = arith.divf %324, %325 : vector<2x128xf32>
    %327 = vector.extract_strided_slice %326 {offsets = [0, 0], sizes = [2, 32], strides = [1, 1]} : vector<2x128xf32> to vector<2x32xf32>
    %328 = vector.extract_strided_slice %326 {offsets = [0, 32], sizes = [2, 32], strides = [1, 1]} : vector<2x128xf32> to vector<2x32xf32>
    %329 = vector.extract_strided_slice %326 {offsets = [0, 96], sizes = [2, 32], strides = [1, 1]} : vector<2x128xf32> to vector<2x32xf32>
    %330 = vector.extract_strided_slice %321 {offsets = [0, 64], sizes = [2, 32], strides = [1, 1]} : vector<2x128xf32> to vector<2x32xf32>
    %331 = math.tanh %330 : vector<2x32xf32>
    %332 = arith.mulf %328, %316 : vector<2x32xf32>
    %333 = arith.mulf %327, %331 : vector<2x32xf32>
    %334 = arith.addf %332, %333 : vector<2x32xf32>
    %335 = math.tanh %334 : vector<2x32xf32>
    %336 = arith.mulf %329, %335 : vector<2x32xf32>
    %337 = vector.extract_strided_slice %263 {offsets = [8, 0], sizes = [2, 128], strides = [1, 1]} : vector<16x128xf32> to vector<2x128xf32>
    %cst_92 = arith.constant dense<0.000000e+00> : vector<2x128xf32>
    %338 = tpu.matmul %336, %264, %cst_92 {dimension_numbers = #tpu.dot_dimension_numbers<[1], [0], [0], [1], [0, 0, 1, 1], [], []>} : vector<2x32xf32>, vector<32x128xf32>, vector<2x128xf32> -> vector<2x128xf32>
    %339 = arith.addf %337, %338 : vector<2x128xf32>
    %340 = arith.negf %339 : vector<2x128xf32>
    %341 = math.exp %340 : vector<2x128xf32>
    %cst_93 = arith.constant 1.000000e+00 : f32
    %342 = vector.broadcast %cst_93 : f32 to vector<2x128xf32>
    %343 = arith.addf %342, %341 : vector<2x128xf32>
    %344 = arith.divf %342, %343 : vector<2x128xf32>
    %345 = vector.extract_strided_slice %344 {offsets = [0, 0], sizes = [2, 32], strides = [1, 1]} : vector<2x128xf32> to vector<2x32xf32>
    %346 = vector.extract_strided_slice %344 {offsets = [0, 32], sizes = [2, 32], strides = [1, 1]} : vector<2x128xf32> to vector<2x32xf32>
    %347 = vector.extract_strided_slice %344 {offsets = [0, 96], sizes = [2, 32], strides = [1, 1]} : vector<2x128xf32> to vector<2x32xf32>
    %348 = vector.extract_strided_slice %339 {offsets = [0, 64], sizes = [2, 32], strides = [1, 1]} : vector<2x128xf32> to vector<2x32xf32>
    %349 = math.tanh %348 : vector<2x32xf32>
    %350 = arith.mulf %346, %334 : vector<2x32xf32>
    %351 = arith.mulf %345, %349 : vector<2x32xf32>
    %352 = arith.addf %350, %351 : vector<2x32xf32>
    %353 = math.tanh %352 : vector<2x32xf32>
    %354 = arith.mulf %347, %353 : vector<2x32xf32>
    %355 = vector.extract_strided_slice %263 {offsets = [10, 0], sizes = [2, 128], strides = [1, 1]} : vector<16x128xf32> to vector<2x128xf32>
    %cst_94 = arith.constant dense<0.000000e+00> : vector<2x128xf32>
    %356 = tpu.matmul %354, %264, %cst_94 {dimension_numbers = #tpu.dot_dimension_numbers<[1], [0], [0], [1], [0, 0, 1, 1], [], []>} : vector<2x32xf32>, vector<32x128xf32>, vector<2x128xf32> -> vector<2x128xf32>
    %357 = arith.addf %355, %356 : vector<2x128xf32>
    %358 = arith.negf %357 : vector<2x128xf32>
    %359 = math.exp %358 : vector<2x128xf32>
    %cst_95 = arith.constant 1.000000e+00 : f32
    %360 = vector.broadcast %cst_95 : f32 to vector<2x128xf32>
    %361 = arith.addf %360, %359 : vector<2x128xf32>
    %362 = arith.divf %360, %361 : vector<2x128xf32>
    %363 = vector.extract_strided_slice %362 {offsets = [0, 0], sizes = [2, 32], strides = [1, 1]} : vector<2x128xf32> to vector<2x32xf32>
    %364 = vector.extract_strided_slice %362 {offsets = [0, 32], sizes = [2, 32], strides = [1, 1]} : vector<2x128xf32> to vector<2x32xf32>
    %365 = vector.extract_strided_slice %362 {offsets = [0, 96], sizes = [2, 32], strides = [1, 1]} : vector<2x128xf32> to vector<2x32xf32>
    %366 = vector.extract_strided_slice %357 {offsets = [0, 64], sizes = [2, 32], strides = [1, 1]} : vector<2x128xf32> to vector<2x32xf32>
    %367 = math.tanh %366 : vector<2x32xf32>
    %368 = arith.mulf %364, %352 : vector<2x32xf32>
    %369 = arith.mulf %363, %367 : vector<2x32xf32>
    %370 = arith.addf %368, %369 : vector<2x32xf32>
    %371 = math.tanh %370 : vector<2x32xf32>
    %372 = arith.mulf %365, %371 : vector<2x32xf32>
    %373 = vector.extract_strided_slice %263 {offsets = [12, 0], sizes = [2, 128], strides = [1, 1]} : vector<16x128xf32> to vector<2x128xf32>
    %cst_96 = arith.constant dense<0.000000e+00> : vector<2x128xf32>
    %374 = tpu.matmul %372, %264, %cst_96 {dimension_numbers = #tpu.dot_dimension_numbers<[1], [0], [0], [1], [0, 0, 1, 1], [], []>} : vector<2x32xf32>, vector<32x128xf32>, vector<2x128xf32> -> vector<2x128xf32>
    %375 = arith.addf %373, %374 : vector<2x128xf32>
    %376 = arith.negf %375 : vector<2x128xf32>
    %377 = math.exp %376 : vector<2x128xf32>
    %cst_97 = arith.constant 1.000000e+00 : f32
    %378 = vector.broadcast %cst_97 : f32 to vector<2x128xf32>
    %379 = arith.addf %378, %377 : vector<2x128xf32>
    %380 = arith.divf %378, %379 : vector<2x128xf32>
    %381 = vector.extract_strided_slice %380 {offsets = [0, 0], sizes = [2, 32], strides = [1, 1]} : vector<2x128xf32> to vector<2x32xf32>
    %382 = vector.extract_strided_slice %380 {offsets = [0, 32], sizes = [2, 32], strides = [1, 1]} : vector<2x128xf32> to vector<2x32xf32>
    %383 = vector.extract_strided_slice %380 {offsets = [0, 96], sizes = [2, 32], strides = [1, 1]} : vector<2x128xf32> to vector<2x32xf32>
    %384 = vector.extract_strided_slice %375 {offsets = [0, 64], sizes = [2, 32], strides = [1, 1]} : vector<2x128xf32> to vector<2x32xf32>
    %385 = math.tanh %384 : vector<2x32xf32>
    %386 = arith.mulf %382, %370 : vector<2x32xf32>
    %387 = arith.mulf %381, %385 : vector<2x32xf32>
    %388 = arith.addf %386, %387 : vector<2x32xf32>
    %389 = math.tanh %388 : vector<2x32xf32>
    %390 = arith.mulf %383, %389 : vector<2x32xf32>
    %391 = vector.extract_strided_slice %263 {offsets = [14, 0], sizes = [2, 128], strides = [1, 1]} : vector<16x128xf32> to vector<2x128xf32>
    %cst_98 = arith.constant dense<0.000000e+00> : vector<2x128xf32>
    %392 = tpu.matmul %390, %264, %cst_98 {dimension_numbers = #tpu.dot_dimension_numbers<[1], [0], [0], [1], [0, 0, 1, 1], [], []>} : vector<2x32xf32>, vector<32x128xf32>, vector<2x128xf32> -> vector<2x128xf32>
    %393 = arith.addf %391, %392 : vector<2x128xf32>
    %394 = arith.negf %393 : vector<2x128xf32>
    %395 = math.exp %394 : vector<2x128xf32>
    %cst_99 = arith.constant 1.000000e+00 : f32
    %396 = vector.broadcast %cst_99 : f32 to vector<2x128xf32>
    %397 = arith.addf %396, %395 : vector<2x128xf32>
    %398 = arith.divf %396, %397 : vector<2x128xf32>
    %399 = vector.extract_strided_slice %398 {offsets = [0, 0], sizes = [2, 32], strides = [1, 1]} : vector<2x128xf32> to vector<2x32xf32>
    %400 = vector.extract_strided_slice %398 {offsets = [0, 32], sizes = [2, 32], strides = [1, 1]} : vector<2x128xf32> to vector<2x32xf32>
    %401 = vector.extract_strided_slice %398 {offsets = [0, 96], sizes = [2, 32], strides = [1, 1]} : vector<2x128xf32> to vector<2x32xf32>
    %402 = vector.extract_strided_slice %393 {offsets = [0, 64], sizes = [2, 32], strides = [1, 1]} : vector<2x128xf32> to vector<2x32xf32>
    %403 = math.tanh %402 : vector<2x32xf32>
    %404 = arith.mulf %400, %388 : vector<2x32xf32>
    %405 = arith.mulf %399, %403 : vector<2x32xf32>
    %406 = arith.addf %404, %405 : vector<2x32xf32>
    %407 = math.tanh %406 : vector<2x32xf32>
    %408 = arith.mulf %401, %407 : vector<2x32xf32>
    %c1624 = arith.constant 1624 : index
    %c0_100 = arith.constant 0 : index
    %409 = vector.load %arg0[%c1624, %c0_100] : memref<2144x128xf32, #tpu.memory_space<vmem>>, vector<33x128xf32>
    %410 = vector.extract_strided_slice %409 {offsets = [0, 0], sizes = [32, 128], strides = [1, 1]} : vector<33x128xf32> to vector<32x128xf32>
    %cst_101 = arith.constant dense<0.000000e+00> : vector<8x128xf32>
    %411 = tpu.matmul %255, %410, %cst_101 {dimension_numbers = #tpu.dot_dimension_numbers<[1], [0], [0], [1], [0, 0, 1, 1], [], []>} : vector<8x32xf32>, vector<32x128xf32>, vector<8x128xf32> -> vector<8x128xf32>
    %412 = vector.extract_strided_slice %409 {offsets = [32, 0], sizes = [1, 128], strides = [1, 1]} : vector<33x128xf32> to vector<1x128xf32>
    %413 = vector.broadcast %412 : vector<1x128xf32> to vector<8x128xf32>
    %414 = arith.addf %411, %413 : vector<8x128xf32>
    %c1664 = arith.constant 1664 : index
    %c0_102 = arith.constant 0 : index
    %415 = vector.load %arg0[%c1664, %c0_102] : memref<2144x128xf32, #tpu.memory_space<vmem>>, vector<32x128xf32>
    %416 = vector.extract_strided_slice %414 {offsets = [0, 0], sizes = [2, 128], strides = [1, 1]} : vector<8x128xf32> to vector<2x128xf32>
    %cst_103 = arith.constant dense<0.000000e+00> : vector<2x128xf32>
    %417 = tpu.matmul %408, %415, %cst_103 {dimension_numbers = #tpu.dot_dimension_numbers<[1], [0], [0], [1], [0, 0, 1, 1], [], []>} : vector<2x32xf32>, vector<32x128xf32>, vector<2x128xf32> -> vector<2x128xf32>
    %418 = arith.addf %416, %417 : vector<2x128xf32>
    %419 = arith.negf %418 : vector<2x128xf32>
    %420 = math.exp %419 : vector<2x128xf32>
    %cst_104 = arith.constant 1.000000e+00 : f32
    %421 = vector.broadcast %cst_104 : f32 to vector<2x128xf32>
    %422 = arith.addf %421, %420 : vector<2x128xf32>
    %423 = arith.divf %421, %422 : vector<2x128xf32>
    %424 = vector.extract_strided_slice %423 {offsets = [0, 0], sizes = [2, 32], strides = [1, 1]} : vector<2x128xf32> to vector<2x32xf32>
    %425 = vector.extract_strided_slice %423 {offsets = [0, 32], sizes = [2, 32], strides = [1, 1]} : vector<2x128xf32> to vector<2x32xf32>
    %426 = vector.extract_strided_slice %423 {offsets = [0, 96], sizes = [2, 32], strides = [1, 1]} : vector<2x128xf32> to vector<2x32xf32>
    %427 = vector.extract_strided_slice %418 {offsets = [0, 64], sizes = [2, 32], strides = [1, 1]} : vector<2x128xf32> to vector<2x32xf32>
    %428 = math.tanh %427 : vector<2x32xf32>
    %429 = arith.mulf %425, %406 : vector<2x32xf32>
    %430 = arith.mulf %424, %428 : vector<2x32xf32>
    %431 = arith.addf %429, %430 : vector<2x32xf32>
    %432 = math.tanh %431 : vector<2x32xf32>
    %433 = arith.mulf %426, %432 : vector<2x32xf32>
    %434 = vector.extract_strided_slice %414 {offsets = [2, 0], sizes = [2, 128], strides = [1, 1]} : vector<8x128xf32> to vector<2x128xf32>
    %cst_105 = arith.constant dense<0.000000e+00> : vector<2x128xf32>
    %435 = tpu.matmul %433, %415, %cst_105 {dimension_numbers = #tpu.dot_dimension_numbers<[1], [0], [0], [1], [0, 0, 1, 1], [], []>} : vector<2x32xf32>, vector<32x128xf32>, vector<2x128xf32> -> vector<2x128xf32>
    %436 = arith.addf %434, %435 : vector<2x128xf32>
    %437 = arith.negf %436 : vector<2x128xf32>
    %438 = math.exp %437 : vector<2x128xf32>
    %cst_106 = arith.constant 1.000000e+00 : f32
    %439 = vector.broadcast %cst_106 : f32 to vector<2x128xf32>
    %440 = arith.addf %439, %438 : vector<2x128xf32>
    %441 = arith.divf %439, %440 : vector<2x128xf32>
    %442 = vector.extract_strided_slice %441 {offsets = [0, 0], sizes = [2, 32], strides = [1, 1]} : vector<2x128xf32> to vector<2x32xf32>
    %443 = vector.extract_strided_slice %441 {offsets = [0, 32], sizes = [2, 32], strides = [1, 1]} : vector<2x128xf32> to vector<2x32xf32>
    %444 = vector.extract_strided_slice %441 {offsets = [0, 96], sizes = [2, 32], strides = [1, 1]} : vector<2x128xf32> to vector<2x32xf32>
    %445 = vector.extract_strided_slice %436 {offsets = [0, 64], sizes = [2, 32], strides = [1, 1]} : vector<2x128xf32> to vector<2x32xf32>
    %446 = math.tanh %445 : vector<2x32xf32>
    %447 = arith.mulf %443, %431 : vector<2x32xf32>
    %448 = arith.mulf %442, %446 : vector<2x32xf32>
    %449 = arith.addf %447, %448 : vector<2x32xf32>
    %450 = math.tanh %449 : vector<2x32xf32>
    %451 = arith.mulf %444, %450 : vector<2x32xf32>
    %452 = vector.extract_strided_slice %414 {offsets = [4, 0], sizes = [2, 128], strides = [1, 1]} : vector<8x128xf32> to vector<2x128xf32>
    %cst_107 = arith.constant dense<0.000000e+00> : vector<2x128xf32>
    %453 = tpu.matmul %451, %415, %cst_107 {dimension_numbers = #tpu.dot_dimension_numbers<[1], [0], [0], [1], [0, 0, 1, 1], [], []>} : vector<2x32xf32>, vector<32x128xf32>, vector<2x128xf32> -> vector<2x128xf32>
    %454 = arith.addf %452, %453 : vector<2x128xf32>
    %455 = arith.negf %454 : vector<2x128xf32>
    %456 = math.exp %455 : vector<2x128xf32>
    %cst_108 = arith.constant 1.000000e+00 : f32
    %457 = vector.broadcast %cst_108 : f32 to vector<2x128xf32>
    %458 = arith.addf %457, %456 : vector<2x128xf32>
    %459 = arith.divf %457, %458 : vector<2x128xf32>
    %460 = vector.extract_strided_slice %459 {offsets = [0, 0], sizes = [2, 32], strides = [1, 1]} : vector<2x128xf32> to vector<2x32xf32>
    %461 = vector.extract_strided_slice %459 {offsets = [0, 32], sizes = [2, 32], strides = [1, 1]} : vector<2x128xf32> to vector<2x32xf32>
    %462 = vector.extract_strided_slice %459 {offsets = [0, 96], sizes = [2, 32], strides = [1, 1]} : vector<2x128xf32> to vector<2x32xf32>
    %463 = vector.extract_strided_slice %454 {offsets = [0, 64], sizes = [2, 32], strides = [1, 1]} : vector<2x128xf32> to vector<2x32xf32>
    %464 = math.tanh %463 : vector<2x32xf32>
    %465 = arith.mulf %461, %449 : vector<2x32xf32>
    %466 = arith.mulf %460, %464 : vector<2x32xf32>
    %467 = arith.addf %465, %466 : vector<2x32xf32>
    %468 = math.tanh %467 : vector<2x32xf32>
    %469 = arith.mulf %462, %468 : vector<2x32xf32>
    %470 = vector.extract_strided_slice %414 {offsets = [6, 0], sizes = [2, 128], strides = [1, 1]} : vector<8x128xf32> to vector<2x128xf32>
    %cst_109 = arith.constant dense<0.000000e+00> : vector<2x128xf32>
    %471 = tpu.matmul %469, %415, %cst_109 {dimension_numbers = #tpu.dot_dimension_numbers<[1], [0], [0], [1], [0, 0, 1, 1], [], []>} : vector<2x32xf32>, vector<32x128xf32>, vector<2x128xf32> -> vector<2x128xf32>
    %472 = arith.addf %470, %471 : vector<2x128xf32>
    %473 = arith.negf %472 : vector<2x128xf32>
    %474 = math.exp %473 : vector<2x128xf32>
    %cst_110 = arith.constant 1.000000e+00 : f32
    %475 = vector.broadcast %cst_110 : f32 to vector<2x128xf32>
    %476 = arith.addf %475, %474 : vector<2x128xf32>
    %477 = arith.divf %475, %476 : vector<2x128xf32>
    %478 = vector.extract_strided_slice %477 {offsets = [0, 0], sizes = [2, 32], strides = [1, 1]} : vector<2x128xf32> to vector<2x32xf32>
    %479 = vector.extract_strided_slice %477 {offsets = [0, 32], sizes = [2, 32], strides = [1, 1]} : vector<2x128xf32> to vector<2x32xf32>
    %480 = vector.extract_strided_slice %477 {offsets = [0, 96], sizes = [2, 32], strides = [1, 1]} : vector<2x128xf32> to vector<2x32xf32>
    %481 = vector.extract_strided_slice %472 {offsets = [0, 64], sizes = [2, 32], strides = [1, 1]} : vector<2x128xf32> to vector<2x32xf32>
    %482 = math.tanh %481 : vector<2x32xf32>
    %483 = arith.mulf %479, %467 : vector<2x32xf32>
    %484 = arith.mulf %478, %482 : vector<2x32xf32>
    %485 = arith.addf %483, %484 : vector<2x32xf32>
    %486 = math.tanh %485 : vector<2x32xf32>
    %487 = arith.mulf %480, %486 : vector<2x32xf32>
    %488 = tpu.concatenate %282, %300, %318, %336, %354, %372, %390, %408, %433, %451, %469, %487 in 0 : vector<2x32xf32>, vector<2x32xf32>, vector<2x32xf32>, vector<2x32xf32>, vector<2x32xf32>, vector<2x32xf32>, vector<2x32xf32>, vector<2x32xf32>, vector<2x32xf32>, vector<2x32xf32>, vector<2x32xf32>, vector<2x32xf32> -> vector<24x32xf32>
    %489 = tpu.concatenate %129, %255 in 0 : vector<16x32xf32>, vector<8x32xf32> -> vector<24x32xf32>
    %c1696 = arith.constant 1696 : index
    %c0_111 = arith.constant 0 : index
    %490 = vector.load %arg0[%c1696, %c0_111] : memref<2144x128xf32, #tpu.memory_space<vmem>>, vector<33x64xf32>
    %491 = vector.extract_strided_slice %490 {offsets = [0, 0], sizes = [32, 64], strides = [1, 1]} : vector<33x64xf32> to vector<32x64xf32>
    %cst_112 = arith.constant dense<0.000000e+00> : vector<24x64xf32>
    %492 = tpu.matmul %488, %491, %cst_112 {dimension_numbers = #tpu.dot_dimension_numbers<[1], [0], [0], [1], [0, 0, 1, 1], [], []>} : vector<24x32xf32>, vector<32x64xf32>, vector<24x64xf32> -> vector<24x64xf32>
    %493 = vector.extract_strided_slice %490 {offsets = [32, 0], sizes = [1, 64], strides = [1, 1]} : vector<33x64xf32> to vector<1x64xf32>
    %494 = vector.broadcast %493 : vector<1x64xf32> to vector<24x64xf32>
    %495 = arith.addf %492, %494 : vector<24x64xf32>
    %496 = vector.extract_strided_slice %495 {offsets = [0, 0], sizes = [24, 32], strides = [1, 1]} : vector<24x64xf32> to vector<24x32xf32>
    %497 = arith.negf %496 : vector<24x32xf32>
    %498 = math.exp %497 : vector<24x32xf32>
    %cst_113 = arith.constant 1.000000e+00 : f32
    %499 = vector.broadcast %cst_113 : f32 to vector<24x32xf32>
    %500 = arith.addf %499, %498 : vector<24x32xf32>
    %501 = arith.divf %499, %500 : vector<24x32xf32>
    %502 = vector.extract_strided_slice %495 {offsets = [0, 32], sizes = [24, 32], strides = [1, 1]} : vector<24x64xf32> to vector<24x32xf32>
    %503 = arith.mulf %501, %502 : vector<24x32xf32>
    %504 = arith.addf %489, %503 : vector<24x32xf32>
    %c1816 = arith.constant 1816 : index
    %c0_114 = arith.constant 0 : index
    %505 = vector.load %arg0[%c1816, %c0_114] : memref<2144x128xf32, #tpu.memory_space<vmem>>, vector<2x32xf32>
    %cst_115 = arith.constant dense<0.000000e+00> : vector<24xf32>
    %506 = vector.multi_reduction <add>, %504, %cst_115 [1] : vector<24x32xf32> to vector<24xf32>
    %507 = vector.shape_cast %506 : vector<24xf32> to vector<24x1xf32>
    %cst_116 = arith.constant 3.200000e+01 : f32
    %508 = vector.broadcast %cst_116 : f32 to vector<24x1xf32>
    %509 = arith.divf %507, %508 : vector<24x1xf32>
    %510 = vector.broadcast %509 : vector<24x1xf32> to vector<24x32xf32>
    %511 = arith.subf %504, %510 : vector<24x32xf32>
    %512 = arith.mulf %511, %511 : vector<24x32xf32>
    %cst_117 = arith.constant dense<0.000000e+00> : vector<24xf32>
    %513 = vector.multi_reduction <add>, %512, %cst_117 [1] : vector<24x32xf32> to vector<24xf32>
    %514 = vector.shape_cast %513 : vector<24xf32> to vector<24x1xf32>
    %cst_118 = arith.constant 3.200000e+01 : f32
    %515 = vector.broadcast %cst_118 : f32 to vector<24x1xf32>
    %516 = arith.divf %514, %515 : vector<24x1xf32>
    %517 = vector.broadcast %509 : vector<24x1xf32> to vector<24x32xf32>
    %518 = arith.subf %504, %517 : vector<24x32xf32>
    %cst_119 = arith.constant 9.99999974E-6 : f32
    %519 = vector.broadcast %cst_119 : f32 to vector<24x1xf32>
    %520 = arith.addf %516, %519 : vector<24x1xf32>
    %521 = math.rsqrt %520 : vector<24x1xf32>
    %522 = vector.broadcast %521 : vector<24x1xf32> to vector<24x32xf32>
    %523 = arith.mulf %518, %522 : vector<24x32xf32>
    %524 = vector.extract_strided_slice %505 {offsets = [0, 0], sizes = [1, 32], strides = [1, 1]} : vector<2x32xf32> to vector<1x32xf32>
    %525 = vector.broadcast %524 : vector<1x32xf32> to vector<24x32xf32>
    %526 = arith.mulf %523, %525 : vector<24x32xf32>
    %527 = vector.extract_strided_slice %505 {offsets = [1, 0], sizes = [1, 32], strides = [1, 1]} : vector<2x32xf32> to vector<1x32xf32>
    %528 = vector.broadcast %527 : vector<1x32xf32> to vector<24x32xf32>
    %529 = arith.addf %526, %528 : vector<24x32xf32>
    %c1840 = arith.constant 1840 : index
    %c0_120 = arith.constant 0 : index
    %530 = vector.load %arg0[%c1840, %c0_120] : memref<2144x128xf32, #tpu.memory_space<vmem>>, vector<33x32xf32>
    %531 = vector.extract_strided_slice %530 {offsets = [0, 0], sizes = [32, 32], strides = [1, 1]} : vector<33x32xf32> to vector<32x32xf32>
    %cst_121 = arith.constant dense<0.000000e+00> : vector<24x32xf32>
    %532 = tpu.matmul %529, %531, %cst_121 {dimension_numbers = #tpu.dot_dimension_numbers<[1], [0], [0], [1], [0, 0, 1, 1], [], []>} : vector<24x32xf32>, vector<32x32xf32>, vector<24x32xf32> -> vector<24x32xf32>
    %533 = vector.extract_strided_slice %530 {offsets = [32, 0], sizes = [1, 32], strides = [1, 1]} : vector<33x32xf32> to vector<1x32xf32>
    %534 = vector.broadcast %533 : vector<1x32xf32> to vector<24x32xf32>
    %535 = arith.addf %532, %534 : vector<24x32xf32>
    %c1928 = arith.constant 1928 : index
    %c0_122 = arith.constant 0 : index
    %536 = vector.load %arg0[%c1928, %c0_122] : memref<2144x128xf32, #tpu.memory_space<vmem>>, vector<24x32xf32>
    %537 = arith.addf %535, %536 : vector<24x32xf32>
    %cst_123 = arith.constant 0.000000e+00 : f32
    %538 = vector.broadcast %cst_123 : f32 to vector<24x32xf32>
    %539 = arith.cmpf ogt, %537, %538 : vector<24x32xf32>
    %cst_124 = arith.constant 0.000000e+00 : f32
    %540 = vector.broadcast %cst_124 : f32 to vector<24x32xf32>
    %541 = arith.minimumf %537, %540 : vector<24x32xf32>
    %542 = math.exp %541 : vector<24x32xf32>
    %cst_125 = arith.constant 1.000000e+00 : f32
    %543 = vector.broadcast %cst_125 : f32 to vector<24x32xf32>
    %544 = arith.subf %542, %543 : vector<24x32xf32>
    %545 = arith.select %539, %537, %544 : vector<24x32xi1>, vector<24x32xf32>
    %c1880 = arith.constant 1880 : index
    %c0_126 = arith.constant 0 : index
    %546 = vector.load %arg0[%c1880, %c0_126] : memref<2144x128xf32, #tpu.memory_space<vmem>>, vector<33x64xf32>
    %547 = vector.extract_strided_slice %546 {offsets = [0, 0], sizes = [32, 64], strides = [1, 1]} : vector<33x64xf32> to vector<32x64xf32>
    %cst_127 = arith.constant dense<0.000000e+00> : vector<24x64xf32>
    %548 = tpu.matmul %545, %547, %cst_127 {dimension_numbers = #tpu.dot_dimension_numbers<[1], [0], [0], [1], [0, 0, 1, 1], [], []>} : vector<24x32xf32>, vector<32x64xf32>, vector<24x64xf32> -> vector<24x64xf32>
    %549 = vector.extract_strided_slice %546 {offsets = [32, 0], sizes = [1, 64], strides = [1, 1]} : vector<33x64xf32> to vector<1x64xf32>
    %550 = vector.broadcast %549 : vector<1x64xf32> to vector<24x64xf32>
    %551 = arith.addf %548, %550 : vector<24x64xf32>
    %552 = vector.extract_strided_slice %551 {offsets = [0, 0], sizes = [24, 32], strides = [1, 1]} : vector<24x64xf32> to vector<24x32xf32>
    %553 = arith.negf %552 : vector<24x32xf32>
    %554 = math.exp %553 : vector<24x32xf32>
    %cst_128 = arith.constant 1.000000e+00 : f32
    %555 = vector.broadcast %cst_128 : f32 to vector<24x32xf32>
    %556 = arith.addf %555, %554 : vector<24x32xf32>
    %557 = arith.divf %555, %556 : vector<24x32xf32>
    %558 = vector.extract_strided_slice %551 {offsets = [0, 32], sizes = [24, 32], strides = [1, 1]} : vector<24x64xf32> to vector<24x32xf32>
    %559 = arith.mulf %557, %558 : vector<24x32xf32>
    %560 = arith.addf %529, %559 : vector<24x32xf32>
    %c1920 = arith.constant 1920 : index
    %c0_129 = arith.constant 0 : index
    %561 = vector.load %arg0[%c1920, %c0_129] : memref<2144x128xf32, #tpu.memory_space<vmem>>, vector<2x32xf32>
    %cst_130 = arith.constant dense<0.000000e+00> : vector<24xf32>
    %562 = vector.multi_reduction <add>, %560, %cst_130 [1] : vector<24x32xf32> to vector<24xf32>
    %563 = vector.shape_cast %562 : vector<24xf32> to vector<24x1xf32>
    %cst_131 = arith.constant 3.200000e+01 : f32
    %564 = vector.broadcast %cst_131 : f32 to vector<24x1xf32>
    %565 = arith.divf %563, %564 : vector<24x1xf32>
    %566 = vector.broadcast %565 : vector<24x1xf32> to vector<24x32xf32>
    %567 = arith.subf %560, %566 : vector<24x32xf32>
    %568 = arith.mulf %567, %567 : vector<24x32xf32>
    %cst_132 = arith.constant dense<0.000000e+00> : vector<24xf32>
    %569 = vector.multi_reduction <add>, %568, %cst_132 [1] : vector<24x32xf32> to vector<24xf32>
    %570 = vector.shape_cast %569 : vector<24xf32> to vector<24x1xf32>
    %cst_133 = arith.constant 3.200000e+01 : f32
    %571 = vector.broadcast %cst_133 : f32 to vector<24x1xf32>
    %572 = arith.divf %570, %571 : vector<24x1xf32>
    %573 = vector.broadcast %565 : vector<24x1xf32> to vector<24x32xf32>
    %574 = arith.subf %560, %573 : vector<24x32xf32>
    %cst_134 = arith.constant 9.99999974E-6 : f32
    %575 = vector.broadcast %cst_134 : f32 to vector<24x1xf32>
    %576 = arith.addf %572, %575 : vector<24x1xf32>
    %577 = math.rsqrt %576 : vector<24x1xf32>
    %578 = vector.broadcast %577 : vector<24x1xf32> to vector<24x32xf32>
    %579 = arith.mulf %574, %578 : vector<24x32xf32>
    %580 = vector.extract_strided_slice %561 {offsets = [0, 0], sizes = [1, 32], strides = [1, 1]} : vector<2x32xf32> to vector<1x32xf32>
    %581 = vector.broadcast %580 : vector<1x32xf32> to vector<24x32xf32>
    %582 = arith.mulf %579, %581 : vector<24x32xf32>
    %583 = vector.extract_strided_slice %561 {offsets = [1, 0], sizes = [1, 32], strides = [1, 1]} : vector<2x32xf32> to vector<1x32xf32>
    %584 = vector.broadcast %583 : vector<1x32xf32> to vector<24x32xf32>
    %585 = arith.addf %582, %584 : vector<24x32xf32>
    %c2048 = arith.constant 2048 : index
    %c0_135 = arith.constant 0 : index
    %586 = vector.load %arg0[%c2048, %c0_135] : memref<2144x128xf32, #tpu.memory_space<vmem>>, vector<33x72xf32>
    %587 = vector.extract_strided_slice %586 {offsets = [0, 0], sizes = [32, 72], strides = [1, 1]} : vector<33x72xf32> to vector<32x72xf32>
    %cst_136 = arith.constant dense<0.000000e+00> : vector<24x72xf32>
    %588 = tpu.matmul %585, %587, %cst_136 {dimension_numbers = #tpu.dot_dimension_numbers<[1], [0], [0], [1], [0, 0, 1, 1], [], []>} : vector<24x32xf32>, vector<32x72xf32>, vector<24x72xf32> -> vector<24x72xf32>
    %589 = vector.extract_strided_slice %586 {offsets = [32, 0], sizes = [1, 72], strides = [1, 1]} : vector<33x72xf32> to vector<1x72xf32>
    %590 = vector.broadcast %589 : vector<1x72xf32> to vector<24x72xf32>
    %591 = arith.addf %588, %590 : vector<24x72xf32>
    %592 = vector.shape_cast %591 : vector<24x72xf32> to vector<12x2x72xf32>
    %593 = tpu.transpose %592, [1, 0, 2] : vector<12x2x72xf32> -> vector<2x12x72xf32>
    %594 = vector.extract_strided_slice %593 {offsets = [0, 0, 64], sizes = [2, 12, 8], strides = [1, 1, 1]} : vector<2x12x72xf32> to vector<2x12x8xf32>
    %595 = vector.extract_strided_slice %593 {offsets = [0, 0, 0], sizes = [2, 12, 8], strides = [1, 1, 1]} : vector<2x12x72xf32> to vector<2x12x8xf32>
    %596 = vector.extract_strided_slice %593 {offsets = [0, 0, 32], sizes = [2, 12, 8], strides = [1, 1, 1]} : vector<2x12x72xf32> to vector<2x12x8xf32>
    "tpu.trace_start"() <{level = 10 : i32, message = "btd,bsd->bts"}> : () -> ()
    %cst_137 = arith.constant dense<0.000000e+00> : vector<2x12x12xf32>
    %597 = tpu.matmul %595, %596, %cst_137 {dimension_numbers = #tpu.dot_dimension_numbers<[2], [2], [1], [1], [0, 0, 0, 1, 1, 1], [0], [0]>} : vector<2x12x8xf32>, vector<2x12x8xf32>, vector<2x12x12xf32> -> vector<2x12x12xf32>
    "tpu.trace_stop"() : () -> ()
    %cst_138 = arith.constant dense<0xFF800000> : vector<2x12xf32>
    %598 = vector.multi_reduction <maximumf>, %597, %cst_138 [2] : vector<2x12x12xf32> to vector<2x12xf32>
    %599 = vector.shape_cast %598 : vector<2x12xf32> to vector<2x12x1xf32>
    %600 = vector.broadcast %599 : vector<2x12x1xf32> to vector<2x12x12xf32>
    %601 = arith.subf %597, %600 : vector<2x12x12xf32>
    %602 = math.exp %601 : vector<2x12x12xf32>
    %cst_139 = arith.constant dense<0.000000e+00> : vector<2x12xf32>
    %603 = vector.multi_reduction <add>, %602, %cst_139 [2] : vector<2x12x12xf32> to vector<2x12xf32>
    %604 = vector.shape_cast %603 : vector<2x12xf32> to vector<2x12x1xf32>
    %605 = tpu.reciprocal %604 {approx = true} : vector<2x12x1xf32> -> vector<2x12x1xf32>
    %606 = vector.broadcast %605 : vector<2x12x1xf32> to vector<2x12x12xf32>
    %607 = arith.mulf %602, %606 : vector<2x12x12xf32>
    %608 = vector.extract_strided_slice %593 {offsets = [0, 0, 8], sizes = [2, 12, 8], strides = [1, 1, 1]} : vector<2x12x72xf32> to vector<2x12x8xf32>
    %609 = vector.extract_strided_slice %593 {offsets = [0, 0, 40], sizes = [2, 12, 8], strides = [1, 1, 1]} : vector<2x12x72xf32> to vector<2x12x8xf32>
    "tpu.trace_start"() <{level = 10 : i32, message = "btd,bsd->bts"}> : () -> ()
    %cst_140 = arith.constant dense<0.000000e+00> : vector<2x12x12xf32>
    %610 = tpu.matmul %608, %609, %cst_140 {dimension_numbers = #tpu.dot_dimension_numbers<[2], [2], [1], [1], [0, 0, 0, 1, 1, 1], [0], [0]>} : vector<2x12x8xf32>, vector<2x12x8xf32>, vector<2x12x12xf32> -> vector<2x12x12xf32>
    "tpu.trace_stop"() : () -> ()
    %cst_141 = arith.constant dense<0xFF800000> : vector<2x12xf32>
    %611 = vector.multi_reduction <maximumf>, %610, %cst_141 [2] : vector<2x12x12xf32> to vector<2x12xf32>
    %612 = vector.shape_cast %611 : vector<2x12xf32> to vector<2x12x1xf32>
    %613 = vector.broadcast %612 : vector<2x12x1xf32> to vector<2x12x12xf32>
    %614 = arith.subf %610, %613 : vector<2x12x12xf32>
    %615 = math.exp %614 : vector<2x12x12xf32>
    %cst_142 = arith.constant dense<0.000000e+00> : vector<2x12xf32>
    %616 = vector.multi_reduction <add>, %615, %cst_142 [2] : vector<2x12x12xf32> to vector<2x12xf32>
    %617 = vector.shape_cast %616 : vector<2x12xf32> to vector<2x12x1xf32>
    %618 = tpu.reciprocal %617 {approx = true} : vector<2x12x1xf32> -> vector<2x12x1xf32>
    %619 = vector.broadcast %618 : vector<2x12x1xf32> to vector<2x12x12xf32>
    %620 = arith.mulf %615, %619 : vector<2x12x12xf32>
    %621 = arith.addf %607, %620 : vector<2x12x12xf32>
    %622 = vector.extract_strided_slice %593 {offsets = [0, 0, 16], sizes = [2, 12, 8], strides = [1, 1, 1]} : vector<2x12x72xf32> to vector<2x12x8xf32>
    %623 = vector.extract_strided_slice %593 {offsets = [0, 0, 48], sizes = [2, 12, 8], strides = [1, 1, 1]} : vector<2x12x72xf32> to vector<2x12x8xf32>
    "tpu.trace_start"() <{level = 10 : i32, message = "btd,bsd->bts"}> : () -> ()
    %cst_143 = arith.constant dense<0.000000e+00> : vector<2x12x12xf32>
    %624 = tpu.matmul %622, %623, %cst_143 {dimension_numbers = #tpu.dot_dimension_numbers<[2], [2], [1], [1], [0, 0, 0, 1, 1, 1], [0], [0]>} : vector<2x12x8xf32>, vector<2x12x8xf32>, vector<2x12x12xf32> -> vector<2x12x12xf32>
    "tpu.trace_stop"() : () -> ()
    %cst_144 = arith.constant dense<0xFF800000> : vector<2x12xf32>
    %625 = vector.multi_reduction <maximumf>, %624, %cst_144 [2] : vector<2x12x12xf32> to vector<2x12xf32>
    %626 = vector.shape_cast %625 : vector<2x12xf32> to vector<2x12x1xf32>
    %627 = vector.broadcast %626 : vector<2x12x1xf32> to vector<2x12x12xf32>
    %628 = arith.subf %624, %627 : vector<2x12x12xf32>
    %629 = math.exp %628 : vector<2x12x12xf32>
    %cst_145 = arith.constant dense<0.000000e+00> : vector<2x12xf32>
    %630 = vector.multi_reduction <add>, %629, %cst_145 [2] : vector<2x12x12xf32> to vector<2x12xf32>
    %631 = vector.shape_cast %630 : vector<2x12xf32> to vector<2x12x1xf32>
    %632 = tpu.reciprocal %631 {approx = true} : vector<2x12x1xf32> -> vector<2x12x1xf32>
    %633 = vector.broadcast %632 : vector<2x12x1xf32> to vector<2x12x12xf32>
    %634 = arith.mulf %629, %633 : vector<2x12x12xf32>
    %635 = arith.addf %621, %634 : vector<2x12x12xf32>
    %636 = vector.extract_strided_slice %593 {offsets = [0, 0, 24], sizes = [2, 12, 8], strides = [1, 1, 1]} : vector<2x12x72xf32> to vector<2x12x8xf32>
    %637 = vector.extract_strided_slice %593 {offsets = [0, 0, 56], sizes = [2, 12, 8], strides = [1, 1, 1]} : vector<2x12x72xf32> to vector<2x12x8xf32>
    "tpu.trace_start"() <{level = 10 : i32, message = "btd,bsd->bts"}> : () -> ()
    %cst_146 = arith.constant dense<0.000000e+00> : vector<2x12x12xf32>
    %638 = tpu.matmul %636, %637, %cst_146 {dimension_numbers = #tpu.dot_dimension_numbers<[2], [2], [1], [1], [0, 0, 0, 1, 1, 1], [0], [0]>} : vector<2x12x8xf32>, vector<2x12x8xf32>, vector<2x12x12xf32> -> vector<2x12x12xf32>
    "tpu.trace_stop"() : () -> ()
    %cst_147 = arith.constant dense<0xFF800000> : vector<2x12xf32>
    %639 = vector.multi_reduction <maximumf>, %638, %cst_147 [2] : vector<2x12x12xf32> to vector<2x12xf32>
    %640 = vector.shape_cast %639 : vector<2x12xf32> to vector<2x12x1xf32>
    %641 = vector.broadcast %640 : vector<2x12x1xf32> to vector<2x12x12xf32>
    %642 = arith.subf %638, %641 : vector<2x12x12xf32>
    %643 = math.exp %642 : vector<2x12x12xf32>
    %cst_148 = arith.constant dense<0.000000e+00> : vector<2x12xf32>
    %644 = vector.multi_reduction <add>, %643, %cst_148 [2] : vector<2x12x12xf32> to vector<2x12xf32>
    %645 = vector.shape_cast %644 : vector<2x12xf32> to vector<2x12x1xf32>
    %646 = tpu.reciprocal %645 {approx = true} : vector<2x12x1xf32> -> vector<2x12x1xf32>
    %647 = vector.broadcast %646 : vector<2x12x1xf32> to vector<2x12x12xf32>
    %648 = arith.mulf %643, %647 : vector<2x12x12xf32>
    %649 = arith.addf %635, %648 : vector<2x12x12xf32>
    "tpu.trace_start"() <{level = 10 : i32, message = "bts,bsd->btd"}> : () -> ()
    %cst_149 = arith.constant dense<0.000000e+00> : vector<2x12x8xf32>
    %650 = tpu.matmul %649, %594, %cst_149 {dimension_numbers = #tpu.dot_dimension_numbers<[2], [1], [1], [2], [0, 0, 0, 1, 1, 2], [0], [0]>} : vector<2x12x12xf32>, vector<2x12x8xf32>, vector<2x12x8xf32> -> vector<2x12x8xf32>
    "tpu.trace_stop"() : () -> ()
    %651 = vector.extract_strided_slice %650 {offsets = [0, 8, 0], sizes = [2, 4, 8], strides = [1, 1, 1]} : vector<2x12x8xf32> to vector<2x4x8xf32>
    %652 = tpu.transpose %651, [1, 0, 2] : vector<2x4x8xf32> -> vector<4x2x8xf32>
    %653 = vector.shape_cast %652 : vector<4x2x8xf32> to vector<8x8xf32>
    %c2088 = arith.constant 2088 : index
    %c0_150 = arith.constant 0 : index
    %654 = vector.load %arg0[%c2088, %c0_150] : memref<2144x128xf32, #tpu.memory_space<vmem>>, vector<9x32xf32>
    %655 = vector.extract_strided_slice %654 {offsets = [0, 0], sizes = [8, 32], strides = [1, 1]} : vector<9x32xf32> to vector<8x32xf32>
    %cst_151 = arith.constant dense<0.000000e+00> : vector<8x32xf32>
    %656 = tpu.matmul %653, %655, %cst_151 {dimension_numbers = #tpu.dot_dimension_numbers<[1], [0], [0], [1], [0, 0, 1, 1], [], []>} : vector<8x8xf32>, vector<8x32xf32>, vector<8x32xf32> -> vector<8x32xf32>
    %657 = vector.extract_strided_slice %654 {offsets = [8, 0], sizes = [1, 32], strides = [1, 1]} : vector<9x32xf32> to vector<1x32xf32>
    %658 = vector.broadcast %657 : vector<1x32xf32> to vector<8x32xf32>
    %659 = arith.addf %656, %658 : vector<8x32xf32>
    %660 = vector.extract_strided_slice %529 {offsets = [16, 0], sizes = [8, 32], strides = [1, 1]} : vector<24x32xf32> to vector<8x32xf32>
    %661 = vector.extract_strided_slice %585 {offsets = [16, 0], sizes = [8, 32], strides = [1, 1]} : vector<24x32xf32> to vector<8x32xf32>
    %c1736 = arith.constant 1736 : index
    %c0_152 = arith.constant 0 : index
    %662 = vector.load %arg0[%c1736, %c0_152] : memref<2144x128xf32, #tpu.memory_space<vmem>>, vector<33x64xf32>
    %663 = vector.extract_strided_slice %662 {offsets = [0, 0], sizes = [32, 64], strides = [1, 1]} : vector<33x64xf32> to vector<32x64xf32>
    %cst_153 = arith.constant dense<0.000000e+00> : vector<8x64xf32>
    %664 = tpu.matmul %659, %663, %cst_153 {dimension_numbers = #tpu.dot_dimension_numbers<[1], [0], [0], [1], [0, 0, 1, 1], [], []>} : vector<8x32xf32>, vector<32x64xf32>, vector<8x64xf32> -> vector<8x64xf32>
    %665 = vector.extract_strided_slice %662 {offsets = [32, 0], sizes = [1, 64], strides = [1, 1]} : vector<33x64xf32> to vector<1x64xf32>
    %666 = vector.broadcast %665 : vector<1x64xf32> to vector<8x64xf32>
    %667 = arith.addf %664, %666 : vector<8x64xf32>
    %668 = vector.extract_strided_slice %667 {offsets = [0, 0], sizes = [8, 32], strides = [1, 1]} : vector<8x64xf32> to vector<8x32xf32>
    %669 = arith.negf %668 : vector<8x32xf32>
    %670 = math.exp %669 : vector<8x32xf32>
    %cst_154 = arith.constant 1.000000e+00 : f32
    %671 = vector.broadcast %cst_154 : f32 to vector<8x32xf32>
    %672 = arith.addf %671, %670 : vector<8x32xf32>
    %673 = arith.divf %671, %672 : vector<8x32xf32>
    %674 = vector.extract_strided_slice %667 {offsets = [0, 32], sizes = [8, 32], strides = [1, 1]} : vector<8x64xf32> to vector<8x32xf32>
    %675 = arith.mulf %673, %674 : vector<8x32xf32>
    %676 = arith.addf %661, %675 : vector<8x32xf32>
    %c1824 = arith.constant 1824 : index
    %c0_155 = arith.constant 0 : index
    %677 = vector.load %arg0[%c1824, %c0_155] : memref<2144x128xf32, #tpu.memory_space<vmem>>, vector<2x32xf32>
    %cst_156 = arith.constant dense<0.000000e+00> : vector<8xf32>
    %678 = vector.multi_reduction <add>, %676, %cst_156 [1] : vector<8x32xf32> to vector<8xf32>
    %679 = vector.shape_cast %678 : vector<8xf32> to vector<8x1xf32>
    %cst_157 = arith.constant 3.200000e+01 : f32
    %680 = vector.broadcast %cst_157 : f32 to vector<8x1xf32>
    %681 = arith.divf %679, %680 : vector<8x1xf32>
    %682 = vector.broadcast %681 : vector<8x1xf32> to vector<8x32xf32>
    %683 = arith.subf %676, %682 : vector<8x32xf32>
    %684 = arith.mulf %683, %683 : vector<8x32xf32>
    %cst_158 = arith.constant dense<0.000000e+00> : vector<8xf32>
    %685 = vector.multi_reduction <add>, %684, %cst_158 [1] : vector<8x32xf32> to vector<8xf32>
    %686 = vector.shape_cast %685 : vector<8xf32> to vector<8x1xf32>
    %cst_159 = arith.constant 3.200000e+01 : f32
    %687 = vector.broadcast %cst_159 : f32 to vector<8x1xf32>
    %688 = arith.divf %686, %687 : vector<8x1xf32>
    %689 = vector.broadcast %681 : vector<8x1xf32> to vector<8x32xf32>
    %690 = arith.subf %676, %689 : vector<8x32xf32>
    %cst_160 = arith.constant 9.99999974E-6 : f32
    %691 = vector.broadcast %cst_160 : f32 to vector<8x1xf32>
    %692 = arith.addf %688, %691 : vector<8x1xf32>
    %693 = math.rsqrt %692 : vector<8x1xf32>
    %694 = vector.broadcast %693 : vector<8x1xf32> to vector<8x32xf32>
    %695 = arith.mulf %690, %694 : vector<8x32xf32>
    %696 = vector.extract_strided_slice %677 {offsets = [0, 0], sizes = [1, 32], strides = [1, 1]} : vector<2x32xf32> to vector<1x32xf32>
    %697 = vector.broadcast %696 : vector<1x32xf32> to vector<8x32xf32>
    %698 = arith.mulf %695, %697 : vector<8x32xf32>
    %699 = vector.extract_strided_slice %677 {offsets = [1, 0], sizes = [1, 32], strides = [1, 1]} : vector<2x32xf32> to vector<1x32xf32>
    %700 = vector.broadcast %699 : vector<1x32xf32> to vector<8x32xf32>
    %701 = arith.addf %698, %700 : vector<8x32xf32>
    %c1952 = arith.constant 1952 : index
    %c0_161 = arith.constant 0 : index
    %702 = vector.load %arg0[%c1952, %c0_161] : memref<2144x128xf32, #tpu.memory_space<vmem>>, vector<33x32xf32>
    %703 = vector.extract_strided_slice %702 {offsets = [0, 0], sizes = [32, 32], strides = [1, 1]} : vector<33x32xf32> to vector<32x32xf32>
    %cst_162 = arith.constant dense<0.000000e+00> : vector<8x32xf32>
    %704 = tpu.matmul %701, %703, %cst_162 {dimension_numbers = #tpu.dot_dimension_numbers<[1], [0], [0], [1], [0, 0, 1, 1], [], []>} : vector<8x32xf32>, vector<32x32xf32>, vector<8x32xf32> -> vector<8x32xf32>
    %705 = vector.extract_strided_slice %702 {offsets = [32, 0], sizes = [1, 32], strides = [1, 1]} : vector<33x32xf32> to vector<1x32xf32>
    %706 = vector.broadcast %705 : vector<1x32xf32> to vector<8x32xf32>
    %707 = arith.addf %704, %706 : vector<8x32xf32>
    %c2040 = arith.constant 2040 : index
    %c0_163 = arith.constant 0 : index
    %708 = vector.load %arg0[%c2040, %c0_163] : memref<2144x128xf32, #tpu.memory_space<vmem>>, vector<8x32xf32>
    %709 = arith.addf %707, %708 : vector<8x32xf32>
    %cst_164 = arith.constant 0.000000e+00 : f32
    %710 = vector.broadcast %cst_164 : f32 to vector<8x32xf32>
    %711 = arith.cmpf ogt, %709, %710 : vector<8x32xf32>
    %cst_165 = arith.constant 0.000000e+00 : f32
    %712 = vector.broadcast %cst_165 : f32 to vector<8x32xf32>
    %713 = arith.minimumf %709, %712 : vector<8x32xf32>
    %714 = math.exp %713 : vector<8x32xf32>
    %cst_166 = arith.constant 1.000000e+00 : f32
    %715 = vector.broadcast %cst_166 : f32 to vector<8x32xf32>
    %716 = arith.subf %714, %715 : vector<8x32xf32>
    %717 = arith.select %711, %709, %716 : vector<8x32xi1>, vector<8x32xf32>
    %c1992 = arith.constant 1992 : index
    %c0_167 = arith.constant 0 : index
    %718 = vector.load %arg0[%c1992, %c0_167] : memref<2144x128xf32, #tpu.memory_space<vmem>>, vector<33x64xf32>
    %719 = vector.extract_strided_slice %718 {offsets = [0, 0], sizes = [32, 64], strides = [1, 1]} : vector<33x64xf32> to vector<32x64xf32>
    %cst_168 = arith.constant dense<0.000000e+00> : vector<8x64xf32>
    %720 = tpu.matmul %717, %719, %cst_168 {dimension_numbers = #tpu.dot_dimension_numbers<[1], [0], [0], [1], [0, 0, 1, 1], [], []>} : vector<8x32xf32>, vector<32x64xf32>, vector<8x64xf32> -> vector<8x64xf32>
    %721 = vector.extract_strided_slice %718 {offsets = [32, 0], sizes = [1, 64], strides = [1, 1]} : vector<33x64xf32> to vector<1x64xf32>
    %722 = vector.broadcast %721 : vector<1x64xf32> to vector<8x64xf32>
    %723 = arith.addf %720, %722 : vector<8x64xf32>
    %724 = vector.extract_strided_slice %723 {offsets = [0, 0], sizes = [8, 32], strides = [1, 1]} : vector<8x64xf32> to vector<8x32xf32>
    %725 = arith.negf %724 : vector<8x32xf32>
    %726 = math.exp %725 : vector<8x32xf32>
    %cst_169 = arith.constant 1.000000e+00 : f32
    %727 = vector.broadcast %cst_169 : f32 to vector<8x32xf32>
    %728 = arith.addf %727, %726 : vector<8x32xf32>
    %729 = arith.divf %727, %728 : vector<8x32xf32>
    %730 = vector.extract_strided_slice %723 {offsets = [0, 32], sizes = [8, 32], strides = [1, 1]} : vector<8x64xf32> to vector<8x32xf32>
    %731 = arith.mulf %729, %730 : vector<8x32xf32>
    %732 = arith.addf %701, %731 : vector<8x32xf32>
    %c2032 = arith.constant 2032 : index
    %c0_170 = arith.constant 0 : index
    %733 = vector.load %arg0[%c2032, %c0_170] : memref<2144x128xf32, #tpu.memory_space<vmem>>, vector<2x32xf32>
    %cst_171 = arith.constant dense<0.000000e+00> : vector<8xf32>
    %734 = vector.multi_reduction <add>, %732, %cst_171 [1] : vector<8x32xf32> to vector<8xf32>
    %735 = vector.shape_cast %734 : vector<8xf32> to vector<8x1xf32>
    %cst_172 = arith.constant 3.200000e+01 : f32
    %736 = vector.broadcast %cst_172 : f32 to vector<8x1xf32>
    %737 = arith.divf %735, %736 : vector<8x1xf32>
    %738 = vector.broadcast %737 : vector<8x1xf32> to vector<8x32xf32>
    %739 = arith.subf %732, %738 : vector<8x32xf32>
    %740 = arith.mulf %739, %739 : vector<8x32xf32>
    %cst_173 = arith.constant dense<0.000000e+00> : vector<8xf32>
    %741 = vector.multi_reduction <add>, %740, %cst_173 [1] : vector<8x32xf32> to vector<8xf32>
    %742 = vector.shape_cast %741 : vector<8xf32> to vector<8x1xf32>
    %cst_174 = arith.constant 3.200000e+01 : f32
    %743 = vector.broadcast %cst_174 : f32 to vector<8x1xf32>
    %744 = arith.divf %742, %743 : vector<8x1xf32>
    %745 = vector.broadcast %737 : vector<8x1xf32> to vector<8x32xf32>
    %746 = arith.subf %732, %745 : vector<8x32xf32>
    %cst_175 = arith.constant 9.99999974E-6 : f32
    %747 = vector.broadcast %cst_175 : f32 to vector<8x1xf32>
    %748 = arith.addf %744, %747 : vector<8x1xf32>
    %749 = math.rsqrt %748 : vector<8x1xf32>
    %750 = vector.broadcast %749 : vector<8x1xf32> to vector<8x32xf32>
    %751 = arith.mulf %746, %750 : vector<8x32xf32>
    %752 = vector.extract_strided_slice %733 {offsets = [0, 0], sizes = [1, 32], strides = [1, 1]} : vector<2x32xf32> to vector<1x32xf32>
    %753 = vector.broadcast %752 : vector<1x32xf32> to vector<8x32xf32>
    %754 = arith.mulf %751, %753 : vector<8x32xf32>
    %755 = vector.extract_strided_slice %733 {offsets = [1, 0], sizes = [1, 32], strides = [1, 1]} : vector<2x32xf32> to vector<1x32xf32>
    %756 = vector.broadcast %755 : vector<1x32xf32> to vector<8x32xf32>
    %757 = arith.addf %754, %756 : vector<8x32xf32>
    %c1776 = arith.constant 1776 : index
    %c0_176 = arith.constant 0 : index
    %758 = vector.load %arg0[%c1776, %c0_176] : memref<2144x128xf32, #tpu.memory_space<vmem>>, vector<33x64xf32>
    %759 = vector.extract_strided_slice %758 {offsets = [0, 0], sizes = [32, 64], strides = [1, 1]} : vector<33x64xf32> to vector<32x64xf32>
    %cst_177 = arith.constant dense<0.000000e+00> : vector<8x64xf32>
    %760 = tpu.matmul %757, %759, %cst_177 {dimension_numbers = #tpu.dot_dimension_numbers<[1], [0], [0], [1], [0, 0, 1, 1], [], []>} : vector<8x32xf32>, vector<32x64xf32>, vector<8x64xf32> -> vector<8x64xf32>
    %761 = vector.extract_strided_slice %758 {offsets = [32, 0], sizes = [1, 64], strides = [1, 1]} : vector<33x64xf32> to vector<1x64xf32>
    %762 = vector.broadcast %761 : vector<1x64xf32> to vector<8x64xf32>
    %763 = arith.addf %760, %762 : vector<8x64xf32>
    %764 = vector.extract_strided_slice %763 {offsets = [0, 0], sizes = [8, 32], strides = [1, 1]} : vector<8x64xf32> to vector<8x32xf32>
    %765 = arith.negf %764 : vector<8x32xf32>
    %766 = math.exp %765 : vector<8x32xf32>
    %cst_178 = arith.constant 1.000000e+00 : f32
    %767 = vector.broadcast %cst_178 : f32 to vector<8x32xf32>
    %768 = arith.addf %767, %766 : vector<8x32xf32>
    %769 = arith.divf %767, %768 : vector<8x32xf32>
    %770 = vector.extract_strided_slice %763 {offsets = [0, 32], sizes = [8, 32], strides = [1, 1]} : vector<8x64xf32> to vector<8x32xf32>
    %771 = arith.mulf %769, %770 : vector<8x32xf32>
    %772 = arith.addf %660, %771 : vector<8x32xf32>
    %c1832 = arith.constant 1832 : index
    %c0_179 = arith.constant 0 : index
    %773 = vector.load %arg0[%c1832, %c0_179] : memref<2144x128xf32, #tpu.memory_space<vmem>>, vector<2x32xf32>
    %cst_180 = arith.constant dense<0.000000e+00> : vector<8xf32>
    %774 = vector.multi_reduction <add>, %772, %cst_180 [1] : vector<8x32xf32> to vector<8xf32>
    %775 = vector.shape_cast %774 : vector<8xf32> to vector<8x1xf32>
    %cst_181 = arith.constant 3.200000e+01 : f32
    %776 = vector.broadcast %cst_181 : f32 to vector<8x1xf32>
    %777 = arith.divf %775, %776 : vector<8x1xf32>
    %778 = vector.broadcast %777 : vector<8x1xf32> to vector<8x32xf32>
    %779 = arith.subf %772, %778 : vector<8x32xf32>
    %780 = arith.mulf %779, %779 : vector<8x32xf32>
    %cst_182 = arith.constant dense<0.000000e+00> : vector<8xf32>
    %781 = vector.multi_reduction <add>, %780, %cst_182 [1] : vector<8x32xf32> to vector<8xf32>
    %782 = vector.shape_cast %781 : vector<8xf32> to vector<8x1xf32>
    %cst_183 = arith.constant 3.200000e+01 : f32
    %783 = vector.broadcast %cst_183 : f32 to vector<8x1xf32>
    %784 = arith.divf %782, %783 : vector<8x1xf32>
    %785 = vector.broadcast %777 : vector<8x1xf32> to vector<8x32xf32>
    %786 = arith.subf %772, %785 : vector<8x32xf32>
    %cst_184 = arith.constant 9.99999974E-6 : f32
    %787 = vector.broadcast %cst_184 : f32 to vector<8x1xf32>
    %788 = arith.addf %784, %787 : vector<8x1xf32>
    %789 = math.rsqrt %788 : vector<8x1xf32>
    %790 = vector.broadcast %789 : vector<8x1xf32> to vector<8x32xf32>
    %791 = arith.mulf %786, %790 : vector<8x32xf32>
    %792 = vector.extract_strided_slice %773 {offsets = [0, 0], sizes = [1, 32], strides = [1, 1]} : vector<2x32xf32> to vector<1x32xf32>
    %793 = vector.broadcast %792 : vector<1x32xf32> to vector<8x32xf32>
    %794 = arith.mulf %791, %793 : vector<8x32xf32>
    %795 = vector.extract_strided_slice %773 {offsets = [1, 0], sizes = [1, 32], strides = [1, 1]} : vector<2x32xf32> to vector<1x32xf32>
    %796 = vector.broadcast %795 : vector<1x32xf32> to vector<8x32xf32>
    %797 = arith.addf %794, %796 : vector<8x32xf32>
    %c2104 = arith.constant 2104 : index
    %c0_185 = arith.constant 0 : index
    %798 = vector.load %arg0[%c2104, %c0_185] : memref<2144x128xf32, #tpu.memory_space<vmem>>, vector<33x3xf32>
    %799 = vector.extract_strided_slice %798 {offsets = [0, 0], sizes = [32, 3], strides = [1, 1]} : vector<33x3xf32> to vector<32x3xf32>
    %cst_186 = arith.constant dense<0.000000e+00> : vector<8x3xf32>
    %800 = tpu.matmul %797, %799, %cst_186 {dimension_numbers = #tpu.dot_dimension_numbers<[1], [0], [0], [1], [0, 0, 1, 1], [], []>} : vector<8x32xf32>, vector<32x3xf32>, vector<8x3xf32> -> vector<8x3xf32>
    %801 = vector.extract_strided_slice %798 {offsets = [32, 0], sizes = [1, 3], strides = [1, 1]} : vector<33x3xf32> to vector<1x3xf32>
    %802 = vector.broadcast %801 : vector<1x3xf32> to vector<8x3xf32>
    %803 = arith.addf %800, %802 : vector<8x3xf32>
    %804 = vector.shape_cast %803 : vector<8x3xf32> to vector<4x2x3xf32>
    %c0_187 = arith.constant 0 : index
    %c0_188 = arith.constant 0 : index
    %c0_189 = arith.constant 0 : index
    %805 = vector.load %arg3[%c0_187, %c0_188, %c0_189] : memref<4x2x3xf32, #tpu.memory_space<vmem>>, vector<4x2x3xf32>
    tpu.vector_store %arg3[%c0_187, %c0_188, %c0_189], %804 {strides = array<i32>} : memref<4x2x3xf32, #tpu.memory_space<vmem>>, vector<4x2x3xf32>,
    return
  }
}

</mosaic_0001>

<llo_original>
// kernel: tpu_custom_call.1
$region0: #{tpu_custom_call.1}
  #allocation0 [shape = 'u32[]', space=smem, size = 0x4, offset = 0x4, fixed_abs, tag = 'smem constant byte address 0x4 - core index']
  #allocation1 [shape = 'u32[144,128]{1,0:T(1,128)}', space=vmem, size = 0x12000, scoped, tag = 'internal scratch']
  %s0 = inlined_call_operand.hbm [shape: f32[2144,128], index: 0, kind: input, shape index: {}]
  %s1 = inlined_call_operand.vmem [shape: f32[8,2,4], index: 1, kind: input, shape index: {}]
  %s2 = inlined_call_operand.vmem [shape: f32[4,2,3], index: 2, kind: input, shape index: {}]
  %s3 = inlined_call_operand.vmem [shape: f32[4,2,3], index: 3, kind: output, shape index: {}]
  %s4 = sld [smem:[#allocation0]]
  $region26: #{tpu_custom_call.1} parent=0
    _
  %s6 = ssub.s32 1, %s4
  %s7 = scalar_select 0, %s6, %s4
  $region1: #{tpu_custom_call.1} parent=0
    #allocation2 [shape = 'u8[1097728]{0}', space=vmem, size = 0x10c000, scoped, tag = 'input window, operand 0, single buffered']
    #allocation3 [shape = 's32[1]{0}', space=sflag, size = 0x4, scoped, tag = 'scoped memory for tpu_custom_call.1']
    %8 = vsyncpa [#allocation3], 0
    // Predicated region
    $region2: #{tpu_custom_call.1} parent=1 // pred_check
      _
    $region3: #{tpu_custom_call.1} parent=1 // pred_check_branch
      %10 = sbr.rel (0) target = $region5
    $region4: #{tpu_custom_call.1} parent=1 // pred_region
      %s12 = ssub.s32 34304, 34304
      %13 = vsyncadd [#allocation3], %s12
      %s14 = sshll.u32 [#allocation2], 4
      %s15 = int_to_ptr.vmem [resolvable:$true] %s14
      %20 = dma.hbm_to_vmem [thread:$0]  %s0, 34304, %s15, [#allocation3], 128, 128, 8
    $region5: #{tpu_custom_call.1} parent=1 // pred_fallthru
      _
    // Predicated region
    $region6: #{tpu_custom_call.1} parent=1 // pred_check
      _
    $region7: #{tpu_custom_call.1} parent=1 // pred_check_branch
      %22 = sbr.rel (0) target = $region9
    $region8: #{tpu_custom_call.1} parent=1 // pred_region
      _
    $region9: #{tpu_custom_call.1} parent=1 // pred_fallthru
      _
    // Predicated region
    $region10: #{tpu_custom_call.1} parent=1 // pred_check
      _
    $region11: #{tpu_custom_call.1} parent=1 // pred_check_branch
      %24 = sbr.rel (0) target = $region13
    $region12: #{tpu_custom_call.1} parent=1 // pred_region
      _
    $region13: #{tpu_custom_call.1} parent=1 // pred_fallthru
      _
    // Predicated region
    $region14: #{tpu_custom_call.1} parent=1 // pred_check
      _
    $region15: #{tpu_custom_call.1} parent=1 // pred_check_branch
      %26 = sbr.rel (0) target = $region17
    $region16: #{tpu_custom_call.1} parent=1 // pred_region
      %27 = dma.done [#allocation3], 34304
    $region17: #{tpu_custom_call.1} parent=1 // pred_fallthru
      _
    %v28 = vld [vmem:[%s1] sm:$0x3]
    %v29 = vld [vmem:[%s1 + $0x2] sm:$0x3]
    %v30 = vld [vmem:[%s1 + $0x4] sm:$0x3]
    %v31 = vld [vmem:[%s1 + $0x6] sm:$0x3]
    %v32 = vld [vmem:[%s1 + $0x8] sm:$0x3]
    %v33 = vld [vmem:[%s1 + $0xa] sm:$0x3]
    %v34 = vld [vmem:[%s1 + $0xc] sm:$0x3]
    %v35 = vld [vmem:[%s1 + $0xe] sm:$0x3]
    %v36 = vld [vmem:[%s2] sm:$0x3]
    %v37 = vld [vmem:[%s2 + $0x2] sm:$0x3]
    %v38 = vld [vmem:[%s2 + $0x4] sm:$0x3]
    %v39 = vld [vmem:[%s2 + $0x6] sm:$0x3]
    %v40 = vld [vmem:[#allocation2] sm:$0x1f]
    %v41 = vlaneseq
    %v42 = vshrl.u32 %v41, 7
    %v43 = vsub.s32 4, %v42
    %v44 = vrot.slane %v40, %v43
    %v53 = vcombine.low %v28, %v29
    %v54 = vcombine.low %v30, %v31
    %v56 = vunpack.c.l.s4 1983009808
    %v57 = vunpack.c.0.s8 %v56
    %v58 = vlaneseq
    %v59 = vshrl.u32 %v58, 7
    %v60 = vsub.s32 %v57, %v59
    %v61 = vrot.slane %v53, %v60
    %v63 = vunpack.c.l.s4 1983009808
    %v64 = vunpack.c.0.s8 %v63
    %v65 = vlaneseq
    %v66 = vshrl.u32 %v65, 7
    %v67 = vsub.s32 %v64, %v66
    %v68 = vrot.slane %v54, %v67
    %v69 = vcombine.low %v61, %v68
    %v70 = vcombine.low %v32, %v33
    %v71 = vcombine.low %v34, %v35
    %v73 = vunpack.c.l.s4 1983009808
    %v74 = vunpack.c.0.s8 %v73
    %v75 = vlaneseq
    %v76 = vshrl.u32 %v75, 7
    %v77 = vsub.s32 %v74, %v76
    %v78 = vrot.slane %v70, %v77
    %v80 = vunpack.c.l.s4 1983009808
    %v81 = vunpack.c.0.s8 %v80
    %v82 = vlaneseq
    %v83 = vshrl.u32 %v82, 7
    %v84 = vsub.s32 %v81, %v83
    %v85 = vrot.slane %v71, %v84
    %v86 = vcombine.low %v78, %v85
    %vm87 = vcmask 31744
    %v88 = vsel %vm87, %v69, 0
    %v90 = vsel %vm87, %v86, 0
    %vm92 = vcmask 1043456
    %v94 = vsel %vm92, %v40, 0
    %96 = vmatprep.subr.mxu0 0.0
    %97 = vmatpush1.msra.mxu0 0.0
    %98 = vmatprep.subr.mxu0 0.0
    %99 = vmatpush1.msra.mxu0 0.0
    %100 = vmatprep.subr.mxu0 0.0
    %101 = vmatpush1.msra.mxu0 0.0
    %102 = vmatprep.subr.mxu0 0.0
    %103 = vmatpush1.msra.mxu0 0.0
    %104 = vmatprep.subr.mxu0 0.0
    %105 = vmatpush1.msra.mxu0 0.0
    %106 = vmatprep.subr.mxu0 0.0
    %107 = vmatpush1.msra.mxu0 0.0
    %108 = vmatprep.subr.mxu0 0.0
    %109 = vmatpush1.msra.mxu0 0.0
    %110 = vmatprep.subr.mxu0 0.0
    %111 = vmatpush1.msra.mxu0 0.0
    %112 = vmatprep.subr.mxu0 0.0
    %113 = vmatpush1.msra.mxu0 0.0
    %114 = vmatprep.subr.mxu0 0.0
    %115 = vmatpush1.msra.mxu0 0.0
    %116 = vmatprep.subr.mxu0 0.0
    %117 = vmatpush1.msra.mxu0 0.0
    %118 = vmatprep.subr.mxu0 0.0
    %119 = vmatpush1.msra.mxu0 0.0
    %120 = vmatprep.subr.mxu0 0.0
    %121 = vmatpush1.msra.mxu0 0.0
    %122 = vmatprep.subr.mxu0 0.0
    %123 = vmatpush1.msra.mxu0 0.0
    %124 = vmatprep.subr.mxu0 0.0
    %125 = vmatpush1.msra.mxu0 0.0
    %126 = vmatprep.subr.mxu0 0.0
    %127 = vmatpush1.msra.mxu0 %v94
    %128 = vmatprep.subr.mxu0 0.0
    %129 = vmatpush2.msra.mxu0 0.0
    %130 = vmatprep.subr.mxu0 0.0
    %131 = vmatpush2.msra.mxu0 0.0
    %132 = vmatprep.subr.mxu0 0.0
    %133 = vmatpush2.msra.mxu0 0.0
    %134 = vmatprep.subr.mxu0 0.0
    %135 = vmatpush2.msra.mxu0 0.0
    %136 = vmatprep.subr.mxu0 0.0
    %137 = vmatpush2.msra.mxu0 0.0
    %138 = vmatprep.subr.mxu0 0.0
    %139 = vmatpush2.msra.mxu0 0.0
    %140 = vmatprep.subr.mxu0 0.0
    %141 = vmatpush2.msra.mxu0 0.0
    %142 = vmatprep.subr.mxu0 0.0
    %143 = vmatpush2.msra.mxu0 0.0
    %144 = vmatprep.subr.mxu0 0.0
    %145 = vmatpush2.msra.mxu0 0.0
    %146 = vmatprep.subr.mxu0 0.0
    %147 = vmatpush2.msra.mxu0 0.0
    %148 = vmatprep.subr.mxu0 0.0
    %149 = vmatpush2.msra.mxu0 0.0
    %150 = vmatprep.subr.mxu0 0.0
    %151 = vmatpush2.msra.mxu0 0.0
    %152 = vmatprep.subr.mxu0 0.0
    %153 = vmatpush2.msra.mxu0 0.0
    %154 = vmatprep.subr.mxu0 0.0
    %155 = vmatpush2.msra.mxu0 0.0
    %156 = vmatprep.subr.mxu0 0.0
    %157 = vmatpush2.msra.mxu0 0.0
    %158 = vmatprep.subr.mxu0 0.0
    %159 = vmatpush2.msra.mxu0 0.0
    %160 = vmatprep.mubr.f32.mxu0 0.0
    %161 = vmatmul.mubr.f32.gmra.mxu0 %v88
    %v162 = vpop.f32.mrf.mxu0
    %v163 = vadd.f32 %v44, %v162
    %v164 = vpop.f32.mrf.mxu0
    %165 = vmatprep.mubr.f32.mxu0 0.0
    %166 = vmatmul.mubr.f32.gmra.mxu0 %v90
    %v167 = vpop.f32.mrf.mxu0
    %v168 = vadd.f32 %v44, %v167
    %v169 = vpop.f32.mrf.mxu0
    %170 = vdwg.mxu0
    %v171 = vld [vmem:[#allocation2 + $0x10] sm:$0xff]
    %v172 = vld [vmem:[#allocation2 + $0x18] sm:$0xff]
    %v173 = vld [vmem:[#allocation2 + $0x20] sm:$0xff]
    %v174 = vld [vmem:[#allocation2 + $0x28] sm:$0xff]
    %v175 = vld [vmem:[#allocation2 + $0x30] sm:$0xff]
    %v176 = vld [vmem:[#allocation2 + $0x38] sm:$0xff]
    %v177 = vld [vmem:[#allocation2 + $0x40] sm:$0xff]
    %v178 = vld [vmem:[#allocation2 + $0x48] sm:$0xff]
    %v179 = vld [vmem:[#allocation2 + $0x50] sm:$0xff]
    %v180 = vld [vmem:[#allocation2 + $0x58] sm:$0xff]
    %v181 = vld [vmem:[#allocation2 + $0x60] sm:$0xff]
    %v182 = vld [vmem:[#allocation2 + $0x68] sm:$0xff]
    %v183 = vld [vmem:[#allocation2 + $0x70] sm:$0xff]
    %v184 = vld [vmem:[#allocation2 + $0x78] sm:$0xff]
    %v185 = vld [vmem:[#allocation2 + $0x80] sm:$0xff]
    %v186 = vld [vmem:[#allocation2 + $0x88] sm:$0xff]
    %v187 = vld [vmem:[#allocation2 + $0x90] sm:$0x1]
    %v188 = vlaneseq
    %v189 = vshrl.u32 %v188, 7
    %v190 = vsub.s32 0, %v189
    %v191 = vrot.slane %v187, %v190
    %192 = vmatprep.subr.mxu0 0.0
    %193 = vmatpush1.msra.mxu0 %v186
    %194 = vmatprep.subr.mxu0 0.0
    %195 = vmatpush1.msra.mxu0 %v185
    %196 = vmatprep.subr.mxu0 0.0
    %197 = vmatpush1.msra.mxu0 %v184
    %198 = vmatprep.subr.mxu0 0.0
    %199 = vmatpush1.msra.mxu0 %v183
    %200 = vmatprep.subr.mxu0 0.0
    %201 = vmatpush1.msra.mxu0 %v182
    %202 = vmatprep.subr.mxu0 0.0
    %203 = vmatpush1.msra.mxu0 %v181
    %204 = vmatprep.subr.mxu0 0.0
    %205 = vmatpush1.msra.mxu0 %v180
    %206 = vmatprep.subr.mxu0 0.0
    %207 = vmatpush1.msra.mxu0 %v179
    %208 = vmatprep.subr.mxu0 0.0
    %209 = vmatpush1.msra.mxu0 %v178
    %210 = vmatprep.subr.mxu0 0.0
    %211 = vmatpush1.msra.mxu0 %v177
    %212 = vmatprep.subr.mxu0 0.0
    %213 = vmatpush1.msra.mxu0 %v176
    %214 = vmatprep.subr.mxu0 0.0
    %215 = vmatpush1.msra.mxu0 %v175
    %216 = vmatprep.subr.mxu0 0.0
    %217 = vmatpush1.msra.mxu0 %v174
    %218 = vmatprep.subr.mxu0 0.0
    %219 = vmatpush1.msra.mxu0 %v173
    %220 = vmatprep.subr.mxu0 0.0
    %221 = vmatpush1.msra.mxu0 %v172
    %222 = vmatprep.subr.mxu0 0.0
    %223 = vmatpush1.msra.mxu0 %v171
    %224 = vmatprep.subr.mxu0 0.0
    %225 = vmatpush2.msra.mxu0 0.0
    %226 = vmatprep.subr.mxu0 0.0
    %227 = vmatpush2.msra.mxu0 0.0
    %228 = vmatprep.subr.mxu0 0.0
    %229 = vmatpush2.msra.mxu0 0.0
    %230 = vmatprep.subr.mxu0 0.0
    %231 = vmatpush2.msra.mxu0 0.0
    %232 = vmatprep.subr.mxu0 0.0
    %233 = vmatpush2.msra.mxu0 0.0
    %234 = vmatprep.subr.mxu0 0.0
    %235 = vmatpush2.msra.mxu0 0.0
    %236 = vmatprep.subr.mxu0 0.0
    %237 = vmatpush2.msra.mxu0 0.0
    %238 = vmatprep.subr.mxu0 0.0
    %239 = vmatpush2.msra.mxu0 0.0
    %240 = vmatprep.subr.mxu0 0.0
    %241 = vmatpush2.msra.mxu0 0.0
    %242 = vmatprep.subr.mxu0 0.0
    %243 = vmatpush2.msra.mxu0 0.0
    %244 = vmatprep.subr.mxu0 0.0
    %245 = vmatpush2.msra.mxu0 0.0
    %246 = vmatprep.subr.mxu0 0.0
    %247 = vmatpush2.msra.mxu0 0.0
    %248 = vmatprep.subr.mxu0 0.0
    %249 = vmatpush2.msra.mxu0 0.0
    %250 = vmatprep.subr.mxu0 0.0
    %251 = vmatpush2.msra.mxu0 0.0
    %252 = vmatprep.subr.mxu0 0.0
    %253 = vmatpush2.msra.mxu0 0.0
    %254 = vmatprep.subr.mxu0 0.0
    %255 = vmatpush2.msra.mxu0 0.0
    %256 = vmatprep.mubr.f32.mxu0 0.0
    %257 = vmatmul.mubr.f32.gmra.mxu0 %v163
    %v258 = vpop.f32.mrf.mxu0
    %v259 = vadd.f32 %v191, %v258
    %v260 = vpop.f32.mrf.mxu0
    %261 = vmatprep.mubr.f32.mxu0 0.0
    %262 = vmatmul.mubr.f32.gmra.mxu0 %v168
    %v263 = vpop.f32.mrf.mxu0
    %v264 = vadd.f32 %v191, %v263
    %v265 = vpop.f32.mrf.mxu0
    %266 = vdwg.mxu0
    %vm267 = vcmp.gt.f32.partialorder %v259, 0.0
    %vm268 = vcmp.gt.f32.partialorder %v264, 0.0
    %v269 = vmin.f32 %v259, 0.0
    %v270 = vmin.f32 %v264, 0.0
    %v271 = vmul.f32 %v269, 1.442695
    %v272 = vpow.pop %v271
    %v273 = vmul.f32 %v270, 1.442695
    %v274 = vpow.pop %v273
    %v275 = vsub.f32 %v272, 1.0
    %v276 = vsub.f32 %v274, 1.0
    %v277 = vsel %vm267, %v259, %v275
    %v278 = vsel %vm268, %v264, %v276
    %v279 = vld [vmem:[#allocation2 + $0x98] sm:$0xff]
    %v280 = vld [vmem:[#allocation2 + $0xa0] sm:$0xff]
    %v281 = vld [vmem:[#allocation2 + $0xa8] sm:$0xff]
    %v282 = vld [vmem:[#allocation2 + $0xb0] sm:$0xff]
    %v283 = vld [vmem:[#allocation2 + $0xb8] sm:$0x1]
    %v284 = vlaneseq
    %v285 = vshrl.u32 %v284, 7
    %v286 = vsub.s32 0, %v285
    %v287 = vrot.slane %v283, %v286
    %vm288 = vcmask 261120
    %v290 = vsel %vm288, %v277, 0
    %v293 = vsel %vm288, %v278, 0
    %295 = vmatprep.subr.mxu0 0.0
    %296 = vmatpush1.msra.mxu0 0.0
    %297 = vmatprep.subr.mxu0 0.0
    %298 = vmatpush1.msra.mxu0 0.0
    %299 = vmatprep.subr.mxu0 0.0
    %300 = vmatpush1.msra.mxu0 0.0
    %301 = vmatprep.subr.mxu0 0.0
    %302 = vmatpush1.msra.mxu0 0.0
    %303 = vmatprep.subr.mxu0 0.0
    %304 = vmatpush1.msra.mxu0 0.0
    %305 = vmatprep.subr.mxu0 0.0
    %306 = vmatpush1.msra.mxu0 0.0
    %307 = vmatprep.subr.mxu0 0.0
    %308 = vmatpush1.msra.mxu0 0.0
    %309 = vmatprep.subr.mxu0 0.0
    %310 = vmatpush1.msra.mxu0 0.0
    %311 = vmatprep.subr.mxu0 0.0
    %312 = vmatpush1.msra.mxu0 0.0
    %313 = vmatprep.subr.mxu0 0.0
    %314 = vmatpush1.msra.mxu0 0.0
    %315 = vmatprep.subr.mxu0 0.0
    %316 = vmatpush1.msra.mxu0 0.0
    %317 = vmatprep.subr.mxu0 0.0
    %318 = vmatpush1.msra.mxu0 0.0
    %319 = vmatprep.subr.mxu0 0.0
    %320 = vmatpush1.msra.mxu0 %v282
    %321 = vmatprep.subr.mxu0 0.0
    %322 = vmatpush1.msra.mxu0 %v281
    %323 = vmatprep.subr.mxu0 0.0
    %324 = vmatpush1.msra.mxu0 %v280
    %325 = vmatprep.subr.mxu0 0.0
    %326 = vmatpush1.msra.mxu0 %v279
    %327 = vmatprep.subr.mxu0 0.0
    %328 = vmatpush2.msra.mxu0 0.0
    %329 = vmatprep.subr.mxu0 0.0
    %330 = vmatpush2.msra.mxu0 0.0
    %331 = vmatprep.subr.mxu0 0.0
    %332 = vmatpush2.msra.mxu0 0.0
    %333 = vmatprep.subr.mxu0 0.0
    %334 = vmatpush2.msra.mxu0 0.0
    %335 = vmatprep.subr.mxu0 0.0
    %336 = vmatpush2.msra.mxu0 0.0
    %337 = vmatprep.subr.mxu0 0.0
    %338 = vmatpush2.msra.mxu0 0.0
    %339 = vmatprep.subr.mxu0 0.0
    %340 = vmatpush2.msra.mxu0 0.0
    %341 = vmatprep.subr.mxu0 0.0
    %342 = vmatpush2.msra.mxu0 0.0
    %343 = vmatprep.subr.mxu0 0.0
    %344 = vmatpush2.msra.mxu0 0.0
    %345 = vmatprep.subr.mxu0 0.0
    %346 = vmatpush2.msra.mxu0 0.0
    %347 = vmatprep.subr.mxu0 0.0
    %348 = vmatpush2.msra.mxu0 0.0
    %349 = vmatprep.subr.mxu0 0.0
    %350 = vmatpush2.msra.mxu0 0.0
    %351 = vmatprep.subr.mxu0 0.0
    %352 = vmatpush2.msra.mxu0 0.0
    %353 = vmatprep.subr.mxu0 0.0
    %354 = vmatpush2.msra.mxu0 0.0
    %355 = vmatprep.subr.mxu0 0.0
    %356 = vmatpush2.msra.mxu0 0.0
    %357 = vmatprep.subr.mxu0 0.0
    %358 = vmatpush2.msra.mxu0 0.0
    %359 = vmatprep.mubr.f32.mxu0 0.0
    %360 = vmatmul.mubr.f32.gmra.mxu0 %v290
    %v361 = vpop.f32.mrf.mxu0
    %v362 = vadd.f32 %v287, %v361
    %v363 = vpop.f32.mrf.mxu0
    %364 = vmatprep.mubr.f32.mxu0 0.0
    %365 = vmatmul.mubr.f32.gmra.mxu0 %v293
    %v366 = vpop.f32.mrf.mxu0
    %v367 = vadd.f32 %v287, %v366
    %v368 = vpop.f32.mrf.mxu0
    %369 = vdwg.mxu0
    %v370 = vxor.u32 %v362, 2147483648
    %v371 = vxor.u32 %v367, 2147483648
    %v372 = vmul.f32 %v370, 1.442695
    %v373 = vpow.pop %v372
    %v374 = vmul.f32 %v371, 1.442695
    %v375 = vpow.pop %v374
    %v376 = vadd.f32 %v373, 1.0
    %v377 = vadd.f32 %v375, 1.0
    %v378 = vrcp.pop %v376
    %v379 = vmul.f32 1.0, %v378
    %v380 = vrcp.pop %v377
    %v381 = vmul.f32 1.0, %v380
    %384 = vrot.lane.b32.xlu0 %v362, 124
    %v385 = vpop.permute.xlu0 %384
    %386 = vrot.lane.b32.xlu0 %v367, 124
    %v387 = vpop.permute.xlu0 %386
    %v390 = vmul.f32 %v379, %v385
    %v391 = vmul.f32 %v381, %v387
    %394 = vrot.lane.b32.xlu0 %v390, 32
    %v395 = vpop.permute.xlu0 %394
    %396 = vrot.lane.b32.xlu0 %v391, 32
    %v397 = vpop.permute.xlu0 %396
    %v400 = vadd.f32 %v259, %v395
    %v401 = vadd.f32 %v264, %v397
    %v402 = vld [vmem:[#allocation2 + $0xc0] sm:$0x3]
    %405 = vrot.lane.b32.xlu0 %v400, 96
    %v406 = vpop.permute.xlu0 %405
    %407 = vrot.lane.b32.xlu0 %v401, 96
    %v408 = vpop.permute.xlu0 %407
    %v411 = vsel %vm87, %v406, 0.0
    %412 = vadd.xlane.f32.xlu0 %v411
    %v413 = vpop.xlane.xlu0 %412
    %v414 = vsel %vm87, %v408, 0.0
    %415 = vadd.xlane.f32.xlu0 %v414
    %v416 = vpop.xlane.xlu0 %415
    %v417 = vrcp.pop 4.0
    %v418 = vmul.f32 %v413, %v417
    %v419 = vmul.f32 %v416, %v417
    %v420 = vsub.f32 %v400, %v418
    %v421 = vsub.f32 %v401, %v419
    %v422 = vmul.f32 %v420, %v420
    %v423 = vmul.f32 %v421, %v421
    %426 = vrot.lane.b32.xlu0 %v422, 96
    %v427 = vpop.permute.xlu0 %426
    %428 = vrot.lane.b32.xlu0 %v423, 96
    %v429 = vpop.permute.xlu0 %428
    %v432 = vsel %vm87, %v427, 0.0
    %433 = vadd.xlane.f32.xlu0 %v432
    %v434 = vpop.xlane.xlu0 %433
    %v435 = vsel %vm87, %v429, 0.0
    %436 = vadd.xlane.f32.xlu0 %v435
    %v437 = vpop.xlane.xlu0 %436
    %v438 = vmul.f32 %v434, %v417
    %v439 = vmul.f32 %v437, %v417
    %v440 = vadd.f32 %v438, 1e-05
    %v441 = vadd.f32 %v439, 1e-05
    %v442 = vrsqrt.pop %v440
    %v443 = vrsqrt.pop %v441
    %v444 = vmul.f32 %v420, %v442
    %v445 = vmul.f32 %v421, %v443
    %v446 = vlaneseq
    %v447 = vshrl.u32 %v446, 7
    %v448 = vsub.s32 0, %v447
    %v449 = vrot.slane %v402, %v448
    %451 = vrot.lane.b32.xlu0 %v449, 32
    %v452 = vpop.permute.xlu0 %451
    %v454 = vmul.f32 %v444, %v452
    %v455 = vmul.f32 %v445, %v452
    %v456 = vlaneseq
    %v457 = vshrl.u32 %v456, 7
    %v458 = vsub.s32 1, %v457
    %v459 = vrot.slane %v402, %v458
    %461 = vrot.lane.b32.xlu0 %v459, 32
    %v462 = vpop.permute.xlu0 %461
    %v464 = vadd.f32 %v454, %v462
    %v465 = vadd.f32 %v455, %v462
    %vm466 = vcmask 294144
    %v467 = vsel %vm466, %v464, -inf
    %468 = vmax.xlane.f32.xlu0 %v467
    %v469 = vpop.xlane.xlu0 %468
    %v470 = vsel %vm466, %v465, -inf
    %471 = vmax.xlane.f32.xlu0 %v470
    %v472 = vpop.xlane.xlu0 %471
    %v473 = vsub.f32 %v464, %v469
    %v474 = vsub.f32 %v465, %v472
    %v475 = vmul.f32 %v473, 1.442695
    %v476 = vpow.pop %v475
    %v477 = vmul.f32 %v474, 1.442695
    %v478 = vpow.pop %v477
    %481 = vrot.lane.b32.xlu0 %v476, 96
    %v482 = vpop.permute.xlu0 %481
    %483 = vrot.lane.b32.xlu0 %v478, 96
    %v484 = vpop.permute.xlu0 %483
    %v487 = vsel %vm87, %v482, 0.0
    %488 = vadd.xlane.f32.xlu0 %v487
    %v489 = vpop.xlane.xlu0 %488
    %v490 = vsel %vm87, %v484, 0.0
    %491 = vadd.xlane.f32.xlu0 %v490
    %v492 = vpop.xlane.xlu0 %491
    %v493 = vrcp.pop %v489
    %v494 = vrcp.pop %v492
    %v495 = vmul.f32 %v476, %v493
    %v496 = vmul.f32 %v478, %v494
    %v497 = vld [vmem:[#allocation2 + $0xc8] sm:$0xff]
    %v498 = vld [vmem:[#allocation2 + $0xd0] sm:$0xff]
    %v499 = vld [vmem:[#allocation2 + $0xd8] sm:$0xff]
    %v500 = vld [vmem:[#allocation2 + $0xe0] sm:$0xff]
    %v501 = vld [vmem:[#allocation2 + $0xe8] sm:$0xff]
    %v502 = vld [vmem:[#allocation2 + $0xf0] sm:$0xff]
    %v503 = vld [vmem:[#allocation2 + $0xf8] sm:$0xff]
    %v504 = vld [vmem:[#allocation2 + $0x100] sm:$0xff]
    %v505 = vld [vmem:[#allocation2 + $0x108] sm:$0xff]
    %v506 = vld [vmem:[#allocation2 + $0x110] sm:$0xff]
    %v507 = vld [vmem:[#allocation2 + $0x118] sm:$0xff]
    %v508 = vld [vmem:[#allocation2 + $0x120] sm:$0xff]
    %v509 = vld [vmem:[#allocation2 + $0x128] sm:$0xff]
    %v510 = vld [vmem:[#allocation2 + $0x130] sm:$0xff]
    %v511 = vld [vmem:[#allocation2 + $0x138] sm:$0xff]
    %v512 = vld [vmem:[#allocation2 + $0x140] sm:$0xff]
    %v513 = vld [vmem:[#allocation2 + $0x148] sm:$0x1]
    %v514 = vlaneseq
    %v515 = vshrl.u32 %v514, 7
    %v516 = vsub.s32 0, %v515
    %v517 = vrot.slane %v513, %v516
    %518 = vmatprep.subr.mxu0 0.0
    %519 = vmatpush1.msra.mxu0 %v512
    %520 = vmatprep.subr.mxu0 0.0
    %521 = vmatpush1.msra.mxu0 %v511
    %522 = vmatprep.subr.mxu0 0.0
    %523 = vmatpush1.msra.mxu0 %v510
    %524 = vmatprep.subr.mxu0 0.0
    %525 = vmatpush1.msra.mxu0 %v509
    %526 = vmatprep.subr.mxu0 0.0
    %527 = vmatpush1.msra.mxu0 %v508
    %528 = vmatprep.subr.mxu0 0.0
    %529 = vmatpush1.msra.mxu0 %v507
    %530 = vmatprep.subr.mxu0 0.0
    %531 = vmatpush1.msra.mxu0 %v506
    %532 = vmatprep.subr.mxu0 0.0
    %533 = vmatpush1.msra.mxu0 %v505
    %534 = vmatprep.subr.mxu0 0.0
    %535 = vmatpush1.msra.mxu0 %v504
    %536 = vmatprep.subr.mxu0 0.0
    %537 = vmatpush1.msra.mxu0 %v503
    %538 = vmatprep.subr.mxu0 0.0
    %539 = vmatpush1.msra.mxu0 %v502
    %540 = vmatprep.subr.mxu0 0.0
    %541 = vmatpush1.msra.mxu0 %v501
    %542 = vmatprep.subr.mxu0 0.0
    %543 = vmatpush1.msra.mxu0 %v500
    %544 = vmatprep.subr.mxu0 0.0
    %545 = vmatpush1.msra.mxu0 %v499
    %546 = vmatprep.subr.mxu0 0.0
    %547 = vmatpush1.msra.mxu0 %v498
    %548 = vmatprep.subr.mxu0 0.0
    %549 = vmatpush1.msra.mxu0 %v497
    %550 = vmatprep.subr.mxu0 0.0
    %551 = vmatpush2.msra.mxu0 0.0
    %552 = vmatprep.subr.mxu0 0.0
    %553 = vmatpush2.msra.mxu0 0.0
    %554 = vmatprep.subr.mxu0 0.0
    %555 = vmatpush2.msra.mxu0 0.0
    %556 = vmatprep.subr.mxu0 0.0
    %557 = vmatpush2.msra.mxu0 0.0
    %558 = vmatprep.subr.mxu0 0.0
    %559 = vmatpush2.msra.mxu0 0.0
    %560 = vmatprep.subr.mxu0 0.0
    %561 = vmatpush2.msra.mxu0 0.0
    %562 = vmatprep.subr.mxu0 0.0
    %563 = vmatpush2.msra.mxu0 0.0
    %564 = vmatprep.subr.mxu0 0.0
    %565 = vmatpush2.msra.mxu0 0.0
    %566 = vmatprep.subr.mxu0 0.0
    %567 = vmatpush2.msra.mxu0 0.0
    %568 = vmatprep.subr.mxu0 0.0
    %569 = vmatpush2.msra.mxu0 0.0
    %570 = vmatprep.subr.mxu0 0.0
    %571 = vmatpush2.msra.mxu0 0.0
    %572 = vmatprep.subr.mxu0 0.0
    %573 = vmatpush2.msra.mxu0 0.0
    %574 = vmatprep.subr.mxu0 0.0
    %575 = vmatpush2.msra.mxu0 0.0
    %576 = vmatprep.subr.mxu0 0.0
    %577 = vmatpush2.msra.mxu0 0.0
    %578 = vmatprep.subr.mxu0 0.0
    %579 = vmatpush2.msra.mxu0 0.0
    %580 = vmatprep.subr.mxu0 0.0
    %581 = vmatpush2.msra.mxu0 0.0
    %582 = vmatprep.mubr.f32.mxu0 0.0
    %583 = vmatmul.mubr.f32.gmra.mxu0 %v163
    %v584 = vpop.f32.mrf.mxu0
    %v585 = vadd.f32 %v517, %v584
    %v586 = vpop.f32.mrf.mxu0
    %587 = vmatprep.mubr.f32.mxu0 0.0
    %588 = vmatmul.mubr.f32.gmra.mxu0 %v168
    %v589 = vpop.f32.mrf.mxu0
    %v590 = vadd.f32 %v517, %v589
    %v591 = vpop.f32.mrf.mxu0
    %592 = vdwg.mxu0
    %vm593 = vcmp.gt.f32.partialorder %v585, 0.0
    %vm594 = vcmp.gt.f32.partialorder %v590, 0.0
    %v595 = vmin.f32 %v585, 0.0
    %v596 = vmin.f32 %v590, 0.0
    %v597 = vmul.f32 %v595, 1.442695
    %v598 = vpow.pop %v597
    %v599 = vmul.f32 %v596, 1.442695
    %v600 = vpow.pop %v599
    %v601 = vsub.f32 %v598, 1.0
    %v602 = vsub.f32 %v600, 1.0
    %v603 = vsel %vm593, %v585, %v601
    %v604 = vsel %vm594, %v590, %v602
    %v605 = vld [vmem:[#allocation2 + $0x150] sm:$0xff]
    %v606 = vld [vmem:[#allocation2 + $0x158] sm:$0xff]
    %v607 = vld [vmem:[#allocation2 + $0x160] sm:$0xff]
    %v608 = vld [vmem:[#allocation2 + $0x168] sm:$0xff]
    %v609 = vld [vmem:[#allocation2 + $0x170] sm:$0xff]
    %v610 = vld [vmem:[#allocation2 + $0x178] sm:$0xff]
    %v611 = vld [vmem:[#allocation2 + $0x180] sm:$0xff]
    %v612 = vld [vmem:[#allocation2 + $0x188] sm:$0xff]
    %v613 = vld [vmem:[#allocation2 + $0x190] sm:$0xff]
    %v614 = vld [vmem:[#allocation2 + $0x198] sm:$0xff]
    %v615 = vld [vmem:[#allocation2 + $0x1a0] sm:$0xff]
    %v616 = vld [vmem:[#allocation2 + $0x1a8] sm:$0xff]
    %v617 = vld [vmem:[#allocation2 + $0x1b0] sm:$0xff]
    %v618 = vld [vmem:[#allocation2 + $0x1b8] sm:$0xff]
    %v619 = vld [vmem:[#allocation2 + $0x1c0] sm:$0xff]
    %v620 = vld [vmem:[#allocation2 + $0x1c8] sm:$0xff]
    %v621 = vld [vmem:[#allocation2 + $0x1d0] sm:$0x1]
    %v622 = vlaneseq
    %v623 = vshrl.u32 %v622, 7
    %v624 = vsub.s32 0, %v623
    %v625 = vrot.slane %v621, %v624
    %626 = vmatprep.subr.mxu0 0.0
    %627 = vmatpush1.msra.mxu0 %v620
    %628 = vmatprep.subr.mxu0 0.0
    %629 = vmatpush1.msra.mxu0 %v619
    %630 = vmatprep.subr.mxu0 0.0
    %631 = vmatpush1.msra.mxu0 %v618
    %632 = vmatprep.subr.mxu0 0.0
    %633 = vmatpush1.msra.mxu0 %v617
    %634 = vmatprep.subr.mxu0 0.0
    %635 = vmatpush1.msra.mxu0 %v616
    %636 = vmatprep.subr.mxu0 0.0
    %637 = vmatpush1.msra.mxu0 %v615
    %638 = vmatprep.subr.mxu0 0.0
    %639 = vmatpush1.msra.mxu0 %v614
    %640 = vmatprep.subr.mxu0 0.0
    %641 = vmatpush1.msra.mxu0 %v613
    %642 = vmatprep.subr.mxu0 0.0
    %643 = vmatpush1.msra.mxu0 %v612
    %644 = vmatprep.subr.mxu0 0.0
    %645 = vmatpush1.msra.mxu0 %v611
    %646 = vmatprep.subr.mxu0 0.0
    %647 = vmatpush1.msra.mxu0 %v610
    %648 = vmatprep.subr.mxu0 0.0
    %649 = vmatpush1.msra.mxu0 %v609
    %650 = vmatprep.subr.mxu0 0.0
    %651 = vmatpush1.msra.mxu0 %v608
    %652 = vmatprep.subr.mxu0 0.0
    %653 = vmatpush1.msra.mxu0 %v607
    %654 = vmatprep.subr.mxu0 0.0
    %655 = vmatpush1.msra.mxu0 %v606
    %656 = vmatprep.subr.mxu0 0.0
    %657 = vmatpush1.msra.mxu0 %v605
    %658 = vmatprep.subr.mxu0 0.0
    %659 = vmatpush2.msra.mxu0 0.0
    %660 = vmatprep.subr.mxu0 0.0
    %661 = vmatpush2.msra.mxu0 0.0
    %662 = vmatprep.subr.mxu0 0.0
    %663 = vmatpush2.msra.mxu0 0.0
    %664 = vmatprep.subr.mxu0 0.0
    %665 = vmatpush2.msra.mxu0 0.0
    %666 = vmatprep.subr.mxu0 0.0
    %667 = vmatpush2.msra.mxu0 0.0
    %668 = vmatprep.subr.mxu0 0.0
    %669 = vmatpush2.msra.mxu0 0.0
    %670 = vmatprep.subr.mxu0 0.0
    %671 = vmatpush2.msra.mxu0 0.0
    %672 = vmatprep.subr.mxu0 0.0
    %673 = vmatpush2.msra.mxu0 0.0
    %674 = vmatprep.subr.mxu0 0.0
    %675 = vmatpush2.msra.mxu0 0.0
    %676 = vmatprep.subr.mxu0 0.0
    %677 = vmatpush2.msra.mxu0 0.0
    %678 = vmatprep.subr.mxu0 0.0
    %679 = vmatpush2.msra.mxu0 0.0
    %680 = vmatprep.subr.mxu0 0.0
    %681 = vmatpush2.msra.mxu0 0.0
    %682 = vmatprep.subr.mxu0 0.0
    %683 = vmatpush2.msra.mxu0 0.0
    %684 = vmatprep.subr.mxu0 0.0
    %685 = vmatpush2.msra.mxu0 0.0
    %686 = vmatprep.subr.mxu0 0.0
    %687 = vmatpush2.msra.mxu0 0.0
    %688 = vmatprep.subr.mxu0 0.0
    %689 = vmatpush2.msra.mxu0 0.0
    %690 = vmatprep.mubr.f32.mxu0 0.0
    %691 = vmatmul.mubr.f32.gmra.mxu0 %v603
    %v692 = vpop.f32.mrf.mxu0
    %v693 = vadd.f32 %v625, %v692
    %v694 = vpop.f32.mrf.mxu0
    %695 = vmatprep.mubr.f32.mxu0 0.0
    %696 = vmatmul.mubr.f32.gmra.mxu0 %v604
    %v697 = vpop.f32.mrf.mxu0
    %v698 = vadd.f32 %v625, %v697
    %v699 = vpop.f32.mrf.mxu0
    %700 = vdwg.mxu0
    %v701 = vxor.u32 %v693, 2147483648
    %v702 = vxor.u32 %v698, 2147483648
    %v703 = vmul.f32 %v701, 1.442695
    %v704 = vpow.pop %v703
    %v705 = vmul.f32 %v702, 1.442695
    %v706 = vpow.pop %v705
    %v707 = vadd.f32 %v704, 1.0
    %v708 = vadd.f32 %v706, 1.0
    %v709 = vrcp.pop %v707
    %v710 = vmul.f32 1.0, %v709
    %v711 = vrcp.pop %v708
    %v712 = vmul.f32 1.0, %v711
    %v713 = vld [vmem:[#allocation2 + $0x1d8] sm:$0xff]
    %v714 = vld [vmem:[#allocation2 + $0x1e0] sm:$0xff]
    %v715 = vld [vmem:[#allocation2 + $0x1e8] sm:$0xff]
    %v716 = vld [vmem:[#allocation2 + $0x1f0] sm:$0xff]
    %v717 = vld [vmem:[#allocation2 + $0x1f8] sm:$0xff]
    %v718 = vld [vmem:[#allocation2 + $0x200] sm:$0xff]
    %v719 = vld [vmem:[#allocation2 + $0x208] sm:$0xff]
    %v720 = vld [vmem:[#allocation2 + $0x210] sm:$0xff]
    %v721 = vld [vmem:[#allocation2 + $0x218] sm:$0xff]
    %v722 = vld [vmem:[#allocation2 + $0x220] sm:$0xff]
    %v723 = vld [vmem:[#allocation2 + $0x228] sm:$0xff]
    %v724 = vld [vmem:[#allocation2 + $0x230] sm:$0xff]
    %v725 = vld [vmem:[#allocation2 + $0x238] sm:$0xff]
    %v726 = vld [vmem:[#allocation2 + $0x240] sm:$0xff]
    %v727 = vld [vmem:[#allocation2 + $0x248] sm:$0xff]
    %v728 = vld [vmem:[#allocation2 + $0x250] sm:$0xff]
    %v729 = vld [vmem:[#allocation2 + $0x258] sm:$0x1]
    %v730 = vlaneseq
    %v731 = vshrl.u32 %v730, 7
    %v732 = vsub.s32 0, %v731
    %v733 = vrot.slane %v729, %v732
    %734 = vmatprep.subr.mxu0 0.0
    %735 = vmatpush1.msra.mxu0 %v728
    %736 = vmatprep.subr.mxu0 0.0
    %737 = vmatpush1.msra.mxu0 %v727
    %738 = vmatprep.subr.mxu0 0.0
    %739 = vmatpush1.msra.mxu0 %v726
    %740 = vmatprep.subr.mxu0 0.0
    %741 = vmatpush1.msra.mxu0 %v725
    %742 = vmatprep.subr.mxu0 0.0
    %743 = vmatpush1.msra.mxu0 %v724
    %744 = vmatprep.subr.mxu0 0.0
    %745 = vmatpush1.msra.mxu0 %v723
    %746 = vmatprep.subr.mxu0 0.0
    %747 = vmatpush1.msra.mxu0 %v722
    %748 = vmatprep.subr.mxu0 0.0
    %749 = vmatpush1.msra.mxu0 %v721
    %750 = vmatprep.subr.mxu0 0.0
    %751 = vmatpush1.msra.mxu0 %v720
    %752 = vmatprep.subr.mxu0 0.0
    %753 = vmatpush1.msra.mxu0 %v719
    %754 = vmatprep.subr.mxu0 0.0
    %755 = vmatpush1.msra.mxu0 %v718
    %756 = vmatprep.subr.mxu0 0.0
    %757 = vmatpush1.msra.mxu0 %v717
    %758 = vmatprep.subr.mxu0 0.0
    %759 = vmatpush1.msra.mxu0 %v716
    %760 = vmatprep.subr.mxu0 0.0
    %761 = vmatpush1.msra.mxu0 %v715
    %762 = vmatprep.subr.mxu0 0.0
    %763 = vmatpush1.msra.mxu0 %v714
    %764 = vmatprep.subr.mxu0 0.0
    %765 = vmatpush1.msra.mxu0 %v713
    %766 = vmatprep.subr.mxu0 0.0
    %767 = vmatpush2.msra.mxu0 0.0
    %768 = vmatprep.subr.mxu0 0.0
    %769 = vmatpush2.msra.mxu0 0.0
    %770 = vmatprep.subr.mxu0 0.0
    %771 = vmatpush2.msra.mxu0 0.0
    %772 = vmatprep.subr.mxu0 0.0
    %773 = vmatpush2.msra.mxu0 0.0
    %774 = vmatprep.subr.mxu0 0.0
    %775 = vmatpush2.msra.mxu0 0.0
    %776 = vmatprep.subr.mxu0 0.0
    %777 = vmatpush2.msra.mxu0 0.0
    %778 = vmatprep.subr.mxu0 0.0
    %779 = vmatpush2.msra.mxu0 0.0
    %780 = vmatprep.subr.mxu0 0.0
    %781 = vmatpush2.msra.mxu0 0.0
    %782 = vmatprep.subr.mxu0 0.0
    %783 = vmatpush2.msra.mxu0 0.0
    %784 = vmatprep.subr.mxu0 0.0
    %785 = vmatpush2.msra.mxu0 0.0
    %786 = vmatprep.subr.mxu0 0.0
    %787 = vmatpush2.msra.mxu0 0.0
    %788 = vmatprep.subr.mxu0 0.0
    %789 = vmatpush2.msra.mxu0 0.0
    %790 = vmatprep.subr.mxu0 0.0
    %791 = vmatpush2.msra.mxu0 0.0
    %792 = vmatprep.subr.mxu0 0.0
    %793 = vmatpush2.msra.mxu0 0.0
    %794 = vmatprep.subr.mxu0 0.0
    %795 = vmatpush2.msra.mxu0 0.0
    %796 = vmatprep.subr.mxu0 0.0
    %797 = vmatpush2.msra.mxu0 0.0
    %798 = vmatprep.mubr.f32.mxu0 0.0
    %799 = vmatmul.mubr.f32.gmra.mxu0 %v603
    %v800 = vpop.f32.mrf.mxu0
    %v801 = vadd.f32 %v733, %v800
    %v802 = vpop.f32.mrf.mxu0
    %803 = vmatprep.mubr.f32.mxu0 0.0
    %804 = vmatmul.mubr.f32.gmra.mxu0 %v604
    %v805 = vpop.f32.mrf.mxu0
    %v806 = vadd.f32 %v733, %v805
    %v807 = vpop.f32.mrf.mxu0
    %808 = vdwg.mxu0
    %v809 = vmul.f32 %v710, %v801
    %v810 = vmul.f32 %v712, %v806
    %v811 = vadd.f32 %v163, %v809
    %v812 = vadd.f32 %v168, %v810
    %v813 = vld [vmem:[#allocation2 + $0x268] sm:$0xff]
    %v814 = vld [vmem:[#allocation2 + $0x270] sm:$0xff]
    %v815 = vld [vmem:[#allocation2 + $0x278] sm:$0xff]
    %v816 = vld [vmem:[#allocation2 + $0x280] sm:$0xff]
    %v817 = vld [vmem:[#allocation2 + $0x288] sm:$0xff]
    %v818 = vld [vmem:[#allocation2 + $0x290] sm:$0xff]
    %v819 = vld [vmem:[#allocation2 + $0x298] sm:$0xff]
    %v820 = vld [vmem:[#allocation2 + $0x2a0] sm:$0xff]
    %v821 = vld [vmem:[#allocation2 + $0x2a8] sm:$0xff]
    %v822 = vld [vmem:[#allocation2 + $0x2b0] sm:$0xff]
    %v823 = vld [vmem:[#allocation2 + $0x2b8] sm:$0xff]
    %v824 = vld [vmem:[#allocation2 + $0x2c0] sm:$0xff]
    %v825 = vld [vmem:[#allocation2 + $0x2c8] sm:$0xff]
    %v826 = vld [vmem:[#allocation2 + $0x2d0] sm:$0xff]
    %v827 = vld [vmem:[#allocation2 + $0x2d8] sm:$0xff]
    %v828 = vld [vmem:[#allocation2 + $0x2e0] sm:$0xff]
    %829 = vmatprep.subr.mxu0 0.0
    %830 = vmatpush1.msra.mxu0 %v828
    %831 = vmatprep.subr.mxu0 0.0
    %832 = vmatpush1.msra.mxu0 %v827
    %833 = vmatprep.subr.mxu0 0.0
    %834 = vmatpush1.msra.mxu0 %v826
    %835 = vmatprep.subr.mxu0 0.0
    %836 = vmatpush1.msra.mxu0 %v825
    %837 = vmatprep.subr.mxu0 0.0
    %838 = vmatpush1.msra.mxu0 %v824
    %839 = vmatprep.subr.mxu0 0.0
    %840 = vmatpush1.msra.mxu0 %v823
    %841 = vmatprep.subr.mxu0 0.0
    %842 = vmatpush1.msra.mxu0 %v822
    %843 = vmatprep.subr.mxu0 0.0
    %844 = vmatpush1.msra.mxu0 %v821
    %845 = vmatprep.subr.mxu0 0.0
    %846 = vmatpush1.msra.mxu0 %v820
    %847 = vmatprep.subr.mxu0 0.0
    %848 = vmatpush1.msra.mxu0 %v819
    %849 = vmatprep.subr.mxu0 0.0
    %850 = vmatpush1.msra.mxu0 %v818
    %851 = vmatprep.subr.mxu0 0.0
    %852 = vmatpush1.msra.mxu0 %v817
    %853 = vmatprep.subr.mxu0 0.0
    %854 = vmatpush1.msra.mxu0 %v816
    %855 = vmatprep.subr.mxu0 0.0
    %856 = vmatpush1.msra.mxu0 %v815
    %857 = vmatprep.subr.mxu0 0.0
    %858 = vmatpush1.msra.mxu0 %v814
    %859 = vmatprep.subr.mxu0 0.0
    %860 = vmatpush1.msra.mxu0 %v813
    %861 = vmatprep.subr.mxu0 0.0
    %862 = vmatpush2.msra.mxu0 0.0
    %863 = vmatprep.subr.mxu0 0.0
    %864 = vmatpush2.msra.mxu0 0.0
    %865 = vmatprep.subr.mxu0 0.0
    %866 = vmatpush2.msra.mxu0 0.0
    %867 = vmatprep.subr.mxu0 0.0
    %868 = vmatpush2.msra.mxu0 0.0
    %869 = vmatprep.subr.mxu0 0.0
    %870 = vmatpush2.msra.mxu0 0.0
    %871 = vmatprep.subr.mxu0 0.0
    %872 = vmatpush2.msra.mxu0 0.0
    %873 = vmatprep.subr.mxu0 0.0
    %874 = vmatpush2.msra.mxu0 0.0
    %875 = vmatprep.subr.mxu0 0.0
    %876 = vmatpush2.msra.mxu0 0.0
    %877 = vmatprep.subr.mxu0 0.0
    %878 = vmatpush2.msra.mxu0 0.0
    %879 = vmatprep.subr.mxu0 0.0
    %880 = vmatpush2.msra.mxu0 0.0
    %881 = vmatprep.subr.mxu0 0.0
    %882 = vmatpush2.msra.mxu0 0.0
    %883 = vmatprep.subr.mxu0 0.0
    %884 = vmatpush2.msra.mxu0 0.0
    %885 = vmatprep.subr.mxu0 0.0
    %886 = vmatpush2.msra.mxu0 0.0
    %887 = vmatprep.subr.mxu0 0.0
    %888 = vmatpush2.msra.mxu0 0.0
    %889 = vmatprep.subr.mxu0 0.0
    %890 = vmatpush2.msra.mxu0 0.0
    %891 = vmatprep.subr.mxu0 0.0
    %892 = vmatpush2.msra.mxu0 0.0
    %893 = vmatprep.mubr.f32.mxu0 0.0
    %894 = vmatmul.mubr.f32.gmra.mxu0 %v811
    %v895 = vpop.f32.mrf.mxu0
    %v896 = vadd.f32 0.0, %v895
    %v897 = vpop.f32.mrf.mxu0
    %898 = vmatprep.mubr.f32.mxu0 0.0
    %899 = vmatmul.mubr.f32.gmra.mxu0 %v812
    %v900 = vpop.f32.mrf.mxu0
    %v901 = vadd.f32 0.0, %v900
    %v902 = vpop.f32.mrf.mxu0
    %903 = vdwg.mxu0
    %v904 = vsub.f32 %v811, %v896
    %v905 = vsub.f32 %v812, %v901
    %v906 = vmul.f32 %v904, %v904
    %v907 = vmul.f32 %v905, %v905
    %v908 = vld [vmem:[#allocation2 + $0x260] sm:$0x3]
    %909 = vmatprep.subr.mxu0 0.0
    %910 = vmatpush1.msra.mxu0 %v828
    %911 = vmatprep.subr.mxu0 0.0
    %912 = vmatpush1.msra.mxu0 %v827
    %913 = vmatprep.subr.mxu0 0.0
    %914 = vmatpush1.msra.mxu0 %v826
    %915 = vmatprep.subr.mxu0 0.0
    %916 = vmatpush1.msra.mxu0 %v825
    %917 = vmatprep.subr.mxu0 0.0
    %918 = vmatpush1.msra.mxu0 %v824
    %919 = vmatprep.subr.mxu0 0.0
    %920 = vmatpush1.msra.mxu0 %v823
    %921 = vmatprep.subr.mxu0 0.0
    %922 = vmatpush1.msra.mxu0 %v822
    %923 = vmatprep.subr.mxu0 0.0
    %924 = vmatpush1.msra.mxu0 %v821
    %925 = vmatprep.subr.mxu0 0.0
    %926 = vmatpush1.msra.mxu0 %v820
    %927 = vmatprep.subr.mxu0 0.0
    %928 = vmatpush1.msra.mxu0 %v819
    %929 = vmatprep.subr.mxu0 0.0
    %930 = vmatpush1.msra.mxu0 %v818
    %931 = vmatprep.subr.mxu0 0.0
    %932 = vmatpush1.msra.mxu0 %v817
    %933 = vmatprep.subr.mxu0 0.0
    %934 = vmatpush1.msra.mxu0 %v816
    %935 = vmatprep.subr.mxu0 0.0
    %936 = vmatpush1.msra.mxu0 %v815
    %937 = vmatprep.subr.mxu0 0.0
    %938 = vmatpush1.msra.mxu0 %v814
    %939 = vmatprep.subr.mxu0 0.0
    %940 = vmatpush1.msra.mxu0 %v813
    %941 = vmatprep.subr.mxu0 0.0
    %942 = vmatpush2.msra.mxu0 0.0
    %943 = vmatprep.subr.mxu0 0.0
    %944 = vmatpush2.msra.mxu0 0.0
    %945 = vmatprep.subr.mxu0 0.0
    %946 = vmatpush2.msra.mxu0 0.0
    %947 = vmatprep.subr.mxu0 0.0
    %948 = vmatpush2.msra.mxu0 0.0
    %949 = vmatprep.subr.mxu0 0.0
    %950 = vmatpush2.msra.mxu0 0.0
    %951 = vmatprep.subr.mxu0 0.0
    %952 = vmatpush2.msra.mxu0 0.0
    %953 = vmatprep.subr.mxu0 0.0
    %954 = vmatpush2.msra.mxu0 0.0
    %955 = vmatprep.subr.mxu0 0.0
    %956 = vmatpush2.msra.mxu0 0.0
    %957 = vmatprep.subr.mxu0 0.0
    %958 = vmatpush2.msra.mxu0 0.0
    %959 = vmatprep.subr.mxu0 0.0
    %960 = vmatpush2.msra.mxu0 0.0
    %961 = vmatprep.subr.mxu0 0.0
    %962 = vmatpush2.msra.mxu0 0.0
    %963 = vmatprep.subr.mxu0 0.0
    %964 = vmatpush2.msra.mxu0 0.0
    %965 = vmatprep.subr.mxu0 0.0
    %966 = vmatpush2.msra.mxu0 0.0
    %967 = vmatprep.subr.mxu0 0.0
    %968 = vmatpush2.msra.mxu0 0.0
    %969 = vmatprep.subr.mxu0 0.0
    %970 = vmatpush2.msra.mxu0 0.0
    %971 = vmatprep.subr.mxu0 0.0
    %972 = vmatpush2.msra.mxu0 0.0
    %973 = vmatprep.mubr.f32.mxu0 0.0
    %974 = vmatmul.mubr.f32.gmra.mxu0 %v906
    %v975 = vpop.f32.mrf.mxu0
    %v976 = vadd.f32 1e-05, %v975
    %v977 = vpop.f32.mrf.mxu0
    %978 = vmatprep.mubr.f32.mxu0 0.0
    %979 = vmatmul.mubr.f32.gmra.mxu0 %v907
    %v980 = vpop.f32.mrf.mxu0
    %v981 = vadd.f32 1e-05, %v980
    %v982 = vpop.f32.mrf.mxu0
    %983 = vdwg.mxu0
    %v984 = vrsqrt.pop %v976
    %v985 = vrsqrt.pop %v981
    %v986 = vmul.f32 %v904, %v984
    %v987 = vmul.f32 %v905, %v985
    %v988 = vlaneseq
    %v989 = vshrl.u32 %v988, 7
    %v990 = vsub.s32 0, %v989
    %v991 = vrot.slane %v908, %v990
    %v992 = vmul.f32 %v986, %v991
    %v993 = vmul.f32 %v987, %v991
    %v994 = vlaneseq
    %v995 = vshrl.u32 %v994, 7
    %v996 = vsub.s32 1, %v995
    %v997 = vrot.slane %v908, %v996
    %v998 = vadd.f32 %v992, %v997
    %v999 = vadd.f32 %v993, %v997
    %v1000 = vld [vmem:[#allocation2 + $0x2e8] sm:$0xf]
    %1003 = vrot.lane.b32.xlu0 %v495, 96
    %v1004 = vpop.permute.xlu0 %1003
    %1005 = vrot.lane.b32.xlu0 %v496, 96
    %v1006 = vpop.permute.xlu0 %1005
    %v1007 = vsel %vm87, %v1004, 0
    %v1009 = vsel %vm87, %v1006, 0
    %v1012 = vsel %vm92, %v1000, 0
    %1014 = vmatprep.subr.mxu0 0.0
    %1015 = vmatpush1.msra.mxu0 0.0
    %1016 = vmatprep.subr.mxu0 0.0
    %1017 = vmatpush1.msra.mxu0 0.0
    %1018 = vmatprep.subr.mxu0 0.0
    %1019 = vmatpush1.msra.mxu0 0.0
    %1020 = vmatprep.subr.mxu0 0.0
    %1021 = vmatpush1.msra.mxu0 0.0
    %1022 = vmatprep.subr.mxu0 0.0
    %1023 = vmatpush1.msra.mxu0 0.0
    %1024 = vmatprep.subr.mxu0 0.0
    %1025 = vmatpush1.msra.mxu0 0.0
    %1026 = vmatprep.subr.mxu0 0.0
    %1027 = vmatpush1.msra.mxu0 0.0
    %1028 = vmatprep.subr.mxu0 0.0
    %1029 = vmatpush1.msra.mxu0 0.0
    %1030 = vmatprep.subr.mxu0 0.0
    %1031 = vmatpush1.msra.mxu0 0.0
    %1032 = vmatprep.subr.mxu0 0.0
    %1033 = vmatpush1.msra.mxu0 0.0
    %1034 = vmatprep.subr.mxu0 0.0
    %1035 = vmatpush1.msra.mxu0 0.0
    %1036 = vmatprep.subr.mxu0 0.0
    %1037 = vmatpush1.msra.mxu0 0.0
    %1038 = vmatprep.subr.mxu0 0.0
    %1039 = vmatpush1.msra.mxu0 0.0
    %1040 = vmatprep.subr.mxu0 0.0
    %1041 = vmatpush1.msra.mxu0 0.0
    %1042 = vmatprep.subr.mxu0 0.0
    %1043 = vmatpush1.msra.mxu0 0.0
    %1044 = vmatprep.subr.mxu0 0.0
    %1045 = vmatpush1.msra.mxu0 %v1012
    %1046 = vmatprep.subr.mxu0 0.0
    %1047 = vmatpush2.msra.mxu0 0.0
    %1048 = vmatprep.subr.mxu0 0.0
    %1049 = vmatpush2.msra.mxu0 0.0
    %1050 = vmatprep.subr.mxu0 0.0
    %1051 = vmatpush2.msra.mxu0 0.0
    %1052 = vmatprep.subr.mxu0 0.0
    %1053 = vmatpush2.msra.mxu0 0.0
    %1054 = vmatprep.subr.mxu0 0.0
    %1055 = vmatpush2.msra.mxu0 0.0
    %1056 = vmatprep.subr.mxu0 0.0
    %1057 = vmatpush2.msra.mxu0 0.0
    %1058 = vmatprep.subr.mxu0 0.0
    %1059 = vmatpush2.msra.mxu0 0.0
    %1060 = vmatprep.subr.mxu0 0.0
    %1061 = vmatpush2.msra.mxu0 0.0
    %1062 = vmatprep.subr.mxu0 0.0
    %1063 = vmatpush2.msra.mxu0 0.0
    %1064 = vmatprep.subr.mxu0 0.0
    %1065 = vmatpush2.msra.mxu0 0.0
    %1066 = vmatprep.subr.mxu0 0.0
    %1067 = vmatpush2.msra.mxu0 0.0
    %1068 = vmatprep.subr.mxu0 0.0
    %1069 = vmatpush2.msra.mxu0 0.0
    %1070 = vmatprep.subr.mxu0 0.0
    %1071 = vmatpush2.msra.mxu0 0.0
    %1072 = vmatprep.subr.mxu0 0.0
    %1073 = vmatpush2.msra.mxu0 0.0
    %1074 = vmatprep.subr.mxu0 0.0
    %1075 = vmatpush2.msra.mxu0 0.0
    %1076 = vmatprep.subr.mxu0 0.0
    %1077 = vmatpush2.msra.mxu0 0.0
    %1078 = vmatprep.mubr.f32.mxu0 0.0
    %1079 = vmatmul.mubr.f32.gmra.mxu0 %v1007
    %v1080 = vpop.f32.mrf.mxu0
    %v1081 = vadd.f32 0.0, %v1080
    %v1082 = vpop.f32.mrf.mxu0
    %1083 = vmatprep.mubr.f32.mxu0 0.0
    %1084 = vmatmul.mubr.f32.gmra.mxu0 %v1009
    %v1085 = vpop.f32.mrf.mxu0
    %v1086 = vadd.f32 0.0, %v1085
    %v1087 = vpop.f32.mrf.mxu0
    %1088 = vdwg.mxu0
    %v1089 = vmul.f32 %v998, %v1081
    %v1090 = vmul.f32 %v999, %v1086
    %v1091 = vld [vmem:[#allocation2 + $0x2f0] sm:$0xff]
    %v1092 = vld [vmem:[#allocation2 + $0x2f8] sm:$0xff]
    %v1093 = vld [vmem:[#allocation2 + $0x300] sm:$0xff]
    %v1094 = vld [vmem:[#allocation2 + $0x308] sm:$0xff]
    %v1095 = vld [vmem:[#allocation2 + $0x310] sm:$0xff]
    %v1096 = vld [vmem:[#allocation2 + $0x318] sm:$0xff]
    %v1097 = vld [vmem:[#allocation2 + $0x320] sm:$0xff]
    %v1098 = vld [vmem:[#allocation2 + $0x328] sm:$0xff]
    %v1099 = vld [vmem:[#allocation2 + $0x330] sm:$0xff]
    %v1100 = vld [vmem:[#allocation2 + $0x338] sm:$0xff]
    %v1101 = vld [vmem:[#allocation2 + $0x340] sm:$0xff]
    %v1102 = vld [vmem:[#allocation2 + $0x348] sm:$0xff]
    %v1103 = vld [vmem:[#allocation2 + $0x350] sm:$0xff]
    %v1104 = vld [vmem:[#allocation2 + $0x358] sm:$0xff]
    %v1105 = vld [vmem:[#allocation2 + $0x360] sm:$0xff]
    %v1106 = vld [vmem:[#allocation2 + $0x368] sm:$0xff]
    %1107 = vmatprep.subr.mxu0 0.0
    %1108 = vmatpush1.msra.mxu0 %v1106
    %1109 = vmatprep.subr.mxu0 0.0
    %1110 = vmatpush1.msra.mxu0 %v1105
    %1111 = vmatprep.subr.mxu0 0.0
    %1112 = vmatpush1.msra.mxu0 %v1104
    %1113 = vmatprep.subr.mxu0 0.0
    %1114 = vmatpush1.msra.mxu0 %v1103
    %1115 = vmatprep.subr.mxu0 0.0
    %1116 = vmatpush1.msra.mxu0 %v1102
    %1117 = vmatprep.subr.mxu0 0.0
    %1118 = vmatpush1.msra.mxu0 %v1101
    %1119 = vmatprep.subr.mxu0 0.0
    %1120 = vmatpush1.msra.mxu0 %v1100
    %1121 = vmatprep.subr.mxu0 0.0
    %1122 = vmatpush1.msra.mxu0 %v1099
    %1123 = vmatprep.subr.mxu0 0.0
    %1124 = vmatpush1.msra.mxu0 %v1098
    %1125 = vmatprep.subr.mxu0 0.0
    %1126 = vmatpush1.msra.mxu0 %v1097
    %1127 = vmatprep.subr.mxu0 0.0
    %1128 = vmatpush1.msra.mxu0 %v1096
    %1129 = vmatprep.subr.mxu0 0.0
    %1130 = vmatpush1.msra.mxu0 %v1095
    %1131 = vmatprep.subr.mxu0 0.0
    %1132 = vmatpush1.msra.mxu0 %v1094
    %1133 = vmatprep.subr.mxu0 0.0
    %1134 = vmatpush1.msra.mxu0 %v1093
    %1135 = vmatprep.subr.mxu0 0.0
    %1136 = vmatpush1.msra.mxu0 %v1092
    %1137 = vmatprep.subr.mxu0 0.0
    %1138 = vmatpush1.msra.mxu0 %v1091
    %1139 = vmatprep.subr.mxu0 0.0
    %1140 = vmatpush2.msra.mxu0 0.0
    %1141 = vmatprep.subr.mxu0 0.0
    %1142 = vmatpush2.msra.mxu0 0.0
    %1143 = vmatprep.subr.mxu0 0.0
    %1144 = vmatpush2.msra.mxu0 0.0
    %1145 = vmatprep.subr.mxu0 0.0
    %1146 = vmatpush2.msra.mxu0 0.0
    %1147 = vmatprep.subr.mxu0 0.0
    %1148 = vmatpush2.msra.mxu0 0.0
    %1149 = vmatprep.subr.mxu0 0.0
    %1150 = vmatpush2.msra.mxu0 0.0
    %1151 = vmatprep.subr.mxu0 0.0
    %1152 = vmatpush2.msra.mxu0 0.0
    %1153 = vmatprep.subr.mxu0 0.0
    %1154 = vmatpush2.msra.mxu0 0.0
    %1155 = vmatprep.subr.mxu0 0.0
    %1156 = vmatpush2.msra.mxu0 0.0
    %1157 = vmatprep.subr.mxu0 0.0
    %1158 = vmatpush2.msra.mxu0 0.0
    %1159 = vmatprep.subr.mxu0 0.0
    %1160 = vmatpush2.msra.mxu0 0.0
    %1161 = vmatprep.subr.mxu0 0.0
    %1162 = vmatpush2.msra.mxu0 0.0
    %1163 = vmatprep.subr.mxu0 0.0
    %1164 = vmatpush2.msra.mxu0 0.0
    %1165 = vmatprep.subr.mxu0 0.0
    %1166 = vmatpush2.msra.mxu0 0.0
    %1167 = vmatprep.subr.mxu0 0.0
    %1168 = vmatpush2.msra.mxu0 0.0
    %1169 = vmatprep.subr.mxu0 0.0
    %1170 = vmatpush2.msra.mxu0 0.0
    %1171 = vmatprep.mubr.f32.mxu0 0.0
    %1172 = vmatmul.mubr.f32.gmra.mxu0 %v1089
    %v1173 = vpop.f32.mrf.mxu0
    %v1174 = vadd.f32 0.0, %v1173
    %v1175 = vpop.f32.mrf.mxu0
    %1176 = vmatprep.mubr.f32.mxu0 0.0
    %1177 = vmatmul.mubr.f32.gmra.mxu0 %v1090
    %v1178 = vpop.f32.mrf.mxu0
    %v1179 = vadd.f32 0.0, %v1178
    %v1180 = vpop.f32.mrf.mxu0
    %1181 = vdwg.mxu0
    %v1182 = vld [vmem:[#allocation2 + $0x8] sm:$0xf]
    %v1183 = vlaneseq
    %v1184 = vshrl.u32 %v1183, 7
    %v1185 = vsub.s32 3, %v1184
    %v1186 = vrot.slane %v1182, %v1185
    %v1191 = vcombine.low %v36, %v37
    %v1192 = vcombine.low %v38, %v39
    %v1194 = vunpack.c.l.s4 1983009808
    %v1195 = vunpack.c.0.s8 %v1194
    %v1196 = vlaneseq
    %v1197 = vshrl.u32 %v1196, 7
    %v1198 = vsub.s32 %v1195, %v1197
    %v1199 = vrot.slane %v1191, %v1198
    %v1201 = vunpack.c.l.s4 1983009808
    %v1202 = vunpack.c.0.s8 %v1201
    %v1203 = vlaneseq
    %v1204 = vshrl.u32 %v1203, 7
    %v1205 = vsub.s32 %v1202, %v1204
    %v1206 = vrot.slane %v1192, %v1205
    %v1207 = vcombine.low %v1199, %v1206
    %vm1208 = vcmask 23552
    %v1209 = vsel %vm1208, %v1207, 0
    %vm1211 = vcmask 1042432
    %v1213 = vsel %vm1211, %v1182, 0
    %1215 = vmatprep.subr.mxu0 0.0
    %1216 = vmatpush1.msra.mxu0 0.0
    %1217 = vmatprep.subr.mxu0 0.0
    %1218 = vmatpush1.msra.mxu0 0.0
    %1219 = vmatprep.subr.mxu0 0.0
    %1220 = vmatpush1.msra.mxu0 0.0
    %1221 = vmatprep.subr.mxu0 0.0
    %1222 = vmatpush1.msra.mxu0 0.0
    %1223 = vmatprep.subr.mxu0 0.0
    %1224 = vmatpush1.msra.mxu0 0.0
    %1225 = vmatprep.subr.mxu0 0.0
    %1226 = vmatpush1.msra.mxu0 0.0
    %1227 = vmatprep.subr.mxu0 0.0
    %1228 = vmatpush1.msra.mxu0 0.0
    %1229 = vmatprep.subr.mxu0 0.0
    %1230 = vmatpush1.msra.mxu0 0.0
    %1231 = vmatprep.subr.mxu0 0.0
    %1232 = vmatpush1.msra.mxu0 0.0
    %1233 = vmatprep.subr.mxu0 0.0
    %1234 = vmatpush1.msra.mxu0 0.0
    %1235 = vmatprep.subr.mxu0 0.0
    %1236 = vmatpush1.msra.mxu0 0.0
    %1237 = vmatprep.subr.mxu0 0.0
    %1238 = vmatpush1.msra.mxu0 0.0
    %1239 = vmatprep.subr.mxu0 0.0
    %1240 = vmatpush1.msra.mxu0 0.0
    %1241 = vmatprep.subr.mxu0 0.0
    %1242 = vmatpush1.msra.mxu0 0.0
    %1243 = vmatprep.subr.mxu0 0.0
    %1244 = vmatpush1.msra.mxu0 0.0
    %1245 = vmatprep.subr.mxu0 0.0
    %1246 = vmatpush1.msra.mxu0 %v1213
    %1247 = vmatprep.subr.mxu0 0.0
    %1248 = vmatpush2.msra.mxu0 0.0
    %1249 = vmatprep.subr.mxu0 0.0
    %1250 = vmatpush2.msra.mxu0 0.0
    %1251 = vmatprep.subr.mxu0 0.0
    %1252 = vmatpush2.msra.mxu0 0.0
    %1253 = vmatprep.subr.mxu0 0.0
    %1254 = vmatpush2.msra.mxu0 0.0
    %1255 = vmatprep.subr.mxu0 0.0
    %1256 = vmatpush2.msra.mxu0 0.0
    %1257 = vmatprep.subr.mxu0 0.0
    %1258 = vmatpush2.msra.mxu0 0.0
    %1259 = vmatprep.subr.mxu0 0.0
    %1260 = vmatpush2.msra.mxu0 0.0
    %1261 = vmatprep.subr.mxu0 0.0
    %1262 = vmatpush2.msra.mxu0 0.0
    %1263 = vmatprep.subr.mxu0 0.0
    %1264 = vmatpush2.msra.mxu0 0.0
    %1265 = vmatprep.subr.mxu0 0.0
    %1266 = vmatpush2.msra.mxu0 0.0
    %1267 = vmatprep.subr.mxu0 0.0
    %1268 = vmatpush2.msra.mxu0 0.0
    %1269 = vmatprep.subr.mxu0 0.0
    %1270 = vmatpush2.msra.mxu0 0.0
    %1271 = vmatprep.subr.mxu0 0.0
    %1272 = vmatpush2.msra.mxu0 0.0
    %1273 = vmatprep.subr.mxu0 0.0
    %1274 = vmatpush2.msra.mxu0 0.0
    %1275 = vmatprep.subr.mxu0 0.0
    %1276 = vmatpush2.msra.mxu0 0.0
    %1277 = vmatprep.subr.mxu0 0.0
    %1278 = vmatpush2.msra.mxu0 0.0
    %1279 = vmatprep.mubr.f32.mxu0 0.0
    %1280 = vmatmul.mubr.f32.gmra.mxu0 %v1209
    %v1281 = vpop.f32.mrf.mxu0
    %v1282 = vadd.f32 %v1186, %v1281
    %v1283 = vpop.f32.mrf.mxu0
    %1284 = vdwg.mxu0
    %v1285 = vld [vmem:[#allocation2 + $0x370] sm:$0xff]
    %v1286 = vld [vmem:[#allocation2 + $0x378] sm:$0xff]
    %v1287 = vld [vmem:[#allocation2 + $0x380] sm:$0xff]
    %v1288 = vld [vmem:[#allocation2 + $0x388] sm:$0xff]
    %v1289 = vld [vmem:[#allocation2 + $0x390] sm:$0xff]
    %v1290 = vld [vmem:[#allocation2 + $0x398] sm:$0xff]
    %v1291 = vld [vmem:[#allocation2 + $0x3a0] sm:$0xff]
    %v1292 = vld [vmem:[#allocation2 + $0x3a8] sm:$0xff]
    %v1293 = vld [vmem:[#allocation2 + $0x3b0] sm:$0xff]
    %v1294 = vld [vmem:[#allocation2 + $0x3b8] sm:$0xff]
    %v1295 = vld [vmem:[#allocation2 + $0x3c0] sm:$0xff]
    %v1296 = vld [vmem:[#allocation2 + $0x3c8] sm:$0xff]
    %v1297 = vld [vmem:[#allocation2 + $0x3d0] sm:$0x1]
    %v1298 = vlaneseq
    %v1299 = vshrl.u32 %v1298, 7
    %v1300 = vsub.s32 0, %v1299
    %v1301 = vrot.slane %v1297, %v1300
    %vm1302 = vcmask 785408
    %v1304 = vsel %vm1302, %v1282, 0
    %1306 = vmatprep.subr.mxu0 0.0
    %1307 = vmatpush1.msra.mxu0 0.0
    %1308 = vmatprep.subr.mxu0 0.0
    %1309 = vmatpush1.msra.mxu0 0.0
    %1310 = vmatprep.subr.mxu0 0.0
    %1311 = vmatpush1.msra.mxu0 0.0
    %1312 = vmatprep.subr.mxu0 0.0
    %1313 = vmatpush1.msra.mxu0 0.0
    %1314 = vmatprep.subr.mxu0 0.0
    %1315 = vmatpush1.msra.mxu0 %v1296
    %1316 = vmatprep.subr.mxu0 0.0
    %1317 = vmatpush1.msra.mxu0 %v1295
    %1318 = vmatprep.subr.mxu0 0.0
    %1319 = vmatpush1.msra.mxu0 %v1294
    %1320 = vmatprep.subr.mxu0 0.0
    %1321 = vmatpush1.msra.mxu0 %v1293
    %1322 = vmatprep.subr.mxu0 0.0
    %1323 = vmatpush1.msra.mxu0 %v1292
    %1324 = vmatprep.subr.mxu0 0.0
    %1325 = vmatpush1.msra.mxu0 %v1291
    %1326 = vmatprep.subr.mxu0 0.0
    %1327 = vmatpush1.msra.mxu0 %v1290
    %1328 = vmatprep.subr.mxu0 0.0
    %1329 = vmatpush1.msra.mxu0 %v1289
    %1330 = vmatprep.subr.mxu0 0.0
    %1331 = vmatpush1.msra.mxu0 %v1288
    %1332 = vmatprep.subr.mxu0 0.0
    %1333 = vmatpush1.msra.mxu0 %v1287
    %1334 = vmatprep.subr.mxu0 0.0
    %1335 = vmatpush1.msra.mxu0 %v1286
    %1336 = vmatprep.subr.mxu0 0.0
    %1337 = vmatpush1.msra.mxu0 %v1285
    %1338 = vmatprep.subr.mxu0 0.0
    %1339 = vmatpush2.msra.mxu0 0.0
    %1340 = vmatprep.subr.mxu0 0.0
    %1341 = vmatpush2.msra.mxu0 0.0
    %1342 = vmatprep.subr.mxu0 0.0
    %1343 = vmatpush2.msra.mxu0 0.0
    %1344 = vmatprep.subr.mxu0 0.0
    %1345 = vmatpush2.msra.mxu0 0.0
    %1346 = vmatprep.subr.mxu0 0.0
    %1347 = vmatpush2.msra.mxu0 0.0
    %1348 = vmatprep.subr.mxu0 0.0
    %1349 = vmatpush2.msra.mxu0 0.0
    %1350 = vmatprep.subr.mxu0 0.0
    %1351 = vmatpush2.msra.mxu0 0.0
    %1352 = vmatprep.subr.mxu0 0.0
    %1353 = vmatpush2.msra.mxu0 0.0
    %1354 = vmatprep.subr.mxu0 0.0
    %1355 = vmatpush2.msra.mxu0 0.0
    %1356 = vmatprep.subr.mxu0 0.0
    %1357 = vmatpush2.msra.mxu0 0.0
    %1358 = vmatprep.subr.mxu0 0.0
    %1359 = vmatpush2.msra.mxu0 0.0
    %1360 = vmatprep.subr.mxu0 0.0
    %1361 = vmatpush2.msra.mxu0 0.0
    %1362 = vmatprep.subr.mxu0 0.0
    %1363 = vmatpush2.msra.mxu0 0.0
    %1364 = vmatprep.subr.mxu0 0.0
    %1365 = vmatpush2.msra.mxu0 0.0
    %1366 = vmatprep.subr.mxu0 0.0
    %1367 = vmatpush2.msra.mxu0 0.0
    %1368 = vmatprep.subr.mxu0 0.0
    %1369 = vmatpush2.msra.mxu0 0.0
    %1370 = vmatprep.mubr.f32.mxu0 0.0
    %1371 = vmatmul.mubr.f32.gmra.mxu0 %v1304
    %v1372 = vpop.f32.mrf.mxu0
    %v1373 = vadd.f32 %v1301, %v1372
    %v1374 = vpop.f32.mrf.mxu0
    %1375 = vdwg.mxu0
    %vm1376 = vcmp.gt.f32.partialorder %v1373, 0.0
    %v1377 = vmin.f32 %v1373, 0.0
    %v1378 = vmul.f32 %v1377, 1.442695
    %v1379 = vpow.pop %v1378
    %v1380 = vsub.f32 %v1379, 1.0
    %v1381 = vsel %vm1376, %v1373, %v1380
    %v1382 = vld [vmem:[#allocation2 + $0x3d8] sm:$0xff]
    %v1383 = vld [vmem:[#allocation2 + $0x3e0] sm:$0xff]
    %v1384 = vld [vmem:[#allocation2 + $0x3e8] sm:$0xff]
    %v1385 = vld [vmem:[#allocation2 + $0x3f0] sm:$0xff]
    %v1386 = vld [vmem:[#allocation2 + $0x3f8] sm:$0x1]
    %v1387 = vlaneseq
    %v1388 = vshrl.u32 %v1387, 7
    %v1389 = vsub.s32 0, %v1388
    %v1390 = vrot.slane %v1386, %v1389
    %v1392 = vsel %vm288, %v1381, 0
    %1394 = vmatprep.subr.mxu0 0.0
    %1395 = vmatpush1.msra.mxu0 0.0
    %1396 = vmatprep.subr.mxu0 0.0
    %1397 = vmatpush1.msra.mxu0 0.0
    %1398 = vmatprep.subr.mxu0 0.0
    %1399 = vmatpush1.msra.mxu0 0.0
    %1400 = vmatprep.subr.mxu0 0.0
    %1401 = vmatpush1.msra.mxu0 0.0
    %1402 = vmatprep.subr.mxu0 0.0
    %1403 = vmatpush1.msra.mxu0 0.0
    %1404 = vmatprep.subr.mxu0 0.0
    %1405 = vmatpush1.msra.mxu0 0.0
    %1406 = vmatprep.subr.mxu0 0.0
    %1407 = vmatpush1.msra.mxu0 0.0
    %1408 = vmatprep.subr.mxu0 0.0
    %1409 = vmatpush1.msra.mxu0 0.0
    %1410 = vmatprep.subr.mxu0 0.0
    %1411 = vmatpush1.msra.mxu0 0.0
    %1412 = vmatprep.subr.mxu0 0.0
    %1413 = vmatpush1.msra.mxu0 0.0
    %1414 = vmatprep.subr.mxu0 0.0
    %1415 = vmatpush1.msra.mxu0 0.0
    %1416 = vmatprep.subr.mxu0 0.0
    %1417 = vmatpush1.msra.mxu0 0.0
    %1418 = vmatprep.subr.mxu0 0.0
    %1419 = vmatpush1.msra.mxu0 %v1385
    %1420 = vmatprep.subr.mxu0 0.0
    %1421 = vmatpush1.msra.mxu0 %v1384
    %1422 = vmatprep.subr.mxu0 0.0
    %1423 = vmatpush1.msra.mxu0 %v1383
    %1424 = vmatprep.subr.mxu0 0.0
    %1425 = vmatpush1.msra.mxu0 %v1382
    %1426 = vmatprep.subr.mxu0 0.0
    %1427 = vmatpush2.msra.mxu0 0.0
    %1428 = vmatprep.subr.mxu0 0.0
    %1429 = vmatpush2.msra.mxu0 0.0
    %1430 = vmatprep.subr.mxu0 0.0
    %1431 = vmatpush2.msra.mxu0 0.0
    %1432 = vmatprep.subr.mxu0 0.0
    %1433 = vmatpush2.msra.mxu0 0.0
    %1434 = vmatprep.subr.mxu0 0.0
    %1435 = vmatpush2.msra.mxu0 0.0
    %1436 = vmatprep.subr.mxu0 0.0
    %1437 = vmatpush2.msra.mxu0 0.0
    %1438 = vmatprep.subr.mxu0 0.0
    %1439 = vmatpush2.msra.mxu0 0.0
    %1440 = vmatprep.subr.mxu0 0.0
    %1441 = vmatpush2.msra.mxu0 0.0
    %1442 = vmatprep.subr.mxu0 0.0
    %1443 = vmatpush2.msra.mxu0 0.0
    %1444 = vmatprep.subr.mxu0 0.0
    %1445 = vmatpush2.msra.mxu0 0.0
    %1446 = vmatprep.subr.mxu0 0.0
    %1447 = vmatpush2.msra.mxu0 0.0
    %1448 = vmatprep.subr.mxu0 0.0
    %1449 = vmatpush2.msra.mxu0 0.0
    %1450 = vmatprep.subr.mxu0 0.0
    %1451 = vmatpush2.msra.mxu0 0.0
    %1452 = vmatprep.subr.mxu0 0.0
    %1453 = vmatpush2.msra.mxu0 0.0
    %1454 = vmatprep.subr.mxu0 0.0
    %1455 = vmatpush2.msra.mxu0 0.0
    %1456 = vmatprep.subr.mxu0 0.0
    %1457 = vmatpush2.msra.mxu0 0.0
    %1458 = vmatprep.mubr.f32.mxu0 0.0
    %1459 = vmatmul.mubr.f32.gmra.mxu0 %v1392
    %v1460 = vpop.f32.mrf.mxu0
    %v1461 = vadd.f32 %v1390, %v1460
    %v1462 = vpop.f32.mrf.mxu0
    %1463 = vdwg.mxu0
    %v1464 = vxor.u32 %v1461, 2147483648
    %v1465 = vmul.f32 %v1464, 1.442695
    %v1466 = vpow.pop %v1465
    %v1467 = vadd.f32 %v1466, 1.0
    %v1468 = vrcp.pop %v1467
    %v1469 = vmul.f32 1.0, %v1468
    %1471 = vrot.lane.b32.xlu0 %v1461, 125
    %v1472 = vpop.permute.xlu0 %1471
    %v1474 = vmul.f32 %v1469, %v1472
    %1476 = vrot.lane.b32.xlu0 %v1474, 32
    %v1477 = vpop.permute.xlu0 %1476
    %v1479 = vadd.f32 %v1373, %v1477
    %v1480 = vld [vmem:[#allocation2 + $0x400] sm:$0x3]
    %1482 = vrot.lane.b32.xlu0 %v1479, 96
    %v1483 = vpop.permute.xlu0 %1482
    %v1485 = vsel %vm1208, %v1483, 0.0
    %1486 = vadd.xlane.f32.xlu0 %v1485
    %v1487 = vpop.xlane.xlu0 %1486
    %v1488 = vrcp.pop 3.0
    %v1489 = vmul.f32 %v1487, %v1488
    %v1490 = vsub.f32 %v1479, %v1489
    %v1491 = vmul.f32 %v1490, %v1490
    %1493 = vrot.lane.b32.xlu0 %v1491, 96
    %v1494 = vpop.permute.xlu0 %1493
    %v1496 = vsel %vm1208, %v1494, 0.0
    %1497 = vadd.xlane.f32.xlu0 %v1496
    %v1498 = vpop.xlane.xlu0 %1497
    %v1499 = vmul.f32 %v1498, %v1488
    %v1500 = vadd.f32 %v1499, 1e-05
    %v1501 = vrsqrt.pop %v1500
    %v1502 = vmul.f32 %v1490, %v1501
    %v1503 = vlaneseq
    %v1504 = vshrl.u32 %v1503, 7
    %v1505 = vsub.s32 0, %v1504
    %v1506 = vrot.slane %v1480, %v1505
    %1508 = vrot.lane.b32.xlu0 %v1506, 32
    %v1509 = vpop.permute.xlu0 %1508
    %v1511 = vmul.f32 %v1502, %v1509
    %v1512 = vlaneseq
    %v1513 = vshrl.u32 %v1512, 7
    %v1514 = vsub.s32 1, %v1513
    %v1515 = vrot.slane %v1480, %v1514
    %1517 = vrot.lane.b32.xlu0 %v1515, 32
    %v1518 = vpop.permute.xlu0 %1517
    %v1520 = vadd.f32 %v1511, %v1518
    %vm1521 = vcmask 285952
    %v1522 = vsel %vm1521, %v1520, -inf
    %1523 = vmax.xlane.f32.xlu0 %v1522
    %v1524 = vpop.xlane.xlu0 %1523
    %v1525 = vsub.f32 %v1520, %v1524
    %v1526 = vmul.f32 %v1525, 1.442695
    %v1527 = vpow.pop %v1526
    %1529 = vrot.lane.b32.xlu0 %v1527, 96
    %v1530 = vpop.permute.xlu0 %1529
    %v1532 = vsel %vm1208, %v1530, 0.0
    %1533 = vadd.xlane.f32.xlu0 %v1532
    %v1534 = vpop.xlane.xlu0 %1533
    %v1535 = vrcp.pop %v1534
    %v1536 = vmul.f32 %v1527, %v1535
    %v1537 = vld [vmem:[#allocation2 + $0x408] sm:$0xff]
    %v1538 = vld [vmem:[#allocation2 + $0x410] sm:$0xff]
    %v1539 = vld [vmem:[#allocation2 + $0x418] sm:$0xff]
    %v1540 = vld [vmem:[#allocation2 + $0x420] sm:$0xff]
    %v1541 = vld [vmem:[#allocation2 + $0x428] sm:$0xff]
    %v1542 = vld [vmem:[#allocation2 + $0x430] sm:$0xff]
    %v1543 = vld [vmem:[#allocation2 + $0x438] sm:$0xff]
    %v1544 = vld [vmem:[#allocation2 + $0x440] sm:$0xff]
    %v1545 = vld [vmem:[#allocation2 + $0x448] sm:$0xff]
    %v1546 = vld [vmem:[#allocation2 + $0x450] sm:$0xff]
    %v1547 = vld [vmem:[#allocation2 + $0x458] sm:$0xff]
    %v1548 = vld [vmem:[#allocation2 + $0x460] sm:$0xff]
    %v1549 = vld [vmem:[#allocation2 + $0x468] sm:$0x1]
    %v1550 = vlaneseq
    %v1551 = vshrl.u32 %v1550, 7
    %v1552 = vsub.s32 0, %v1551
    %v1553 = vrot.slane %v1549, %v1552
    %1554 = vmatprep.subr.mxu0 0.0
    %1555 = vmatpush1.msra.mxu0 0.0
    %1556 = vmatprep.subr.mxu0 0.0
    %1557 = vmatpush1.msra.mxu0 0.0
    %1558 = vmatprep.subr.mxu0 0.0
    %1559 = vmatpush1.msra.mxu0 0.0
    %1560 = vmatprep.subr.mxu0 0.0
    %1561 = vmatpush1.msra.mxu0 0.0
    %1562 = vmatprep.subr.mxu0 0.0
    %1563 = vmatpush1.msra.mxu0 %v1548
    %1564 = vmatprep.subr.mxu0 0.0
    %1565 = vmatpush1.msra.mxu0 %v1547
    %1566 = vmatprep.subr.mxu0 0.0
    %1567 = vmatpush1.msra.mxu0 %v1546
    %1568 = vmatprep.subr.mxu0 0.0
    %1569 = vmatpush1.msra.mxu0 %v1545
    %1570 = vmatprep.subr.mxu0 0.0
    %1571 = vmatpush1.msra.mxu0 %v1544
    %1572 = vmatprep.subr.mxu0 0.0
    %1573 = vmatpush1.msra.mxu0 %v1543
    %1574 = vmatprep.subr.mxu0 0.0
    %1575 = vmatpush1.msra.mxu0 %v1542
    %1576 = vmatprep.subr.mxu0 0.0
    %1577 = vmatpush1.msra.mxu0 %v1541
    %1578 = vmatprep.subr.mxu0 0.0
    %1579 = vmatpush1.msra.mxu0 %v1540
    %1580 = vmatprep.subr.mxu0 0.0
    %1581 = vmatpush1.msra.mxu0 %v1539
    %1582 = vmatprep.subr.mxu0 0.0
    %1583 = vmatpush1.msra.mxu0 %v1538
    %1584 = vmatprep.subr.mxu0 0.0
    %1585 = vmatpush1.msra.mxu0 %v1537
    %1586 = vmatprep.subr.mxu0 0.0
    %1587 = vmatpush2.msra.mxu0 0.0
    %1588 = vmatprep.subr.mxu0 0.0
    %1589 = vmatpush2.msra.mxu0 0.0
    %1590 = vmatprep.subr.mxu0 0.0
    %1591 = vmatpush2.msra.mxu0 0.0
    %1592 = vmatprep.subr.mxu0 0.0
    %1593 = vmatpush2.msra.mxu0 0.0
    %1594 = vmatprep.subr.mxu0 0.0
    %1595 = vmatpush2.msra.mxu0 0.0
    %1596 = vmatprep.subr.mxu0 0.0
    %1597 = vmatpush2.msra.mxu0 0.0
    %1598 = vmatprep.subr.mxu0 0.0
    %1599 = vmatpush2.msra.mxu0 0.0
    %1600 = vmatprep.subr.mxu0 0.0
    %1601 = vmatpush2.msra.mxu0 0.0
    %1602 = vmatprep.subr.mxu0 0.0
    %1603 = vmatpush2.msra.mxu0 0.0
    %1604 = vmatprep.subr.mxu0 0.0
    %1605 = vmatpush2.msra.mxu0 0.0
    %1606 = vmatprep.subr.mxu0 0.0
    %1607 = vmatpush2.msra.mxu0 0.0
    %1608 = vmatprep.subr.mxu0 0.0
    %1609 = vmatpush2.msra.mxu0 0.0
    %1610 = vmatprep.subr.mxu0 0.0
    %1611 = vmatpush2.msra.mxu0 0.0
    %1612 = vmatprep.subr.mxu0 0.0
    %1613 = vmatpush2.msra.mxu0 0.0
    %1614 = vmatprep.subr.mxu0 0.0
    %1615 = vmatpush2.msra.mxu0 0.0
    %1616 = vmatprep.subr.mxu0 0.0
    %1617 = vmatpush2.msra.mxu0 0.0
    %1618 = vmatprep.mubr.f32.mxu0 0.0
    %1619 = vmatmul.mubr.f32.gmra.mxu0 %v1304
    %v1620 = vpop.f32.mrf.mxu0
    %v1621 = vadd.f32 %v1553, %v1620
    %v1622 = vpop.f32.mrf.mxu0
    %1623 = vdwg.mxu0
    %vm1624 = vcmp.gt.f32.partialorder %v1621, 0.0
    %v1625 = vmin.f32 %v1621, 0.0
    %v1626 = vmul.f32 %v1625, 1.442695
    %v1627 = vpow.pop %v1626
    %v1628 = vsub.f32 %v1627, 1.0
    %v1629 = vsel %vm1624, %v1621, %v1628
    %v1630 = vld [vmem:[#allocation2 + $0x470] sm:$0xff]
    %v1631 = vld [vmem:[#allocation2 + $0x478] sm:$0xff]
    %v1632 = vld [vmem:[#allocation2 + $0x480] sm:$0xff]
    %v1633 = vld [vmem:[#allocation2 + $0x488] sm:$0xff]
    %v1634 = vld [vmem:[#allocation2 + $0x490] sm:$0xff]
    %v1635 = vld [vmem:[#allocation2 + $0x498] sm:$0xff]
    %v1636 = vld [vmem:[#allocation2 + $0x4a0] sm:$0xff]
    %v1637 = vld [vmem:[#allocation2 + $0x4a8] sm:$0xff]
    %v1638 = vld [vmem:[#allocation2 + $0x4b0] sm:$0xff]
    %v1639 = vld [vmem:[#allocation2 + $0x4b8] sm:$0xff]
    %v1640 = vld [vmem:[#allocation2 + $0x4c0] sm:$0xff]
    %v1641 = vld [vmem:[#allocation2 + $0x4c8] sm:$0xff]
    %v1642 = vld [vmem:[#allocation2 + $0x4d0] sm:$0x1]
    %v1643 = vlaneseq
    %v1644 = vshrl.u32 %v1643, 7
    %v1645 = vsub.s32 0, %v1644
    %v1646 = vrot.slane %v1642, %v1645
    %v1648 = vsel %vm1302, %v1629, 0
    %1650 = vmatprep.subr.mxu0 0.0
    %1651 = vmatpush1.msra.mxu0 0.0
    %1652 = vmatprep.subr.mxu0 0.0
    %1653 = vmatpush1.msra.mxu0 0.0
    %1654 = vmatprep.subr.mxu0 0.0
    %1655 = vmatpush1.msra.mxu0 0.0
    %1656 = vmatprep.subr.mxu0 0.0
    %1657 = vmatpush1.msra.mxu0 0.0
    %1658 = vmatprep.subr.mxu0 0.0
    %1659 = vmatpush1.msra.mxu0 %v1641
    %1660 = vmatprep.subr.mxu0 0.0
    %1661 = vmatpush1.msra.mxu0 %v1640
    %1662 = vmatprep.subr.mxu0 0.0
    %1663 = vmatpush1.msra.mxu0 %v1639
    %1664 = vmatprep.subr.mxu0 0.0
    %1665 = vmatpush1.msra.mxu0 %v1638
    %1666 = vmatprep.subr.mxu0 0.0
    %1667 = vmatpush1.msra.mxu0 %v1637
    %1668 = vmatprep.subr.mxu0 0.0
    %1669 = vmatpush1.msra.mxu0 %v1636
    %1670 = vmatprep.subr.mxu0 0.0
    %1671 = vmatpush1.msra.mxu0 %v1635
    %1672 = vmatprep.subr.mxu0 0.0
    %1673 = vmatpush1.msra.mxu0 %v1634
    %1674 = vmatprep.subr.mxu0 0.0
    %1675 = vmatpush1.msra.mxu0 %v1633
    %1676 = vmatprep.subr.mxu0 0.0
    %1677 = vmatpush1.msra.mxu0 %v1632
    %1678 = vmatprep.subr.mxu0 0.0
    %1679 = vmatpush1.msra.mxu0 %v1631
    %1680 = vmatprep.subr.mxu0 0.0
    %1681 = vmatpush1.msra.mxu0 %v1630
    %1682 = vmatprep.subr.mxu0 0.0
    %1683 = vmatpush2.msra.mxu0 0.0
    %1684 = vmatprep.subr.mxu0 0.0
    %1685 = vmatpush2.msra.mxu0 0.0
    %1686 = vmatprep.subr.mxu0 0.0
    %1687 = vmatpush2.msra.mxu0 0.0
    %1688 = vmatprep.subr.mxu0 0.0
    %1689 = vmatpush2.msra.mxu0 0.0
    %1690 = vmatprep.subr.mxu0 0.0
    %1691 = vmatpush2.msra.mxu0 0.0
    %1692 = vmatprep.subr.mxu0 0.0
    %1693 = vmatpush2.msra.mxu0 0.0
    %1694 = vmatprep.subr.mxu0 0.0
    %1695 = vmatpush2.msra.mxu0 0.0
    %1696 = vmatprep.subr.mxu0 0.0
    %1697 = vmatpush2.msra.mxu0 0.0
    %1698 = vmatprep.subr.mxu0 0.0
    %1699 = vmatpush2.msra.mxu0 0.0
    %1700 = vmatprep.subr.mxu0 0.0
    %1701 = vmatpush2.msra.mxu0 0.0
    %1702 = vmatprep.subr.mxu0 0.0
    %1703 = vmatpush2.msra.mxu0 0.0
    %1704 = vmatprep.subr.mxu0 0.0
    %1705 = vmatpush2.msra.mxu0 0.0
    %1706 = vmatprep.subr.mxu0 0.0
    %1707 = vmatpush2.msra.mxu0 0.0
    %1708 = vmatprep.subr.mxu0 0.0
    %1709 = vmatpush2.msra.mxu0 0.0
    %1710 = vmatprep.subr.mxu0 0.0
    %1711 = vmatpush2.msra.mxu0 0.0
    %1712 = vmatprep.subr.mxu0 0.0
    %1713 = vmatpush2.msra.mxu0 0.0
    %1714 = vmatprep.mubr.f32.mxu0 0.0
    %1715 = vmatmul.mubr.f32.gmra.mxu0 %v1648
    %v1716 = vpop.f32.mrf.mxu0
    %v1717 = vadd.f32 %v1646, %v1716
    %v1718 = vpop.f32.mrf.mxu0
    %1719 = vdwg.mxu0
    %v1720 = vxor.u32 %v1717, 2147483648
    %v1721 = vmul.f32 %v1720, 1.442695
    %v1722 = vpow.pop %v1721
    %v1723 = vadd.f32 %v1722, 1.0
    %v1724 = vrcp.pop %v1723
    %v1725 = vmul.f32 1.0, %v1724
    %v1726 = vld [vmem:[#allocation2 + $0x4d8] sm:$0xff]
    %v1727 = vld [vmem:[#allocation2 + $0x4e0] sm:$0xff]
    %v1728 = vld [vmem:[#allocation2 + $0x4e8] sm:$0xff]
    %v1729 = vld [vmem:[#allocation2 + $0x4f0] sm:$0xff]
    %v1730 = vld [vmem:[#allocation2 + $0x4f8] sm:$0xff]
    %v1731 = vld [vmem:[#allocation2 + $0x500] sm:$0xff]
    %v1732 = vld [vmem:[#allocation2 + $0x508] sm:$0xff]
    %v1733 = vld [vmem:[#allocation2 + $0x510] sm:$0xff]
    %v1734 = vld [vmem:[#allocation2 + $0x518] sm:$0xff]
    %v1735 = vld [vmem:[#allocation2 + $0x520] sm:$0xff]
    %v1736 = vld [vmem:[#allocation2 + $0x528] sm:$0xff]
    %v1737 = vld [vmem:[#allocation2 + $0x530] sm:$0xff]
    %v1738 = vld [vmem:[#allocation2 + $0x538] sm:$0x1]
    %v1739 = vlaneseq
    %v1740 = vshrl.u32 %v1739, 7
    %v1741 = vsub.s32 0, %v1740
    %v1742 = vrot.slane %v1738, %v1741
    %1743 = vmatprep.subr.mxu0 0.0
    %1744 = vmatpush1.msra.mxu0 0.0
    %1745 = vmatprep.subr.mxu0 0.0
    %1746 = vmatpush1.msra.mxu0 0.0
    %1747 = vmatprep.subr.mxu0 0.0
    %1748 = vmatpush1.msra.mxu0 0.0
    %1749 = vmatprep.subr.mxu0 0.0
    %1750 = vmatpush1.msra.mxu0 0.0
    %1751 = vmatprep.subr.mxu0 0.0
    %1752 = vmatpush1.msra.mxu0 %v1737
    %1753 = vmatprep.subr.mxu0 0.0
    %1754 = vmatpush1.msra.mxu0 %v1736
    %1755 = vmatprep.subr.mxu0 0.0
    %1756 = vmatpush1.msra.mxu0 %v1735
    %1757 = vmatprep.subr.mxu0 0.0
    %1758 = vmatpush1.msra.mxu0 %v1734
    %1759 = vmatprep.subr.mxu0 0.0
    %1760 = vmatpush1.msra.mxu0 %v1733
    %1761 = vmatprep.subr.mxu0 0.0
    %1762 = vmatpush1.msra.mxu0 %v1732
    %1763 = vmatprep.subr.mxu0 0.0
    %1764 = vmatpush1.msra.mxu0 %v1731
    %1765 = vmatprep.subr.mxu0 0.0
    %1766 = vmatpush1.msra.mxu0 %v1730
    %1767 = vmatprep.subr.mxu0 0.0
    %1768 = vmatpush1.msra.mxu0 %v1729
    %1769 = vmatprep.subr.mxu0 0.0
    %1770 = vmatpush1.msra.mxu0 %v1728
    %1771 = vmatprep.subr.mxu0 0.0
    %1772 = vmatpush1.msra.mxu0 %v1727
    %1773 = vmatprep.subr.mxu0 0.0
    %1774 = vmatpush1.msra.mxu0 %v1726
    %1775 = vmatprep.subr.mxu0 0.0
    %1776 = vmatpush2.msra.mxu0 0.0
    %1777 = vmatprep.subr.mxu0 0.0
    %1778 = vmatpush2.msra.mxu0 0.0
    %1779 = vmatprep.subr.mxu0 0.0
    %1780 = vmatpush2.msra.mxu0 0.0
    %1781 = vmatprep.subr.mxu0 0.0
    %1782 = vmatpush2.msra.mxu0 0.0
    %1783 = vmatprep.subr.mxu0 0.0
    %1784 = vmatpush2.msra.mxu0 0.0
    %1785 = vmatprep.subr.mxu0 0.0
    %1786 = vmatpush2.msra.mxu0 0.0
    %1787 = vmatprep.subr.mxu0 0.0
    %1788 = vmatpush2.msra.mxu0 0.0
    %1789 = vmatprep.subr.mxu0 0.0
    %1790 = vmatpush2.msra.mxu0 0.0
    %1791 = vmatprep.subr.mxu0 0.0
    %1792 = vmatpush2.msra.mxu0 0.0
    %1793 = vmatprep.subr.mxu0 0.0
    %1794 = vmatpush2.msra.mxu0 0.0
    %1795 = vmatprep.subr.mxu0 0.0
    %1796 = vmatpush2.msra.mxu0 0.0
    %1797 = vmatprep.subr.mxu0 0.0
    %1798 = vmatpush2.msra.mxu0 0.0
    %1799 = vmatprep.subr.mxu0 0.0
    %1800 = vmatpush2.msra.mxu0 0.0
    %1801 = vmatprep.subr.mxu0 0.0
    %1802 = vmatpush2.msra.mxu0 0.0
    %1803 = vmatprep.subr.mxu0 0.0
    %1804 = vmatpush2.msra.mxu0 0.0
    %1805 = vmatprep.subr.mxu0 0.0
    %1806 = vmatpush2.msra.mxu0 0.0
    %1807 = vmatprep.mubr.f32.mxu0 0.0
    %1808 = vmatmul.mubr.f32.gmra.mxu0 %v1648
    %v1809 = vpop.f32.mrf.mxu0
    %v1810 = vadd.f32 %v1742, %v1809
    %v1811 = vpop.f32.mrf.mxu0
    %1812 = vdwg.mxu0
    %v1813 = vmul.f32 %v1725, %v1810
    %v1814 = vadd.f32 %v1282, %v1813
    %v1815 = vld [vmem:[#allocation2 + $0x548] sm:$0xff]
    %v1816 = vld [vmem:[#allocation2 + $0x550] sm:$0xff]
    %v1817 = vld [vmem:[#allocation2 + $0x558] sm:$0xff]
    %v1818 = vld [vmem:[#allocation2 + $0x560] sm:$0xff]
    %v1819 = vld [vmem:[#allocation2 + $0x568] sm:$0xff]
    %v1820 = vld [vmem:[#allocation2 + $0x570] sm:$0xff]
    %v1821 = vld [vmem:[#allocation2 + $0x578] sm:$0xff]
    %v1822 = vld [vmem:[#allocation2 + $0x580] sm:$0xff]
    %v1823 = vld [vmem:[#allocation2 + $0x588] sm:$0xff]
    %v1824 = vld [vmem:[#allocation2 + $0x590] sm:$0xff]
    %v1825 = vld [vmem:[#allocation2 + $0x598] sm:$0xff]
    %v1826 = vld [vmem:[#allocation2 + $0x5a0] sm:$0xff]
    %v1828 = vsel %vm1302, %v1814, 0
    %1830 = vmatprep.subr.mxu0 0.0
    %1831 = vmatpush1.msra.mxu0 0.0
    %1832 = vmatprep.subr.mxu0 0.0
    %1833 = vmatpush1.msra.mxu0 0.0
    %1834 = vmatprep.subr.mxu0 0.0
    %1835 = vmatpush1.msra.mxu0 0.0
    %1836 = vmatprep.subr.mxu0 0.0
    %1837 = vmatpush1.msra.mxu0 0.0
    %1838 = vmatprep.subr.mxu0 0.0
    %1839 = vmatpush1.msra.mxu0 %v1826
    %1840 = vmatprep.subr.mxu0 0.0
    %1841 = vmatpush1.msra.mxu0 %v1825
    %1842 = vmatprep.subr.mxu0 0.0
    %1843 = vmatpush1.msra.mxu0 %v1824
    %1844 = vmatprep.subr.mxu0 0.0
    %1845 = vmatpush1.msra.mxu0 %v1823
    %1846 = vmatprep.subr.mxu0 0.0
    %1847 = vmatpush1.msra.mxu0 %v1822
    %1848 = vmatprep.subr.mxu0 0.0
    %1849 = vmatpush1.msra.mxu0 %v1821
    %1850 = vmatprep.subr.mxu0 0.0
    %1851 = vmatpush1.msra.mxu0 %v1820
    %1852 = vmatprep.subr.mxu0 0.0
    %1853 = vmatpush1.msra.mxu0 %v1819
    %1854 = vmatprep.subr.mxu0 0.0
    %1855 = vmatpush1.msra.mxu0 %v1818
    %1856 = vmatprep.subr.mxu0 0.0
    %1857 = vmatpush1.msra.mxu0 %v1817
    %1858 = vmatprep.subr.mxu0 0.0
    %1859 = vmatpush1.msra.mxu0 %v1816
    %1860 = vmatprep.subr.mxu0 0.0
    %1861 = vmatpush1.msra.mxu0 %v1815
    %1862 = vmatprep.subr.mxu0 0.0
    %1863 = vmatpush2.msra.mxu0 0.0
    %1864 = vmatprep.subr.mxu0 0.0
    %1865 = vmatpush2.msra.mxu0 0.0
    %1866 = vmatprep.subr.mxu0 0.0
    %1867 = vmatpush2.msra.mxu0 0.0
    %1868 = vmatprep.subr.mxu0 0.0
    %1869 = vmatpush2.msra.mxu0 0.0
    %1870 = vmatprep.subr.mxu0 0.0
    %1871 = vmatpush2.msra.mxu0 0.0
    %1872 = vmatprep.subr.mxu0 0.0
    %1873 = vmatpush2.msra.mxu0 0.0
    %1874 = vmatprep.subr.mxu0 0.0
    %1875 = vmatpush2.msra.mxu0 0.0
    %1876 = vmatprep.subr.mxu0 0.0
    %1877 = vmatpush2.msra.mxu0 0.0
    %1878 = vmatprep.subr.mxu0 0.0
    %1879 = vmatpush2.msra.mxu0 0.0
    %1880 = vmatprep.subr.mxu0 0.0
    %1881 = vmatpush2.msra.mxu0 0.0
    %1882 = vmatprep.subr.mxu0 0.0
    %1883 = vmatpush2.msra.mxu0 0.0
    %1884 = vmatprep.subr.mxu0 0.0
    %1885 = vmatpush2.msra.mxu0 0.0
    %1886 = vmatprep.subr.mxu0 0.0
    %1887 = vmatpush2.msra.mxu0 0.0
    %1888 = vmatprep.subr.mxu0 0.0
    %1889 = vmatpush2.msra.mxu0 0.0
    %1890 = vmatprep.subr.mxu0 0.0
    %1891 = vmatpush2.msra.mxu0 0.0
    %1892 = vmatprep.subr.mxu0 0.0
    %1893 = vmatpush2.msra.mxu0 0.0
    %1894 = vmatprep.mubr.f32.mxu0 0.0
    %1895 = vmatmul.mubr.f32.gmra.mxu0 %v1828
    %v1896 = vpop.f32.mrf.mxu0
    %v1897 = vadd.f32 0.0, %v1896
    %v1898 = vpop.f32.mrf.mxu0
    %1899 = vdwg.mxu0
    %v1900 = vsub.f32 %v1814, %v1897
    %v1901 = vmul.f32 %v1900, %v1900
    %v1902 = vld [vmem:[#allocation2 + $0x540] sm:$0x3]
    %v1904 = vsel %vm1302, %v1901, 0
    %1906 = vmatprep.subr.mxu0 0.0
    %1907 = vmatpush1.msra.mxu0 0.0
    %1908 = vmatprep.subr.mxu0 0.0
    %1909 = vmatpush1.msra.mxu0 0.0
    %1910 = vmatprep.subr.mxu0 0.0
    %1911 = vmatpush1.msra.mxu0 0.0
    %1912 = vmatprep.subr.mxu0 0.0
    %1913 = vmatpush1.msra.mxu0 0.0
    %1914 = vmatprep.subr.mxu0 0.0
    %1915 = vmatpush1.msra.mxu0 %v1826
    %1916 = vmatprep.subr.mxu0 0.0
    %1917 = vmatpush1.msra.mxu0 %v1825
    %1918 = vmatprep.subr.mxu0 0.0
    %1919 = vmatpush1.msra.mxu0 %v1824
    %1920 = vmatprep.subr.mxu0 0.0
    %1921 = vmatpush1.msra.mxu0 %v1823
    %1922 = vmatprep.subr.mxu0 0.0
    %1923 = vmatpush1.msra.mxu0 %v1822
    %1924 = vmatprep.subr.mxu0 0.0
    %1925 = vmatpush1.msra.mxu0 %v1821
    %1926 = vmatprep.subr.mxu0 0.0
    %1927 = vmatpush1.msra.mxu0 %v1820
    %1928 = vmatprep.subr.mxu0 0.0
    %1929 = vmatpush1.msra.mxu0 %v1819
    %1930 = vmatprep.subr.mxu0 0.0
    %1931 = vmatpush1.msra.mxu0 %v1818
    %1932 = vmatprep.subr.mxu0 0.0
    %1933 = vmatpush1.msra.mxu0 %v1817
    %1934 = vmatprep.subr.mxu0 0.0
    %1935 = vmatpush1.msra.mxu0 %v1816
    %1936 = vmatprep.subr.mxu0 0.0
    %1937 = vmatpush1.msra.mxu0 %v1815
    %1938 = vmatprep.subr.mxu0 0.0
    %1939 = vmatpush2.msra.mxu0 0.0
    %1940 = vmatprep.subr.mxu0 0.0
    %1941 = vmatpush2.msra.mxu0 0.0
    %1942 = vmatprep.subr.mxu0 0.0
    %1943 = vmatpush2.msra.mxu0 0.0
    %1944 = vmatprep.subr.mxu0 0.0
    %1945 = vmatpush2.msra.mxu0 0.0
    %1946 = vmatprep.subr.mxu0 0.0
    %1947 = vmatpush2.msra.mxu0 0.0
    %1948 = vmatprep.subr.mxu0 0.0
    %1949 = vmatpush2.msra.mxu0 0.0
    %1950 = vmatprep.subr.mxu0 0.0
    %1951 = vmatpush2.msra.mxu0 0.0
    %1952 = vmatprep.subr.mxu0 0.0
    %1953 = vmatpush2.msra.mxu0 0.0
    %1954 = vmatprep.subr.mxu0 0.0
    %1955 = vmatpush2.msra.mxu0 0.0
    %1956 = vmatprep.subr.mxu0 0.0
    %1957 = vmatpush2.msra.mxu0 0.0
    %1958 = vmatprep.subr.mxu0 0.0
    %1959 = vmatpush2.msra.mxu0 0.0
    %1960 = vmatprep.subr.mxu0 0.0
    %1961 = vmatpush2.msra.mxu0 0.0
    %1962 = vmatprep.subr.mxu0 0.0
    %1963 = vmatpush2.msra.mxu0 0.0
    %1964 = vmatprep.subr.mxu0 0.0
    %1965 = vmatpush2.msra.mxu0 0.0
    %1966 = vmatprep.subr.mxu0 0.0
    %1967 = vmatpush2.msra.mxu0 0.0
    %1968 = vmatprep.subr.mxu0 0.0
    %1969 = vmatpush2.msra.mxu0 0.0
    %1970 = vmatprep.mubr.f32.mxu0 0.0
    %1971 = vmatmul.mubr.f32.gmra.mxu0 %v1904
    %v1972 = vpop.f32.mrf.mxu0
    %v1973 = vadd.f32 1e-05, %v1972
    %v1974 = vpop.f32.mrf.mxu0
    %1975 = vdwg.mxu0
    %v1976 = vrsqrt.pop %v1973
    %v1977 = vmul.f32 %v1900, %v1976
    %v1978 = vlaneseq
    %v1979 = vshrl.u32 %v1978, 7
    %v1980 = vsub.s32 0, %v1979
    %v1981 = vrot.slane %v1902, %v1980
    %v1982 = vmul.f32 %v1977, %v1981
    %v1983 = vlaneseq
    %v1984 = vshrl.u32 %v1983, 7
    %v1985 = vsub.s32 1, %v1984
    %v1986 = vrot.slane %v1902, %v1985
    %v1987 = vadd.f32 %v1982, %v1986
    %v1988 = vld [vmem:[#allocation2 + $0x5a8] sm:$0x7]
    %1990 = vrot.lane.b32.xlu0 %v1536, 96
    %v1991 = vpop.permute.xlu0 %1990
    %v1992 = vsel %vm1208, %v1991, 0
    %v1995 = vsel %vm1211, %v1988, 0
    %1997 = vmatprep.subr.mxu0 0.0
    %1998 = vmatpush1.msra.mxu0 0.0
    %1999 = vmatprep.subr.mxu0 0.0
    %2000 = vmatpush1.msra.mxu0 0.0
    %2001 = vmatprep.subr.mxu0 0.0
    %2002 = vmatpush1.msra.mxu0 0.0
    %2003 = vmatprep.subr.mxu0 0.0
    %2004 = vmatpush1.msra.mxu0 0.0
    %2005 = vmatprep.subr.mxu0 0.0
    %2006 = vmatpush1.msra.mxu0 0.0
    %2007 = vmatprep.subr.mxu0 0.0
    %2008 = vmatpush1.msra.mxu0 0.0
    %2009 = vmatprep.subr.mxu0 0.0
    %2010 = vmatpush1.msra.mxu0 0.0
    %2011 = vmatprep.subr.mxu0 0.0
    %2012 = vmatpush1.msra.mxu0 0.0
    %2013 = vmatprep.subr.mxu0 0.0
    %2014 = vmatpush1.msra.mxu0 0.0
    %2015 = vmatprep.subr.mxu0 0.0
    %2016 = vmatpush1.msra.mxu0 0.0
    %2017 = vmatprep.subr.mxu0 0.0
    %2018 = vmatpush1.msra.mxu0 0.0
    %2019 = vmatprep.subr.mxu0 0.0
    %2020 = vmatpush1.msra.mxu0 0.0
    %2021 = vmatprep.subr.mxu0 0.0
    %2022 = vmatpush1.msra.mxu0 0.0
    %2023 = vmatprep.subr.mxu0 0.0
    %2024 = vmatpush1.msra.mxu0 0.0
    %2025 = vmatprep.subr.mxu0 0.0
    %2026 = vmatpush1.msra.mxu0 0.0
    %2027 = vmatprep.subr.mxu0 0.0
    %2028 = vmatpush1.msra.mxu0 %v1995
    %2029 = vmatprep.subr.mxu0 0.0
    %2030 = vmatpush2.msra.mxu0 0.0
    %2031 = vmatprep.subr.mxu0 0.0
    %2032 = vmatpush2.msra.mxu0 0.0
    %2033 = vmatprep.subr.mxu0 0.0
    %2034 = vmatpush2.msra.mxu0 0.0
    %2035 = vmatprep.subr.mxu0 0.0
    %2036 = vmatpush2.msra.mxu0 0.0
    %2037 = vmatprep.subr.mxu0 0.0
    %2038 = vmatpush2.msra.mxu0 0.0
    %2039 = vmatprep.subr.mxu0 0.0
    %2040 = vmatpush2.msra.mxu0 0.0
    %2041 = vmatprep.subr.mxu0 0.0
    %2042 = vmatpush2.msra.mxu0 0.0
    %2043 = vmatprep.subr.mxu0 0.0
    %2044 = vmatpush2.msra.mxu0 0.0
    %2045 = vmatprep.subr.mxu0 0.0
    %2046 = vmatpush2.msra.mxu0 0.0
    %2047 = vmatprep.subr.mxu0 0.0
    %2048 = vmatpush2.msra.mxu0 0.0
    %2049 = vmatprep.subr.mxu0 0.0
    %2050 = vmatpush2.msra.mxu0 0.0
    %2051 = vmatprep.subr.mxu0 0.0
    %2052 = vmatpush2.msra.mxu0 0.0
    %2053 = vmatprep.subr.mxu0 0.0
    %2054 = vmatpush2.msra.mxu0 0.0
    %2055 = vmatprep.subr.mxu0 0.0
    %2056 = vmatpush2.msra.mxu0 0.0
    %2057 = vmatprep.subr.mxu0 0.0
    %2058 = vmatpush2.msra.mxu0 0.0
    %2059 = vmatprep.subr.mxu0 0.0
    %2060 = vmatpush2.msra.mxu0 0.0
    %2061 = vmatprep.mubr.f32.mxu0 0.0
    %2062 = vmatmul.mubr.f32.gmra.mxu0 %v1992
    %v2063 = vpop.f32.mrf.mxu0
    %v2064 = vadd.f32 0.0, %v2063
    %v2065 = vpop.f32.mrf.mxu0
    %2066 = vdwg.mxu0
    %v2067 = vmul.f32 %v1987, %v2064
    %v2068 = vld [vmem:[#allocation2 + $0x5b0] sm:$0xff]
    %v2069 = vld [vmem:[#allocation2 + $0x5b8] sm:$0xff]
    %v2070 = vld [vmem:[#allocation2 + $0x5c0] sm:$0xff]
    %v2071 = vld [vmem:[#allocation2 + $0x5c8] sm:$0xff]
    %v2072 = vld [vmem:[#allocation2 + $0x5d0] sm:$0xff]
    %v2073 = vld [vmem:[#allocation2 + $0x5d8] sm:$0xff]
    %v2074 = vld [vmem:[#allocation2 + $0x5e0] sm:$0xff]
    %v2075 = vld [vmem:[#allocation2 + $0x5e8] sm:$0xff]
    %v2076 = vld [vmem:[#allocation2 + $0x5f0] sm:$0xff]
    %v2077 = vld [vmem:[#allocation2 + $0x5f8] sm:$0xff]
    %v2078 = vld [vmem:[#allocation2 + $0x600] sm:$0xff]
    %v2079 = vld [vmem:[#allocation2 + $0x608] sm:$0xff]
    %v2081 = vsel %vm1302, %v2067, 0
    %2083 = vmatprep.subr.mxu0 0.0
    %2084 = vmatpush1.msra.mxu0 0.0
    %2085 = vmatprep.subr.mxu0 0.0
    %2086 = vmatpush1.msra.mxu0 0.0
    %2087 = vmatprep.subr.mxu0 0.0
    %2088 = vmatpush1.msra.mxu0 0.0
    %2089 = vmatprep.subr.mxu0 0.0
    %2090 = vmatpush1.msra.mxu0 0.0
    %2091 = vmatprep.subr.mxu0 0.0
    %2092 = vmatpush1.msra.mxu0 %v2079
    %2093 = vmatprep.subr.mxu0 0.0
    %2094 = vmatpush1.msra.mxu0 %v2078
    %2095 = vmatprep.subr.mxu0 0.0
    %2096 = vmatpush1.msra.mxu0 %v2077
    %2097 = vmatprep.subr.mxu0 0.0
    %2098 = vmatpush1.msra.mxu0 %v2076
    %2099 = vmatprep.subr.mxu0 0.0
    %2100 = vmatpush1.msra.mxu0 %v2075
    %2101 = vmatprep.subr.mxu0 0.0
    %2102 = vmatpush1.msra.mxu0 %v2074
    %2103 = vmatprep.subr.mxu0 0.0
    %2104 = vmatpush1.msra.mxu0 %v2073
    %2105 = vmatprep.subr.mxu0 0.0
    %2106 = vmatpush1.msra.mxu0 %v2072
    %2107 = vmatprep.subr.mxu0 0.0
    %2108 = vmatpush1.msra.mxu0 %v2071
    %2109 = vmatprep.subr.mxu0 0.0
    %2110 = vmatpush1.msra.mxu0 %v2070
    %2111 = vmatprep.subr.mxu0 0.0
    %2112 = vmatpush1.msra.mxu0 %v2069
    %2113 = vmatprep.subr.mxu0 0.0
    %2114 = vmatpush1.msra.mxu0 %v2068
    %2115 = vmatprep.subr.mxu0 0.0
    %2116 = vmatpush2.msra.mxu0 0.0
    %2117 = vmatprep.subr.mxu0 0.0
    %2118 = vmatpush2.msra.mxu0 0.0
    %2119 = vmatprep.subr.mxu0 0.0
    %2120 = vmatpush2.msra.mxu0 0.0
    %2121 = vmatprep.subr.mxu0 0.0
    %2122 = vmatpush2.msra.mxu0 0.0
    %2123 = vmatprep.subr.mxu0 0.0
    %2124 = vmatpush2.msra.mxu0 0.0
    %2125 = vmatprep.subr.mxu0 0.0
    %2126 = vmatpush2.msra.mxu0 0.0
    %2127 = vmatprep.subr.mxu0 0.0
    %2128 = vmatpush2.msra.mxu0 0.0
    %2129 = vmatprep.subr.mxu0 0.0
    %2130 = vmatpush2.msra.mxu0 0.0
    %2131 = vmatprep.subr.mxu0 0.0
    %2132 = vmatpush2.msra.mxu0 0.0
    %2133 = vmatprep.subr.mxu0 0.0
    %2134 = vmatpush2.msra.mxu0 0.0
    %2135 = vmatprep.subr.mxu0 0.0
    %2136 = vmatpush2.msra.mxu0 0.0
    %2137 = vmatprep.subr.mxu0 0.0
    %2138 = vmatpush2.msra.mxu0 0.0
    %2139 = vmatprep.subr.mxu0 0.0
    %2140 = vmatpush2.msra.mxu0 0.0
    %2141 = vmatprep.subr.mxu0 0.0
    %2142 = vmatpush2.msra.mxu0 0.0
    %2143 = vmatprep.subr.mxu0 0.0
    %2144 = vmatpush2.msra.mxu0 0.0
    %2145 = vmatprep.subr.mxu0 0.0
    %2146 = vmatpush2.msra.mxu0 0.0
    %2147 = vmatprep.mubr.f32.mxu0 0.0
    %2148 = vmatmul.mubr.f32.gmra.mxu0 %v2081
    %v2149 = vpop.f32.mrf.mxu0
    %v2150 = vadd.f32 0.0, %v2149
    %v2151 = vpop.f32.mrf.mxu0
    %2152 = vdwg.mxu0
    %v2153 = vld [vmem:[#allocation2 + $0x610] sm:$0xff]
    %v2154 = vld [vmem:[#allocation2 + $0x618] sm:$0xff]
    %v2155 = vld [vmem:[#allocation2 + $0x620] sm:$0xff]
    %v2156 = vld [vmem:[#allocation2 + $0x628] sm:$0xff]
    %v2157 = vld [vmem:[#allocation2 + $0x630] sm:$0x1]
    %v2158 = vlaneseq
    %v2159 = vshrl.u32 %v2158, 7
    %v2160 = vsub.s32 0, %v2159
    %v2161 = vrot.slane %v2157, %v2160
    %v2163 = vsel %vm288, %v1174, 0
    %v2166 = vsel %vm288, %v1179, 0
    %2168 = vmatprep.subr.mxu0 0.0
    %2169 = vmatpush1.msra.mxu0 0.0
    %2170 = vmatprep.subr.mxu0 0.0
    %2171 = vmatpush1.msra.mxu0 0.0
    %2172 = vmatprep.subr.mxu0 0.0
    %2173 = vmatpush1.msra.mxu0 0.0
    %2174 = vmatprep.subr.mxu0 0.0
    %2175 = vmatpush1.msra.mxu0 0.0
    %2176 = vmatprep.subr.mxu0 0.0
    %2177 = vmatpush1.msra.mxu0 0.0
    %2178 = vmatprep.subr.mxu0 0.0
    %2179 = vmatpush1.msra.mxu0 0.0
    %2180 = vmatprep.subr.mxu0 0.0
    %2181 = vmatpush1.msra.mxu0 0.0
    %2182 = vmatprep.subr.mxu0 0.0
    %2183 = vmatpush1.msra.mxu0 0.0
    %2184 = vmatprep.subr.mxu0 0.0
    %2185 = vmatpush1.msra.mxu0 0.0
    %2186 = vmatprep.subr.mxu0 0.0
    %2187 = vmatpush1.msra.mxu0 0.0
    %2188 = vmatprep.subr.mxu0 0.0
    %2189 = vmatpush1.msra.mxu0 0.0
    %2190 = vmatprep.subr.mxu0 0.0
    %2191 = vmatpush1.msra.mxu0 0.0
    %2192 = vmatprep.subr.mxu0 0.0
    %2193 = vmatpush1.msra.mxu0 %v2156
    %2194 = vmatprep.subr.mxu0 0.0
    %2195 = vmatpush1.msra.mxu0 %v2155
    %2196 = vmatprep.subr.mxu0 0.0
    %2197 = vmatpush1.msra.mxu0 %v2154
    %2198 = vmatprep.subr.mxu0 0.0
    %2199 = vmatpush1.msra.mxu0 %v2153
    %2200 = vmatprep.subr.mxu0 0.0
    %2201 = vmatpush2.msra.mxu0 0.0
    %2202 = vmatprep.subr.mxu0 0.0
    %2203 = vmatpush2.msra.mxu0 0.0
    %2204 = vmatprep.subr.mxu0 0.0
    %2205 = vmatpush2.msra.mxu0 0.0
    %2206 = vmatprep.subr.mxu0 0.0
    %2207 = vmatpush2.msra.mxu0 0.0
    %2208 = vmatprep.subr.mxu0 0.0
    %2209 = vmatpush2.msra.mxu0 0.0
    %2210 = vmatprep.subr.mxu0 0.0
    %2211 = vmatpush2.msra.mxu0 0.0
    %2212 = vmatprep.subr.mxu0 0.0
    %2213 = vmatpush2.msra.mxu0 0.0
    %2214 = vmatprep.subr.mxu0 0.0
    %2215 = vmatpush2.msra.mxu0 0.0
    %2216 = vmatprep.subr.mxu0 0.0
    %2217 = vmatpush2.msra.mxu0 0.0
    %2218 = vmatprep.subr.mxu0 0.0
    %2219 = vmatpush2.msra.mxu0 0.0
    %2220 = vmatprep.subr.mxu0 0.0
    %2221 = vmatpush2.msra.mxu0 0.0
    %2222 = vmatprep.subr.mxu0 0.0
    %2223 = vmatpush2.msra.mxu0 0.0
    %2224 = vmatprep.subr.mxu0 0.0
    %2225 = vmatpush2.msra.mxu0 0.0
    %2226 = vmatprep.subr.mxu0 0.0
    %2227 = vmatpush2.msra.mxu0 0.0
    %2228 = vmatprep.subr.mxu0 0.0
    %2229 = vmatpush2.msra.mxu0 0.0
    %2230 = vmatprep.subr.mxu0 0.0
    %2231 = vmatpush2.msra.mxu0 0.0
    %2232 = vmatprep.mubr.f32.mxu0 0.0
    %2233 = vmatmul.mubr.f32.gmra.mxu0 %v2163
    %v2234 = vpop.f32.mrf.mxu0
    %v2235 = vadd.f32 %v2161, %v2234
    %v2236 = vpop.f32.mrf.mxu0
    %2237 = vmatprep.mubr.f32.mxu0 0.0
    %2238 = vmatmul.mubr.f32.gmra.mxu0 %v2166
    %v2239 = vpop.f32.mrf.mxu0
    %v2240 = vadd.f32 %v2161, %v2239
    %v2241 = vpop.f32.mrf.mxu0
    %2242 = vdwg.mxu0
    %v2243 = vld [vmem:[#allocation2 + $0x638] sm:$0xff]
    %v2244 = vld [vmem:[#allocation2 + $0x640] sm:$0xff]
    %v2245 = vld [vmem:[#allocation2 + $0x648] sm:$0xff]
    %v2246 = vld [vmem:[#allocation2 + $0x650] sm:$0xff]
    %v2248 = vsel %vm288, 0.0, 0
    %2250 = vmatprep.subr.mxu0 0.0
    %2251 = vmatpush1.msra.mxu0 0.0
    %2252 = vmatprep.subr.mxu0 0.0
    %2253 = vmatpush1.msra.mxu0 0.0
    %2254 = vmatprep.subr.mxu0 0.0
    %2255 = vmatpush1.msra.mxu0 0.0
    %2256 = vmatprep.subr.mxu0 0.0
    %2257 = vmatpush1.msra.mxu0 0.0
    %2258 = vmatprep.subr.mxu0 0.0
    %2259 = vmatpush1.msra.mxu0 0.0
    %2260 = vmatprep.subr.mxu0 0.0
    %2261 = vmatpush1.msra.mxu0 0.0
    %2262 = vmatprep.subr.mxu0 0.0
    %2263 = vmatpush1.msra.mxu0 0.0
    %2264 = vmatprep.subr.mxu0 0.0
    %2265 = vmatpush1.msra.mxu0 0.0
    %2266 = vmatprep.subr.mxu0 0.0
    %2267 = vmatpush1.msra.mxu0 0.0
    %2268 = vmatprep.subr.mxu0 0.0
    %2269 = vmatpush1.msra.mxu0 0.0
    %2270 = vmatprep.subr.mxu0 0.0
    %2271 = vmatpush1.msra.mxu0 0.0
    %2272 = vmatprep.subr.mxu0 0.0
    %2273 = vmatpush1.msra.mxu0 0.0
    %2274 = vmatprep.subr.mxu0 0.0
    %2275 = vmatpush1.msra.mxu0 %v2246
    %2276 = vmatprep.subr.mxu0 0.0
    %2277 = vmatpush1.msra.mxu0 %v2245
    %2278 = vmatprep.subr.mxu0 0.0
    %2279 = vmatpush1.msra.mxu0 %v2244
    %2280 = vmatprep.subr.mxu0 0.0
    %2281 = vmatpush1.msra.mxu0 %v2243
    %2282 = vmatprep.subr.mxu0 0.0
    %2283 = vmatpush2.msra.mxu0 0.0
    %2284 = vmatprep.subr.mxu0 0.0
    %2285 = vmatpush2.msra.mxu0 0.0
    %2286 = vmatprep.subr.mxu0 0.0
    %2287 = vmatpush2.msra.mxu0 0.0
    %2288 = vmatprep.subr.mxu0 0.0
    %2289 = vmatpush2.msra.mxu0 0.0
    %2290 = vmatprep.subr.mxu0 0.0
    %2291 = vmatpush2.msra.mxu0 0.0
    %2292 = vmatprep.subr.mxu0 0.0
    %2293 = vmatpush2.msra.mxu0 0.0
    %2294 = vmatprep.subr.mxu0 0.0
    %2295 = vmatpush2.msra.mxu0 0.0
    %2296 = vmatprep.subr.mxu0 0.0
    %2297 = vmatpush2.msra.mxu0 0.0
    %2298 = vmatprep.subr.mxu0 0.0
    %2299 = vmatpush2.msra.mxu0 0.0
    %2300 = vmatprep.subr.mxu0 0.0
    %2301 = vmatpush2.msra.mxu0 0.0
    %2302 = vmatprep.subr.mxu0 0.0
    %2303 = vmatpush2.msra.mxu0 0.0
    %2304 = vmatprep.subr.mxu0 0.0
    %2305 = vmatpush2.msra.mxu0 0.0
    %2306 = vmatprep.subr.mxu0 0.0
    %2307 = vmatpush2.msra.mxu0 0.0
    %2308 = vmatprep.subr.mxu0 0.0
    %2309 = vmatpush2.msra.mxu0 0.0
    %2310 = vmatprep.subr.mxu0 0.0
    %2311 = vmatpush2.msra.mxu0 0.0
    %2312 = vmatprep.subr.mxu0 0.0
    %2313 = vmatpush2.msra.mxu0 0.0
    %2314 = vmatprep.mubr.f32.mxu0 0.0
    %2315 = vmatmul.mubr.f32.gmra.mxu0 %v2248
    %v2316 = vpop.f32.mrf.mxu0
    %v2317 = vadd.f32 0.0, %v2316
    %v2318 = vpop.f32.mrf.mxu0
    %2319 = vdwg.mxu0
    %v2320 = vadd.f32 %v2235, %v2317
    %v2321 = vxor.u32 %v2320, 2147483648
    %v2322 = vmul.f32 %v2321, 1.442695
    %v2323 = vpow.pop %v2322
    %v2324 = vadd.f32 %v2323, 1.0
    %v2325 = vrcp.pop %v2324
    %v2326 = vmul.f32 1.0, %v2325
    %v2327 = vtanh.pop %v2320
    %v2328 = vmul.f32 %v2326, 0.0
    %2330 = vrot.lane.b32.xlu0 %v2327, 64
    %v2331 = vpop.permute.xlu0 %2330
    %v2333 = vmul.f32 %v2326, %v2331
    %2335 = vrot.lane.b32.xlu0 %v2333, 32
    %v2336 = vpop.permute.xlu0 %2335
    %v2338 = vadd.f32 %v2328, %v2336
    %v2339 = vtanh.pop %v2338
    %2341 = vrot.lane.b32.xlu0 %v2339, 64
    %v2342 = vpop.permute.xlu0 %2341
    %v2344 = vmul.f32 %v2326, %v2342
    %2346 = vrot.lane.b32.xlu0 %v2344, 32
    %v2347 = vpop.permute.xlu0 %2346
    %v2348 = vsel %vm288, %v2347, 0
    %2350 = vmatprep.subr.mxu0 0.0
    %2351 = vmatpush1.msra.mxu0 0.0
    %2352 = vmatprep.subr.mxu0 0.0
    %2353 = vmatpush1.msra.mxu0 0.0
    %2354 = vmatprep.subr.mxu0 0.0
    %2355 = vmatpush1.msra.mxu0 0.0
    %2356 = vmatprep.subr.mxu0 0.0
    %2357 = vmatpush1.msra.mxu0 0.0
    %2358 = vmatprep.subr.mxu0 0.0
    %2359 = vmatpush1.msra.mxu0 0.0
    %2360 = vmatprep.subr.mxu0 0.0
    %2361 = vmatpush1.msra.mxu0 0.0
    %2362 = vmatprep.subr.mxu0 0.0
    %2363 = vmatpush1.msra.mxu0 0.0
    %2364 = vmatprep.subr.mxu0 0.0
    %2365 = vmatpush1.msra.mxu0 0.0
    %2366 = vmatprep.subr.mxu0 0.0
    %2367 = vmatpush1.msra.mxu0 0.0
    %2368 = vmatprep.subr.mxu0 0.0
    %2369 = vmatpush1.msra.mxu0 0.0
    %2370 = vmatprep.subr.mxu0 0.0
    %2371 = vmatpush1.msra.mxu0 0.0
    %2372 = vmatprep.subr.mxu0 0.0
    %2373 = vmatpush1.msra.mxu0 0.0
    %2374 = vmatprep.subr.mxu0 0.0
    %2375 = vmatpush1.msra.mxu0 %v2246
    %2376 = vmatprep.subr.mxu0 0.0
    %2377 = vmatpush1.msra.mxu0 %v2245
    %2378 = vmatprep.subr.mxu0 0.0
    %2379 = vmatpush1.msra.mxu0 %v2244
    %2380 = vmatprep.subr.mxu0 0.0
    %2381 = vmatpush1.msra.mxu0 %v2243
    %2382 = vmatprep.subr.mxu0 0.0
    %2383 = vmatpush2.msra.mxu0 0.0
    %2384 = vmatprep.subr.mxu0 0.0
    %2385 = vmatpush2.msra.mxu0 0.0
    %2386 = vmatprep.subr.mxu0 0.0
    %2387 = vmatpush2.msra.mxu0 0.0
    %2388 = vmatprep.subr.mxu0 0.0
    %2389 = vmatpush2.msra.mxu0 0.0
    %2390 = vmatprep.subr.mxu0 0.0
    %2391 = vmatpush2.msra.mxu0 0.0
    %2392 = vmatprep.subr.mxu0 0.0
    %2393 = vmatpush2.msra.mxu0 0.0
    %2394 = vmatprep.subr.mxu0 0.0
    %2395 = vmatpush2.msra.mxu0 0.0
    %2396 = vmatprep.subr.mxu0 0.0
    %2397 = vmatpush2.msra.mxu0 0.0
    %2398 = vmatprep.subr.mxu0 0.0
    %2399 = vmatpush2.msra.mxu0 0.0
    %2400 = vmatprep.subr.mxu0 0.0
    %2401 = vmatpush2.msra.mxu0 0.0
    %2402 = vmatprep.subr.mxu0 0.0
    %2403 = vmatpush2.msra.mxu0 0.0
    %2404 = vmatprep.subr.mxu0 0.0
    %2405 = vmatpush2.msra.mxu0 0.0
    %2406 = vmatprep.subr.mxu0 0.0
    %2407 = vmatpush2.msra.mxu0 0.0
    %2408 = vmatprep.subr.mxu0 0.0
    %2409 = vmatpush2.msra.mxu0 0.0
    %2410 = vmatprep.subr.mxu0 0.0
    %2411 = vmatpush2.msra.mxu0 0.0
    %2412 = vmatprep.subr.mxu0 0.0
    %2413 = vmatpush2.msra.mxu0 0.0
    %2414 = vmatprep.mubr.f32.mxu0 0.0
    %2415 = vmatmul.mubr.f32.gmra.mxu0 %v2348
    %v2416 = vpop.f32.mrf.mxu0
    %v2417 = vadd.f32 0.0, %v2416
    %v2418 = vpop.f32.mrf.mxu0
    %2419 = vdwg.mxu0
    %v2421 = vrot.slane %v2417, 6
    %v2423 = vadd.f32 %v2235, %v2421
    %v2424 = vxor.u32 %v2423, 2147483648
    %v2425 = vmul.f32 %v2424, 1.442695
    %v2426 = vpow.pop %v2425
    %v2427 = vadd.f32 %v2426, 1.0
    %v2428 = vrcp.pop %v2427
    %v2429 = vmul.f32 1.0, %v2428
    %v2430 = vtanh.pop %v2423
    %v2432 = vrot.slane %v2338, 6
    %v2434 = vmul.f32 %v2429, %v2432
    %2436 = vrot.lane.b32.xlu0 %v2430, 64
    %v2437 = vpop.permute.xlu0 %2436
    %v2439 = vmul.f32 %v2429, %v2437
    %2441 = vrot.lane.b32.xlu0 %v2439, 32
    %v2442 = vpop.permute.xlu0 %2441
    %v2444 = vadd.f32 %v2434, %v2442
    %v2445 = vtanh.pop %v2444
    %2447 = vrot.lane.b32.xlu0 %v2445, 64
    %v2448 = vpop.permute.xlu0 %2447
    %v2450 = vmul.f32 %v2429, %v2448
    %v2452 = vrot.slane %v2450, 2
    %2453 = vrot.lane.b32.xlu0 %v2452, 32
    %v2454 = vpop.permute.xlu0 %2453
    %v2455 = vsel %vm288, %v2454, 0
    %2457 = vmatprep.subr.mxu0 0.0
    %2458 = vmatpush1.msra.mxu0 0.0
    %2459 = vmatprep.subr.mxu0 0.0
    %2460 = vmatpush1.msra.mxu0 0.0
    %2461 = vmatprep.subr.mxu0 0.0
    %2462 = vmatpush1.msra.mxu0 0.0
    %2463 = vmatprep.subr.mxu0 0.0
    %2464 = vmatpush1.msra.mxu0 0.0
    %2465 = vmatprep.subr.mxu0 0.0
    %2466 = vmatpush1.msra.mxu0 0.0
    %2467 = vmatprep.subr.mxu0 0.0
    %2468 = vmatpush1.msra.mxu0 0.0
    %2469 = vmatprep.subr.mxu0 0.0
    %2470 = vmatpush1.msra.mxu0 0.0
    %2471 = vmatprep.subr.mxu0 0.0
    %2472 = vmatpush1.msra.mxu0 0.0
    %2473 = vmatprep.subr.mxu0 0.0
    %2474 = vmatpush1.msra.mxu0 0.0
    %2475 = vmatprep.subr.mxu0 0.0
    %2476 = vmatpush1.msra.mxu0 0.0
    %2477 = vmatprep.subr.mxu0 0.0
    %2478 = vmatpush1.msra.mxu0 0.0
    %2479 = vmatprep.subr.mxu0 0.0
    %2480 = vmatpush1.msra.mxu0 0.0
    %2481 = vmatprep.subr.mxu0 0.0
    %2482 = vmatpush1.msra.mxu0 %v2246
    %2483 = vmatprep.subr.mxu0 0.0
    %2484 = vmatpush1.msra.mxu0 %v2245
    %2485 = vmatprep.subr.mxu0 0.0
    %2486 = vmatpush1.msra.mxu0 %v2244
    %2487 = vmatprep.subr.mxu0 0.0
    %2488 = vmatpush1.msra.mxu0 %v2243
    %2489 = vmatprep.subr.mxu0 0.0
    %2490 = vmatpush2.msra.mxu0 0.0
    %2491 = vmatprep.subr.mxu0 0.0
    %2492 = vmatpush2.msra.mxu0 0.0
    %2493 = vmatprep.subr.mxu0 0.0
    %2494 = vmatpush2.msra.mxu0 0.0
    %2495 = vmatprep.subr.mxu0 0.0
    %2496 = vmatpush2.msra.mxu0 0.0
    %2497 = vmatprep.subr.mxu0 0.0
    %2498 = vmatpush2.msra.mxu0 0.0
    %2499 = vmatprep.subr.mxu0 0.0
    %2500 = vmatpush2.msra.mxu0 0.0
    %2501 = vmatprep.subr.mxu0 0.0
    %2502 = vmatpush2.msra.mxu0 0.0
    %2503 = vmatprep.subr.mxu0 0.0
    %2504 = vmatpush2.msra.mxu0 0.0
    %2505 = vmatprep.subr.mxu0 0.0
    %2506 = vmatpush2.msra.mxu0 0.0
    %2507 = vmatprep.subr.mxu0 0.0
    %2508 = vmatpush2.msra.mxu0 0.0
    %2509 = vmatprep.subr.mxu0 0.0
    %2510 = vmatpush2.msra.mxu0 0.0
    %2511 = vmatprep.subr.mxu0 0.0
    %2512 = vmatpush2.msra.mxu0 0.0
    %2513 = vmatprep.subr.mxu0 0.0
    %2514 = vmatpush2.msra.mxu0 0.0
    %2515 = vmatprep.subr.mxu0 0.0
    %2516 = vmatpush2.msra.mxu0 0.0
    %2517 = vmatprep.subr.mxu0 0.0
    %2518 = vmatpush2.msra.mxu0 0.0
    %2519 = vmatprep.subr.mxu0 0.0
    %2520 = vmatpush2.msra.mxu0 0.0
    %2521 = vmatprep.mubr.f32.mxu0 0.0
    %2522 = vmatmul.mubr.f32.gmra.mxu0 %v2455
    %v2523 = vpop.f32.mrf.mxu0
    %v2524 = vadd.f32 0.0, %v2523
    %v2525 = vpop.f32.mrf.mxu0
    %2526 = vdwg.mxu0
    %v2528 = vrot.slane %v2524, 4
    %v2530 = vadd.f32 %v2235, %v2528
    %v2531 = vxor.u32 %v2530, 2147483648
    %v2532 = vmul.f32 %v2531, 1.442695
    %v2533 = vpow.pop %v2532
    %v2534 = vadd.f32 %v2533, 1.0
    %v2535 = vrcp.pop %v2534
    %v2536 = vmul.f32 1.0, %v2535
    %v2537 = vtanh.pop %v2530
    %v2539 = vrot.slane %v2444, 6
    %v2541 = vmul.f32 %v2536, %v2539
    %2543 = vrot.lane.b32.xlu0 %v2537, 64
    %v2544 = vpop.permute.xlu0 %2543
    %v2546 = vmul.f32 %v2536, %v2544
    %2548 = vrot.lane.b32.xlu0 %v2546, 32
    %v2549 = vpop.permute.xlu0 %2548
    %v2551 = vadd.f32 %v2541, %v2549
    %v2552 = vtanh.pop %v2551
    %2554 = vrot.lane.b32.xlu0 %v2552, 64
    %v2555 = vpop.permute.xlu0 %2554
    %v2557 = vmul.f32 %v2536, %v2555
    %v2559 = vrot.slane %v2557, 4
    %2560 = vrot.lane.b32.xlu0 %v2559, 32
    %v2561 = vpop.permute.xlu0 %2560
    %v2562 = vsel %vm288, %v2561, 0
    %2564 = vmatprep.subr.mxu0 0.0
    %2565 = vmatpush1.msra.mxu0 0.0
    %2566 = vmatprep.subr.mxu0 0.0
    %2567 = vmatpush1.msra.mxu0 0.0
    %2568 = vmatprep.subr.mxu0 0.0
    %2569 = vmatpush1.msra.mxu0 0.0
    %2570 = vmatprep.subr.mxu0 0.0
    %2571 = vmatpush1.msra.mxu0 0.0
    %2572 = vmatprep.subr.mxu0 0.0
    %2573 = vmatpush1.msra.mxu0 0.0
    %2574 = vmatprep.subr.mxu0 0.0
    %2575 = vmatpush1.msra.mxu0 0.0
    %2576 = vmatprep.subr.mxu0 0.0
    %2577 = vmatpush1.msra.mxu0 0.0
    %2578 = vmatprep.subr.mxu0 0.0
    %2579 = vmatpush1.msra.mxu0 0.0
    %2580 = vmatprep.subr.mxu0 0.0
    %2581 = vmatpush1.msra.mxu0 0.0
    %2582 = vmatprep.subr.mxu0 0.0
    %2583 = vmatpush1.msra.mxu0 0.0
    %2584 = vmatprep.subr.mxu0 0.0
    %2585 = vmatpush1.msra.mxu0 0.0
    %2586 = vmatprep.subr.mxu0 0.0
    %2587 = vmatpush1.msra.mxu0 0.0
    %2588 = vmatprep.subr.mxu0 0.0
    %2589 = vmatpush1.msra.mxu0 %v2246
    %2590 = vmatprep.subr.mxu0 0.0
    %2591 = vmatpush1.msra.mxu0 %v2245
    %2592 = vmatprep.subr.mxu0 0.0
    %2593 = vmatpush1.msra.mxu0 %v2244
    %2594 = vmatprep.subr.mxu0 0.0
    %2595 = vmatpush1.msra.mxu0 %v2243
    %2596 = vmatprep.subr.mxu0 0.0
    %2597 = vmatpush2.msra.mxu0 0.0
    %2598 = vmatprep.subr.mxu0 0.0
    %2599 = vmatpush2.msra.mxu0 0.0
    %2600 = vmatprep.subr.mxu0 0.0
    %2601 = vmatpush2.msra.mxu0 0.0
    %2602 = vmatprep.subr.mxu0 0.0
    %2603 = vmatpush2.msra.mxu0 0.0
    %2604 = vmatprep.subr.mxu0 0.0
    %2605 = vmatpush2.msra.mxu0 0.0
    %2606 = vmatprep.subr.mxu0 0.0
    %2607 = vmatpush2.msra.mxu0 0.0
    %2608 = vmatprep.subr.mxu0 0.0
    %2609 = vmatpush2.msra.mxu0 0.0
    %2610 = vmatprep.subr.mxu0 0.0
    %2611 = vmatpush2.msra.mxu0 0.0
    %2612 = vmatprep.subr.mxu0 0.0
    %2613 = vmatpush2.msra.mxu0 0.0
    %2614 = vmatprep.subr.mxu0 0.0
    %2615 = vmatpush2.msra.mxu0 0.0
    %2616 = vmatprep.subr.mxu0 0.0
    %2617 = vmatpush2.msra.mxu0 0.0
    %2618 = vmatprep.subr.mxu0 0.0
    %2619 = vmatpush2.msra.mxu0 0.0
    %2620 = vmatprep.subr.mxu0 0.0
    %2621 = vmatpush2.msra.mxu0 0.0
    %2622 = vmatprep.subr.mxu0 0.0
    %2623 = vmatpush2.msra.mxu0 0.0
    %2624 = vmatprep.subr.mxu0 0.0
    %2625 = vmatpush2.msra.mxu0 0.0
    %2626 = vmatprep.subr.mxu0 0.0
    %2627 = vmatpush2.msra.mxu0 0.0
    %2628 = vmatprep.mubr.f32.mxu0 0.0
    %2629 = vmatmul.mubr.f32.gmra.mxu0 %v2562
    %v2630 = vpop.f32.mrf.mxu0
    %v2631 = vadd.f32 0.0, %v2630
    %v2632 = vpop.f32.mrf.mxu0
    %2633 = vdwg.mxu0
    %v2635 = vrot.slane %v2631, 2
    %v2637 = vadd.f32 %v2235, %v2635
    %v2638 = vxor.u32 %v2637, 2147483648
    %v2639 = vmul.f32 %v2638, 1.442695
    %v2640 = vpow.pop %v2639
    %v2641 = vadd.f32 %v2640, 1.0
    %v2642 = vrcp.pop %v2641
    %v2643 = vmul.f32 1.0, %v2642
    %v2644 = vtanh.pop %v2637
    %v2646 = vrot.slane %v2551, 6
    %v2648 = vmul.f32 %v2643, %v2646
    %2650 = vrot.lane.b32.xlu0 %v2644, 64
    %v2651 = vpop.permute.xlu0 %2650
    %v2653 = vmul.f32 %v2643, %v2651
    %2655 = vrot.lane.b32.xlu0 %v2653, 32
    %v2656 = vpop.permute.xlu0 %2655
    %v2658 = vadd.f32 %v2648, %v2656
    %v2659 = vtanh.pop %v2658
    %2661 = vrot.lane.b32.xlu0 %v2659, 64
    %v2662 = vpop.permute.xlu0 %2661
    %v2664 = vmul.f32 %v2643, %v2662
    %v2666 = vrot.slane %v2664, 6
    %2667 = vrot.lane.b32.xlu0 %v2666, 32
    %v2668 = vpop.permute.xlu0 %2667
    %v2669 = vsel %vm288, %v2668, 0
    %2671 = vmatprep.subr.mxu0 0.0
    %2672 = vmatpush1.msra.mxu0 0.0
    %2673 = vmatprep.subr.mxu0 0.0
    %2674 = vmatpush1.msra.mxu0 0.0
    %2675 = vmatprep.subr.mxu0 0.0
    %2676 = vmatpush1.msra.mxu0 0.0
    %2677 = vmatprep.subr.mxu0 0.0
    %2678 = vmatpush1.msra.mxu0 0.0
    %2679 = vmatprep.subr.mxu0 0.0
    %2680 = vmatpush1.msra.mxu0 0.0
    %2681 = vmatprep.subr.mxu0 0.0
    %2682 = vmatpush1.msra.mxu0 0.0
    %2683 = vmatprep.subr.mxu0 0.0
    %2684 = vmatpush1.msra.mxu0 0.0
    %2685 = vmatprep.subr.mxu0 0.0
    %2686 = vmatpush1.msra.mxu0 0.0
    %2687 = vmatprep.subr.mxu0 0.0
    %2688 = vmatpush1.msra.mxu0 0.0
    %2689 = vmatprep.subr.mxu0 0.0
    %2690 = vmatpush1.msra.mxu0 0.0
    %2691 = vmatprep.subr.mxu0 0.0
    %2692 = vmatpush1.msra.mxu0 0.0
    %2693 = vmatprep.subr.mxu0 0.0
    %2694 = vmatpush1.msra.mxu0 0.0
    %2695 = vmatprep.subr.mxu0 0.0
    %2696 = vmatpush1.msra.mxu0 %v2246
    %2697 = vmatprep.subr.mxu0 0.0
    %2698 = vmatpush1.msra.mxu0 %v2245
    %2699 = vmatprep.subr.mxu0 0.0
    %2700 = vmatpush1.msra.mxu0 %v2244
    %2701 = vmatprep.subr.mxu0 0.0
    %2702 = vmatpush1.msra.mxu0 %v2243
    %2703 = vmatprep.subr.mxu0 0.0
    %2704 = vmatpush2.msra.mxu0 0.0
    %2705 = vmatprep.subr.mxu0 0.0
    %2706 = vmatpush2.msra.mxu0 0.0
    %2707 = vmatprep.subr.mxu0 0.0
    %2708 = vmatpush2.msra.mxu0 0.0
    %2709 = vmatprep.subr.mxu0 0.0
    %2710 = vmatpush2.msra.mxu0 0.0
    %2711 = vmatprep.subr.mxu0 0.0
    %2712 = vmatpush2.msra.mxu0 0.0
    %2713 = vmatprep.subr.mxu0 0.0
    %2714 = vmatpush2.msra.mxu0 0.0
    %2715 = vmatprep.subr.mxu0 0.0
    %2716 = vmatpush2.msra.mxu0 0.0
    %2717 = vmatprep.subr.mxu0 0.0
    %2718 = vmatpush2.msra.mxu0 0.0
    %2719 = vmatprep.subr.mxu0 0.0
    %2720 = vmatpush2.msra.mxu0 0.0
    %2721 = vmatprep.subr.mxu0 0.0
    %2722 = vmatpush2.msra.mxu0 0.0
    %2723 = vmatprep.subr.mxu0 0.0
    %2724 = vmatpush2.msra.mxu0 0.0
    %2725 = vmatprep.subr.mxu0 0.0
    %2726 = vmatpush2.msra.mxu0 0.0
    %2727 = vmatprep.subr.mxu0 0.0
    %2728 = vmatpush2.msra.mxu0 0.0
    %2729 = vmatprep.subr.mxu0 0.0
    %2730 = vmatpush2.msra.mxu0 0.0
    %2731 = vmatprep.subr.mxu0 0.0
    %2732 = vmatpush2.msra.mxu0 0.0
    %2733 = vmatprep.subr.mxu0 0.0
    %2734 = vmatpush2.msra.mxu0 0.0
    %2735 = vmatprep.mubr.f32.mxu0 0.0
    %2736 = vmatmul.mubr.f32.gmra.mxu0 %v2669
    %v2737 = vpop.f32.mrf.mxu0
    %v2738 = vadd.f32 0.0, %v2737
    %v2739 = vpop.f32.mrf.mxu0
    %2740 = vdwg.mxu0
    %v2741 = vadd.f32 %v2240, %v2738
    %v2742 = vxor.u32 %v2741, 2147483648
    %v2743 = vmul.f32 %v2742, 1.442695
    %v2744 = vpow.pop %v2743
    %v2745 = vadd.f32 %v2744, 1.0
    %v2746 = vrcp.pop %v2745
    %v2747 = vmul.f32 1.0, %v2746
    %v2748 = vtanh.pop %v2741
    %v2750 = vrot.slane %v2658, 6
    %v2752 = vmul.f32 %v2747, %v2750
    %2754 = vrot.lane.b32.xlu0 %v2748, 64
    %v2755 = vpop.permute.xlu0 %2754
    %v2757 = vmul.f32 %v2747, %v2755
    %2759 = vrot.lane.b32.xlu0 %v2757, 32
    %v2760 = vpop.permute.xlu0 %2759
    %v2762 = vadd.f32 %v2752, %v2760
    %v2763 = vtanh.pop %v2762
    %2765 = vrot.lane.b32.xlu0 %v2763, 64
    %v2766 = vpop.permute.xlu0 %2765
    %v2768 = vmul.f32 %v2747, %v2766
    %2770 = vrot.lane.b32.xlu0 %v2768, 32
    %v2771 = vpop.permute.xlu0 %2770
    %v2772 = vsel %vm288, %v2771, 0
    %2774 = vmatprep.subr.mxu0 0.0
    %2775 = vmatpush1.msra.mxu0 0.0
    %2776 = vmatprep.subr.mxu0 0.0
    %2777 = vmatpush1.msra.mxu0 0.0
    %2778 = vmatprep.subr.mxu0 0.0
    %2779 = vmatpush1.msra.mxu0 0.0
    %2780 = vmatprep.subr.mxu0 0.0
    %2781 = vmatpush1.msra.mxu0 0.0
    %2782 = vmatprep.subr.mxu0 0.0
    %2783 = vmatpush1.msra.mxu0 0.0
    %2784 = vmatprep.subr.mxu0 0.0
    %2785 = vmatpush1.msra.mxu0 0.0
    %2786 = vmatprep.subr.mxu0 0.0
    %2787 = vmatpush1.msra.mxu0 0.0
    %2788 = vmatprep.subr.mxu0 0.0
    %2789 = vmatpush1.msra.mxu0 0.0
    %2790 = vmatprep.subr.mxu0 0.0
    %2791 = vmatpush1.msra.mxu0 0.0
    %2792 = vmatprep.subr.mxu0 0.0
    %2793 = vmatpush1.msra.mxu0 0.0
    %2794 = vmatprep.subr.mxu0 0.0
    %2795 = vmatpush1.msra.mxu0 0.0
    %2796 = vmatprep.subr.mxu0 0.0
    %2797 = vmatpush1.msra.mxu0 0.0
    %2798 = vmatprep.subr.mxu0 0.0
    %2799 = vmatpush1.msra.mxu0 %v2246
    %2800 = vmatprep.subr.mxu0 0.0
    %2801 = vmatpush1.msra.mxu0 %v2245
    %2802 = vmatprep.subr.mxu0 0.0
    %2803 = vmatpush1.msra.mxu0 %v2244
    %2804 = vmatprep.subr.mxu0 0.0
    %2805 = vmatpush1.msra.mxu0 %v2243
    %2806 = vmatprep.subr.mxu0 0.0
    %2807 = vmatpush2.msra.mxu0 0.0
    %2808 = vmatprep.subr.mxu0 0.0
    %2809 = vmatpush2.msra.mxu0 0.0
    %2810 = vmatprep.subr.mxu0 0.0
    %2811 = vmatpush2.msra.mxu0 0.0
    %2812 = vmatprep.subr.mxu0 0.0
    %2813 = vmatpush2.msra.mxu0 0.0
    %2814 = vmatprep.subr.mxu0 0.0
    %2815 = vmatpush2.msra.mxu0 0.0
    %2816 = vmatprep.subr.mxu0 0.0
    %2817 = vmatpush2.msra.mxu0 0.0
    %2818 = vmatprep.subr.mxu0 0.0
    %2819 = vmatpush2.msra.mxu0 0.0
    %2820 = vmatprep.subr.mxu0 0.0
    %2821 = vmatpush2.msra.mxu0 0.0
    %2822 = vmatprep.subr.mxu0 0.0
    %2823 = vmatpush2.msra.mxu0 0.0
    %2824 = vmatprep.subr.mxu0 0.0
    %2825 = vmatpush2.msra.mxu0 0.0
    %2826 = vmatprep.subr.mxu0 0.0
    %2827 = vmatpush2.msra.mxu0 0.0
    %2828 = vmatprep.subr.mxu0 0.0
    %2829 = vmatpush2.msra.mxu0 0.0
    %2830 = vmatprep.subr.mxu0 0.0
    %2831 = vmatpush2.msra.mxu0 0.0
    %2832 = vmatprep.subr.mxu0 0.0
    %2833 = vmatpush2.msra.mxu0 0.0
    %2834 = vmatprep.subr.mxu0 0.0
    %2835 = vmatpush2.msra.mxu0 0.0
    %2836 = vmatprep.subr.mxu0 0.0
    %2837 = vmatpush2.msra.mxu0 0.0
    %2838 = vmatprep.mubr.f32.mxu0 0.0
    %2839 = vmatmul.mubr.f32.gmra.mxu0 %v2772
    %v2840 = vpop.f32.mrf.mxu0
    %v2841 = vadd.f32 0.0, %v2840
    %v2842 = vpop.f32.mrf.mxu0
    %2843 = vdwg.mxu0
    %v2845 = vrot.slane %v2841, 6
    %v2847 = vadd.f32 %v2240, %v2845
    %v2848 = vxor.u32 %v2847, 2147483648
    %v2849 = vmul.f32 %v2848, 1.442695
    %v2850 = vpow.pop %v2849
    %v2851 = vadd.f32 %v2850, 1.0
    %v2852 = vrcp.pop %v2851
    %v2853 = vmul.f32 1.0, %v2852
    %v2854 = vtanh.pop %v2847
    %v2856 = vrot.slane %v2762, 6
    %v2858 = vmul.f32 %v2853, %v2856
    %2860 = vrot.lane.b32.xlu0 %v2854, 64
    %v2861 = vpop.permute.xlu0 %2860
    %v2863 = vmul.f32 %v2853, %v2861
    %2865 = vrot.lane.b32.xlu0 %v2863, 32
    %v2866 = vpop.permute.xlu0 %2865
    %v2868 = vadd.f32 %v2858, %v2866
    %v2869 = vtanh.pop %v2868
    %2871 = vrot.lane.b32.xlu0 %v2869, 64
    %v2872 = vpop.permute.xlu0 %2871
    %v2874 = vmul.f32 %v2853, %v2872
    %v2876 = vrot.slane %v2874, 2
    %2877 = vrot.lane.b32.xlu0 %v2876, 32
    %v2878 = vpop.permute.xlu0 %2877
    %v2879 = vsel %vm288, %v2878, 0
    %2881 = vmatprep.subr.mxu0 0.0
    %2882 = vmatpush1.msra.mxu0 0.0
    %2883 = vmatprep.subr.mxu0 0.0
    %2884 = vmatpush1.msra.mxu0 0.0
    %2885 = vmatprep.subr.mxu0 0.0
    %2886 = vmatpush1.msra.mxu0 0.0
    %2887 = vmatprep.subr.mxu0 0.0
    %2888 = vmatpush1.msra.mxu0 0.0
    %2889 = vmatprep.subr.mxu0 0.0
    %2890 = vmatpush1.msra.mxu0 0.0
    %2891 = vmatprep.subr.mxu0 0.0
    %2892 = vmatpush1.msra.mxu0 0.0
    %2893 = vmatprep.subr.mxu0 0.0
    %2894 = vmatpush1.msra.mxu0 0.0
    %2895 = vmatprep.subr.mxu0 0.0
    %2896 = vmatpush1.msra.mxu0 0.0
    %2897 = vmatprep.subr.mxu0 0.0
    %2898 = vmatpush1.msra.mxu0 0.0
    %2899 = vmatprep.subr.mxu0 0.0
    %2900 = vmatpush1.msra.mxu0 0.0
    %2901 = vmatprep.subr.mxu0 0.0
    %2902 = vmatpush1.msra.mxu0 0.0
    %2903 = vmatprep.subr.mxu0 0.0
    %2904 = vmatpush1.msra.mxu0 0.0
    %2905 = vmatprep.subr.mxu0 0.0
    %2906 = vmatpush1.msra.mxu0 %v2246
    %2907 = vmatprep.subr.mxu0 0.0
    %2908 = vmatpush1.msra.mxu0 %v2245
    %2909 = vmatprep.subr.mxu0 0.0
    %2910 = vmatpush1.msra.mxu0 %v2244
    %2911 = vmatprep.subr.mxu0 0.0
    %2912 = vmatpush1.msra.mxu0 %v2243
    %2913 = vmatprep.subr.mxu0 0.0
    %2914 = vmatpush2.msra.mxu0 0.0
    %2915 = vmatprep.subr.mxu0 0.0
    %2916 = vmatpush2.msra.mxu0 0.0
    %2917 = vmatprep.subr.mxu0 0.0
    %2918 = vmatpush2.msra.mxu0 0.0
    %2919 = vmatprep.subr.mxu0 0.0
    %2920 = vmatpush2.msra.mxu0 0.0
    %2921 = vmatprep.subr.mxu0 0.0
    %2922 = vmatpush2.msra.mxu0 0.0
    %2923 = vmatprep.subr.mxu0 0.0
    %2924 = vmatpush2.msra.mxu0 0.0
    %2925 = vmatprep.subr.mxu0 0.0
    %2926 = vmatpush2.msra.mxu0 0.0
    %2927 = vmatprep.subr.mxu0 0.0
    %2928 = vmatpush2.msra.mxu0 0.0
    %2929 = vmatprep.subr.mxu0 0.0
    %2930 = vmatpush2.msra.mxu0 0.0
    %2931 = vmatprep.subr.mxu0 0.0
    %2932 = vmatpush2.msra.mxu0 0.0
    %2933 = vmatprep.subr.mxu0 0.0
    %2934 = vmatpush2.msra.mxu0 0.0
    %2935 = vmatprep.subr.mxu0 0.0
    %2936 = vmatpush2.msra.mxu0 0.0
    %2937 = vmatprep.subr.mxu0 0.0
    %2938 = vmatpush2.msra.mxu0 0.0
    %2939 = vmatprep.subr.mxu0 0.0
    %2940 = vmatpush2.msra.mxu0 0.0
    %2941 = vmatprep.subr.mxu0 0.0
    %2942 = vmatpush2.msra.mxu0 0.0
    %2943 = vmatprep.subr.mxu0 0.0
    %2944 = vmatpush2.msra.mxu0 0.0
    %2945 = vmatprep.mubr.f32.mxu0 0.0
    %2946 = vmatmul.mubr.f32.gmra.mxu0 %v2879
    %v2947 = vpop.f32.mrf.mxu0
    %v2948 = vadd.f32 0.0, %v2947
    %v2949 = vpop.f32.mrf.mxu0
    %2950 = vdwg.mxu0
    %v2952 = vrot.slane %v2948, 4
    %v2954 = vadd.f32 %v2240, %v2952
    %v2955 = vxor.u32 %v2954, 2147483648
    %v2956 = vmul.f32 %v2955, 1.442695
    %v2957 = vpow.pop %v2956
    %v2958 = vadd.f32 %v2957, 1.0
    %v2959 = vrcp.pop %v2958
    %v2960 = vmul.f32 1.0, %v2959
    %v2961 = vtanh.pop %v2954
    %v2963 = vrot.slane %v2868, 6
    %v2965 = vmul.f32 %v2960, %v2963
    %2967 = vrot.lane.b32.xlu0 %v2961, 64
    %v2968 = vpop.permute.xlu0 %2967
    %v2970 = vmul.f32 %v2960, %v2968
    %2972 = vrot.lane.b32.xlu0 %v2970, 32
    %v2973 = vpop.permute.xlu0 %2972
    %v2975 = vadd.f32 %v2965, %v2973
    %v2976 = vtanh.pop %v2975
    %2978 = vrot.lane.b32.xlu0 %v2976, 64
    %v2979 = vpop.permute.xlu0 %2978
    %v2981 = vmul.f32 %v2960, %v2979
    %v2983 = vrot.slane %v2981, 4
    %2984 = vrot.lane.b32.xlu0 %v2983, 32
    %v2985 = vpop.permute.xlu0 %2984
    %v2986 = vsel %vm288, %v2985, 0
    %2988 = vmatprep.subr.mxu0 0.0
    %2989 = vmatpush1.msra.mxu0 0.0
    %2990 = vmatprep.subr.mxu0 0.0
    %2991 = vmatpush1.msra.mxu0 0.0
    %2992 = vmatprep.subr.mxu0 0.0
    %2993 = vmatpush1.msra.mxu0 0.0
    %2994 = vmatprep.subr.mxu0 0.0
    %2995 = vmatpush1.msra.mxu0 0.0
    %2996 = vmatprep.subr.mxu0 0.0
    %2997 = vmatpush1.msra.mxu0 0.0
    %2998 = vmatprep.subr.mxu0 0.0
    %2999 = vmatpush1.msra.mxu0 0.0
    %3000 = vmatprep.subr.mxu0 0.0
    %3001 = vmatpush1.msra.mxu0 0.0
    %3002 = vmatprep.subr.mxu0 0.0
    %3003 = vmatpush1.msra.mxu0 0.0
    %3004 = vmatprep.subr.mxu0 0.0
    %3005 = vmatpush1.msra.mxu0 0.0
    %3006 = vmatprep.subr.mxu0 0.0
    %3007 = vmatpush1.msra.mxu0 0.0
    %3008 = vmatprep.subr.mxu0 0.0
    %3009 = vmatpush1.msra.mxu0 0.0
    %3010 = vmatprep.subr.mxu0 0.0
    %3011 = vmatpush1.msra.mxu0 0.0
    %3012 = vmatprep.subr.mxu0 0.0
    %3013 = vmatpush1.msra.mxu0 %v2246
    %3014 = vmatprep.subr.mxu0 0.0
    %3015 = vmatpush1.msra.mxu0 %v2245
    %3016 = vmatprep.subr.mxu0 0.0
    %3017 = vmatpush1.msra.mxu0 %v2244
    %3018 = vmatprep.subr.mxu0 0.0
    %3019 = vmatpush1.msra.mxu0 %v2243
    %3020 = vmatprep.subr.mxu0 0.0
    %3021 = vmatpush2.msra.mxu0 0.0
    %3022 = vmatprep.subr.mxu0 0.0
    %3023 = vmatpush2.msra.mxu0 0.0
    %3024 = vmatprep.subr.mxu0 0.0
    %3025 = vmatpush2.msra.mxu0 0.0
    %3026 = vmatprep.subr.mxu0 0.0
    %3027 = vmatpush2.msra.mxu0 0.0
    %3028 = vmatprep.subr.mxu0 0.0
    %3029 = vmatpush2.msra.mxu0 0.0
    %3030 = vmatprep.subr.mxu0 0.0
    %3031 = vmatpush2.msra.mxu0 0.0
    %3032 = vmatprep.subr.mxu0 0.0
    %3033 = vmatpush2.msra.mxu0 0.0
    %3034 = vmatprep.subr.mxu0 0.0
    %3035 = vmatpush2.msra.mxu0 0.0
    %3036 = vmatprep.subr.mxu0 0.0
    %3037 = vmatpush2.msra.mxu0 0.0
    %3038 = vmatprep.subr.mxu0 0.0
    %3039 = vmatpush2.msra.mxu0 0.0
    %3040 = vmatprep.subr.mxu0 0.0
    %3041 = vmatpush2.msra.mxu0 0.0
    %3042 = vmatprep.subr.mxu0 0.0
    %3043 = vmatpush2.msra.mxu0 0.0
    %3044 = vmatprep.subr.mxu0 0.0
    %3045 = vmatpush2.msra.mxu0 0.0
    %3046 = vmatprep.subr.mxu0 0.0
    %3047 = vmatpush2.msra.mxu0 0.0
    %3048 = vmatprep.subr.mxu0 0.0
    %3049 = vmatpush2.msra.mxu0 0.0
    %3050 = vmatprep.subr.mxu0 0.0
    %3051 = vmatpush2.msra.mxu0 0.0
    %3052 = vmatprep.mubr.f32.mxu0 0.0
    %3053 = vmatmul.mubr.f32.gmra.mxu0 %v2986
    %v3054 = vpop.f32.mrf.mxu0
    %v3055 = vadd.f32 0.0, %v3054
    %v3056 = vpop.f32.mrf.mxu0
    %3057 = vdwg.mxu0
    %v3059 = vrot.slane %v3055, 2
    %v3061 = vadd.f32 %v2240, %v3059
    %v3062 = vxor.u32 %v3061, 2147483648
    %v3063 = vmul.f32 %v3062, 1.442695
    %v3064 = vpow.pop %v3063
    %v3065 = vadd.f32 %v3064, 1.0
    %v3066 = vrcp.pop %v3065
    %v3067 = vmul.f32 1.0, %v3066
    %v3068 = vtanh.pop %v3061
    %v3070 = vrot.slane %v2975, 6
    %v3072 = vmul.f32 %v3067, %v3070
    %3074 = vrot.lane.b32.xlu0 %v3068, 64
    %v3075 = vpop.permute.xlu0 %3074
    %v3077 = vmul.f32 %v3067, %v3075
    %3079 = vrot.lane.b32.xlu0 %v3077, 32
    %v3080 = vpop.permute.xlu0 %3079
    %v3082 = vadd.f32 %v3072, %v3080
    %v3083 = vtanh.pop %v3082
    %3085 = vrot.lane.b32.xlu0 %v3083, 64
    %v3086 = vpop.permute.xlu0 %3085
    %v3088 = vmul.f32 %v3067, %v3086
    %v3089 = vld [vmem:[#allocation2 + $0x658] sm:$0xff]
    %v3090 = vld [vmem:[#allocation2 + $0x660] sm:$0xff]
    %v3091 = vld [vmem:[#allocation2 + $0x668] sm:$0xff]
    %v3092 = vld [vmem:[#allocation2 + $0x670] sm:$0xff]
    %v3093 = vld [vmem:[#allocation2 + $0x678] sm:$0x1]
    %v3094 = vlaneseq
    %v3095 = vshrl.u32 %v3094, 7
    %v3096 = vsub.s32 0, %v3095
    %v3097 = vrot.slane %v3093, %v3096
    %v3099 = vsel %vm288, %v2150, 0
    %3101 = vmatprep.subr.mxu0 0.0
    %3102 = vmatpush1.msra.mxu0 0.0
    %3103 = vmatprep.subr.mxu0 0.0
    %3104 = vmatpush1.msra.mxu0 0.0
    %3105 = vmatprep.subr.mxu0 0.0
    %3106 = vmatpush1.msra.mxu0 0.0
    %3107 = vmatprep.subr.mxu0 0.0
    %3108 = vmatpush1.msra.mxu0 0.0
    %3109 = vmatprep.subr.mxu0 0.0
    %3110 = vmatpush1.msra.mxu0 0.0
    %3111 = vmatprep.subr.mxu0 0.0
    %3112 = vmatpush1.msra.mxu0 0.0
    %3113 = vmatprep.subr.mxu0 0.0
    %3114 = vmatpush1.msra.mxu0 0.0
    %3115 = vmatprep.subr.mxu0 0.0
    %3116 = vmatpush1.msra.mxu0 0.0
    %3117 = vmatprep.subr.mxu0 0.0
    %3118 = vmatpush1.msra.mxu0 0.0
    %3119 = vmatprep.subr.mxu0 0.0
    %3120 = vmatpush1.msra.mxu0 0.0
    %3121 = vmatprep.subr.mxu0 0.0
    %3122 = vmatpush1.msra.mxu0 0.0
    %3123 = vmatprep.subr.mxu0 0.0
    %3124 = vmatpush1.msra.mxu0 0.0
    %3125 = vmatprep.subr.mxu0 0.0
    %3126 = vmatpush1.msra.mxu0 %v3092
    %3127 = vmatprep.subr.mxu0 0.0
    %3128 = vmatpush1.msra.mxu0 %v3091
    %3129 = vmatprep.subr.mxu0 0.0
    %3130 = vmatpush1.msra.mxu0 %v3090
    %3131 = vmatprep.subr.mxu0 0.0
    %3132 = vmatpush1.msra.mxu0 %v3089
    %3133 = vmatprep.subr.mxu0 0.0
    %3134 = vmatpush2.msra.mxu0 0.0
    %3135 = vmatprep.subr.mxu0 0.0
    %3136 = vmatpush2.msra.mxu0 0.0
    %3137 = vmatprep.subr.mxu0 0.0
    %3138 = vmatpush2.msra.mxu0 0.0
    %3139 = vmatprep.subr.mxu0 0.0
    %3140 = vmatpush2.msra.mxu0 0.0
    %3141 = vmatprep.subr.mxu0 0.0
    %3142 = vmatpush2.msra.mxu0 0.0
    %3143 = vmatprep.subr.mxu0 0.0
    %3144 = vmatpush2.msra.mxu0 0.0
    %3145 = vmatprep.subr.mxu0 0.0
    %3146 = vmatpush2.msra.mxu0 0.0
    %3147 = vmatprep.subr.mxu0 0.0
    %3148 = vmatpush2.msra.mxu0 0.0
    %3149 = vmatprep.subr.mxu0 0.0
    %3150 = vmatpush2.msra.mxu0 0.0
    %3151 = vmatprep.subr.mxu0 0.0
    %3152 = vmatpush2.msra.mxu0 0.0
    %3153 = vmatprep.subr.mxu0 0.0
    %3154 = vmatpush2.msra.mxu0 0.0
    %3155 = vmatprep.subr.mxu0 0.0
    %3156 = vmatpush2.msra.mxu0 0.0
    %3157 = vmatprep.subr.mxu0 0.0
    %3158 = vmatpush2.msra.mxu0 0.0
    %3159 = vmatprep.subr.mxu0 0.0
    %3160 = vmatpush2.msra.mxu0 0.0
    %3161 = vmatprep.subr.mxu0 0.0
    %3162 = vmatpush2.msra.mxu0 0.0
    %3163 = vmatprep.subr.mxu0 0.0
    %3164 = vmatpush2.msra.mxu0 0.0
    %3165 = vmatprep.mubr.f32.mxu0 0.0
    %3166 = vmatmul.mubr.f32.gmra.mxu0 %v3099
    %v3167 = vpop.f32.mrf.mxu0
    %v3168 = vadd.f32 %v3097, %v3167
    %v3169 = vpop.f32.mrf.mxu0
    %3170 = vdwg.mxu0
    %v3171 = vld [vmem:[#allocation2 + $0x680] sm:$0xff]
    %v3172 = vld [vmem:[#allocation2 + $0x688] sm:$0xff]
    %v3173 = vld [vmem:[#allocation2 + $0x690] sm:$0xff]
    %v3174 = vld [vmem:[#allocation2 + $0x698] sm:$0xff]
    %v3176 = vrot.slane %v3088, 6
    %3177 = vrot.lane.b32.xlu0 %v3176, 32
    %v3178 = vpop.permute.xlu0 %3177
    %v3179 = vsel %vm288, %v3178, 0
    %3181 = vmatprep.subr.mxu0 0.0
    %3182 = vmatpush1.msra.mxu0 0.0
    %3183 = vmatprep.subr.mxu0 0.0
    %3184 = vmatpush1.msra.mxu0 0.0
    %3185 = vmatprep.subr.mxu0 0.0
    %3186 = vmatpush1.msra.mxu0 0.0
    %3187 = vmatprep.subr.mxu0 0.0
    %3188 = vmatpush1.msra.mxu0 0.0
    %3189 = vmatprep.subr.mxu0 0.0
    %3190 = vmatpush1.msra.mxu0 0.0
    %3191 = vmatprep.subr.mxu0 0.0
    %3192 = vmatpush1.msra.mxu0 0.0
    %3193 = vmatprep.subr.mxu0 0.0
    %3194 = vmatpush1.msra.mxu0 0.0
    %3195 = vmatprep.subr.mxu0 0.0
    %3196 = vmatpush1.msra.mxu0 0.0
    %3197 = vmatprep.subr.mxu0 0.0
    %3198 = vmatpush1.msra.mxu0 0.0
    %3199 = vmatprep.subr.mxu0 0.0
    %3200 = vmatpush1.msra.mxu0 0.0
    %3201 = vmatprep.subr.mxu0 0.0
    %3202 = vmatpush1.msra.mxu0 0.0
    %3203 = vmatprep.subr.mxu0 0.0
    %3204 = vmatpush1.msra.mxu0 0.0
    %3205 = vmatprep.subr.mxu0 0.0
    %3206 = vmatpush1.msra.mxu0 %v3174
    %3207 = vmatprep.subr.mxu0 0.0
    %3208 = vmatpush1.msra.mxu0 %v3173
    %3209 = vmatprep.subr.mxu0 0.0
    %3210 = vmatpush1.msra.mxu0 %v3172
    %3211 = vmatprep.subr.mxu0 0.0
    %3212 = vmatpush1.msra.mxu0 %v3171
    %3213 = vmatprep.subr.mxu0 0.0
    %3214 = vmatpush2.msra.mxu0 0.0
    %3215 = vmatprep.subr.mxu0 0.0
    %3216 = vmatpush2.msra.mxu0 0.0
    %3217 = vmatprep.subr.mxu0 0.0
    %3218 = vmatpush2.msra.mxu0 0.0
    %3219 = vmatprep.subr.mxu0 0.0
    %3220 = vmatpush2.msra.mxu0 0.0
    %3221 = vmatprep.subr.mxu0 0.0
    %3222 = vmatpush2.msra.mxu0 0.0
    %3223 = vmatprep.subr.mxu0 0.0
    %3224 = vmatpush2.msra.mxu0 0.0
    %3225 = vmatprep.subr.mxu0 0.0
    %3226 = vmatpush2.msra.mxu0 0.0
    %3227 = vmatprep.subr.mxu0 0.0
    %3228 = vmatpush2.msra.mxu0 0.0
    %3229 = vmatprep.subr.mxu0 0.0
    %3230 = vmatpush2.msra.mxu0 0.0
    %3231 = vmatprep.subr.mxu0 0.0
    %3232 = vmatpush2.msra.mxu0 0.0
    %3233 = vmatprep.subr.mxu0 0.0
    %3234 = vmatpush2.msra.mxu0 0.0
    %3235 = vmatprep.subr.mxu0 0.0
    %3236 = vmatpush2.msra.mxu0 0.0
    %3237 = vmatprep.subr.mxu0 0.0
    %3238 = vmatpush2.msra.mxu0 0.0
    %3239 = vmatprep.subr.mxu0 0.0
    %3240 = vmatpush2.msra.mxu0 0.0
    %3241 = vmatprep.subr.mxu0 0.0
    %3242 = vmatpush2.msra.mxu0 0.0
    %3243 = vmatprep.subr.mxu0 0.0
    %3244 = vmatpush2.msra.mxu0 0.0
    %3245 = vmatprep.mubr.f32.mxu0 0.0
    %3246 = vmatmul.mubr.f32.gmra.mxu0 %v3179
    %v3247 = vpop.f32.mrf.mxu0
    %v3248 = vadd.f32 0.0, %v3247
    %v3249 = vpop.f32.mrf.mxu0
    %3250 = vdwg.mxu0
    %v3251 = vadd.f32 %v3168, %v3248
    %v3252 = vxor.u32 %v3251, 2147483648
    %v3253 = vmul.f32 %v3252, 1.442695
    %v3254 = vpow.pop %v3253
    %v3255 = vadd.f32 %v3254, 1.0
    %v3256 = vrcp.pop %v3255
    %v3257 = vmul.f32 1.0, %v3256
    %v3258 = vtanh.pop %v3251
    %v3260 = vrot.slane %v3082, 6
    %v3262 = vmul.f32 %v3257, %v3260
    %3264 = vrot.lane.b32.xlu0 %v3258, 64
    %v3265 = vpop.permute.xlu0 %3264
    %v3267 = vmul.f32 %v3257, %v3265
    %3269 = vrot.lane.b32.xlu0 %v3267, 32
    %v3270 = vpop.permute.xlu0 %3269
    %v3272 = vadd.f32 %v3262, %v3270
    %v3273 = vtanh.pop %v3272
    %3275 = vrot.lane.b32.xlu0 %v3273, 64
    %v3276 = vpop.permute.xlu0 %3275
    %v3278 = vmul.f32 %v3257, %v3276
    %3280 = vrot.lane.b32.xlu0 %v3278, 32
    %v3281 = vpop.permute.xlu0 %3280
    %v3282 = vsel %vm288, %v3281, 0
    %3284 = vmatprep.subr.mxu0 0.0
    %3285 = vmatpush1.msra.mxu0 0.0
    %3286 = vmatprep.subr.mxu0 0.0
    %3287 = vmatpush1.msra.mxu0 0.0
    %3288 = vmatprep.subr.mxu0 0.0
    %3289 = vmatpush1.msra.mxu0 0.0
    %3290 = vmatprep.subr.mxu0 0.0
    %3291 = vmatpush1.msra.mxu0 0.0
    %3292 = vmatprep.subr.mxu0 0.0
    %3293 = vmatpush1.msra.mxu0 0.0
    %3294 = vmatprep.subr.mxu0 0.0
    %3295 = vmatpush1.msra.mxu0 0.0
    %3296 = vmatprep.subr.mxu0 0.0
    %3297 = vmatpush1.msra.mxu0 0.0
    %3298 = vmatprep.subr.mxu0 0.0
    %3299 = vmatpush1.msra.mxu0 0.0
    %3300 = vmatprep.subr.mxu0 0.0
    %3301 = vmatpush1.msra.mxu0 0.0
    %3302 = vmatprep.subr.mxu0 0.0
    %3303 = vmatpush1.msra.mxu0 0.0
    %3304 = vmatprep.subr.mxu0 0.0
    %3305 = vmatpush1.msra.mxu0 0.0
    %3306 = vmatprep.subr.mxu0 0.0
    %3307 = vmatpush1.msra.mxu0 0.0
    %3308 = vmatprep.subr.mxu0 0.0
    %3309 = vmatpush1.msra.mxu0 %v3174
    %3310 = vmatprep.subr.mxu0 0.0
    %3311 = vmatpush1.msra.mxu0 %v3173
    %3312 = vmatprep.subr.mxu0 0.0
    %3313 = vmatpush1.msra.mxu0 %v3172
    %3314 = vmatprep.subr.mxu0 0.0
    %3315 = vmatpush1.msra.mxu0 %v3171
    %3316 = vmatprep.subr.mxu0 0.0
    %3317 = vmatpush2.msra.mxu0 0.0
    %3318 = vmatprep.subr.mxu0 0.0
    %3319 = vmatpush2.msra.mxu0 0.0
    %3320 = vmatprep.subr.mxu0 0.0
    %3321 = vmatpush2.msra.mxu0 0.0
    %3322 = vmatprep.subr.mxu0 0.0
    %3323 = vmatpush2.msra.mxu0 0.0
    %3324 = vmatprep.subr.mxu0 0.0
    %3325 = vmatpush2.msra.mxu0 0.0
    %3326 = vmatprep.subr.mxu0 0.0
    %3327 = vmatpush2.msra.mxu0 0.0
    %3328 = vmatprep.subr.mxu0 0.0
    %3329 = vmatpush2.msra.mxu0 0.0
    %3330 = vmatprep.subr.mxu0 0.0
    %3331 = vmatpush2.msra.mxu0 0.0
    %3332 = vmatprep.subr.mxu0 0.0
    %3333 = vmatpush2.msra.mxu0 0.0
    %3334 = vmatprep.subr.mxu0 0.0
    %3335 = vmatpush2.msra.mxu0 0.0
    %3336 = vmatprep.subr.mxu0 0.0
    %3337 = vmatpush2.msra.mxu0 0.0
    %3338 = vmatprep.subr.mxu0 0.0
    %3339 = vmatpush2.msra.mxu0 0.0
    %3340 = vmatprep.subr.mxu0 0.0
    %3341 = vmatpush2.msra.mxu0 0.0
    %3342 = vmatprep.subr.mxu0 0.0
    %3343 = vmatpush2.msra.mxu0 0.0
    %3344 = vmatprep.subr.mxu0 0.0
    %3345 = vmatpush2.msra.mxu0 0.0
    %3346 = vmatprep.subr.mxu0 0.0
    %3347 = vmatpush2.msra.mxu0 0.0
    %3348 = vmatprep.mubr.f32.mxu0 0.0
    %3349 = vmatmul.mubr.f32.gmra.mxu0 %v3282
    %v3350 = vpop.f32.mrf.mxu0
    %v3351 = vadd.f32 0.0, %v3350
    %v3352 = vpop.f32.mrf.mxu0
    %3353 = vdwg.mxu0
    %v3355 = vrot.slane %v3351, 6
    %v3357 = vadd.f32 %v3168, %v3355
    %v3358 = vxor.u32 %v3357, 2147483648
    %v3359 = vmul.f32 %v3358, 1.442695
    %v3360 = vpow.pop %v3359
    %v3361 = vadd.f32 %v3360, 1.0
    %v3362 = vrcp.pop %v3361
    %v3363 = vmul.f32 1.0, %v3362
    %v3364 = vtanh.pop %v3357
    %v3366 = vrot.slane %v3272, 6
    %v3368 = vmul.f32 %v3363, %v3366
    %3370 = vrot.lane.b32.xlu0 %v3364, 64
    %v3371 = vpop.permute.xlu0 %3370
    %v3373 = vmul.f32 %v3363, %v3371
    %3375 = vrot.lane.b32.xlu0 %v3373, 32
    %v3376 = vpop.permute.xlu0 %3375
    %v3378 = vadd.f32 %v3368, %v3376
    %v3379 = vtanh.pop %v3378
    %3381 = vrot.lane.b32.xlu0 %v3379, 64
    %v3382 = vpop.permute.xlu0 %3381
    %v3384 = vmul.f32 %v3363, %v3382
    %v3386 = vrot.slane %v3384, 2
    %3387 = vrot.lane.b32.xlu0 %v3386, 32
    %v3388 = vpop.permute.xlu0 %3387
    %v3389 = vsel %vm288, %v3388, 0
    %3391 = vmatprep.subr.mxu0 0.0
    %3392 = vmatpush1.msra.mxu0 0.0
    %3393 = vmatprep.subr.mxu0 0.0
    %3394 = vmatpush1.msra.mxu0 0.0
    %3395 = vmatprep.subr.mxu0 0.0
    %3396 = vmatpush1.msra.mxu0 0.0
    %3397 = vmatprep.subr.mxu0 0.0
    %3398 = vmatpush1.msra.mxu0 0.0
    %3399 = vmatprep.subr.mxu0 0.0
    %3400 = vmatpush1.msra.mxu0 0.0
    %3401 = vmatprep.subr.mxu0 0.0
    %3402 = vmatpush1.msra.mxu0 0.0
    %3403 = vmatprep.subr.mxu0 0.0
    %3404 = vmatpush1.msra.mxu0 0.0
    %3405 = vmatprep.subr.mxu0 0.0
    %3406 = vmatpush1.msra.mxu0 0.0
    %3407 = vmatprep.subr.mxu0 0.0
    %3408 = vmatpush1.msra.mxu0 0.0
    %3409 = vmatprep.subr.mxu0 0.0
    %3410 = vmatpush1.msra.mxu0 0.0
    %3411 = vmatprep.subr.mxu0 0.0
    %3412 = vmatpush1.msra.mxu0 0.0
    %3413 = vmatprep.subr.mxu0 0.0
    %3414 = vmatpush1.msra.mxu0 0.0
    %3415 = vmatprep.subr.mxu0 0.0
    %3416 = vmatpush1.msra.mxu0 %v3174
    %3417 = vmatprep.subr.mxu0 0.0
    %3418 = vmatpush1.msra.mxu0 %v3173
    %3419 = vmatprep.subr.mxu0 0.0
    %3420 = vmatpush1.msra.mxu0 %v3172
    %3421 = vmatprep.subr.mxu0 0.0
    %3422 = vmatpush1.msra.mxu0 %v3171
    %3423 = vmatprep.subr.mxu0 0.0
    %3424 = vmatpush2.msra.mxu0 0.0
    %3425 = vmatprep.subr.mxu0 0.0
    %3426 = vmatpush2.msra.mxu0 0.0
    %3427 = vmatprep.subr.mxu0 0.0
    %3428 = vmatpush2.msra.mxu0 0.0
    %3429 = vmatprep.subr.mxu0 0.0
    %3430 = vmatpush2.msra.mxu0 0.0
    %3431 = vmatprep.subr.mxu0 0.0
    %3432 = vmatpush2.msra.mxu0 0.0
    %3433 = vmatprep.subr.mxu0 0.0
    %3434 = vmatpush2.msra.mxu0 0.0
    %3435 = vmatprep.subr.mxu0 0.0
    %3436 = vmatpush2.msra.mxu0 0.0
    %3437 = vmatprep.subr.mxu0 0.0
    %3438 = vmatpush2.msra.mxu0 0.0
    %3439 = vmatprep.subr.mxu0 0.0
    %3440 = vmatpush2.msra.mxu0 0.0
    %3441 = vmatprep.subr.mxu0 0.0
    %3442 = vmatpush2.msra.mxu0 0.0
    %3443 = vmatprep.subr.mxu0 0.0
    %3444 = vmatpush2.msra.mxu0 0.0
    %3445 = vmatprep.subr.mxu0 0.0
    %3446 = vmatpush2.msra.mxu0 0.0
    %3447 = vmatprep.subr.mxu0 0.0
    %3448 = vmatpush2.msra.mxu0 0.0
    %3449 = vmatprep.subr.mxu0 0.0
    %3450 = vmatpush2.msra.mxu0 0.0
    %3451 = vmatprep.subr.mxu0 0.0
    %3452 = vmatpush2.msra.mxu0 0.0
    %3453 = vmatprep.subr.mxu0 0.0
    %3454 = vmatpush2.msra.mxu0 0.0
    %3455 = vmatprep.mubr.f32.mxu0 0.0
    %3456 = vmatmul.mubr.f32.gmra.mxu0 %v3389
    %v3457 = vpop.f32.mrf.mxu0
    %v3458 = vadd.f32 0.0, %v3457
    %v3459 = vpop.f32.mrf.mxu0
    %3460 = vdwg.mxu0
    %v3462 = vrot.slane %v3458, 4
    %v3464 = vadd.f32 %v3168, %v3462
    %v3465 = vxor.u32 %v3464, 2147483648
    %v3466 = vmul.f32 %v3465, 1.442695
    %v3467 = vpow.pop %v3466
    %v3468 = vadd.f32 %v3467, 1.0
    %v3469 = vrcp.pop %v3468
    %v3470 = vmul.f32 1.0, %v3469
    %v3471 = vtanh.pop %v3464
    %v3473 = vrot.slane %v3378, 6
    %v3475 = vmul.f32 %v3470, %v3473
    %3477 = vrot.lane.b32.xlu0 %v3471, 64
    %v3478 = vpop.permute.xlu0 %3477
    %v3480 = vmul.f32 %v3470, %v3478
    %3482 = vrot.lane.b32.xlu0 %v3480, 32
    %v3483 = vpop.permute.xlu0 %3482
    %v3485 = vadd.f32 %v3475, %v3483
    %v3486 = vtanh.pop %v3485
    %3488 = vrot.lane.b32.xlu0 %v3486, 64
    %v3489 = vpop.permute.xlu0 %3488
    %v3491 = vmul.f32 %v3470, %v3489
    %v3493 = vrot.slane %v3491, 4
    %3494 = vrot.lane.b32.xlu0 %v3493, 32
    %v3495 = vpop.permute.xlu0 %3494
    %v3496 = vsel %vm288, %v3495, 0
    %3498 = vmatprep.subr.mxu0 0.0
    %3499 = vmatpush1.msra.mxu0 0.0
    %3500 = vmatprep.subr.mxu0 0.0
    %3501 = vmatpush1.msra.mxu0 0.0
    %3502 = vmatprep.subr.mxu0 0.0
    %3503 = vmatpush1.msra.mxu0 0.0
    %3504 = vmatprep.subr.mxu0 0.0
    %3505 = vmatpush1.msra.mxu0 0.0
    %3506 = vmatprep.subr.mxu0 0.0
    %3507 = vmatpush1.msra.mxu0 0.0
    %3508 = vmatprep.subr.mxu0 0.0
    %3509 = vmatpush1.msra.mxu0 0.0
    %3510 = vmatprep.subr.mxu0 0.0
    %3511 = vmatpush1.msra.mxu0 0.0
    %3512 = vmatprep.subr.mxu0 0.0
    %3513 = vmatpush1.msra.mxu0 0.0
    %3514 = vmatprep.subr.mxu0 0.0
    %3515 = vmatpush1.msra.mxu0 0.0
    %3516 = vmatprep.subr.mxu0 0.0
    %3517 = vmatpush1.msra.mxu0 0.0
    %3518 = vmatprep.subr.mxu0 0.0
    %3519 = vmatpush1.msra.mxu0 0.0
    %3520 = vmatprep.subr.mxu0 0.0
    %3521 = vmatpush1.msra.mxu0 0.0
    %3522 = vmatprep.subr.mxu0 0.0
    %3523 = vmatpush1.msra.mxu0 %v3174
    %3524 = vmatprep.subr.mxu0 0.0
    %3525 = vmatpush1.msra.mxu0 %v3173
    %3526 = vmatprep.subr.mxu0 0.0
    %3527 = vmatpush1.msra.mxu0 %v3172
    %3528 = vmatprep.subr.mxu0 0.0
    %3529 = vmatpush1.msra.mxu0 %v3171
    %3530 = vmatprep.subr.mxu0 0.0
    %3531 = vmatpush2.msra.mxu0 0.0
    %3532 = vmatprep.subr.mxu0 0.0
    %3533 = vmatpush2.msra.mxu0 0.0
    %3534 = vmatprep.subr.mxu0 0.0
    %3535 = vmatpush2.msra.mxu0 0.0
    %3536 = vmatprep.subr.mxu0 0.0
    %3537 = vmatpush2.msra.mxu0 0.0
    %3538 = vmatprep.subr.mxu0 0.0
    %3539 = vmatpush2.msra.mxu0 0.0
    %3540 = vmatprep.subr.mxu0 0.0
    %3541 = vmatpush2.msra.mxu0 0.0
    %3542 = vmatprep.subr.mxu0 0.0
    %3543 = vmatpush2.msra.mxu0 0.0
    %3544 = vmatprep.subr.mxu0 0.0
    %3545 = vmatpush2.msra.mxu0 0.0
    %3546 = vmatprep.subr.mxu0 0.0
    %3547 = vmatpush2.msra.mxu0 0.0
    %3548 = vmatprep.subr.mxu0 0.0
    %3549 = vmatpush2.msra.mxu0 0.0
    %3550 = vmatprep.subr.mxu0 0.0
    %3551 = vmatpush2.msra.mxu0 0.0
    %3552 = vmatprep.subr.mxu0 0.0
    %3553 = vmatpush2.msra.mxu0 0.0
    %3554 = vmatprep.subr.mxu0 0.0
    %3555 = vmatpush2.msra.mxu0 0.0
    %3556 = vmatprep.subr.mxu0 0.0
    %3557 = vmatpush2.msra.mxu0 0.0
    %3558 = vmatprep.subr.mxu0 0.0
    %3559 = vmatpush2.msra.mxu0 0.0
    %3560 = vmatprep.subr.mxu0 0.0
    %3561 = vmatpush2.msra.mxu0 0.0
    %3562 = vmatprep.mubr.f32.mxu0 0.0
    %3563 = vmatmul.mubr.f32.gmra.mxu0 %v3496
    %v3564 = vpop.f32.mrf.mxu0
    %v3565 = vadd.f32 0.0, %v3564
    %v3566 = vpop.f32.mrf.mxu0
    %3567 = vdwg.mxu0
    %v3569 = vrot.slane %v3565, 2
    %v3571 = vadd.f32 %v3168, %v3569
    %v3572 = vxor.u32 %v3571, 2147483648
    %v3573 = vmul.f32 %v3572, 1.442695
    %v3574 = vpow.pop %v3573
    %v3575 = vadd.f32 %v3574, 1.0
    %v3576 = vrcp.pop %v3575
    %v3577 = vmul.f32 1.0, %v3576
    %v3578 = vtanh.pop %v3571
    %v3580 = vrot.slane %v3485, 6
    %v3582 = vmul.f32 %v3577, %v3580
    %3584 = vrot.lane.b32.xlu0 %v3578, 64
    %v3585 = vpop.permute.xlu0 %3584
    %v3587 = vmul.f32 %v3577, %v3585
    %3589 = vrot.lane.b32.xlu0 %v3587, 32
    %v3590 = vpop.permute.xlu0 %3589
    %v3592 = vadd.f32 %v3582, %v3590
    %v3593 = vtanh.pop %v3592
    %3595 = vrot.lane.b32.xlu0 %v3593, 64
    %v3596 = vpop.permute.xlu0 %3595
    %v3598 = vmul.f32 %v3577, %v3596
    %vm3599 = vcmask 1041408
    %v3600 = vsel %vm3599, %v2344, %v2450
    %v3601 = vsel %vm92, %v3600, %v2557
    %vm3602 = vcmask 1045504
    %v3603 = vsel %vm3602, %v3601, %v2664
    %v3604 = vsel %vm3599, %v2768, %v2874
    %v3605 = vsel %vm92, %v3604, %v2981
    %v3606 = vsel %vm3602, %v3605, %v3088
    %v3607 = vsel %vm3599, %v3278, %v3384
    %v3608 = vsel %vm92, %v3607, %v3491
    %v3609 = vsel %vm3602, %v3608, %v3598
    %v3610 = vld [vmem:[#allocation2 + $0x6a0] sm:$0xff]
    %v3611 = vld [vmem:[#allocation2 + $0x6a8] sm:$0xff]
    %v3612 = vld [vmem:[#allocation2 + $0x6b0] sm:$0xff]
    %v3613 = vld [vmem:[#allocation2 + $0x6b8] sm:$0xff]
    %v3614 = vld [vmem:[#allocation2 + $0x6c0] sm:$0x1]
    %v3615 = vlaneseq
    %v3616 = vshrl.u32 %v3615, 7
    %v3617 = vsub.s32 0, %v3616
    %v3618 = vrot.slane %v3614, %v3617
    %3622 = vrot.lane.b32.xlu0 %v3603, 32
    %v3623 = vpop.permute.xlu0 %3622
    %3624 = vrot.lane.b32.xlu0 %v3606, 32
    %v3625 = vpop.permute.xlu0 %3624
    %3626 = vrot.lane.b32.xlu0 %v3609, 32
    %v3627 = vpop.permute.xlu0 %3626
    %v3628 = vsel %vm288, %v3623, 0
    %v3630 = vsel %vm288, %v3625, 0
    %v3632 = vsel %vm288, %v3627, 0
    %3634 = vmatprep.subr.mxu0 0.0
    %3635 = vmatpush1.msra.mxu0 0.0
    %3636 = vmatprep.subr.mxu0 0.0
    %3637 = vmatpush1.msra.mxu0 0.0
    %3638 = vmatprep.subr.mxu0 0.0
    %3639 = vmatpush1.msra.mxu0 0.0
    %3640 = vmatprep.subr.mxu0 0.0
    %3641 = vmatpush1.msra.mxu0 0.0
    %3642 = vmatprep.subr.mxu0 0.0
    %3643 = vmatpush1.msra.mxu0 0.0
    %3644 = vmatprep.subr.mxu0 0.0
    %3645 = vmatpush1.msra.mxu0 0.0
    %3646 = vmatprep.subr.mxu0 0.0
    %3647 = vmatpush1.msra.mxu0 0.0
    %3648 = vmatprep.subr.mxu0 0.0
    %3649 = vmatpush1.msra.mxu0 0.0
    %3650 = vmatprep.subr.mxu0 0.0
    %3651 = vmatpush1.msra.mxu0 0.0
    %3652 = vmatprep.subr.mxu0 0.0
    %3653 = vmatpush1.msra.mxu0 0.0
    %3654 = vmatprep.subr.mxu0 0.0
    %3655 = vmatpush1.msra.mxu0 0.0
    %3656 = vmatprep.subr.mxu0 0.0
    %3657 = vmatpush1.msra.mxu0 0.0
    %3658 = vmatprep.subr.mxu0 0.0
    %3659 = vmatpush1.msra.mxu0 %v3613
    %3660 = vmatprep.subr.mxu0 0.0
    %3661 = vmatpush1.msra.mxu0 %v3612
    %3662 = vmatprep.subr.mxu0 0.0
    %3663 = vmatpush1.msra.mxu0 %v3611
    %3664 = vmatprep.subr.mxu0 0.0
    %3665 = vmatpush1.msra.mxu0 %v3610
    %3666 = vmatprep.subr.mxu0 0.0
    %3667 = vmatpush2.msra.mxu0 0.0
    %3668 = vmatprep.subr.mxu0 0.0
    %3669 = vmatpush2.msra.mxu0 0.0
    %3670 = vmatprep.subr.mxu0 0.0
    %3671 = vmatpush2.msra.mxu0 0.0
    %3672 = vmatprep.subr.mxu0 0.0
    %3673 = vmatpush2.msra.mxu0 0.0
    %3674 = vmatprep.subr.mxu0 0.0
    %3675 = vmatpush2.msra.mxu0 0.0
    %3676 = vmatprep.subr.mxu0 0.0
    %3677 = vmatpush2.msra.mxu0 0.0
    %3678 = vmatprep.subr.mxu0 0.0
    %3679 = vmatpush2.msra.mxu0 0.0
    %3680 = vmatprep.subr.mxu0 0.0
    %3681 = vmatpush2.msra.mxu0 0.0
    %3682 = vmatprep.subr.mxu0 0.0
    %3683 = vmatpush2.msra.mxu0 0.0
    %3684 = vmatprep.subr.mxu0 0.0
    %3685 = vmatpush2.msra.mxu0 0.0
    %3686 = vmatprep.subr.mxu0 0.0
    %3687 = vmatpush2.msra.mxu0 0.0
    %3688 = vmatprep.subr.mxu0 0.0
    %3689 = vmatpush2.msra.mxu0 0.0
    %3690 = vmatprep.subr.mxu0 0.0
    %3691 = vmatpush2.msra.mxu0 0.0
    %3692 = vmatprep.subr.mxu0 0.0
    %3693 = vmatpush2.msra.mxu0 0.0
    %3694 = vmatprep.subr.mxu0 0.0
    %3695 = vmatpush2.msra.mxu0 0.0
    %3696 = vmatprep.subr.mxu0 0.0
    %3697 = vmatpush2.msra.mxu0 0.0
    %3698 = vmatprep.mubr.f32.mxu0 0.0
    %3699 = vmatmul.mubr.f32.gmra.mxu0 %v3628
    %v3700 = vpop.f32.mrf.mxu0
    %v3701 = vadd.f32 %v3618, %v3700
    %v3702 = vpop.f32.mrf.mxu0
    %3703 = vmatprep.mubr.f32.mxu0 0.0
    %3704 = vmatmul.mubr.f32.gmra.mxu0 %v3630
    %v3705 = vpop.f32.mrf.mxu0
    %v3706 = vadd.f32 %v3618, %v3705
    %v3707 = vpop.f32.mrf.mxu0
    %3708 = vmatprep.mubr.f32.mxu0 0.0
    %3709 = vmatmul.mubr.f32.gmra.mxu0 %v3632
    %v3710 = vpop.f32.mrf.mxu0
    %v3711 = vadd.f32 %v3618, %v3710
    %v3712 = vpop.f32.mrf.mxu0
    %3713 = vdwg.mxu0
    %v3714 = vxor.u32 %v3701, 2147483648
    %v3715 = vxor.u32 %v3706, 2147483648
    %v3716 = vxor.u32 %v3711, 2147483648
    %v3717 = vmul.f32 %v3714, 1.442695
    %v3718 = vpow.pop %v3717
    %v3719 = vmul.f32 %v3715, 1.442695
    %v3720 = vpow.pop %v3719
    %v3721 = vmul.f32 %v3716, 1.442695
    %v3722 = vpow.pop %v3721
    %v3723 = vadd.f32 %v3718, 1.0
    %v3724 = vadd.f32 %v3720, 1.0
    %v3725 = vadd.f32 %v3722, 1.0
    %v3726 = vrcp.pop %v3723
    %v3727 = vmul.f32 1.0, %v3726
    %v3728 = vrcp.pop %v3724
    %v3729 = vmul.f32 1.0, %v3728
    %v3730 = vrcp.pop %v3725
    %v3731 = vmul.f32 1.0, %v3730
    %3735 = vrot.lane.b32.xlu0 %v3701, 96
    %v3736 = vpop.permute.xlu0 %3735
    %3737 = vrot.lane.b32.xlu0 %v3706, 96
    %v3738 = vpop.permute.xlu0 %3737
    %3739 = vrot.lane.b32.xlu0 %v3711, 96
    %v3740 = vpop.permute.xlu0 %3739
    %v3744 = vmul.f32 %v3727, %v3736
    %v3745 = vmul.f32 %v3729, %v3738
    %v3746 = vmul.f32 %v3731, %v3740
    %v3747 = vadd.f32 %v1174, %v3744
    %v3748 = vadd.f32 %v1179, %v3745
    %v3749 = vadd.f32 %v2150, %v3746
    %v3750 = vld [vmem:[#allocation2 + $0x718] sm:$0x3]
    %v3751 = vsel %vm288, %v3747, 0.0
    %3752 = vadd.xlane.f32.xlu0 %v3751
    %v3753 = vpop.xlane.xlu0 %3752
    %v3754 = vsel %vm288, %v3748, 0.0
    %3755 = vadd.xlane.f32.xlu0 %v3754
    %v3756 = vpop.xlane.xlu0 %3755
    %v3757 = vsel %vm288, %v3749, 0.0
    %3758 = vadd.xlane.f32.xlu0 %v3757
    %v3759 = vpop.xlane.xlu0 %3758
    %v3760 = vrcp.pop 32.0
    %v3761 = vmul.f32 %v3753, %v3760
    %v3762 = vmul.f32 %v3756, %v3760
    %v3763 = vmul.f32 %v3759, %v3760
    %v3764 = vsub.f32 %v3747, %v3761
    %v3765 = vsub.f32 %v3748, %v3762
    %v3766 = vsub.f32 %v3749, %v3763
    %v3767 = vmul.f32 %v3764, %v3764
    %v3768 = vmul.f32 %v3765, %v3765
    %v3769 = vmul.f32 %v3766, %v3766
    %v3770 = vsel %vm288, %v3767, 0.0
    %3771 = vadd.xlane.f32.xlu0 %v3770
    %v3772 = vpop.xlane.xlu0 %3771
    %v3773 = vsel %vm288, %v3768, 0.0
    %3774 = vadd.xlane.f32.xlu0 %v3773
    %v3775 = vpop.xlane.xlu0 %3774
    %v3776 = vsel %vm288, %v3769, 0.0
    %3777 = vadd.xlane.f32.xlu0 %v3776
    %v3778 = vpop.xlane.xlu0 %3777
    %v3779 = vmul.f32 %v3772, %v3760
    %v3780 = vmul.f32 %v3775, %v3760
    %v3781 = vmul.f32 %v3778, %v3760
    %v3782 = vadd.f32 %v3779, 1e-05
    %v3783 = vadd.f32 %v3780, 1e-05
    %v3784 = vadd.f32 %v3781, 1e-05
    %v3785 = vrsqrt.pop %v3782
    %v3786 = vrsqrt.pop %v3783
    %v3787 = vrsqrt.pop %v3784
    %v3788 = vmul.f32 %v3764, %v3785
    %v3789 = vmul.f32 %v3765, %v3786
    %v3790 = vmul.f32 %v3766, %v3787
    %v3791 = vlaneseq
    %v3792 = vshrl.u32 %v3791, 7
    %v3793 = vsub.s32 0, %v3792
    %v3794 = vrot.slane %v3750, %v3793
    %v3795 = vmul.f32 %v3788, %v3794
    %v3796 = vmul.f32 %v3789, %v3794
    %v3797 = vmul.f32 %v3790, %v3794
    %v3798 = vlaneseq
    %v3799 = vshrl.u32 %v3798, 7
    %v3800 = vsub.s32 1, %v3799
    %v3801 = vrot.slane %v3750, %v3800
    %v3802 = vadd.f32 %v3795, %v3801
    %v3803 = vadd.f32 %v3796, %v3801
    %v3804 = vadd.f32 %v3797, %v3801
    %v3805 = vld [vmem:[#allocation2 + $0x730] sm:$0xff]
    %v3806 = vld [vmem:[#allocation2 + $0x738] sm:$0xff]
    %v3807 = vld [vmem:[#allocation2 + $0x740] sm:$0xff]
    %v3808 = vld [vmem:[#allocation2 + $0x748] sm:$0xff]
    %v3809 = vld [vmem:[#allocation2 + $0x750] sm:$0x1]
    %v3810 = vlaneseq
    %v3811 = vshrl.u32 %v3810, 7
    %v3812 = vsub.s32 0, %v3811
    %v3813 = vrot.slane %v3809, %v3812
    %v3815 = vsel %vm288, %v3802, 0
    %v3818 = vsel %vm288, %v3803, 0
    %v3821 = vsel %vm288, %v3804, 0
    %3823 = vmatprep.subr.mxu0 0.0
    %3824 = vmatpush1.msra.mxu0 0.0
    %3825 = vmatprep.subr.mxu0 0.0
    %3826 = vmatpush1.msra.mxu0 0.0
    %3827 = vmatprep.subr.mxu0 0.0
    %3828 = vmatpush1.msra.mxu0 0.0
    %3829 = vmatprep.subr.mxu0 0.0
    %3830 = vmatpush1.msra.mxu0 0.0
    %3831 = vmatprep.subr.mxu0 0.0
    %3832 = vmatpush1.msra.mxu0 0.0
    %3833 = vmatprep.subr.mxu0 0.0
    %3834 = vmatpush1.msra.mxu0 0.0
    %3835 = vmatprep.subr.mxu0 0.0
    %3836 = vmatpush1.msra.mxu0 0.0
    %3837 = vmatprep.subr.mxu0 0.0
    %3838 = vmatpush1.msra.mxu0 0.0
    %3839 = vmatprep.subr.mxu0 0.0
    %3840 = vmatpush1.msra.mxu0 0.0
    %3841 = vmatprep.subr.mxu0 0.0
    %3842 = vmatpush1.msra.mxu0 0.0
    %3843 = vmatprep.subr.mxu0 0.0
    %3844 = vmatpush1.msra.mxu0 0.0
    %3845 = vmatprep.subr.mxu0 0.0
    %3846 = vmatpush1.msra.mxu0 0.0
    %3847 = vmatprep.subr.mxu0 0.0
    %3848 = vmatpush1.msra.mxu0 %v3808
    %3849 = vmatprep.subr.mxu0 0.0
    %3850 = vmatpush1.msra.mxu0 %v3807
    %3851 = vmatprep.subr.mxu0 0.0
    %3852 = vmatpush1.msra.mxu0 %v3806
    %3853 = vmatprep.subr.mxu0 0.0
    %3854 = vmatpush1.msra.mxu0 %v3805
    %3855 = vmatprep.subr.mxu0 0.0
    %3856 = vmatpush2.msra.mxu0 0.0
    %3857 = vmatprep.subr.mxu0 0.0
    %3858 = vmatpush2.msra.mxu0 0.0
    %3859 = vmatprep.subr.mxu0 0.0
    %3860 = vmatpush2.msra.mxu0 0.0
    %3861 = vmatprep.subr.mxu0 0.0
    %3862 = vmatpush2.msra.mxu0 0.0
    %3863 = vmatprep.subr.mxu0 0.0
    %3864 = vmatpush2.msra.mxu0 0.0
    %3865 = vmatprep.subr.mxu0 0.0
    %3866 = vmatpush2.msra.mxu0 0.0
    %3867 = vmatprep.subr.mxu0 0.0
    %3868 = vmatpush2.msra.mxu0 0.0
    %3869 = vmatprep.subr.mxu0 0.0
    %3870 = vmatpush2.msra.mxu0 0.0
    %3871 = vmatprep.subr.mxu0 0.0
    %3872 = vmatpush2.msra.mxu0 0.0
    %3873 = vmatprep.subr.mxu0 0.0
    %3874 = vmatpush2.msra.mxu0 0.0
    %3875 = vmatprep.subr.mxu0 0.0
    %3876 = vmatpush2.msra.mxu0 0.0
    %3877 = vmatprep.subr.mxu0 0.0
    %3878 = vmatpush2.msra.mxu0 0.0
    %3879 = vmatprep.subr.mxu0 0.0
    %3880 = vmatpush2.msra.mxu0 0.0
    %3881 = vmatprep.subr.mxu0 0.0
    %3882 = vmatpush2.msra.mxu0 0.0
    %3883 = vmatprep.subr.mxu0 0.0
    %3884 = vmatpush2.msra.mxu0 0.0
    %3885 = vmatprep.subr.mxu0 0.0
    %3886 = vmatpush2.msra.mxu0 0.0
    %3887 = vmatprep.mubr.f32.mxu0 0.0
    %3888 = vmatmul.mubr.f32.gmra.mxu0 %v3815
    %v3889 = vpop.f32.mrf.mxu0
    %v3890 = vadd.f32 %v3813, %v3889
    %v3891 = vpop.f32.mrf.mxu0
    %3892 = vmatprep.mubr.f32.mxu0 0.0
    %3893 = vmatmul.mubr.f32.gmra.mxu0 %v3818
    %v3894 = vpop.f32.mrf.mxu0
    %v3895 = vadd.f32 %v3813, %v3894
    %v3896 = vpop.f32.mrf.mxu0
    %3897 = vmatprep.mubr.f32.mxu0 0.0
    %3898 = vmatmul.mubr.f32.gmra.mxu0 %v3821
    %v3899 = vpop.f32.mrf.mxu0
    %v3900 = vadd.f32 %v3813, %v3899
    %v3901 = vpop.f32.mrf.mxu0
    %3902 = vdwg.mxu0
    %v3903 = vld [vmem:[#allocation2 + $0x788] sm:$0xff]
    %v3904 = vld [vmem:[#allocation2 + $0x790] sm:$0xff]
    %v3905 = vld [vmem:[#allocation2 + $0x798] sm:$0xff]
    %v3906 = vadd.f32 %v3890, %v3903
    %v3907 = vadd.f32 %v3895, %v3904
    %v3908 = vadd.f32 %v3900, %v3905
    %vm3909 = vcmp.gt.f32.partialorder %v3906, 0.0
    %vm3910 = vcmp.gt.f32.partialorder %v3907, 0.0
    %vm3911 = vcmp.gt.f32.partialorder %v3908, 0.0
    %v3912 = vmin.f32 %v3906, 0.0
    %v3913 = vmin.f32 %v3907, 0.0
    %v3914 = vmin.f32 %v3908, 0.0
    %v3915 = vmul.f32 %v3912, 1.442695
    %v3916 = vpow.pop %v3915
    %v3917 = vmul.f32 %v3913, 1.442695
    %v3918 = vpow.pop %v3917
    %v3919 = vmul.f32 %v3914, 1.442695
    %v3920 = vpow.pop %v3919
    %v3921 = vsub.f32 %v3916, 1.0
    %v3922 = vsub.f32 %v3918, 1.0
    %v3923 = vsub.f32 %v3920, 1.0
    %v3924 = vsel %vm3909, %v3906, %v3921
    %v3925 = vsel %vm3910, %v3907, %v3922
    %v3926 = vsel %vm3911, %v3908, %v3923
    %v3927 = vld [vmem:[#allocation2 + $0x758] sm:$0xff]
    %v3928 = vld [vmem:[#allocation2 + $0x760] sm:$0xff]
    %v3929 = vld [vmem:[#allocation2 + $0x768] sm:$0xff]
    %v3930 = vld [vmem:[#allocation2 + $0x770] sm:$0xff]
    %v3931 = vld [vmem:[#allocation2 + $0x778] sm:$0x1]
    %v3932 = vlaneseq
    %v3933 = vshrl.u32 %v3932, 7
    %v3934 = vsub.s32 0, %v3933
    %v3935 = vrot.slane %v3931, %v3934
    %v3937 = vsel %vm288, %v3924, 0
    %v3940 = vsel %vm288, %v3925, 0
    %v3943 = vsel %vm288, %v3926, 0
    %3945 = vmatprep.subr.mxu0 0.0
    %3946 = vmatpush1.msra.mxu0 0.0
    %3947 = vmatprep.subr.mxu0 0.0
    %3948 = vmatpush1.msra.mxu0 0.0
    %3949 = vmatprep.subr.mxu0 0.0
    %3950 = vmatpush1.msra.mxu0 0.0
    %3951 = vmatprep.subr.mxu0 0.0
    %3952 = vmatpush1.msra.mxu0 0.0
    %3953 = vmatprep.subr.mxu0 0.0
    %3954 = vmatpush1.msra.mxu0 0.0
    %3955 = vmatprep.subr.mxu0 0.0
    %3956 = vmatpush1.msra.mxu0 0.0
    %3957 = vmatprep.subr.mxu0 0.0
    %3958 = vmatpush1.msra.mxu0 0.0
    %3959 = vmatprep.subr.mxu0 0.0
    %3960 = vmatpush1.msra.mxu0 0.0
    %3961 = vmatprep.subr.mxu0 0.0
    %3962 = vmatpush1.msra.mxu0 0.0
    %3963 = vmatprep.subr.mxu0 0.0
    %3964 = vmatpush1.msra.mxu0 0.0
    %3965 = vmatprep.subr.mxu0 0.0
    %3966 = vmatpush1.msra.mxu0 0.0
    %3967 = vmatprep.subr.mxu0 0.0
    %3968 = vmatpush1.msra.mxu0 0.0
    %3969 = vmatprep.subr.mxu0 0.0
    %3970 = vmatpush1.msra.mxu0 %v3930
    %3971 = vmatprep.subr.mxu0 0.0
    %3972 = vmatpush1.msra.mxu0 %v3929
    %3973 = vmatprep.subr.mxu0 0.0
    %3974 = vmatpush1.msra.mxu0 %v3928
    %3975 = vmatprep.subr.mxu0 0.0
    %3976 = vmatpush1.msra.mxu0 %v3927
    %3977 = vmatprep.subr.mxu0 0.0
    %3978 = vmatpush2.msra.mxu0 0.0
    %3979 = vmatprep.subr.mxu0 0.0
    %3980 = vmatpush2.msra.mxu0 0.0
    %3981 = vmatprep.subr.mxu0 0.0
    %3982 = vmatpush2.msra.mxu0 0.0
    %3983 = vmatprep.subr.mxu0 0.0
    %3984 = vmatpush2.msra.mxu0 0.0
    %3985 = vmatprep.subr.mxu0 0.0
    %3986 = vmatpush2.msra.mxu0 0.0
    %3987 = vmatprep.subr.mxu0 0.0
    %3988 = vmatpush2.msra.mxu0 0.0
    %3989 = vmatprep.subr.mxu0 0.0
    %3990 = vmatpush2.msra.mxu0 0.0
    %3991 = vmatprep.subr.mxu0 0.0
    %3992 = vmatpush2.msra.mxu0 0.0
    %3993 = vmatprep.subr.mxu0 0.0
    %3994 = vmatpush2.msra.mxu0 0.0
    %3995 = vmatprep.subr.mxu0 0.0
    %3996 = vmatpush2.msra.mxu0 0.0
    %3997 = vmatprep.subr.mxu0 0.0
    %3998 = vmatpush2.msra.mxu0 0.0
    %3999 = vmatprep.subr.mxu0 0.0
    %4000 = vmatpush2.msra.mxu0 0.0
    %4001 = vmatprep.subr.mxu0 0.0
    %4002 = vmatpush2.msra.mxu0 0.0
    %4003 = vmatprep.subr.mxu0 0.0
    %4004 = vmatpush2.msra.mxu0 0.0
    %4005 = vmatprep.subr.mxu0 0.0
    %4006 = vmatpush2.msra.mxu0 0.0
    %4007 = vmatprep.subr.mxu0 0.0
    %4008 = vmatpush2.msra.mxu0 0.0
    %4009 = vmatprep.mubr.f32.mxu0 0.0
    %4010 = vmatmul.mubr.f32.gmra.mxu0 %v3937
    %v4011 = vpop.f32.mrf.mxu0
    %v4012 = vadd.f32 %v3935, %v4011
    %v4013 = vpop.f32.mrf.mxu0
    %4014 = vmatprep.mubr.f32.mxu0 0.0
    %4015 = vmatmul.mubr.f32.gmra.mxu0 %v3940
    %v4016 = vpop.f32.mrf.mxu0
    %v4017 = vadd.f32 %v3935, %v4016
    %v4018 = vpop.f32.mrf.mxu0
    %4019 = vmatprep.mubr.f32.mxu0 0.0
    %4020 = vmatmul.mubr.f32.gmra.mxu0 %v3943
    %v4021 = vpop.f32.mrf.mxu0
    %v4022 = vadd.f32 %v3935, %v4021
    %v4023 = vpop.f32.mrf.mxu0
    %4024 = vdwg.mxu0
    %v4025 = vxor.u32 %v4012, 2147483648
    %v4026 = vxor.u32 %v4017, 2147483648
    %v4027 = vxor.u32 %v4022, 2147483648
    %v4028 = vmul.f32 %v4025, 1.442695
    %v4029 = vpow.pop %v4028
    %v4030 = vmul.f32 %v4026, 1.442695
    %v4031 = vpow.pop %v4030
    %v4032 = vmul.f32 %v4027, 1.442695
    %v4033 = vpow.pop %v4032
    %v4034 = vadd.f32 %v4029, 1.0
    %v4035 = vadd.f32 %v4031, 1.0
    %v4036 = vadd.f32 %v4033, 1.0
    %v4037 = vrcp.pop %v4034
    %v4038 = vmul.f32 1.0, %v4037
    %v4039 = vrcp.pop %v4035
    %v4040 = vmul.f32 1.0, %v4039
    %v4041 = vrcp.pop %v4036
    %v4042 = vmul.f32 1.0, %v4041
    %4046 = vrot.lane.b32.xlu0 %v4012, 96
    %v4047 = vpop.permute.xlu0 %4046
    %4048 = vrot.lane.b32.xlu0 %v4017, 96
    %v4049 = vpop.permute.xlu0 %4048
    %4050 = vrot.lane.b32.xlu0 %v4022, 96
    %v4051 = vpop.permute.xlu0 %4050
    %v4055 = vmul.f32 %v4038, %v4047
    %v4056 = vmul.f32 %v4040, %v4049
    %v4057 = vmul.f32 %v4042, %v4051
    %v4058 = vadd.f32 %v3802, %v4055
    %v4059 = vadd.f32 %v3803, %v4056
    %v4060 = vadd.f32 %v3804, %v4057
    %v4061 = vld [vmem:[#allocation2 + $0x780] sm:$0x3]
    %v4062 = vsel %vm288, %v4058, 0.0
    %4063 = vadd.xlane.f32.xlu0 %v4062
    %v4064 = vpop.xlane.xlu0 %4063
    %v4065 = vsel %vm288, %v4059, 0.0
    %4066 = vadd.xlane.f32.xlu0 %v4065
    %v4067 = vpop.xlane.xlu0 %4066
    %v4068 = vsel %vm288, %v4060, 0.0
    %4069 = vadd.xlane.f32.xlu0 %v4068
    %v4070 = vpop.xlane.xlu0 %4069
    %v4071 = vmul.f32 %v4064, %v3760
    %v4072 = vmul.f32 %v4067, %v3760
    %v4073 = vmul.f32 %v4070, %v3760
    %v4074 = vsub.f32 %v4058, %v4071
    %v4075 = vsub.f32 %v4059, %v4072
    %v4076 = vsub.f32 %v4060, %v4073
    %v4077 = vmul.f32 %v4074, %v4074
    %v4078 = vmul.f32 %v4075, %v4075
    %v4079 = vmul.f32 %v4076, %v4076
    %v4080 = vsel %vm288, %v4077, 0.0
    %4081 = vadd.xlane.f32.xlu0 %v4080
    %v4082 = vpop.xlane.xlu0 %4081
    %v4083 = vsel %vm288, %v4078, 0.0
    %4084 = vadd.xlane.f32.xlu0 %v4083
    %v4085 = vpop.xlane.xlu0 %4084
    %v4086 = vsel %vm288, %v4079, 0.0
    %4087 = vadd.xlane.f32.xlu0 %v4086
    %v4088 = vpop.xlane.xlu0 %4087
    %v4089 = vmul.f32 %v4082, %v3760
    %v4090 = vmul.f32 %v4085, %v3760
    %v4091 = vmul.f32 %v4088, %v3760
    %v4092 = vadd.f32 %v4089, 1e-05
    %v4093 = vadd.f32 %v4090, 1e-05
    %v4094 = vadd.f32 %v4091, 1e-05
    %v4095 = vrsqrt.pop %v4092
    %v4096 = vrsqrt.pop %v4093
    %v4097 = vrsqrt.pop %v4094
    %v4098 = vmul.f32 %v4074, %v4095
    %v4099 = vmul.f32 %v4075, %v4096
    %v4100 = vmul.f32 %v4076, %v4097
    %v4101 = vlaneseq
    %v4102 = vshrl.u32 %v4101, 7
    %v4103 = vsub.s32 0, %v4102
    %v4104 = vrot.slane %v4061, %v4103
    %v4105 = vmul.f32 %v4098, %v4104
    %v4106 = vmul.f32 %v4099, %v4104
    %v4107 = vmul.f32 %v4100, %v4104
    %v4108 = vlaneseq
    %v4109 = vshrl.u32 %v4108, 7
    %v4110 = vsub.s32 1, %v4109
    %v4111 = vrot.slane %v4061, %v4110
    %v4112 = vadd.f32 %v4105, %v4111
    %v4113 = vadd.f32 %v4106, %v4111
    %v4114 = vadd.f32 %v4107, %v4111
    %v4115 = vld [vmem:[#allocation2 + $0x800] sm:$0xff]
    %v4116 = vld [vmem:[#allocation2 + $0x808] sm:$0xff]
    %v4117 = vld [vmem:[#allocation2 + $0x810] sm:$0xff]
    %v4118 = vld [vmem:[#allocation2 + $0x818] sm:$0xff]
    %v4119 = vld [vmem:[#allocation2 + $0x820] sm:$0x1]
    %v4120 = vlaneseq
    %v4121 = vshrl.u32 %v4120, 7
    %v4122 = vsub.s32 0, %v4121
    %v4123 = vrot.slane %v4119, %v4122
    %v4125 = vsel %vm288, %v4112, 0
    %v4128 = vsel %vm288, %v4113, 0
    %v4131 = vsel %vm288, %v4114, 0
    %4133 = vmatprep.subr.mxu0 0.0
    %4134 = vmatpush1.msra.mxu0 0.0
    %4135 = vmatprep.subr.mxu0 0.0
    %4136 = vmatpush1.msra.mxu0 0.0
    %4137 = vmatprep.subr.mxu0 0.0
    %4138 = vmatpush1.msra.mxu0 0.0
    %4139 = vmatprep.subr.mxu0 0.0
    %4140 = vmatpush1.msra.mxu0 0.0
    %4141 = vmatprep.subr.mxu0 0.0
    %4142 = vmatpush1.msra.mxu0 0.0
    %4143 = vmatprep.subr.mxu0 0.0
    %4144 = vmatpush1.msra.mxu0 0.0
    %4145 = vmatprep.subr.mxu0 0.0
    %4146 = vmatpush1.msra.mxu0 0.0
    %4147 = vmatprep.subr.mxu0 0.0
    %4148 = vmatpush1.msra.mxu0 0.0
    %4149 = vmatprep.subr.mxu0 0.0
    %4150 = vmatpush1.msra.mxu0 0.0
    %4151 = vmatprep.subr.mxu0 0.0
    %4152 = vmatpush1.msra.mxu0 0.0
    %4153 = vmatprep.subr.mxu0 0.0
    %4154 = vmatpush1.msra.mxu0 0.0
    %4155 = vmatprep.subr.mxu0 0.0
    %4156 = vmatpush1.msra.mxu0 0.0
    %4157 = vmatprep.subr.mxu0 0.0
    %4158 = vmatpush1.msra.mxu0 %v4118
    %4159 = vmatprep.subr.mxu0 0.0
    %4160 = vmatpush1.msra.mxu0 %v4117
    %4161 = vmatprep.subr.mxu0 0.0
    %4162 = vmatpush1.msra.mxu0 %v4116
    %4163 = vmatprep.subr.mxu0 0.0
    %4164 = vmatpush1.msra.mxu0 %v4115
    %4165 = vmatprep.subr.mxu0 0.0
    %4166 = vmatpush2.msra.mxu0 0.0
    %4167 = vmatprep.subr.mxu0 0.0
    %4168 = vmatpush2.msra.mxu0 0.0
    %4169 = vmatprep.subr.mxu0 0.0
    %4170 = vmatpush2.msra.mxu0 0.0
    %4171 = vmatprep.subr.mxu0 0.0
    %4172 = vmatpush2.msra.mxu0 0.0
    %4173 = vmatprep.subr.mxu0 0.0
    %4174 = vmatpush2.msra.mxu0 0.0
    %4175 = vmatprep.subr.mxu0 0.0
    %4176 = vmatpush2.msra.mxu0 0.0
    %4177 = vmatprep.subr.mxu0 0.0
    %4178 = vmatpush2.msra.mxu0 0.0
    %4179 = vmatprep.subr.mxu0 0.0
    %4180 = vmatpush2.msra.mxu0 0.0
    %4181 = vmatprep.subr.mxu0 0.0
    %4182 = vmatpush2.msra.mxu0 0.0
    %4183 = vmatprep.subr.mxu0 0.0
    %4184 = vmatpush2.msra.mxu0 0.0
    %4185 = vmatprep.subr.mxu0 0.0
    %4186 = vmatpush2.msra.mxu0 0.0
    %4187 = vmatprep.subr.mxu0 0.0
    %4188 = vmatpush2.msra.mxu0 0.0
    %4189 = vmatprep.subr.mxu0 0.0
    %4190 = vmatpush2.msra.mxu0 0.0
    %4191 = vmatprep.subr.mxu0 0.0
    %4192 = vmatpush2.msra.mxu0 0.0
    %4193 = vmatprep.subr.mxu0 0.0
    %4194 = vmatpush2.msra.mxu0 0.0
    %4195 = vmatprep.subr.mxu0 0.0
    %4196 = vmatpush2.msra.mxu0 0.0
    %4197 = vmatprep.mubr.f32.mxu0 0.0
    %4198 = vmatmul.mubr.f32.gmra.mxu0 %v4125
    %v4199 = vpop.f32.mrf.mxu0
    %v4200 = vadd.f32 %v4123, %v4199
    %v4201 = vpop.f32.mrf.mxu0
    %4202 = vmatprep.mubr.f32.mxu0 0.0
    %4203 = vmatmul.mubr.f32.gmra.mxu0 %v4128
    %v4204 = vpop.f32.mrf.mxu0
    %v4205 = vadd.f32 %v4123, %v4204
    %v4206 = vpop.f32.mrf.mxu0
    %4207 = vmatprep.mubr.f32.mxu0 0.0
    %4208 = vmatmul.mubr.f32.gmra.mxu0 %v4131
    %v4209 = vpop.f32.mrf.mxu0
    %v4210 = vadd.f32 %v4123, %v4209
    %v4211 = vpop.f32.mrf.mxu0
    %4212 = vdwg.mxu0
    %v4216 = vcombine.high %v4200, %v4200
    %v4218 = vunpack.c.l.s4 1983009808
    %v4219 = vunpack.c.0.s8 %v4218
    %v4220 = vlaneseq
    %v4221 = vshrl.u32 %v4220, 7
    %v4222 = vsub.s32 %v4219, %v4221
    %v4223 = vrot.slane %v4200, %v4222
    %v4225 = vunpack.c.l.s4 1983009808
    %v4226 = vunpack.c.0.s8 %v4225
    %v4227 = vlaneseq
    %v4228 = vshrl.u32 %v4227, 7
    %v4229 = vsub.s32 %v4226, %v4228
    %v4230 = vrot.slane %v4216, %v4229
    %v4231 = vcombine.high %v4223, %v4223
    %v4232 = vcombine.high %v4230, %v4230
    %v4233 = vcombine.high %v4205, %v4205
    %v4235 = vunpack.c.l.s4 1983009808
    %v4236 = vunpack.c.0.s8 %v4235
    %v4237 = vlaneseq
    %v4238 = vshrl.u32 %v4237, 7
    %v4239 = vsub.s32 %v4236, %v4238
    %v4240 = vrot.slane %v4205, %v4239
    %v4242 = vunpack.c.l.s4 1983009808
    %v4243 = vunpack.c.0.s8 %v4242
    %v4244 = vlaneseq
    %v4245 = vshrl.u32 %v4244, 7
    %v4246 = vsub.s32 %v4243, %v4245
    %v4247 = vrot.slane %v4233, %v4246
    %v4248 = vcombine.high %v4240, %v4240
    %v4249 = vcombine.high %v4247, %v4247
    %v4250 = vcombine.high %v4210, %v4210
    %v4252 = vunpack.c.l.s4 1983009808
    %v4253 = vunpack.c.0.s8 %v4252
    %v4254 = vlaneseq
    %v4255 = vshrl.u32 %v4254, 7
    %v4256 = vsub.s32 %v4253, %v4255
    %v4257 = vrot.slane %v4210, %v4256
    %v4259 = vunpack.c.l.s4 1983009808
    %v4260 = vunpack.c.0.s8 %v4259
    %v4261 = vlaneseq
    %v4262 = vshrl.u32 %v4261, 7
    %v4263 = vsub.s32 %v4260, %v4262
    %v4264 = vrot.slane %v4250, %v4263
    %v4265 = vcombine.high %v4257, %v4257
    %v4266 = vcombine.high %v4264, %v4264
    %v4279 = vcombine.low %v4223, %v4231
    %v4281 = vunpack.c.l.s4 1934713408
    %v4282 = vunpack.c.0.s8 %v4281
    %v4283 = vlaneseq
    %v4284 = vshrl.u32 %v4283, 7
    %v4285 = vsub.s32 %v4282, %v4284
    %v4286 = vrot.slane %v4279, %v4285
    %v4287 = vcombine.high %v4286, 0.0
    %v4288 = vcombine.low %v4230, %v4232
    %v4290 = vunpack.c.l.s4 1934713408
    %v4291 = vunpack.c.0.s8 %v4290
    %v4292 = vlaneseq
    %v4293 = vshrl.u32 %v4292, 7
    %v4294 = vsub.s32 %v4291, %v4293
    %v4295 = vrot.slane %v4288, %v4294
    %v4296 = vcombine.high %v4295, 0.0
    %v4297 = vcombine.low %v4240, %v4248
    %v4299 = vunpack.c.l.s4 1934713408
    %v4300 = vunpack.c.0.s8 %v4299
    %v4301 = vlaneseq
    %v4302 = vshrl.u32 %v4301, 7
    %v4303 = vsub.s32 %v4300, %v4302
    %v4304 = vrot.slane %v4297, %v4303
    %v4305 = vcombine.high %v4304, 0.0
    %v4306 = vcombine.low %v4247, %v4249
    %v4308 = vunpack.c.l.s4 1934713408
    %v4309 = vunpack.c.0.s8 %v4308
    %v4310 = vlaneseq
    %v4311 = vshrl.u32 %v4310, 7
    %v4312 = vsub.s32 %v4309, %v4311
    %v4313 = vrot.slane %v4306, %v4312
    %v4314 = vcombine.high %v4313, 0.0
    %v4315 = vcombine.low %v4257, %v4265
    %v4317 = vunpack.c.l.s4 1934713408
    %v4318 = vunpack.c.0.s8 %v4317
    %v4319 = vlaneseq
    %v4320 = vshrl.u32 %v4319, 7
    %v4321 = vsub.s32 %v4318, %v4320
    %v4322 = vrot.slane %v4315, %v4321
    %v4323 = vcombine.high %v4322, 0.0
    %v4324 = vcombine.low %v4264, %v4266
    %v4326 = vunpack.c.l.s4 1934713408
    %v4327 = vunpack.c.0.s8 %v4326
    %v4328 = vlaneseq
    %v4329 = vshrl.u32 %v4328, 7
    %v4330 = vsub.s32 %v4327, %v4329
    %v4331 = vrot.slane %v4324, %v4330
    %v4332 = vcombine.high %v4331, 0.0
    %v4339 = vcombine.low %v4286, %v4295
    %v4340 = vcombine.low %v4304, %v4313
    %v4342 = vunpack.c.l.s4 1983009808
    %v4343 = vunpack.c.0.s8 %v4342
    %v4344 = vlaneseq
    %v4345 = vshrl.u32 %v4344, 7
    %v4346 = vsub.s32 %v4343, %v4345
    %v4347 = vrot.slane %v4339, %v4346
    %v4349 = vunpack.c.l.s4 1983009808
    %v4350 = vunpack.c.0.s8 %v4349
    %v4351 = vlaneseq
    %v4352 = vshrl.u32 %v4351, 7
    %v4353 = vsub.s32 %v4350, %v4352
    %v4354 = vrot.slane %v4340, %v4353
    %v4355 = vcombine.low %v4347, %v4354
    %v4356 = vcombine.low %v4322, %v4331
    %v4358 = vunpack.c.l.s4 1983009808
    %v4359 = vunpack.c.0.s8 %v4358
    %v4360 = vlaneseq
    %v4361 = vshrl.u32 %v4360, 7
    %v4362 = vsub.s32 %v4359, %v4361
    %v4363 = vrot.slane %v4356, %v4362
    %4364 = vrot.lane.b32.xlu0 %v4355, 96
    %v4365 = vpop.permute.xlu0 %4364
    %4366 = vrot.lane.b32.xlu0 %v4363, 96
    %v4367 = vpop.permute.xlu0 %4366
    %vm4368 = vcmask 64512
    %v4369 = vsel %vm4368, %v4355, 0
    %v4371 = vsel %vm4368, %v4363, 0
    %v4373 = vsel %vm4368, %v4365, 0
    %v4375 = vsel %vm4368, %v4367, 0
    %4377 = vmatprep.subr.mxu0 0.0
    %4378 = vmatpush1.xpose.msra.mxu0 0.0
    %4379 = vmatprep.subr.mxu0 0.0
    %4380 = vmatpush1.xpose.msra.mxu0 0.0
    %4381 = vmatprep.subr.mxu0 0.0
    %4382 = vmatpush1.xpose.msra.mxu0 0.0
    %4383 = vmatprep.subr.mxu0 0.0
    %4384 = vmatpush1.xpose.msra.mxu0 0.0
    %4385 = vmatprep.subr.mxu0 0.0
    %4386 = vmatpush1.xpose.msra.mxu0 0.0
    %4387 = vmatprep.subr.mxu0 0.0
    %4388 = vmatpush1.xpose.msra.mxu0 0.0
    %4389 = vmatprep.subr.mxu0 0.0
    %4390 = vmatpush1.xpose.msra.mxu0 0.0
    %4391 = vmatprep.subr.mxu0 0.0
    %4392 = vmatpush1.xpose.msra.mxu0 0.0
    %4393 = vmatprep.subr.mxu0 0.0
    %4394 = vmatpush1.xpose.msra.mxu0 0.0
    %4395 = vmatprep.subr.mxu0 0.0
    %4396 = vmatpush1.xpose.msra.mxu0 0.0
    %4397 = vmatprep.subr.mxu0 0.0
    %4398 = vmatpush1.xpose.msra.mxu0 0.0
    %4399 = vmatprep.subr.mxu0 0.0
    %4400 = vmatpush1.xpose.msra.mxu0 0.0
    %4401 = vmatprep.subr.mxu0 0.0
    %4402 = vmatpush1.xpose.msra.mxu0 0.0
    %4403 = vmatprep.subr.mxu0 0.0
    %4404 = vmatpush1.xpose.msra.mxu0 0.0
    %4405 = vmatprep.subr.mxu0 0.0
    %4406 = vmatpush1.xpose.msra.mxu0 %v4375
    %4407 = vmatprep.subr.mxu0 0.0
    %4408 = vmatpush1.xpose.msra.mxu0 %v4373
    %4409 = vmatprep.subr.mxu0 0.0
    %4410 = vmatpush2.xpose.msra.mxu0 0.0
    %4411 = vmatprep.subr.mxu0 0.0
    %4412 = vmatpush2.xpose.msra.mxu0 0.0
    %4413 = vmatprep.subr.mxu0 0.0
    %4414 = vmatpush2.xpose.msra.mxu0 0.0
    %4415 = vmatprep.subr.mxu0 0.0
    %4416 = vmatpush2.xpose.msra.mxu0 0.0
    %4417 = vmatprep.subr.mxu0 0.0
    %4418 = vmatpush2.xpose.msra.mxu0 0.0
    %4419 = vmatprep.subr.mxu0 0.0
    %4420 = vmatpush2.xpose.msra.mxu0 0.0
    %4421 = vmatprep.subr.mxu0 0.0
    %4422 = vmatpush2.xpose.msra.mxu0 0.0
    %4423 = vmatprep.subr.mxu0 0.0
    %4424 = vmatpush2.xpose.msra.mxu0 0.0
    %4425 = vmatprep.subr.mxu0 0.0
    %4426 = vmatpush2.xpose.msra.mxu0 0.0
    %4427 = vmatprep.subr.mxu0 0.0
    %4428 = vmatpush2.xpose.msra.mxu0 0.0
    %4429 = vmatprep.subr.mxu0 0.0
    %4430 = vmatpush2.xpose.msra.mxu0 0.0
    %4431 = vmatprep.subr.mxu0 0.0
    %4432 = vmatpush2.xpose.msra.mxu0 0.0
    %4433 = vmatprep.subr.mxu0 0.0
    %4434 = vmatpush2.xpose.msra.mxu0 0.0
    %4435 = vmatprep.subr.mxu0 0.0
    %4436 = vmatpush2.xpose.msra.mxu0 0.0
    %4437 = vmatprep.subr.mxu0 0.0
    %4438 = vmatpush2.xpose.msra.mxu0 0.0
    %4439 = vmatprep.subr.mxu0 0.0
    %4440 = vmatpush2.xpose.msra.mxu0 0.0
    %4441 = vmatprep.mubr.f32.mxu0 0.0
    %4442 = vmatmul.mubr.f32.gmra.mxu0 %v4369
    %v4443 = vpop.f32.mrf.mxu0
    %v4444 = vadd.f32 0.0, %v4443
    %v4445 = vpop.f32.mrf.mxu0
    %4446 = vmatprep.mubr.f32.mxu0 0.0
    %4447 = vmatmul.mubr.f32.gmra.mxu0 %v4371
    %v4448 = vpop.f32.mrf.mxu0
    %v4449 = vadd.f32 0.0, %v4448
    %v4450 = vpop.f32.mrf.mxu0
    %4451 = vdwg.mxu0
    %v4458 = vcombine.low %v4287, %v4296
    %v4459 = vcombine.low %v4305, %v4314
    %v4461 = vunpack.c.l.s4 1983009808
    %v4462 = vunpack.c.0.s8 %v4461
    %v4463 = vlaneseq
    %v4464 = vshrl.u32 %v4463, 7
    %v4465 = vsub.s32 %v4462, %v4464
    %v4466 = vrot.slane %v4458, %v4465
    %v4468 = vunpack.c.l.s4 1983009808
    %v4469 = vunpack.c.0.s8 %v4468
    %v4470 = vlaneseq
    %v4471 = vshrl.u32 %v4470, 7
    %v4472 = vsub.s32 %v4469, %v4471
    %v4473 = vrot.slane %v4459, %v4472
    %v4474 = vcombine.low %v4466, %v4473
    %v4475 = vcombine.low %v4323, %v4332
    %v4477 = vunpack.c.l.s4 1983009808
    %v4478 = vunpack.c.0.s8 %v4477
    %v4479 = vlaneseq
    %v4480 = vshrl.u32 %v4479, 7
    %v4481 = vsub.s32 %v4478, %v4480
    %v4482 = vrot.slane %v4475, %v4481
    %4483 = vrot.lane.b32.xlu0 %v4474, 96
    %v4484 = vpop.permute.xlu0 %4483
    %4485 = vrot.lane.b32.xlu0 %v4482, 96
    %v4486 = vpop.permute.xlu0 %4485
    %v4487 = vsel %vm4368, %v4474, 0
    %v4489 = vsel %vm4368, %v4482, 0
    %v4491 = vsel %vm4368, %v4484, 0
    %v4493 = vsel %vm4368, %v4486, 0
    %4495 = vmatprep.subr.mxu0 0.0
    %4496 = vmatpush1.xpose.msra.mxu0 0.0
    %4497 = vmatprep.subr.mxu0 0.0
    %4498 = vmatpush1.xpose.msra.mxu0 0.0
    %4499 = vmatprep.subr.mxu0 0.0
    %4500 = vmatpush1.xpose.msra.mxu0 0.0
    %4501 = vmatprep.subr.mxu0 0.0
    %4502 = vmatpush1.xpose.msra.mxu0 0.0
    %4503 = vmatprep.subr.mxu0 0.0
    %4504 = vmatpush1.xpose.msra.mxu0 0.0
    %4505 = vmatprep.subr.mxu0 0.0
    %4506 = vmatpush1.xpose.msra.mxu0 0.0
    %4507 = vmatprep.subr.mxu0 0.0
    %4508 = vmatpush1.xpose.msra.mxu0 0.0
    %4509 = vmatprep.subr.mxu0 0.0
    %4510 = vmatpush1.xpose.msra.mxu0 0.0
    %4511 = vmatprep.subr.mxu0 0.0
    %4512 = vmatpush1.xpose.msra.mxu0 0.0
    %4513 = vmatprep.subr.mxu0 0.0
    %4514 = vmatpush1.xpose.msra.mxu0 0.0
    %4515 = vmatprep.subr.mxu0 0.0
    %4516 = vmatpush1.xpose.msra.mxu0 0.0
    %4517 = vmatprep.subr.mxu0 0.0
    %4518 = vmatpush1.xpose.msra.mxu0 0.0
    %4519 = vmatprep.subr.mxu0 0.0
    %4520 = vmatpush1.xpose.msra.mxu0 0.0
    %4521 = vmatprep.subr.mxu0 0.0
    %4522 = vmatpush1.xpose.msra.mxu0 0.0
    %4523 = vmatprep.subr.mxu0 0.0
    %4524 = vmatpush1.xpose.msra.mxu0 %v4493
    %4525 = vmatprep.subr.mxu0 0.0
    %4526 = vmatpush1.xpose.msra.mxu0 %v4491
    %4527 = vmatprep.subr.mxu0 0.0
    %4528 = vmatpush2.xpose.msra.mxu0 0.0
    %4529 = vmatprep.subr.mxu0 0.0
    %4530 = vmatpush2.xpose.msra.mxu0 0.0
    %4531 = vmatprep.subr.mxu0 0.0
    %4532 = vmatpush2.xpose.msra.mxu0 0.0
    %4533 = vmatprep.subr.mxu0 0.0
    %4534 = vmatpush2.xpose.msra.mxu0 0.0
    %4535 = vmatprep.subr.mxu0 0.0
    %4536 = vmatpush2.xpose.msra.mxu0 0.0
    %4537 = vmatprep.subr.mxu0 0.0
    %4538 = vmatpush2.xpose.msra.mxu0 0.0
    %4539 = vmatprep.subr.mxu0 0.0
    %4540 = vmatpush2.xpose.msra.mxu0 0.0
    %4541 = vmatprep.subr.mxu0 0.0
    %4542 = vmatpush2.xpose.msra.mxu0 0.0
    %4543 = vmatprep.subr.mxu0 0.0
    %4544 = vmatpush2.xpose.msra.mxu0 0.0
    %4545 = vmatprep.subr.mxu0 0.0
    %4546 = vmatpush2.xpose.msra.mxu0 0.0
    %4547 = vmatprep.subr.mxu0 0.0
    %4548 = vmatpush2.xpose.msra.mxu0 0.0
    %4549 = vmatprep.subr.mxu0 0.0
    %4550 = vmatpush2.xpose.msra.mxu0 0.0
    %4551 = vmatprep.subr.mxu0 0.0
    %4552 = vmatpush2.xpose.msra.mxu0 0.0
    %4553 = vmatprep.subr.mxu0 0.0
    %4554 = vmatpush2.xpose.msra.mxu0 0.0
    %4555 = vmatprep.subr.mxu0 0.0
    %4556 = vmatpush2.xpose.msra.mxu0 0.0
    %4557 = vmatprep.subr.mxu0 0.0
    %4558 = vmatpush2.xpose.msra.mxu0 0.0
    %4559 = vmatprep.mubr.f32.mxu0 0.0
    %4560 = vmatmul.mubr.f32.gmra.mxu0 %v4487
    %v4561 = vpop.f32.mrf.mxu0
    %v4562 = vadd.f32 0.0, %v4561
    %v4563 = vpop.f32.mrf.mxu0
    %4564 = vmatprep.mubr.f32.mxu0 0.0
    %4565 = vmatmul.mubr.f32.gmra.mxu0 %v4489
    %v4566 = vpop.f32.mrf.mxu0
    %v4567 = vadd.f32 0.0, %v4566
    %v4568 = vpop.f32.mrf.mxu0
    %4569 = vdwg.mxu0
    %vm4570 = vcmask 97280
    %v4571 = vsel %vm4570, %v4444, -inf
    %4572 = vmax.xlane.f32.xlu0 %v4571
    %v4573 = vpop.xlane.xlu0 %4572
    %vm4574 = vcmask 93184
    %v4575 = vsel %vm4574, %v4449, -inf
    %4576 = vmax.xlane.f32.xlu0 %v4575
    %v4577 = vpop.xlane.xlu0 %4576
    %v4578 = vsel %vm4570, %v4562, -inf
    %4579 = vmax.xlane.f32.xlu0 %v4578
    %v4580 = vpop.xlane.xlu0 %4579
    %v4581 = vsel %vm4574, %v4567, -inf
    %4582 = vmax.xlane.f32.xlu0 %v4581
    %v4583 = vpop.xlane.xlu0 %4582
    %v4584 = vsub.f32 %v4444, %v4573
    %v4585 = vsub.f32 %v4449, %v4577
    %v4586 = vsub.f32 %v4562, %v4580
    %v4587 = vsub.f32 %v4567, %v4583
    %v4588 = vmul.f32 %v4584, 1.442695
    %v4589 = vpow.pop %v4588
    %v4590 = vmul.f32 %v4585, 1.442695
    %v4591 = vpow.pop %v4590
    %v4592 = vmul.f32 %v4586, 1.442695
    %v4593 = vpow.pop %v4592
    %v4594 = vmul.f32 %v4587, 1.442695
    %v4595 = vpow.pop %v4594
    %v4596 = vsel %vm4570, %v4589, 0.0
    %4597 = vadd.xlane.f32.xlu0 %v4596
    %v4598 = vpop.xlane.xlu0 %4597
    %v4599 = vsel %vm4574, %v4591, 0.0
    %4600 = vadd.xlane.f32.xlu0 %v4599
    %v4601 = vpop.xlane.xlu0 %4600
    %v4602 = vsel %vm4570, %v4593, 0.0
    %4603 = vadd.xlane.f32.xlu0 %v4602
    %v4604 = vpop.xlane.xlu0 %4603
    %v4605 = vsel %vm4574, %v4595, 0.0
    %4606 = vadd.xlane.f32.xlu0 %v4605
    %v4607 = vpop.xlane.xlu0 %4606
    %v4608 = vrcp.pop %v4598
    %v4609 = vrcp.pop %v4601
    %v4610 = vrcp.pop %v4604
    %v4611 = vrcp.pop %v4607
    %v4612 = vmul.f32 %v4589, %v4608
    %v4613 = vmul.f32 %v4591, %v4609
    %v4614 = vmul.f32 %v4593, %v4610
    %v4615 = vmul.f32 %v4595, %v4611
    %4616 = vrot.lane.b32.xlu0 %v4355, 120
    %v4617 = vpop.permute.xlu0 %4616
    %4618 = vrot.lane.b32.xlu0 %v4363, 120
    %v4619 = vpop.permute.xlu0 %4618
    %4620 = vrot.lane.b32.xlu0 %v4355, 88
    %v4621 = vpop.permute.xlu0 %4620
    %4622 = vrot.lane.b32.xlu0 %v4363, 88
    %v4623 = vpop.permute.xlu0 %4622
    %v4624 = vsel %vm4368, %v4617, 0
    %v4626 = vsel %vm4368, %v4619, 0
    %v4628 = vsel %vm4368, %v4621, 0
    %v4630 = vsel %vm4368, %v4623, 0
    %4632 = vmatprep.subr.mxu0 0.0
    %4633 = vmatpush1.xpose.msra.mxu0 0.0
    %4634 = vmatprep.subr.mxu0 0.0
    %4635 = vmatpush1.xpose.msra.mxu0 0.0
    %4636 = vmatprep.subr.mxu0 0.0
    %4637 = vmatpush1.xpose.msra.mxu0 0.0
    %4638 = vmatprep.subr.mxu0 0.0
    %4639 = vmatpush1.xpose.msra.mxu0 0.0
    %4640 = vmatprep.subr.mxu0 0.0
    %4641 = vmatpush1.xpose.msra.mxu0 0.0
    %4642 = vmatprep.subr.mxu0 0.0
    %4643 = vmatpush1.xpose.msra.mxu0 0.0
    %4644 = vmatprep.subr.mxu0 0.0
    %4645 = vmatpush1.xpose.msra.mxu0 0.0
    %4646 = vmatprep.subr.mxu0 0.0
    %4647 = vmatpush1.xpose.msra.mxu0 0.0
    %4648 = vmatprep.subr.mxu0 0.0
    %4649 = vmatpush1.xpose.msra.mxu0 0.0
    %4650 = vmatprep.subr.mxu0 0.0
    %4651 = vmatpush1.xpose.msra.mxu0 0.0
    %4652 = vmatprep.subr.mxu0 0.0
    %4653 = vmatpush1.xpose.msra.mxu0 0.0
    %4654 = vmatprep.subr.mxu0 0.0
    %4655 = vmatpush1.xpose.msra.mxu0 0.0
    %4656 = vmatprep.subr.mxu0 0.0
    %4657 = vmatpush1.xpose.msra.mxu0 0.0
    %4658 = vmatprep.subr.mxu0 0.0
    %4659 = vmatpush1.xpose.msra.mxu0 0.0
    %4660 = vmatprep.subr.mxu0 0.0
    %4661 = vmatpush1.xpose.msra.mxu0 %v4630
    %4662 = vmatprep.subr.mxu0 0.0
    %4663 = vmatpush1.xpose.msra.mxu0 %v4628
    %4664 = vmatprep.subr.mxu0 0.0
    %4665 = vmatpush2.xpose.msra.mxu0 0.0
    %4666 = vmatprep.subr.mxu0 0.0
    %4667 = vmatpush2.xpose.msra.mxu0 0.0
    %4668 = vmatprep.subr.mxu0 0.0
    %4669 = vmatpush2.xpose.msra.mxu0 0.0
    %4670 = vmatprep.subr.mxu0 0.0
    %4671 = vmatpush2.xpose.msra.mxu0 0.0
    %4672 = vmatprep.subr.mxu0 0.0
    %4673 = vmatpush2.xpose.msra.mxu0 0.0
    %4674 = vmatprep.subr.mxu0 0.0
    %4675 = vmatpush2.xpose.msra.mxu0 0.0
    %4676 = vmatprep.subr.mxu0 0.0
    %4677 = vmatpush2.xpose.msra.mxu0 0.0
    %4678 = vmatprep.subr.mxu0 0.0
    %4679 = vmatpush2.xpose.msra.mxu0 0.0
    %4680 = vmatprep.subr.mxu0 0.0
    %4681 = vmatpush2.xpose.msra.mxu0 0.0
    %4682 = vmatprep.subr.mxu0 0.0
    %4683 = vmatpush2.xpose.msra.mxu0 0.0
    %4684 = vmatprep.subr.mxu0 0.0
    %4685 = vmatpush2.xpose.msra.mxu0 0.0
    %4686 = vmatprep.subr.mxu0 0.0
    %4687 = vmatpush2.xpose.msra.mxu0 0.0
    %4688 = vmatprep.subr.mxu0 0.0
    %4689 = vmatpush2.xpose.msra.mxu0 0.0
    %4690 = vmatprep.subr.mxu0 0.0
    %4691 = vmatpush2.xpose.msra.mxu0 0.0
    %4692 = vmatprep.subr.mxu0 0.0
    %4693 = vmatpush2.xpose.msra.mxu0 0.0
    %4694 = vmatprep.subr.mxu0 0.0
    %4695 = vmatpush2.xpose.msra.mxu0 0.0
    %4696 = vmatprep.mubr.f32.mxu0 0.0
    %4697 = vmatmul.mubr.f32.gmra.mxu0 %v4624
    %v4698 = vpop.f32.mrf.mxu0
    %v4699 = vadd.f32 0.0, %v4698
    %v4700 = vpop.f32.mrf.mxu0
    %4701 = vmatprep.mubr.f32.mxu0 0.0
    %4702 = vmatmul.mubr.f32.gmra.mxu0 %v4626
    %v4703 = vpop.f32.mrf.mxu0
    %v4704 = vadd.f32 0.0, %v4703
    %v4705 = vpop.f32.mrf.mxu0
    %4706 = vdwg.mxu0
    %4707 = vrot.lane.b32.xlu0 %v4474, 120
    %v4708 = vpop.permute.xlu0 %4707
    %4709 = vrot.lane.b32.xlu0 %v4482, 120
    %v4710 = vpop.permute.xlu0 %4709
    %4711 = vrot.lane.b32.xlu0 %v4474, 88
    %v4712 = vpop.permute.xlu0 %4711
    %4713 = vrot.lane.b32.xlu0 %v4482, 88
    %v4714 = vpop.permute.xlu0 %4713
    %v4715 = vsel %vm4368, %v4708, 0
    %v4717 = vsel %vm4368, %v4710, 0
    %v4719 = vsel %vm4368, %v4712, 0
    %v4721 = vsel %vm4368, %v4714, 0
    %4723 = vmatprep.subr.mxu0 0.0
    %4724 = vmatpush1.xpose.msra.mxu0 0.0
    %4725 = vmatprep.subr.mxu0 0.0
    %4726 = vmatpush1.xpose.msra.mxu0 0.0
    %4727 = vmatprep.subr.mxu0 0.0
    %4728 = vmatpush1.xpose.msra.mxu0 0.0
    %4729 = vmatprep.subr.mxu0 0.0
    %4730 = vmatpush1.xpose.msra.mxu0 0.0
    %4731 = vmatprep.subr.mxu0 0.0
    %4732 = vmatpush1.xpose.msra.mxu0 0.0
    %4733 = vmatprep.subr.mxu0 0.0
    %4734 = vmatpush1.xpose.msra.mxu0 0.0
    %4735 = vmatprep.subr.mxu0 0.0
    %4736 = vmatpush1.xpose.msra.mxu0 0.0
    %4737 = vmatprep.subr.mxu0 0.0
    %4738 = vmatpush1.xpose.msra.mxu0 0.0
    %4739 = vmatprep.subr.mxu0 0.0
    %4740 = vmatpush1.xpose.msra.mxu0 0.0
    %4741 = vmatprep.subr.mxu0 0.0
    %4742 = vmatpush1.xpose.msra.mxu0 0.0
    %4743 = vmatprep.subr.mxu0 0.0
    %4744 = vmatpush1.xpose.msra.mxu0 0.0
    %4745 = vmatprep.subr.mxu0 0.0
    %4746 = vmatpush1.xpose.msra.mxu0 0.0
    %4747 = vmatprep.subr.mxu0 0.0
    %4748 = vmatpush1.xpose.msra.mxu0 0.0
    %4749 = vmatprep.subr.mxu0 0.0
    %4750 = vmatpush1.xpose.msra.mxu0 0.0
    %4751 = vmatprep.subr.mxu0 0.0
    %4752 = vmatpush1.xpose.msra.mxu0 %v4721
    %4753 = vmatprep.subr.mxu0 0.0
    %4754 = vmatpush1.xpose.msra.mxu0 %v4719
    %4755 = vmatprep.subr.mxu0 0.0
    %4756 = vmatpush2.xpose.msra.mxu0 0.0
    %4757 = vmatprep.subr.mxu0 0.0
    %4758 = vmatpush2.xpose.msra.mxu0 0.0
    %4759 = vmatprep.subr.mxu0 0.0
    %4760 = vmatpush2.xpose.msra.mxu0 0.0
    %4761 = vmatprep.subr.mxu0 0.0
    %4762 = vmatpush2.xpose.msra.mxu0 0.0
    %4763 = vmatprep.subr.mxu0 0.0
    %4764 = vmatpush2.xpose.msra.mxu0 0.0
    %4765 = vmatprep.subr.mxu0 0.0
    %4766 = vmatpush2.xpose.msra.mxu0 0.0
    %4767 = vmatprep.subr.mxu0 0.0
    %4768 = vmatpush2.xpose.msra.mxu0 0.0
    %4769 = vmatprep.subr.mxu0 0.0
    %4770 = vmatpush2.xpose.msra.mxu0 0.0
    %4771 = vmatprep.subr.mxu0 0.0
    %4772 = vmatpush2.xpose.msra.mxu0 0.0
    %4773 = vmatprep.subr.mxu0 0.0
    %4774 = vmatpush2.xpose.msra.mxu0 0.0
    %4775 = vmatprep.subr.mxu0 0.0
    %4776 = vmatpush2.xpose.msra.mxu0 0.0
    %4777 = vmatprep.subr.mxu0 0.0
    %4778 = vmatpush2.xpose.msra.mxu0 0.0
    %4779 = vmatprep.subr.mxu0 0.0
    %4780 = vmatpush2.xpose.msra.mxu0 0.0
    %4781 = vmatprep.subr.mxu0 0.0
    %4782 = vmatpush2.xpose.msra.mxu0 0.0
    %4783 = vmatprep.subr.mxu0 0.0
    %4784 = vmatpush2.xpose.msra.mxu0 0.0
    %4785 = vmatprep.subr.mxu0 0.0
    %4786 = vmatpush2.xpose.msra.mxu0 0.0
    %4787 = vmatprep.mubr.f32.mxu0 0.0
    %4788 = vmatmul.mubr.f32.gmra.mxu0 %v4715
    %v4789 = vpop.f32.mrf.mxu0
    %v4790 = vadd.f32 0.0, %v4789
    %v4791 = vpop.f32.mrf.mxu0
    %4792 = vmatprep.mubr.f32.mxu0 0.0
    %4793 = vmatmul.mubr.f32.gmra.mxu0 %v4717
    %v4794 = vpop.f32.mrf.mxu0
    %v4795 = vadd.f32 0.0, %v4794
    %v4796 = vpop.f32.mrf.mxu0
    %4797 = vdwg.mxu0
    %v4798 = vsel %vm4570, %v4699, -inf
    %4799 = vmax.xlane.f32.xlu0 %v4798
    %v4800 = vpop.xlane.xlu0 %4799
    %v4801 = vsel %vm4574, %v4704, -inf
    %4802 = vmax.xlane.f32.xlu0 %v4801
    %v4803 = vpop.xlane.xlu0 %4802
    %v4804 = vsel %vm4570, %v4790, -inf
    %4805 = vmax.xlane.f32.xlu0 %v4804
    %v4806 = vpop.xlane.xlu0 %4805
    %v4807 = vsel %vm4574, %v4795, -inf
    %4808 = vmax.xlane.f32.xlu0 %v4807
    %v4809 = vpop.xlane.xlu0 %4808
    %v4810 = vsub.f32 %v4699, %v4800
    %v4811 = vsub.f32 %v4704, %v4803
    %v4812 = vsub.f32 %v4790, %v4806
    %v4813 = vsub.f32 %v4795, %v4809
    %v4814 = vmul.f32 %v4810, 1.442695
    %v4815 = vpow.pop %v4814
    %v4816 = vmul.f32 %v4811, 1.442695
    %v4817 = vpow.pop %v4816
    %v4818 = vmul.f32 %v4812, 1.442695
    %v4819 = vpow.pop %v4818
    %v4820 = vmul.f32 %v4813, 1.442695
    %v4821 = vpow.pop %v4820
    %v4822 = vsel %vm4570, %v4815, 0.0
    %4823 = vadd.xlane.f32.xlu0 %v4822
    %v4824 = vpop.xlane.xlu0 %4823
    %v4825 = vsel %vm4574, %v4817, 0.0
    %4826 = vadd.xlane.f32.xlu0 %v4825
    %v4827 = vpop.xlane.xlu0 %4826
    %v4828 = vsel %vm4570, %v4819, 0.0
    %4829 = vadd.xlane.f32.xlu0 %v4828
    %v4830 = vpop.xlane.xlu0 %4829
    %v4831 = vsel %vm4574, %v4821, 0.0
    %4832 = vadd.xlane.f32.xlu0 %v4831
    %v4833 = vpop.xlane.xlu0 %4832
    %v4834 = vrcp.pop %v4824
    %v4835 = vrcp.pop %v4827
    %v4836 = vrcp.pop %v4830
    %v4837 = vrcp.pop %v4833
    %v4838 = vmul.f32 %v4815, %v4834
    %v4839 = vmul.f32 %v4817, %v4835
    %v4840 = vmul.f32 %v4819, %v4836
    %v4841 = vmul.f32 %v4821, %v4837
    %v4842 = vadd.f32 %v4612, %v4838
    %v4843 = vadd.f32 %v4613, %v4839
    %v4844 = vadd.f32 %v4614, %v4840
    %v4845 = vadd.f32 %v4615, %v4841
    %4846 = vrot.lane.b32.xlu0 %v4355, 112
    %v4847 = vpop.permute.xlu0 %4846
    %4848 = vrot.lane.b32.xlu0 %v4363, 112
    %v4849 = vpop.permute.xlu0 %4848
    %4850 = vrot.lane.b32.xlu0 %v4355, 80
    %v4851 = vpop.permute.xlu0 %4850
    %4852 = vrot.lane.b32.xlu0 %v4363, 80
    %v4853 = vpop.permute.xlu0 %4852
    %v4854 = vsel %vm4368, %v4847, 0
    %v4856 = vsel %vm4368, %v4849, 0
    %v4858 = vsel %vm4368, %v4851, 0
    %v4860 = vsel %vm4368, %v4853, 0
    %4862 = vmatprep.subr.mxu0 0.0
    %4863 = vmatpush1.xpose.msra.mxu0 0.0
    %4864 = vmatprep.subr.mxu0 0.0
    %4865 = vmatpush1.xpose.msra.mxu0 0.0
    %4866 = vmatprep.subr.mxu0 0.0
    %4867 = vmatpush1.xpose.msra.mxu0 0.0
    %4868 = vmatprep.subr.mxu0 0.0
    %4869 = vmatpush1.xpose.msra.mxu0 0.0
    %4870 = vmatprep.subr.mxu0 0.0
    %4871 = vmatpush1.xpose.msra.mxu0 0.0
    %4872 = vmatprep.subr.mxu0 0.0
    %4873 = vmatpush1.xpose.msra.mxu0 0.0
    %4874 = vmatprep.subr.mxu0 0.0
    %4875 = vmatpush1.xpose.msra.mxu0 0.0
    %4876 = vmatprep.subr.mxu0 0.0
    %4877 = vmatpush1.xpose.msra.mxu0 0.0
    %4878 = vmatprep.subr.mxu0 0.0
    %4879 = vmatpush1.xpose.msra.mxu0 0.0
    %4880 = vmatprep.subr.mxu0 0.0
    %4881 = vmatpush1.xpose.msra.mxu0 0.0
    %4882 = vmatprep.subr.mxu0 0.0
    %4883 = vmatpush1.xpose.msra.mxu0 0.0
    %4884 = vmatprep.subr.mxu0 0.0
    %4885 = vmatpush1.xpose.msra.mxu0 0.0
    %4886 = vmatprep.subr.mxu0 0.0
    %4887 = vmatpush1.xpose.msra.mxu0 0.0
    %4888 = vmatprep.subr.mxu0 0.0
    %4889 = vmatpush1.xpose.msra.mxu0 0.0
    %4890 = vmatprep.subr.mxu0 0.0
    %4891 = vmatpush1.xpose.msra.mxu0 %v4860
    %4892 = vmatprep.subr.mxu0 0.0
    %4893 = vmatpush1.xpose.msra.mxu0 %v4858
    %4894 = vmatprep.subr.mxu0 0.0
    %4895 = vmatpush2.xpose.msra.mxu0 0.0
    %4896 = vmatprep.subr.mxu0 0.0
    %4897 = vmatpush2.xpose.msra.mxu0 0.0
    %4898 = vmatprep.subr.mxu0 0.0
    %4899 = vmatpush2.xpose.msra.mxu0 0.0
    %4900 = vmatprep.subr.mxu0 0.0
    %4901 = vmatpush2.xpose.msra.mxu0 0.0
    %4902 = vmatprep.subr.mxu0 0.0
    %4903 = vmatpush2.xpose.msra.mxu0 0.0
    %4904 = vmatprep.subr.mxu0 0.0
    %4905 = vmatpush2.xpose.msra.mxu0 0.0
    %4906 = vmatprep.subr.mxu0 0.0
    %4907 = vmatpush2.xpose.msra.mxu0 0.0
    %4908 = vmatprep.subr.mxu0 0.0
    %4909 = vmatpush2.xpose.msra.mxu0 0.0
    %4910 = vmatprep.subr.mxu0 0.0
    %4911 = vmatpush2.xpose.msra.mxu0 0.0
    %4912 = vmatprep.subr.mxu0 0.0
    %4913 = vmatpush2.xpose.msra.mxu0 0.0
    %4914 = vmatprep.subr.mxu0 0.0
    %4915 = vmatpush2.xpose.msra.mxu0 0.0
    %4916 = vmatprep.subr.mxu0 0.0
    %4917 = vmatpush2.xpose.msra.mxu0 0.0
    %4918 = vmatprep.subr.mxu0 0.0
    %4919 = vmatpush2.xpose.msra.mxu0 0.0
    %4920 = vmatprep.subr.mxu0 0.0
    %4921 = vmatpush2.xpose.msra.mxu0 0.0
    %4922 = vmatprep.subr.mxu0 0.0
    %4923 = vmatpush2.xpose.msra.mxu0 0.0
    %4924 = vmatprep.subr.mxu0 0.0
    %4925 = vmatpush2.xpose.msra.mxu0 0.0
    %4926 = vmatprep.mubr.f32.mxu0 0.0
    %4927 = vmatmul.mubr.f32.gmra.mxu0 %v4854
    %v4928 = vpop.f32.mrf.mxu0
    %v4929 = vadd.f32 0.0, %v4928
    %v4930 = vpop.f32.mrf.mxu0
    %4931 = vmatprep.mubr.f32.mxu0 0.0
    %4932 = vmatmul.mubr.f32.gmra.mxu0 %v4856
    %v4933 = vpop.f32.mrf.mxu0
    %v4934 = vadd.f32 0.0, %v4933
    %v4935 = vpop.f32.mrf.mxu0
    %4936 = vdwg.mxu0
    %4937 = vrot.lane.b32.xlu0 %v4474, 112
    %v4938 = vpop.permute.xlu0 %4937
    %4939 = vrot.lane.b32.xlu0 %v4482, 112
    %v4940 = vpop.permute.xlu0 %4939
    %4941 = vrot.lane.b32.xlu0 %v4474, 80
    %v4942 = vpop.permute.xlu0 %4941
    %4943 = vrot.lane.b32.xlu0 %v4482, 80
    %v4944 = vpop.permute.xlu0 %4943
    %v4945 = vsel %vm4368, %v4938, 0
    %v4947 = vsel %vm4368, %v4940, 0
    %v4949 = vsel %vm4368, %v4942, 0
    %v4951 = vsel %vm4368, %v4944, 0
    %4953 = vmatprep.subr.mxu0 0.0
    %4954 = vmatpush1.xpose.msra.mxu0 0.0
    %4955 = vmatprep.subr.mxu0 0.0
    %4956 = vmatpush1.xpose.msra.mxu0 0.0
    %4957 = vmatprep.subr.mxu0 0.0
    %4958 = vmatpush1.xpose.msra.mxu0 0.0
    %4959 = vmatprep.subr.mxu0 0.0
    %4960 = vmatpush1.xpose.msra.mxu0 0.0
    %4961 = vmatprep.subr.mxu0 0.0
    %4962 = vmatpush1.xpose.msra.mxu0 0.0
    %4963 = vmatprep.subr.mxu0 0.0
    %4964 = vmatpush1.xpose.msra.mxu0 0.0
    %4965 = vmatprep.subr.mxu0 0.0
    %4966 = vmatpush1.xpose.msra.mxu0 0.0
    %4967 = vmatprep.subr.mxu0 0.0
    %4968 = vmatpush1.xpose.msra.mxu0 0.0
    %4969 = vmatprep.subr.mxu0 0.0
    %4970 = vmatpush1.xpose.msra.mxu0 0.0
    %4971 = vmatprep.subr.mxu0 0.0
    %4972 = vmatpush1.xpose.msra.mxu0 0.0
    %4973 = vmatprep.subr.mxu0 0.0
    %4974 = vmatpush1.xpose.msra.mxu0 0.0
    %4975 = vmatprep.subr.mxu0 0.0
    %4976 = vmatpush1.xpose.msra.mxu0 0.0
    %4977 = vmatprep.subr.mxu0 0.0
    %4978 = vmatpush1.xpose.msra.mxu0 0.0
    %4979 = vmatprep.subr.mxu0 0.0
    %4980 = vmatpush1.xpose.msra.mxu0 0.0
    %4981 = vmatprep.subr.mxu0 0.0
    %4982 = vmatpush1.xpose.msra.mxu0 %v4951
    %4983 = vmatprep.subr.mxu0 0.0
    %4984 = vmatpush1.xpose.msra.mxu0 %v4949
    %4985 = vmatprep.subr.mxu0 0.0
    %4986 = vmatpush2.xpose.msra.mxu0 0.0
    %4987 = vmatprep.subr.mxu0 0.0
    %4988 = vmatpush2.xpose.msra.mxu0 0.0
    %4989 = vmatprep.subr.mxu0 0.0
    %4990 = vmatpush2.xpose.msra.mxu0 0.0
    %4991 = vmatprep.subr.mxu0 0.0
    %4992 = vmatpush2.xpose.msra.mxu0 0.0
    %4993 = vmatprep.subr.mxu0 0.0
    %4994 = vmatpush2.xpose.msra.mxu0 0.0
    %4995 = vmatprep.subr.mxu0 0.0
    %4996 = vmatpush2.xpose.msra.mxu0 0.0
    %4997 = vmatprep.subr.mxu0 0.0
    %4998 = vmatpush2.xpose.msra.mxu0 0.0
    %4999 = vmatprep.subr.mxu0 0.0
    %5000 = vmatpush2.xpose.msra.mxu0 0.0
    %5001 = vmatprep.subr.mxu0 0.0
    %5002 = vmatpush2.xpose.msra.mxu0 0.0
    %5003 = vmatprep.subr.mxu0 0.0
    %5004 = vmatpush2.xpose.msra.mxu0 0.0
    %5005 = vmatprep.subr.mxu0 0.0
    %5006 = vmatpush2.xpose.msra.mxu0 0.0
    %5007 = vmatprep.subr.mxu0 0.0
    %5008 = vmatpush2.xpose.msra.mxu0 0.0
    %5009 = vmatprep.subr.mxu0 0.0
    %5010 = vmatpush2.xpose.msra.mxu0 0.0
    %5011 = vmatprep.subr.mxu0 0.0
    %5012 = vmatpush2.xpose.msra.mxu0 0.0
    %5013 = vmatprep.subr.mxu0 0.0
    %5014 = vmatpush2.xpose.msra.mxu0 0.0
    %5015 = vmatprep.subr.mxu0 0.0
    %5016 = vmatpush2.xpose.msra.mxu0 0.0
    %5017 = vmatprep.mubr.f32.mxu0 0.0
    %5018 = vmatmul.mubr.f32.gmra.mxu0 %v4945
    %v5019 = vpop.f32.mrf.mxu0
    %v5020 = vadd.f32 0.0, %v5019
    %v5021 = vpop.f32.mrf.mxu0
    %5022 = vmatprep.mubr.f32.mxu0 0.0
    %5023 = vmatmul.mubr.f32.gmra.mxu0 %v4947
    %v5024 = vpop.f32.mrf.mxu0
    %v5025 = vadd.f32 0.0, %v5024
    %v5026 = vpop.f32.mrf.mxu0
    %5027 = vdwg.mxu0
    %v5028 = vsel %vm4570, %v4929, -inf
    %5029 = vmax.xlane.f32.xlu0 %v5028
    %v5030 = vpop.xlane.xlu0 %5029
    %v5031 = vsel %vm4574, %v4934, -inf
    %5032 = vmax.xlane.f32.xlu0 %v5031
    %v5033 = vpop.xlane.xlu0 %5032
    %v5034 = vsel %vm4570, %v5020, -inf
    %5035 = vmax.xlane.f32.xlu0 %v5034
    %v5036 = vpop.xlane.xlu0 %5035
    %v5037 = vsel %vm4574, %v5025, -inf
    %5038 = vmax.xlane.f32.xlu0 %v5037
    %v5039 = vpop.xlane.xlu0 %5038
    %v5040 = vsub.f32 %v4929, %v5030
    %v5041 = vsub.f32 %v4934, %v5033
    %v5042 = vsub.f32 %v5020, %v5036
    %v5043 = vsub.f32 %v5025, %v5039
    %v5044 = vmul.f32 %v5040, 1.442695
    %v5045 = vpow.pop %v5044
    %v5046 = vmul.f32 %v5041, 1.442695
    %v5047 = vpow.pop %v5046
    %v5048 = vmul.f32 %v5042, 1.442695
    %v5049 = vpow.pop %v5048
    %v5050 = vmul.f32 %v5043, 1.442695
    %v5051 = vpow.pop %v5050
    %v5052 = vsel %vm4570, %v5045, 0.0
    %5053 = vadd.xlane.f32.xlu0 %v5052
    %v5054 = vpop.xlane.xlu0 %5053
    %v5055 = vsel %vm4574, %v5047, 0.0
    %5056 = vadd.xlane.f32.xlu0 %v5055
    %v5057 = vpop.xlane.xlu0 %5056
    %v5058 = vsel %vm4570, %v5049, 0.0
    %5059 = vadd.xlane.f32.xlu0 %v5058
    %v5060 = vpop.xlane.xlu0 %5059
    %v5061 = vsel %vm4574, %v5051, 0.0
    %5062 = vadd.xlane.f32.xlu0 %v5061
    %v5063 = vpop.xlane.xlu0 %5062
    %v5064 = vrcp.pop %v5054
    %v5065 = vrcp.pop %v5057
    %v5066 = vrcp.pop %v5060
    %v5067 = vrcp.pop %v5063
    %v5068 = vmul.f32 %v5045, %v5064
    %v5069 = vmul.f32 %v5047, %v5065
    %v5070 = vmul.f32 %v5049, %v5066
    %v5071 = vmul.f32 %v5051, %v5067
    %v5072 = vadd.f32 %v4842, %v5068
    %v5073 = vadd.f32 %v4843, %v5069
    %v5074 = vadd.f32 %v4844, %v5070
    %v5075 = vadd.f32 %v4845, %v5071
    %5076 = vrot.lane.b32.xlu0 %v4355, 104
    %v5077 = vpop.permute.xlu0 %5076
    %5078 = vrot.lane.b32.xlu0 %v4363, 104
    %v5079 = vpop.permute.xlu0 %5078
    %5080 = vrot.lane.b32.xlu0 %v4355, 72
    %v5081 = vpop.permute.xlu0 %5080
    %5082 = vrot.lane.b32.xlu0 %v4363, 72
    %v5083 = vpop.permute.xlu0 %5082
    %v5084 = vsel %vm4368, %v5077, 0
    %v5086 = vsel %vm4368, %v5079, 0
    %v5088 = vsel %vm4368, %v5081, 0
    %v5090 = vsel %vm4368, %v5083, 0
    %5092 = vmatprep.subr.mxu0 0.0
    %5093 = vmatpush1.xpose.msra.mxu0 0.0
    %5094 = vmatprep.subr.mxu0 0.0
    %5095 = vmatpush1.xpose.msra.mxu0 0.0
    %5096 = vmatprep.subr.mxu0 0.0
    %5097 = vmatpush1.xpose.msra.mxu0 0.0
    %5098 = vmatprep.subr.mxu0 0.0
    %5099 = vmatpush1.xpose.msra.mxu0 0.0
    %5100 = vmatprep.subr.mxu0 0.0
    %5101 = vmatpush1.xpose.msra.mxu0 0.0
    %5102 = vmatprep.subr.mxu0 0.0
    %5103 = vmatpush1.xpose.msra.mxu0 0.0
    %5104 = vmatprep.subr.mxu0 0.0
    %5105 = vmatpush1.xpose.msra.mxu0 0.0
    %5106 = vmatprep.subr.mxu0 0.0
    %5107 = vmatpush1.xpose.msra.mxu0 0.0
    %5108 = vmatprep.subr.mxu0 0.0
    %5109 = vmatpush1.xpose.msra.mxu0 0.0
    %5110 = vmatprep.subr.mxu0 0.0
    %5111 = vmatpush1.xpose.msra.mxu0 0.0
    %5112 = vmatprep.subr.mxu0 0.0
    %5113 = vmatpush1.xpose.msra.mxu0 0.0
    %5114 = vmatprep.subr.mxu0 0.0
    %5115 = vmatpush1.xpose.msra.mxu0 0.0
    %5116 = vmatprep.subr.mxu0 0.0
    %5117 = vmatpush1.xpose.msra.mxu0 0.0
    %5118 = vmatprep.subr.mxu0 0.0
    %5119 = vmatpush1.xpose.msra.mxu0 0.0
    %5120 = vmatprep.subr.mxu0 0.0
    %5121 = vmatpush1.xpose.msra.mxu0 %v5090
    %5122 = vmatprep.subr.mxu0 0.0
    %5123 = vmatpush1.xpose.msra.mxu0 %v5088
    %5124 = vmatprep.subr.mxu0 0.0
    %5125 = vmatpush2.xpose.msra.mxu0 0.0
    %5126 = vmatprep.subr.mxu0 0.0
    %5127 = vmatpush2.xpose.msra.mxu0 0.0
    %5128 = vmatprep.subr.mxu0 0.0
    %5129 = vmatpush2.xpose.msra.mxu0 0.0
    %5130 = vmatprep.subr.mxu0 0.0
    %5131 = vmatpush2.xpose.msra.mxu0 0.0
    %5132 = vmatprep.subr.mxu0 0.0
    %5133 = vmatpush2.xpose.msra.mxu0 0.0
    %5134 = vmatprep.subr.mxu0 0.0
    %5135 = vmatpush2.xpose.msra.mxu0 0.0
    %5136 = vmatprep.subr.mxu0 0.0
    %5137 = vmatpush2.xpose.msra.mxu0 0.0
    %5138 = vmatprep.subr.mxu0 0.0
    %5139 = vmatpush2.xpose.msra.mxu0 0.0
    %5140 = vmatprep.subr.mxu0 0.0
    %5141 = vmatpush2.xpose.msra.mxu0 0.0
    %5142 = vmatprep.subr.mxu0 0.0
    %5143 = vmatpush2.xpose.msra.mxu0 0.0
    %5144 = vmatprep.subr.mxu0 0.0
    %5145 = vmatpush2.xpose.msra.mxu0 0.0
    %5146 = vmatprep.subr.mxu0 0.0
    %5147 = vmatpush2.xpose.msra.mxu0 0.0
    %5148 = vmatprep.subr.mxu0 0.0
    %5149 = vmatpush2.xpose.msra.mxu0 0.0
    %5150 = vmatprep.subr.mxu0 0.0
    %5151 = vmatpush2.xpose.msra.mxu0 0.0
    %5152 = vmatprep.subr.mxu0 0.0
    %5153 = vmatpush2.xpose.msra.mxu0 0.0
    %5154 = vmatprep.subr.mxu0 0.0
    %5155 = vmatpush2.xpose.msra.mxu0 0.0
    %5156 = vmatprep.mubr.f32.mxu0 0.0
    %5157 = vmatmul.mubr.f32.gmra.mxu0 %v5084
    %v5158 = vpop.f32.mrf.mxu0
    %v5159 = vadd.f32 0.0, %v5158
    %v5160 = vpop.f32.mrf.mxu0
    %5161 = vmatprep.mubr.f32.mxu0 0.0
    %5162 = vmatmul.mubr.f32.gmra.mxu0 %v5086
    %v5163 = vpop.f32.mrf.mxu0
    %v5164 = vadd.f32 0.0, %v5163
    %v5165 = vpop.f32.mrf.mxu0
    %5166 = vdwg.mxu0
    %5167 = vrot.lane.b32.xlu0 %v4474, 104
    %v5168 = vpop.permute.xlu0 %5167
    %5169 = vrot.lane.b32.xlu0 %v4482, 104
    %v5170 = vpop.permute.xlu0 %5169
    %5171 = vrot.lane.b32.xlu0 %v4474, 72
    %v5172 = vpop.permute.xlu0 %5171
    %5173 = vrot.lane.b32.xlu0 %v4482, 72
    %v5174 = vpop.permute.xlu0 %5173
    %v5175 = vsel %vm4368, %v5168, 0
    %v5177 = vsel %vm4368, %v5170, 0
    %v5179 = vsel %vm4368, %v5172, 0
    %v5181 = vsel %vm4368, %v5174, 0
    %5183 = vmatprep.subr.mxu0 0.0
    %5184 = vmatpush1.xpose.msra.mxu0 0.0
    %5185 = vmatprep.subr.mxu0 0.0
    %5186 = vmatpush1.xpose.msra.mxu0 0.0
    %5187 = vmatprep.subr.mxu0 0.0
    %5188 = vmatpush1.xpose.msra.mxu0 0.0
    %5189 = vmatprep.subr.mxu0 0.0
    %5190 = vmatpush1.xpose.msra.mxu0 0.0
    %5191 = vmatprep.subr.mxu0 0.0
    %5192 = vmatpush1.xpose.msra.mxu0 0.0
    %5193 = vmatprep.subr.mxu0 0.0
    %5194 = vmatpush1.xpose.msra.mxu0 0.0
    %5195 = vmatprep.subr.mxu0 0.0
    %5196 = vmatpush1.xpose.msra.mxu0 0.0
    %5197 = vmatprep.subr.mxu0 0.0
    %5198 = vmatpush1.xpose.msra.mxu0 0.0
    %5199 = vmatprep.subr.mxu0 0.0
    %5200 = vmatpush1.xpose.msra.mxu0 0.0
    %5201 = vmatprep.subr.mxu0 0.0
    %5202 = vmatpush1.xpose.msra.mxu0 0.0
    %5203 = vmatprep.subr.mxu0 0.0
    %5204 = vmatpush1.xpose.msra.mxu0 0.0
    %5205 = vmatprep.subr.mxu0 0.0
    %5206 = vmatpush1.xpose.msra.mxu0 0.0
    %5207 = vmatprep.subr.mxu0 0.0
    %5208 = vmatpush1.xpose.msra.mxu0 0.0
    %5209 = vmatprep.subr.mxu0 0.0
    %5210 = vmatpush1.xpose.msra.mxu0 0.0
    %5211 = vmatprep.subr.mxu0 0.0
    %5212 = vmatpush1.xpose.msra.mxu0 %v5181
    %5213 = vmatprep.subr.mxu0 0.0
    %5214 = vmatpush1.xpose.msra.mxu0 %v5179
    %5215 = vmatprep.subr.mxu0 0.0
    %5216 = vmatpush2.xpose.msra.mxu0 0.0
    %5217 = vmatprep.subr.mxu0 0.0
    %5218 = vmatpush2.xpose.msra.mxu0 0.0
    %5219 = vmatprep.subr.mxu0 0.0
    %5220 = vmatpush2.xpose.msra.mxu0 0.0
    %5221 = vmatprep.subr.mxu0 0.0
    %5222 = vmatpush2.xpose.msra.mxu0 0.0
    %5223 = vmatprep.subr.mxu0 0.0
    %5224 = vmatpush2.xpose.msra.mxu0 0.0
    %5225 = vmatprep.subr.mxu0 0.0
    %5226 = vmatpush2.xpose.msra.mxu0 0.0
    %5227 = vmatprep.subr.mxu0 0.0
    %5228 = vmatpush2.xpose.msra.mxu0 0.0
    %5229 = vmatprep.subr.mxu0 0.0
    %5230 = vmatpush2.xpose.msra.mxu0 0.0
    %5231 = vmatprep.subr.mxu0 0.0
    %5232 = vmatpush2.xpose.msra.mxu0 0.0
    %5233 = vmatprep.subr.mxu0 0.0
    %5234 = vmatpush2.xpose.msra.mxu0 0.0
    %5235 = vmatprep.subr.mxu0 0.0
    %5236 = vmatpush2.xpose.msra.mxu0 0.0
    %5237 = vmatprep.subr.mxu0 0.0
    %5238 = vmatpush2.xpose.msra.mxu0 0.0
    %5239 = vmatprep.subr.mxu0 0.0
    %5240 = vmatpush2.xpose.msra.mxu0 0.0
    %5241 = vmatprep.subr.mxu0 0.0
    %5242 = vmatpush2.xpose.msra.mxu0 0.0
    %5243 = vmatprep.subr.mxu0 0.0
    %5244 = vmatpush2.xpose.msra.mxu0 0.0
    %5245 = vmatprep.subr.mxu0 0.0
    %5246 = vmatpush2.xpose.msra.mxu0 0.0
    %5247 = vmatprep.mubr.f32.mxu0 0.0
    %5248 = vmatmul.mubr.f32.gmra.mxu0 %v5175
    %v5249 = vpop.f32.mrf.mxu0
    %v5250 = vadd.f32 0.0, %v5249
    %v5251 = vpop.f32.mrf.mxu0
    %5252 = vmatprep.mubr.f32.mxu0 0.0
    %5253 = vmatmul.mubr.f32.gmra.mxu0 %v5177
    %v5254 = vpop.f32.mrf.mxu0
    %v5255 = vadd.f32 0.0, %v5254
    %v5256 = vpop.f32.mrf.mxu0
    %5257 = vdwg.mxu0
    %v5258 = vsel %vm4570, %v5159, -inf
    %5259 = vmax.xlane.f32.xlu0 %v5258
    %v5260 = vpop.xlane.xlu0 %5259
    %v5261 = vsel %vm4574, %v5164, -inf
    %5262 = vmax.xlane.f32.xlu0 %v5261
    %v5263 = vpop.xlane.xlu0 %5262
    %v5264 = vsel %vm4570, %v5250, -inf
    %5265 = vmax.xlane.f32.xlu0 %v5264
    %v5266 = vpop.xlane.xlu0 %5265
    %v5267 = vsel %vm4574, %v5255, -inf
    %5268 = vmax.xlane.f32.xlu0 %v5267
    %v5269 = vpop.xlane.xlu0 %5268
    %v5270 = vsub.f32 %v5159, %v5260
    %v5271 = vsub.f32 %v5164, %v5263
    %v5272 = vsub.f32 %v5250, %v5266
    %v5273 = vsub.f32 %v5255, %v5269
    %v5274 = vmul.f32 %v5270, 1.442695
    %v5275 = vpow.pop %v5274
    %v5276 = vmul.f32 %v5271, 1.442695
    %v5277 = vpow.pop %v5276
    %v5278 = vmul.f32 %v5272, 1.442695
    %v5279 = vpow.pop %v5278
    %v5280 = vmul.f32 %v5273, 1.442695
    %v5281 = vpow.pop %v5280
    %v5282 = vsel %vm4570, %v5275, 0.0
    %5283 = vadd.xlane.f32.xlu0 %v5282
    %v5284 = vpop.xlane.xlu0 %5283
    %v5285 = vsel %vm4574, %v5277, 0.0
    %5286 = vadd.xlane.f32.xlu0 %v5285
    %v5287 = vpop.xlane.xlu0 %5286
    %v5288 = vsel %vm4570, %v5279, 0.0
    %5289 = vadd.xlane.f32.xlu0 %v5288
    %v5290 = vpop.xlane.xlu0 %5289
    %v5291 = vsel %vm4574, %v5281, 0.0
    %5292 = vadd.xlane.f32.xlu0 %v5291
    %v5293 = vpop.xlane.xlu0 %5292
    %v5294 = vrcp.pop %v5284
    %v5295 = vrcp.pop %v5287
    %v5296 = vrcp.pop %v5290
    %v5297 = vrcp.pop %v5293
    %v5298 = vmul.f32 %v5275, %v5294
    %v5299 = vmul.f32 %v5277, %v5295
    %v5300 = vmul.f32 %v5279, %v5296
    %v5301 = vmul.f32 %v5281, %v5297
    %v5302 = vadd.f32 %v5072, %v5298
    %v5303 = vadd.f32 %v5073, %v5299
    %v5304 = vadd.f32 %v5074, %v5300
    %v5305 = vadd.f32 %v5075, %v5301
    %5306 = vrot.lane.b32.xlu0 %v4355, 64
    %v5307 = vpop.permute.xlu0 %5306
    %5308 = vrot.lane.b32.xlu0 %v4363, 64
    %v5309 = vpop.permute.xlu0 %5308
    %v5312 = vsel %vm4570, %v5302, 0
    %v5315 = vsel %vm4570, %v5303, 0
    %v5317 = vsel %vm92, %v5309, 0
    %5319 = vmatprep.subr.mxu0 0.0
    %5320 = vmatpush1.msra.mxu0 0.0
    %5321 = vmatprep.subr.mxu0 0.0
    %5322 = vmatpush1.msra.mxu0 0.0
    %5323 = vmatprep.subr.mxu0 0.0
    %5324 = vmatpush1.msra.mxu0 0.0
    %5325 = vmatprep.subr.mxu0 0.0
    %5326 = vmatpush1.msra.mxu0 0.0
    %5327 = vmatprep.subr.mxu0 0.0
    %5328 = vmatpush1.msra.mxu0 0.0
    %5329 = vmatprep.subr.mxu0 0.0
    %5330 = vmatpush1.msra.mxu0 0.0
    %5331 = vmatprep.subr.mxu0 0.0
    %5332 = vmatpush1.msra.mxu0 0.0
    %5333 = vmatprep.subr.mxu0 0.0
    %5334 = vmatpush1.msra.mxu0 0.0
    %5335 = vmatprep.subr.mxu0 0.0
    %5336 = vmatpush1.msra.mxu0 0.0
    %5337 = vmatprep.subr.mxu0 0.0
    %5338 = vmatpush1.msra.mxu0 0.0
    %5339 = vmatprep.subr.mxu0 0.0
    %5340 = vmatpush1.msra.mxu0 0.0
    %5341 = vmatprep.subr.mxu0 0.0
    %5342 = vmatpush1.msra.mxu0 0.0
    %5343 = vmatprep.subr.mxu0 0.0
    %5344 = vmatpush1.msra.mxu0 0.0
    %5345 = vmatprep.subr.mxu0 0.0
    %5346 = vmatpush1.msra.mxu0 0.0
    %5347 = vmatprep.subr.mxu0 0.0
    %5348 = vmatpush1.msra.mxu0 %v5317
    %5349 = vmatprep.subr.mxu0 0.0
    %5350 = vmatpush1.msra.mxu0 %v5307
    %5351 = vmatprep.subr.mxu0 0.0
    %5352 = vmatpush2.msra.mxu0 0.0
    %5353 = vmatprep.subr.mxu0 0.0
    %5354 = vmatpush2.msra.mxu0 0.0
    %5355 = vmatprep.subr.mxu0 0.0
    %5356 = vmatpush2.msra.mxu0 0.0
    %5357 = vmatprep.subr.mxu0 0.0
    %5358 = vmatpush2.msra.mxu0 0.0
    %5359 = vmatprep.subr.mxu0 0.0
    %5360 = vmatpush2.msra.mxu0 0.0
    %5361 = vmatprep.subr.mxu0 0.0
    %5362 = vmatpush2.msra.mxu0 0.0
    %5363 = vmatprep.subr.mxu0 0.0
    %5364 = vmatpush2.msra.mxu0 0.0
    %5365 = vmatprep.subr.mxu0 0.0
    %5366 = vmatpush2.msra.mxu0 0.0
    %5367 = vmatprep.subr.mxu0 0.0
    %5368 = vmatpush2.msra.mxu0 0.0
    %5369 = vmatprep.subr.mxu0 0.0
    %5370 = vmatpush2.msra.mxu0 0.0
    %5371 = vmatprep.subr.mxu0 0.0
    %5372 = vmatpush2.msra.mxu0 0.0
    %5373 = vmatprep.subr.mxu0 0.0
    %5374 = vmatpush2.msra.mxu0 0.0
    %5375 = vmatprep.subr.mxu0 0.0
    %5376 = vmatpush2.msra.mxu0 0.0
    %5377 = vmatprep.subr.mxu0 0.0
    %5378 = vmatpush2.msra.mxu0 0.0
    %5379 = vmatprep.subr.mxu0 0.0
    %5380 = vmatpush2.msra.mxu0 0.0
    %5381 = vmatprep.subr.mxu0 0.0
    %5382 = vmatpush2.msra.mxu0 0.0
    %5383 = vmatprep.mubr.f32.mxu0 0.0
    %5384 = vmatmul.mubr.f32.gmra.mxu0 %v5312
    %v5385 = vpop.f32.mrf.mxu0
    %v5386 = vpop.f32.mrf.mxu0
    %5387 = vmatprep.mubr.f32.mxu0 0.0
    %5388 = vmatmul.mubr.f32.gmra.mxu0 %v5315
    %v5389 = vpop.f32.mrf.mxu0
    %v5390 = vadd.f32 0.0, %v5389
    %v5391 = vpop.f32.mrf.mxu0
    %5392 = vdwg.mxu0
    %5393 = vrot.lane.b32.xlu0 %v4474, 64
    %v5394 = vpop.permute.xlu0 %5393
    %5395 = vrot.lane.b32.xlu0 %v4482, 64
    %v5396 = vpop.permute.xlu0 %5395
    %v5399 = vsel %vm4570, %v5304, 0
    %v5402 = vsel %vm4570, %v5305, 0
    %v5404 = vsel %vm92, %v5396, 0
    %5406 = vmatprep.subr.mxu0 0.0
    %5407 = vmatpush1.msra.mxu0 0.0
    %5408 = vmatprep.subr.mxu0 0.0
    %5409 = vmatpush1.msra.mxu0 0.0
    %5410 = vmatprep.subr.mxu0 0.0
    %5411 = vmatpush1.msra.mxu0 0.0
    %5412 = vmatprep.subr.mxu0 0.0
    %5413 = vmatpush1.msra.mxu0 0.0
    %5414 = vmatprep.subr.mxu0 0.0
    %5415 = vmatpush1.msra.mxu0 0.0
    %5416 = vmatprep.subr.mxu0 0.0
    %5417 = vmatpush1.msra.mxu0 0.0
    %5418 = vmatprep.subr.mxu0 0.0
    %5419 = vmatpush1.msra.mxu0 0.0
    %5420 = vmatprep.subr.mxu0 0.0
    %5421 = vmatpush1.msra.mxu0 0.0
    %5422 = vmatprep.subr.mxu0 0.0
    %5423 = vmatpush1.msra.mxu0 0.0
    %5424 = vmatprep.subr.mxu0 0.0
    %5425 = vmatpush1.msra.mxu0 0.0
    %5426 = vmatprep.subr.mxu0 0.0
    %5427 = vmatpush1.msra.mxu0 0.0
    %5428 = vmatprep.subr.mxu0 0.0
    %5429 = vmatpush1.msra.mxu0 0.0
    %5430 = vmatprep.subr.mxu0 0.0
    %5431 = vmatpush1.msra.mxu0 0.0
    %5432 = vmatprep.subr.mxu0 0.0
    %5433 = vmatpush1.msra.mxu0 0.0
    %5434 = vmatprep.subr.mxu0 0.0
    %5435 = vmatpush1.msra.mxu0 %v5404
    %5436 = vmatprep.subr.mxu0 0.0
    %5437 = vmatpush1.msra.mxu0 %v5394
    %5438 = vmatprep.subr.mxu0 0.0
    %5439 = vmatpush2.msra.mxu0 0.0
    %5440 = vmatprep.subr.mxu0 0.0
    %5441 = vmatpush2.msra.mxu0 0.0
    %5442 = vmatprep.subr.mxu0 0.0
    %5443 = vmatpush2.msra.mxu0 0.0
    %5444 = vmatprep.subr.mxu0 0.0
    %5445 = vmatpush2.msra.mxu0 0.0
    %5446 = vmatprep.subr.mxu0 0.0
    %5447 = vmatpush2.msra.mxu0 0.0
    %5448 = vmatprep.subr.mxu0 0.0
    %5449 = vmatpush2.msra.mxu0 0.0
    %5450 = vmatprep.subr.mxu0 0.0
    %5451 = vmatpush2.msra.mxu0 0.0
    %5452 = vmatprep.subr.mxu0 0.0
    %5453 = vmatpush2.msra.mxu0 0.0
    %5454 = vmatprep.subr.mxu0 0.0
    %5455 = vmatpush2.msra.mxu0 0.0
    %5456 = vmatprep.subr.mxu0 0.0
    %5457 = vmatpush2.msra.mxu0 0.0
    %5458 = vmatprep.subr.mxu0 0.0
    %5459 = vmatpush2.msra.mxu0 0.0
    %5460 = vmatprep.subr.mxu0 0.0
    %5461 = vmatpush2.msra.mxu0 0.0
    %5462 = vmatprep.subr.mxu0 0.0
    %5463 = vmatpush2.msra.mxu0 0.0
    %5464 = vmatprep.subr.mxu0 0.0
    %5465 = vmatpush2.msra.mxu0 0.0
    %5466 = vmatprep.subr.mxu0 0.0
    %5467 = vmatpush2.msra.mxu0 0.0
    %5468 = vmatprep.subr.mxu0 0.0
    %5469 = vmatpush2.msra.mxu0 0.0
    %5470 = vmatprep.mubr.f32.mxu0 0.0
    %5471 = vmatmul.mubr.f32.gmra.mxu0 %v5399
    %v5472 = vpop.f32.mrf.mxu0
    %v5473 = vpop.f32.mrf.mxu0
    %5474 = vmatprep.mubr.f32.mxu0 0.0
    %5475 = vmatmul.mubr.f32.gmra.mxu0 %v5402
    %v5476 = vpop.f32.mrf.mxu0
    %v5477 = vadd.f32 0.0, %v5476
    %v5478 = vpop.f32.mrf.mxu0
    %5479 = vdwg.mxu0
    %v5481 = vunpack.c.l.s4 1983009808
    %v5482 = vunpack.c.0.s8 %v5481
    %v5483 = vlaneseq
    %v5484 = vshrl.u32 %v5483, 7
    %v5485 = vsub.s32 %v5482, %v5484
    %v5486 = vrot.slane %v5390, %v5485
    %v5488 = vunpack.c.l.s4 1983009808
    %v5489 = vunpack.c.0.s8 %v5488
    %v5490 = vlaneseq
    %v5491 = vshrl.u32 %v5490, 7
    %v5492 = vsub.s32 %v5489, %v5491
    %v5493 = vrot.slane %v5477, %v5492
    %v5494 = vcombine.low %v5486, %v5493
    %v5495 = vcombine.high %v5486, %v5493
    %v5497 = vunpack.c.l.s4 1934713408
    %v5498 = vunpack.c.0.s8 %v5497
    %v5499 = vlaneseq
    %v5500 = vshrl.u32 %v5499, 7
    %v5501 = vsub.s32 %v5498, %v5500
    %v5502 = vrot.slane %v5494, %v5501
    %v5504 = vunpack.c.l.s4 1934713408
    %v5505 = vunpack.c.0.s8 %v5504
    %v5506 = vlaneseq
    %v5507 = vshrl.u32 %v5506, 7
    %v5508 = vsub.s32 %v5505, %v5507
    %v5509 = vrot.slane %v5495, %v5508
    %v5510 = vcombine.high %v5502, 0.0
    %v5511 = vcombine.high %v5509, 0.0
    %v5512 = vld [vmem:[#allocation2 + $0x828] sm:$0xff]
    %v5513 = vld [vmem:[#allocation2 + $0x830] sm:$0x1]
    %v5514 = vlaneseq
    %v5515 = vshrl.u32 %v5514, 7
    %v5516 = vsub.s32 0, %v5515
    %v5517 = vrot.slane %v5513, %v5516
    %v5522 = vcombine.low %v5502, %v5510
    %v5523 = vcombine.low %v5509, %v5511
    %v5525 = vunpack.c.l.s4 1983009808
    %v5526 = vunpack.c.0.s8 %v5525
    %v5527 = vlaneseq
    %v5528 = vshrl.u32 %v5527, 7
    %v5529 = vsub.s32 %v5526, %v5528
    %v5530 = vrot.slane %v5522, %v5529
    %v5532 = vunpack.c.l.s4 1983009808
    %v5533 = vunpack.c.0.s8 %v5532
    %v5534 = vlaneseq
    %v5535 = vshrl.u32 %v5534, 7
    %v5536 = vsub.s32 %v5533, %v5535
    %v5537 = vrot.slane %v5523, %v5536
    %v5538 = vcombine.low %v5530, %v5537
    %v5539 = vsel %vm4368, %v5538, 0
    %5541 = vmatprep.subr.mxu0 0.0
    %5542 = vmatpush1.msra.mxu0 0.0
    %5543 = vmatprep.subr.mxu0 0.0
    %5544 = vmatpush1.msra.mxu0 0.0
    %5545 = vmatprep.subr.mxu0 0.0
    %5546 = vmatpush1.msra.mxu0 0.0
    %5547 = vmatprep.subr.mxu0 0.0
    %5548 = vmatpush1.msra.mxu0 0.0
    %5549 = vmatprep.subr.mxu0 0.0
    %5550 = vmatpush1.msra.mxu0 0.0
    %5551 = vmatprep.subr.mxu0 0.0
    %5552 = vmatpush1.msra.mxu0 0.0
    %5553 = vmatprep.subr.mxu0 0.0
    %5554 = vmatpush1.msra.mxu0 0.0
    %5555 = vmatprep.subr.mxu0 0.0
    %5556 = vmatpush1.msra.mxu0 0.0
    %5557 = vmatprep.subr.mxu0 0.0
    %5558 = vmatpush1.msra.mxu0 0.0
    %5559 = vmatprep.subr.mxu0 0.0
    %5560 = vmatpush1.msra.mxu0 0.0
    %5561 = vmatprep.subr.mxu0 0.0
    %5562 = vmatpush1.msra.mxu0 0.0
    %5563 = vmatprep.subr.mxu0 0.0
    %5564 = vmatpush1.msra.mxu0 0.0
    %5565 = vmatprep.subr.mxu0 0.0
    %5566 = vmatpush1.msra.mxu0 0.0
    %5567 = vmatprep.subr.mxu0 0.0
    %5568 = vmatpush1.msra.mxu0 0.0
    %5569 = vmatprep.subr.mxu0 0.0
    %5570 = vmatpush1.msra.mxu0 0.0
    %5571 = vmatprep.subr.mxu0 0.0
    %5572 = vmatpush1.msra.mxu0 %v5512
    %5573 = vmatprep.subr.mxu0 0.0
    %5574 = vmatpush2.msra.mxu0 0.0
    %5575 = vmatprep.subr.mxu0 0.0
    %5576 = vmatpush2.msra.mxu0 0.0
    %5577 = vmatprep.subr.mxu0 0.0
    %5578 = vmatpush2.msra.mxu0 0.0
    %5579 = vmatprep.subr.mxu0 0.0
    %5580 = vmatpush2.msra.mxu0 0.0
    %5581 = vmatprep.subr.mxu0 0.0
    %5582 = vmatpush2.msra.mxu0 0.0
    %5583 = vmatprep.subr.mxu0 0.0
    %5584 = vmatpush2.msra.mxu0 0.0
    %5585 = vmatprep.subr.mxu0 0.0
    %5586 = vmatpush2.msra.mxu0 0.0
    %5587 = vmatprep.subr.mxu0 0.0
    %5588 = vmatpush2.msra.mxu0 0.0
    %5589 = vmatprep.subr.mxu0 0.0
    %5590 = vmatpush2.msra.mxu0 0.0
    %5591 = vmatprep.subr.mxu0 0.0
    %5592 = vmatpush2.msra.mxu0 0.0
    %5593 = vmatprep.subr.mxu0 0.0
    %5594 = vmatpush2.msra.mxu0 0.0
    %5595 = vmatprep.subr.mxu0 0.0
    %5596 = vmatpush2.msra.mxu0 0.0
    %5597 = vmatprep.subr.mxu0 0.0
    %5598 = vmatpush2.msra.mxu0 0.0
    %5599 = vmatprep.subr.mxu0 0.0
    %5600 = vmatpush2.msra.mxu0 0.0
    %5601 = vmatprep.subr.mxu0 0.0
    %5602 = vmatpush2.msra.mxu0 0.0
    %5603 = vmatprep.subr.mxu0 0.0
    %5604 = vmatpush2.msra.mxu0 0.0
    %5605 = vmatprep.mubr.f32.mxu0 0.0
    %5606 = vmatmul.mubr.f32.gmra.mxu0 %v5539
    %v5607 = vpop.f32.mrf.mxu0
    %v5608 = vadd.f32 %v5517, %v5607
    %v5609 = vpop.f32.mrf.mxu0
    %5610 = vdwg.mxu0
    %v5611 = vld [vmem:[#allocation2 + $0x6c8] sm:$0xff]
    %v5612 = vld [vmem:[#allocation2 + $0x6d0] sm:$0xff]
    %v5613 = vld [vmem:[#allocation2 + $0x6d8] sm:$0xff]
    %v5614 = vld [vmem:[#allocation2 + $0x6e0] sm:$0xff]
    %v5615 = vld [vmem:[#allocation2 + $0x6e8] sm:$0x1]
    %v5616 = vlaneseq
    %v5617 = vshrl.u32 %v5616, 7
    %v5618 = vsub.s32 0, %v5617
    %v5619 = vrot.slane %v5615, %v5618
    %v5621 = vsel %vm288, %v5608, 0
    %5623 = vmatprep.subr.mxu0 0.0
    %5624 = vmatpush1.msra.mxu0 0.0
    %5625 = vmatprep.subr.mxu0 0.0
    %5626 = vmatpush1.msra.mxu0 0.0
    %5627 = vmatprep.subr.mxu0 0.0
    %5628 = vmatpush1.msra.mxu0 0.0
    %5629 = vmatprep.subr.mxu0 0.0
    %5630 = vmatpush1.msra.mxu0 0.0
    %5631 = vmatprep.subr.mxu0 0.0
    %5632 = vmatpush1.msra.mxu0 0.0
    %5633 = vmatprep.subr.mxu0 0.0
    %5634 = vmatpush1.msra.mxu0 0.0
    %5635 = vmatprep.subr.mxu0 0.0
    %5636 = vmatpush1.msra.mxu0 0.0
    %5637 = vmatprep.subr.mxu0 0.0
    %5638 = vmatpush1.msra.mxu0 0.0
    %5639 = vmatprep.subr.mxu0 0.0
    %5640 = vmatpush1.msra.mxu0 0.0
    %5641 = vmatprep.subr.mxu0 0.0
    %5642 = vmatpush1.msra.mxu0 0.0
    %5643 = vmatprep.subr.mxu0 0.0
    %5644 = vmatpush1.msra.mxu0 0.0
    %5645 = vmatprep.subr.mxu0 0.0
    %5646 = vmatpush1.msra.mxu0 0.0
    %5647 = vmatprep.subr.mxu0 0.0
    %5648 = vmatpush1.msra.mxu0 %v5614
    %5649 = vmatprep.subr.mxu0 0.0
    %5650 = vmatpush1.msra.mxu0 %v5613
    %5651 = vmatprep.subr.mxu0 0.0
    %5652 = vmatpush1.msra.mxu0 %v5612
    %5653 = vmatprep.subr.mxu0 0.0
    %5654 = vmatpush1.msra.mxu0 %v5611
    %5655 = vmatprep.subr.mxu0 0.0
    %5656 = vmatpush2.msra.mxu0 0.0
    %5657 = vmatprep.subr.mxu0 0.0
    %5658 = vmatpush2.msra.mxu0 0.0
    %5659 = vmatprep.subr.mxu0 0.0
    %5660 = vmatpush2.msra.mxu0 0.0
    %5661 = vmatprep.subr.mxu0 0.0
    %5662 = vmatpush2.msra.mxu0 0.0
    %5663 = vmatprep.subr.mxu0 0.0
    %5664 = vmatpush2.msra.mxu0 0.0
    %5665 = vmatprep.subr.mxu0 0.0
    %5666 = vmatpush2.msra.mxu0 0.0
    %5667 = vmatprep.subr.mxu0 0.0
    %5668 = vmatpush2.msra.mxu0 0.0
    %5669 = vmatprep.subr.mxu0 0.0
    %5670 = vmatpush2.msra.mxu0 0.0
    %5671 = vmatprep.subr.mxu0 0.0
    %5672 = vmatpush2.msra.mxu0 0.0
    %5673 = vmatprep.subr.mxu0 0.0
    %5674 = vmatpush2.msra.mxu0 0.0
    %5675 = vmatprep.subr.mxu0 0.0
    %5676 = vmatpush2.msra.mxu0 0.0
    %5677 = vmatprep.subr.mxu0 0.0
    %5678 = vmatpush2.msra.mxu0 0.0
    %5679 = vmatprep.subr.mxu0 0.0
    %5680 = vmatpush2.msra.mxu0 0.0
    %5681 = vmatprep.subr.mxu0 0.0
    %5682 = vmatpush2.msra.mxu0 0.0
    %5683 = vmatprep.subr.mxu0 0.0
    %5684 = vmatpush2.msra.mxu0 0.0
    %5685 = vmatprep.subr.mxu0 0.0
    %5686 = vmatpush2.msra.mxu0 0.0
    %5687 = vmatprep.mubr.f32.mxu0 0.0
    %5688 = vmatmul.mubr.f32.gmra.mxu0 %v5621
    %v5689 = vpop.f32.mrf.mxu0
    %v5690 = vadd.f32 %v5619, %v5689
    %v5691 = vpop.f32.mrf.mxu0
    %5692 = vdwg.mxu0
    %v5693 = vxor.u32 %v5690, 2147483648
    %v5694 = vmul.f32 %v5693, 1.442695
    %v5695 = vpow.pop %v5694
    %v5696 = vadd.f32 %v5695, 1.0
    %v5697 = vrcp.pop %v5696
    %v5698 = vmul.f32 1.0, %v5697
    %5700 = vrot.lane.b32.xlu0 %v5690, 96
    %v5701 = vpop.permute.xlu0 %5700
    %v5703 = vmul.f32 %v5698, %v5701
    %v5704 = vadd.f32 %v4114, %v5703
    %v5705 = vld [vmem:[#allocation2 + $0x720] sm:$0x3]
    %v5706 = vsel %vm288, %v5704, 0.0
    %5707 = vadd.xlane.f32.xlu0 %v5706
    %v5708 = vpop.xlane.xlu0 %5707
    %v5709 = vmul.f32 %v5708, %v3760
    %v5710 = vsub.f32 %v5704, %v5709
    %v5711 = vmul.f32 %v5710, %v5710
    %v5712 = vsel %vm288, %v5711, 0.0
    %5713 = vadd.xlane.f32.xlu0 %v5712
    %v5714 = vpop.xlane.xlu0 %5713
    %v5715 = vmul.f32 %v5714, %v3760
    %v5716 = vadd.f32 %v5715, 1e-05
    %v5717 = vrsqrt.pop %v5716
    %v5718 = vmul.f32 %v5710, %v5717
    %v5719 = vlaneseq
    %v5720 = vshrl.u32 %v5719, 7
    %v5721 = vsub.s32 0, %v5720
    %v5722 = vrot.slane %v5705, %v5721
    %v5723 = vmul.f32 %v5718, %v5722
    %v5724 = vlaneseq
    %v5725 = vshrl.u32 %v5724, 7
    %v5726 = vsub.s32 1, %v5725
    %v5727 = vrot.slane %v5705, %v5726
    %v5728 = vadd.f32 %v5723, %v5727
    %v5729 = vld [vmem:[#allocation2 + $0x7a0] sm:$0xff]
    %v5730 = vld [vmem:[#allocation2 + $0x7a8] sm:$0xff]
    %v5731 = vld [vmem:[#allocation2 + $0x7b0] sm:$0xff]
    %v5732 = vld [vmem:[#allocation2 + $0x7b8] sm:$0xff]
    %v5733 = vld [vmem:[#allocation2 + $0x7c0] sm:$0x1]
    %v5734 = vlaneseq
    %v5735 = vshrl.u32 %v5734, 7
    %v5736 = vsub.s32 0, %v5735
    %v5737 = vrot.slane %v5733, %v5736
    %v5739 = vsel %vm288, %v5728, 0
    %5741 = vmatprep.subr.mxu0 0.0
    %5742 = vmatpush1.msra.mxu0 0.0
    %5743 = vmatprep.subr.mxu0 0.0
    %5744 = vmatpush1.msra.mxu0 0.0
    %5745 = vmatprep.subr.mxu0 0.0
    %5746 = vmatpush1.msra.mxu0 0.0
    %5747 = vmatprep.subr.mxu0 0.0
    %5748 = vmatpush1.msra.mxu0 0.0
    %5749 = vmatprep.subr.mxu0 0.0
    %5750 = vmatpush1.msra.mxu0 0.0
    %5751 = vmatprep.subr.mxu0 0.0
    %5752 = vmatpush1.msra.mxu0 0.0
    %5753 = vmatprep.subr.mxu0 0.0
    %5754 = vmatpush1.msra.mxu0 0.0
    %5755 = vmatprep.subr.mxu0 0.0
    %5756 = vmatpush1.msra.mxu0 0.0
    %5757 = vmatprep.subr.mxu0 0.0
    %5758 = vmatpush1.msra.mxu0 0.0
    %5759 = vmatprep.subr.mxu0 0.0
    %5760 = vmatpush1.msra.mxu0 0.0
    %5761 = vmatprep.subr.mxu0 0.0
    %5762 = vmatpush1.msra.mxu0 0.0
    %5763 = vmatprep.subr.mxu0 0.0
    %5764 = vmatpush1.msra.mxu0 0.0
    %5765 = vmatprep.subr.mxu0 0.0
    %5766 = vmatpush1.msra.mxu0 %v5732
    %5767 = vmatprep.subr.mxu0 0.0
    %5768 = vmatpush1.msra.mxu0 %v5731
    %5769 = vmatprep.subr.mxu0 0.0
    %5770 = vmatpush1.msra.mxu0 %v5730
    %5771 = vmatprep.subr.mxu0 0.0
    %5772 = vmatpush1.msra.mxu0 %v5729
    %5773 = vmatprep.subr.mxu0 0.0
    %5774 = vmatpush2.msra.mxu0 0.0
    %5775 = vmatprep.subr.mxu0 0.0
    %5776 = vmatpush2.msra.mxu0 0.0
    %5777 = vmatprep.subr.mxu0 0.0
    %5778 = vmatpush2.msra.mxu0 0.0
    %5779 = vmatprep.subr.mxu0 0.0
    %5780 = vmatpush2.msra.mxu0 0.0
    %5781 = vmatprep.subr.mxu0 0.0
    %5782 = vmatpush2.msra.mxu0 0.0
    %5783 = vmatprep.subr.mxu0 0.0
    %5784 = vmatpush2.msra.mxu0 0.0
    %5785 = vmatprep.subr.mxu0 0.0
    %5786 = vmatpush2.msra.mxu0 0.0
    %5787 = vmatprep.subr.mxu0 0.0
    %5788 = vmatpush2.msra.mxu0 0.0
    %5789 = vmatprep.subr.mxu0 0.0
    %5790 = vmatpush2.msra.mxu0 0.0
    %5791 = vmatprep.subr.mxu0 0.0
    %5792 = vmatpush2.msra.mxu0 0.0
    %5793 = vmatprep.subr.mxu0 0.0
    %5794 = vmatpush2.msra.mxu0 0.0
    %5795 = vmatprep.subr.mxu0 0.0
    %5796 = vmatpush2.msra.mxu0 0.0
    %5797 = vmatprep.subr.mxu0 0.0
    %5798 = vmatpush2.msra.mxu0 0.0
    %5799 = vmatprep.subr.mxu0 0.0
    %5800 = vmatpush2.msra.mxu0 0.0
    %5801 = vmatprep.subr.mxu0 0.0
    %5802 = vmatpush2.msra.mxu0 0.0
    %5803 = vmatprep.subr.mxu0 0.0
    %5804 = vmatpush2.msra.mxu0 0.0
    %5805 = vmatprep.mubr.f32.mxu0 0.0
    %5806 = vmatmul.mubr.f32.gmra.mxu0 %v5739
    %v5807 = vpop.f32.mrf.mxu0
    %v5808 = vadd.f32 %v5737, %v5807
    %v5809 = vpop.f32.mrf.mxu0
    %5810 = vdwg.mxu0
    %v5811 = vld [vmem:[#allocation2 + $0x7f8] sm:$0xff]
    %v5812 = vadd.f32 %v5808, %v5811
    %vm5813 = vcmp.gt.f32.partialorder %v5812, 0.0
    %v5814 = vmin.f32 %v5812, 0.0
    %v5815 = vmul.f32 %v5814, 1.442695
    %v5816 = vpow.pop %v5815
    %v5817 = vsub.f32 %v5816, 1.0
    %v5818 = vsel %vm5813, %v5812, %v5817
    %v5819 = vld [vmem:[#allocation2 + $0x7c8] sm:$0xff]
    %v5820 = vld [vmem:[#allocation2 + $0x7d0] sm:$0xff]
    %v5821 = vld [vmem:[#allocation2 + $0x7d8] sm:$0xff]
    %v5822 = vld [vmem:[#allocation2 + $0x7e0] sm:$0xff]
    %v5823 = vld [vmem:[#allocation2 + $0x7e8] sm:$0x1]
    %v5824 = vlaneseq
    %v5825 = vshrl.u32 %v5824, 7
    %v5826 = vsub.s32 0, %v5825
    %v5827 = vrot.slane %v5823, %v5826
    %v5829 = vsel %vm288, %v5818, 0
    %5831 = vmatprep.subr.mxu0 0.0
    %5832 = vmatpush1.msra.mxu0 0.0
    %5833 = vmatprep.subr.mxu0 0.0
    %5834 = vmatpush1.msra.mxu0 0.0
    %5835 = vmatprep.subr.mxu0 0.0
    %5836 = vmatpush1.msra.mxu0 0.0
    %5837 = vmatprep.subr.mxu0 0.0
    %5838 = vmatpush1.msra.mxu0 0.0
    %5839 = vmatprep.subr.mxu0 0.0
    %5840 = vmatpush1.msra.mxu0 0.0
    %5841 = vmatprep.subr.mxu0 0.0
    %5842 = vmatpush1.msra.mxu0 0.0
    %5843 = vmatprep.subr.mxu0 0.0
    %5844 = vmatpush1.msra.mxu0 0.0
    %5845 = vmatprep.subr.mxu0 0.0
    %5846 = vmatpush1.msra.mxu0 0.0
    %5847 = vmatprep.subr.mxu0 0.0
    %5848 = vmatpush1.msra.mxu0 0.0
    %5849 = vmatprep.subr.mxu0 0.0
    %5850 = vmatpush1.msra.mxu0 0.0
    %5851 = vmatprep.subr.mxu0 0.0
    %5852 = vmatpush1.msra.mxu0 0.0
    %5853 = vmatprep.subr.mxu0 0.0
    %5854 = vmatpush1.msra.mxu0 0.0
    %5855 = vmatprep.subr.mxu0 0.0
    %5856 = vmatpush1.msra.mxu0 %v5822
    %5857 = vmatprep.subr.mxu0 0.0
    %5858 = vmatpush1.msra.mxu0 %v5821
    %5859 = vmatprep.subr.mxu0 0.0
    %5860 = vmatpush1.msra.mxu0 %v5820
    %5861 = vmatprep.subr.mxu0 0.0
    %5862 = vmatpush1.msra.mxu0 %v5819
    %5863 = vmatprep.subr.mxu0 0.0
    %5864 = vmatpush2.msra.mxu0 0.0
    %5865 = vmatprep.subr.mxu0 0.0
    %5866 = vmatpush2.msra.mxu0 0.0
    %5867 = vmatprep.subr.mxu0 0.0
    %5868 = vmatpush2.msra.mxu0 0.0
    %5869 = vmatprep.subr.mxu0 0.0
    %5870 = vmatpush2.msra.mxu0 0.0
    %5871 = vmatprep.subr.mxu0 0.0
    %5872 = vmatpush2.msra.mxu0 0.0
    %5873 = vmatprep.subr.mxu0 0.0
    %5874 = vmatpush2.msra.mxu0 0.0
    %5875 = vmatprep.subr.mxu0 0.0
    %5876 = vmatpush2.msra.mxu0 0.0
    %5877 = vmatprep.subr.mxu0 0.0
    %5878 = vmatpush2.msra.mxu0 0.0
    %5879 = vmatprep.subr.mxu0 0.0
    %5880 = vmatpush2.msra.mxu0 0.0
    %5881 = vmatprep.subr.mxu0 0.0
    %5882 = vmatpush2.msra.mxu0 0.0
    %5883 = vmatprep.subr.mxu0 0.0
    %5884 = vmatpush2.msra.mxu0 0.0
    %5885 = vmatprep.subr.mxu0 0.0
    %5886 = vmatpush2.msra.mxu0 0.0
    %5887 = vmatprep.subr.mxu0 0.0
    %5888 = vmatpush2.msra.mxu0 0.0
    %5889 = vmatprep.subr.mxu0 0.0
    %5890 = vmatpush2.msra.mxu0 0.0
    %5891 = vmatprep.subr.mxu0 0.0
    %5892 = vmatpush2.msra.mxu0 0.0
    %5893 = vmatprep.subr.mxu0 0.0
    %5894 = vmatpush2.msra.mxu0 0.0
    %5895 = vmatprep.mubr.f32.mxu0 0.0
    %5896 = vmatmul.mubr.f32.gmra.mxu0 %v5829
    %v5897 = vpop.f32.mrf.mxu0
    %v5898 = vadd.f32 %v5827, %v5897
    %v5899 = vpop.f32.mrf.mxu0
    %5900 = vdwg.mxu0
    %v5901 = vxor.u32 %v5898, 2147483648
    %v5902 = vmul.f32 %v5901, 1.442695
    %v5903 = vpow.pop %v5902
    %v5904 = vadd.f32 %v5903, 1.0
    %v5905 = vrcp.pop %v5904
    %v5906 = vmul.f32 1.0, %v5905
    %5908 = vrot.lane.b32.xlu0 %v5898, 96
    %v5909 = vpop.permute.xlu0 %5908
    %v5911 = vmul.f32 %v5906, %v5909
    %v5912 = vadd.f32 %v5728, %v5911
    %v5913 = vld [vmem:[#allocation2 + $0x7f0] sm:$0x3]
    %v5914 = vsel %vm288, %v5912, 0.0
    %5915 = vadd.xlane.f32.xlu0 %v5914
    %v5916 = vpop.xlane.xlu0 %5915
    %v5917 = vmul.f32 %v5916, %v3760
    %v5918 = vsub.f32 %v5912, %v5917
    %v5919 = vmul.f32 %v5918, %v5918
    %v5920 = vsel %vm288, %v5919, 0.0
    %5921 = vadd.xlane.f32.xlu0 %v5920
    %v5922 = vpop.xlane.xlu0 %5921
    %v5923 = vmul.f32 %v5922, %v3760
    %v5924 = vadd.f32 %v5923, 1e-05
    %v5925 = vrsqrt.pop %v5924
    %v5926 = vmul.f32 %v5918, %v5925
    %v5927 = vlaneseq
    %v5928 = vshrl.u32 %v5927, 7
    %v5929 = vsub.s32 0, %v5928
    %v5930 = vrot.slane %v5913, %v5929
    %v5931 = vmul.f32 %v5926, %v5930
    %v5932 = vlaneseq
    %v5933 = vshrl.u32 %v5932, 7
    %v5934 = vsub.s32 1, %v5933
    %v5935 = vrot.slane %v5913, %v5934
    %v5936 = vadd.f32 %v5931, %v5935
    %v5937 = vld [vmem:[#allocation2 + $0x6f0] sm:$0xff]
    %v5938 = vld [vmem:[#allocation2 + $0x6f8] sm:$0xff]
    %v5939 = vld [vmem:[#allocation2 + $0x700] sm:$0xff]
    %v5940 = vld [vmem:[#allocation2 + $0x708] sm:$0xff]
    %v5941 = vld [vmem:[#allocation2 + $0x710] sm:$0x1]
    %v5942 = vlaneseq
    %v5943 = vshrl.u32 %v5942, 7
    %v5944 = vsub.s32 0, %v5943
    %v5945 = vrot.slane %v5941, %v5944
    %v5947 = vsel %vm288, %v5936, 0
    %5949 = vmatprep.subr.mxu0 0.0
    %5950 = vmatpush1.msra.mxu0 0.0
    %5951 = vmatprep.subr.mxu0 0.0
    %5952 = vmatpush1.msra.mxu0 0.0
    %5953 = vmatprep.subr.mxu0 0.0
    %5954 = vmatpush1.msra.mxu0 0.0
    %5955 = vmatprep.subr.mxu0 0.0
    %5956 = vmatpush1.msra.mxu0 0.0
    %5957 = vmatprep.subr.mxu0 0.0
    %5958 = vmatpush1.msra.mxu0 0.0
    %5959 = vmatprep.subr.mxu0 0.0
    %5960 = vmatpush1.msra.mxu0 0.0
    %5961 = vmatprep.subr.mxu0 0.0
    %5962 = vmatpush1.msra.mxu0 0.0
    %5963 = vmatprep.subr.mxu0 0.0
    %5964 = vmatpush1.msra.mxu0 0.0
    %5965 = vmatprep.subr.mxu0 0.0
    %5966 = vmatpush1.msra.mxu0 0.0
    %5967 = vmatprep.subr.mxu0 0.0
    %5968 = vmatpush1.msra.mxu0 0.0
    %5969 = vmatprep.subr.mxu0 0.0
    %5970 = vmatpush1.msra.mxu0 0.0
    %5971 = vmatprep.subr.mxu0 0.0
    %5972 = vmatpush1.msra.mxu0 0.0
    %5973 = vmatprep.subr.mxu0 0.0
    %5974 = vmatpush1.msra.mxu0 %v5940
    %5975 = vmatprep.subr.mxu0 0.0
    %5976 = vmatpush1.msra.mxu0 %v5939
    %5977 = vmatprep.subr.mxu0 0.0
    %5978 = vmatpush1.msra.mxu0 %v5938
    %5979 = vmatprep.subr.mxu0 0.0
    %5980 = vmatpush1.msra.mxu0 %v5937
    %5981 = vmatprep.subr.mxu0 0.0
    %5982 = vmatpush2.msra.mxu0 0.0
    %5983 = vmatprep.subr.mxu0 0.0
    %5984 = vmatpush2.msra.mxu0 0.0
    %5985 = vmatprep.subr.mxu0 0.0
    %5986 = vmatpush2.msra.mxu0 0.0
    %5987 = vmatprep.subr.mxu0 0.0
    %5988 = vmatpush2.msra.mxu0 0.0
    %5989 = vmatprep.subr.mxu0 0.0
    %5990 = vmatpush2.msra.mxu0 0.0
    %5991 = vmatprep.subr.mxu0 0.0
    %5992 = vmatpush2.msra.mxu0 0.0
    %5993 = vmatprep.subr.mxu0 0.0
    %5994 = vmatpush2.msra.mxu0 0.0
    %5995 = vmatprep.subr.mxu0 0.0
    %5996 = vmatpush2.msra.mxu0 0.0
    %5997 = vmatprep.subr.mxu0 0.0
    %5998 = vmatpush2.msra.mxu0 0.0
    %5999 = vmatprep.subr.mxu0 0.0
    %6000 = vmatpush2.msra.mxu0 0.0
    %6001 = vmatprep.subr.mxu0 0.0
    %6002 = vmatpush2.msra.mxu0 0.0
    %6003 = vmatprep.subr.mxu0 0.0
    %6004 = vmatpush2.msra.mxu0 0.0
    %6005 = vmatprep.subr.mxu0 0.0
    %6006 = vmatpush2.msra.mxu0 0.0
    %6007 = vmatprep.subr.mxu0 0.0
    %6008 = vmatpush2.msra.mxu0 0.0
    %6009 = vmatprep.subr.mxu0 0.0
    %6010 = vmatpush2.msra.mxu0 0.0
    %6011 = vmatprep.subr.mxu0 0.0
    %6012 = vmatpush2.msra.mxu0 0.0
    %6013 = vmatprep.mubr.f32.mxu0 0.0
    %6014 = vmatmul.mubr.f32.gmra.mxu0 %v5947
    %v6015 = vpop.f32.mrf.mxu0
    %v6016 = vadd.f32 %v5945, %v6015
    %v6017 = vpop.f32.mrf.mxu0
    %6018 = vdwg.mxu0
    %v6019 = vxor.u32 %v6016, 2147483648
    %v6020 = vmul.f32 %v6019, 1.442695
    %v6021 = vpow.pop %v6020
    %v6022 = vadd.f32 %v6021, 1.0
    %v6023 = vrcp.pop %v6022
    %v6024 = vmul.f32 1.0, %v6023
    %6026 = vrot.lane.b32.xlu0 %v6016, 96
    %v6027 = vpop.permute.xlu0 %6026
    %v6029 = vmul.f32 %v6024, %v6027
    %v6030 = vadd.f32 %v3804, %v6029
    %v6031 = vld [vmem:[#allocation2 + $0x728] sm:$0x3]
    %v6032 = vsel %vm288, %v6030, 0.0
    %6033 = vadd.xlane.f32.xlu0 %v6032
    %v6034 = vpop.xlane.xlu0 %6033
    %v6035 = vmul.f32 %v6034, %v3760
    %v6036 = vsub.f32 %v6030, %v6035
    %v6037 = vmul.f32 %v6036, %v6036
    %v6038 = vsel %vm288, %v6037, 0.0
    %6039 = vadd.xlane.f32.xlu0 %v6038
    %v6040 = vpop.xlane.xlu0 %6039
    %v6041 = vmul.f32 %v6040, %v3760
    %v6042 = vadd.f32 %v6041, 1e-05
    %v6043 = vrsqrt.pop %v6042
    %v6044 = vmul.f32 %v6036, %v6043
    %v6045 = vlaneseq
    %v6046 = vshrl.u32 %v6045, 7
    %v6047 = vsub.s32 0, %v6046
    %v6048 = vrot.slane %v6031, %v6047
    %v6049 = vmul.f32 %v6044, %v6048
    %v6050 = vlaneseq
    %v6051 = vshrl.u32 %v6050, 7
    %v6052 = vsub.s32 1, %v6051
    %v6053 = vrot.slane %v6031, %v6052
    %v6054 = vadd.f32 %v6049, %v6053
    %v6055 = vld [vmem:[#allocation2 + $0x838] sm:$0xff]
    %v6056 = vld [vmem:[#allocation2 + $0x840] sm:$0xff]
    %v6057 = vld [vmem:[#allocation2 + $0x848] sm:$0xff]
    %v6058 = vld [vmem:[#allocation2 + $0x850] sm:$0xff]
    %v6059 = vld [vmem:[#allocation2 + $0x858] sm:$0x1]
    %v6060 = vlaneseq
    %v6061 = vshrl.u32 %v6060, 7
    %v6062 = vsub.s32 0, %v6061
    %v6063 = vrot.slane %v6059, %v6062
    %v6065 = vsel %vm288, %v6054, 0
    %6067 = vmatprep.subr.mxu0 0.0
    %6068 = vmatpush1.msra.mxu0 0.0
    %6069 = vmatprep.subr.mxu0 0.0
    %6070 = vmatpush1.msra.mxu0 0.0
    %6071 = vmatprep.subr.mxu0 0.0
    %6072 = vmatpush1.msra.mxu0 0.0
    %6073 = vmatprep.subr.mxu0 0.0
    %6074 = vmatpush1.msra.mxu0 0.0
    %6075 = vmatprep.subr.mxu0 0.0
    %6076 = vmatpush1.msra.mxu0 0.0
    %6077 = vmatprep.subr.mxu0 0.0
    %6078 = vmatpush1.msra.mxu0 0.0
    %6079 = vmatprep.subr.mxu0 0.0
    %6080 = vmatpush1.msra.mxu0 0.0
    %6081 = vmatprep.subr.mxu0 0.0
    %6082 = vmatpush1.msra.mxu0 0.0
    %6083 = vmatprep.subr.mxu0 0.0
    %6084 = vmatpush1.msra.mxu0 0.0
    %6085 = vmatprep.subr.mxu0 0.0
    %6086 = vmatpush1.msra.mxu0 0.0
    %6087 = vmatprep.subr.mxu0 0.0
    %6088 = vmatpush1.msra.mxu0 0.0
    %6089 = vmatprep.subr.mxu0 0.0
    %6090 = vmatpush1.msra.mxu0 0.0
    %6091 = vmatprep.subr.mxu0 0.0
    %6092 = vmatpush1.msra.mxu0 %v6058
    %6093 = vmatprep.subr.mxu0 0.0
    %6094 = vmatpush1.msra.mxu0 %v6057
    %6095 = vmatprep.subr.mxu0 0.0
    %6096 = vmatpush1.msra.mxu0 %v6056
    %6097 = vmatprep.subr.mxu0 0.0
    %6098 = vmatpush1.msra.mxu0 %v6055
    %6099 = vmatprep.subr.mxu0 0.0
    %6100 = vmatpush2.msra.mxu0 0.0
    %6101 = vmatprep.subr.mxu0 0.0
    %6102 = vmatpush2.msra.mxu0 0.0
    %6103 = vmatprep.subr.mxu0 0.0
    %6104 = vmatpush2.msra.mxu0 0.0
    %6105 = vmatprep.subr.mxu0 0.0
    %6106 = vmatpush2.msra.mxu0 0.0
    %6107 = vmatprep.subr.mxu0 0.0
    %6108 = vmatpush2.msra.mxu0 0.0
    %6109 = vmatprep.subr.mxu0 0.0
    %6110 = vmatpush2.msra.mxu0 0.0
    %6111 = vmatprep.subr.mxu0 0.0
    %6112 = vmatpush2.msra.mxu0 0.0
    %6113 = vmatprep.subr.mxu0 0.0
    %6114 = vmatpush2.msra.mxu0 0.0
    %6115 = vmatprep.subr.mxu0 0.0
    %6116 = vmatpush2.msra.mxu0 0.0
    %6117 = vmatprep.subr.mxu0 0.0
    %6118 = vmatpush2.msra.mxu0 0.0
    %6119 = vmatprep.subr.mxu0 0.0
    %6120 = vmatpush2.msra.mxu0 0.0
    %6121 = vmatprep.subr.mxu0 0.0
    %6122 = vmatpush2.msra.mxu0 0.0
    %6123 = vmatprep.subr.mxu0 0.0
    %6124 = vmatpush2.msra.mxu0 0.0
    %6125 = vmatprep.subr.mxu0 0.0
    %6126 = vmatpush2.msra.mxu0 0.0
    %6127 = vmatprep.subr.mxu0 0.0
    %6128 = vmatpush2.msra.mxu0 0.0
    %6129 = vmatprep.subr.mxu0 0.0
    %6130 = vmatpush2.msra.mxu0 0.0
    %6131 = vmatprep.mubr.f32.mxu0 0.0
    %6132 = vmatmul.mubr.f32.gmra.mxu0 %v6065
    %v6133 = vpop.f32.mrf.mxu0
    %v6134 = vadd.f32 %v6063, %v6133
    %v6135 = vpop.f32.mrf.mxu0
    %6136 = vdwg.mxu0
    %v6138 = vcombine.high %v6134, %v6134
    %v6140 = vunpack.c.l.s4 1983009808
    %v6141 = vunpack.c.0.s8 %v6140
    %v6142 = vlaneseq
    %v6143 = vshrl.u32 %v6142, 7
    %v6144 = vsub.s32 %v6141, %v6143
    %v6145 = vrot.slane %v6134, %v6144
    %v6147 = vunpack.c.l.s4 1983009808
    %v6148 = vunpack.c.0.s8 %v6147
    %v6149 = vlaneseq
    %v6150 = vshrl.u32 %v6149, 7
    %v6151 = vsub.s32 %v6148, %v6150
    %v6152 = vrot.slane %v6138, %v6151
    %v6153 = vcombine.high %v6145, %v6145
    %v6154 = vcombine.high %v6152, %v6152
    %vm6159 = vcmask 17408
    %6160 = vst.msk [vmem:[%s3] sm:$0x3] %vm6159, %v6145
    %6161 = vst.msk [vmem:[%s3 + $0x2] sm:$0x3] %vm6159, %v6153
    %6162 = vst.msk [vmem:[%s3 + $0x4] sm:$0x3] %vm6159, %v6152
    %6163 = vst.msk [vmem:[%s3 + $0x6] sm:$0x3] %vm6159, %v6154
    // Predicated region
    $region18: #{tpu_custom_call.1} parent=1 // pred_check
      _
    $region19: #{tpu_custom_call.1} parent=1 // pred_check_branch
      %6165 = sbr.rel (0) target = $region21
    $region20: #{tpu_custom_call.1} parent=1 // pred_region
      _
    $region21: #{tpu_custom_call.1} parent=1 // pred_fallthru
      _
    // Predicated region
    $region22: #{tpu_custom_call.1} parent=1 // pred_check
      _
    $region23: #{tpu_custom_call.1} parent=1 // pred_check_branch
      %6167 = sbr.rel (0) target = $region25
    $region24: #{tpu_custom_call.1} parent=1 // pred_region
      _
    $region25: #{tpu_custom_call.1} parent=1 // pred_fallthru
      _
    %6168 = vsyncpa [#allocation3], 1

</llo_original>
